<compile_context>
chip_gen: v5e
topology: v5e:2x2
jax: 0.10.0
libtpu: 0.0.40
codegen_flags: <defaults>
</compile_context>

<pallas_src>
import functools

import jax
import jax.numpy as jnp
import numpy as np
from jax.experimental import pallas as pl
from jax.experimental.pallas import tpu as pltpu


def _layernorm(x, gamma, beta, eps=1e-5):
    mu = jnp.mean(x, axis=-1, keepdims=True)
    var = jnp.mean((x - mu) ** 2, axis=-1, keepdims=True)
    return (x - mu) * jax.lax.rsqrt(var + eps) * gamma + beta


def block_kernel(x_ref,
                 ln1_g_ref, ln1_b_ref,
                 wqkv_ref,                    # (C, 3C) bf16: [all-Q | all-K | all-V]
                 wproj_ref, bproj_ref,        # (C, C) bf16, (1, C) f32
                 ln2_g_ref, ln2_b_ref,
                 wfc1_ref, bfc1_ref,          # (C, H) bf16, (1, H) f32
                 wfc2_ref, bfc2_ref,          # (H, C) bf16, (1, C) f32
                 o_ref,
                 *, num_heads, seq_len):
    f32, bf16 = jnp.float32, jnp.bfloat16
    x = x_ref[...].astype(f32)                # (Np, C)
    Np, C = x.shape
    hd = C // num_heads
    scale = float(hd) ** -0.5

    # ---- Attention branch ---------------------------------------------------
    xn = _layernorm(x, ln1_g_ref[...], ln1_b_ref[...])

    # Single wide QKV matmul: lane-dense 3C-wide output, no head-broadcast of the LHS.
    qkv = jnp.dot(xn.astype(bf16), wqkv_ref[...],
                  preferred_element_type=f32)                       # (Np, 3C)

    # Additive key-padding mask row (0 for valid keys, -1e30 for padded), built once.
    mask_row = None
    if seq_len < Np:                          # static
        key_id = jax.lax.broadcasted_iota(jnp.int32, (1, Np), 1)
        mask_row = jnp.where(key_id < seq_len,
                             jnp.float32(0.0), jnp.float32(-1e30))  # (1, Np)

    # Per-head attention, statically unrolled; head projections accumulate into one
    # (Np, C) f32 buffer (no (h, Np, C) partials, only one (Np, Np) score tile live).
    proj = jnp.zeros((Np, C), f32)
    for h in range(num_heads):
        q = (qkv[:, 0 * C + h * hd:0 * C + (h + 1) * hd] * scale).astype(bf16)
        k = qkv[:, 1 * C + h * hd:1 * C + (h + 1) * hd].astype(bf16)
        v = qkv[:, 2 * C + h * hd:2 * C + (h + 1) * hd].astype(bf16)

        att = jax.lax.dot_general(q, k, (((1,), (1,)), ((), ())),
                                  preferred_element_type=f32)       # (Np, Np)
        if mask_row is not None:
            att = att + mask_row
        att = att - jnp.max(att, axis=-1, keepdims=True)
        p = jnp.exp(att)
        l = jnp.sum(p, axis=-1, keepdims=True)                      # (Np, 1)

        ctx = jnp.dot(p.astype(bf16), v, preferred_element_type=f32)  # (Np, hd)
        ctx = ctx * pl.reciprocal(l, approx=True)                     # EUP slot

        proj = proj + jnp.dot(ctx.astype(bf16),
                              wproj_ref[h * hd:(h + 1) * hd, :],
                              preferred_element_type=f32)
    x1 = x + proj + bproj_ref[...]            # residual 1 (f32)

    # ---- MLP branch -----------------------------------------------------------
    x1n = _layernorm(x1, ln2_g_ref[...], ln2_b_ref[...])
    h1 = jnp.dot(x1n.astype(bf16), wfc1_ref[...],
                 preferred_element_type=f32) + bfc1_ref[...]
    # tanh GELU (EUP) instead of exact erf (long VALU polynomial); <~1e-3 deviation
    # vs nn.GELU's default exact form.
    h1 = jax.nn.gelu(h1, approximate=True)
    h2 = jnp.dot(h1.astype(bf16), wfc2_ref[...],
                 preferred_element_type=f32) + bfc2_ref[...]

    o_ref[...] = (x1 + h2).astype(o_ref.dtype)   # residual 2


def _vmem_limit_bytes(Np, C, H, num_heads):
    """Generation-aware VMEM budget (single-buffered bf16 weights + f32 activations)."""
    wbytes = 2 * (C * 3 * C + C * C + C * H + H * C)     # bf16 weights, 1 buffer each
    small = 4 * (9 * C + H)                              # LN params + biases
    io = 4 * Np * C * 2 * 2                              # x + out, double-buffered
    act = 4 * (Np * 3 * C                                # qkv
               + 3 * Np * Np                             # att / p (+ slack)
               + 6 * Np * C                              # x, xn, x1, x1n, proj, out
               + 2 * Np * H)                             # h1 / gelu
    est = wbytes + small + io + act
    req = max(32 << 20, 2 * est)
    try:
        cap = pltpu.get_tpu_info().vmem_capacity_bytes
    except Exception:
        cap = 128 << 20
    return int(min(req, int(0.9 * cap)))


def vit_block(x, params, num_heads, *, lane_multiple=128):
    B, N, C = x.shape
    H = params["wfc1"].shape[1]

    # Pad tokens so the (Nq, Nk) attention tiles and output stores are lane-dense.
    Np = ((N + lane_multiple - 1) // lane_multiple) * lane_multiple
    x_p = jnp.pad(x, ((0, 0), (0, Np - N), (0, 0))) if Np != N else x

    bf16 = jnp.bfloat16
    wqkv = params["wqkv"].astype(bf16)        # (C, 3C), already [all-Q | all-K | all-V]
    wproj = params["wproj"].astype(bf16)      # (C, C)
    wfc1 = params["wfc1"].astype(bf16)        # (C, H)
    wfc2 = params["wfc2"].astype(bf16)        # (H, C)

    kernel = functools.partial(block_kernel, num_heads=num_heads, seq_len=N)
    args = (x_p,
            params["ln1_g"], params["ln1_b"],
            wqkv,
            wproj, params["bproj"],
            params["ln2_g"], params["ln2_b"],
            wfc1, params["bfc1"],
            wfc2, params["bfc2"])

    def build(single_buffer_weights):
        def w_spec(shape):
            nd = len(shape)
            kwargs = {}
            if single_buffer_weights:
                # Grid-invariant input: one pipeline buffer is enough.
                kwargs["pipeline_mode"] = pl.Buffered(1)
            return pl.BlockSpec(shape, lambda b, _nd=nd: (0,) * _nd, **kwargs)

        return pl.pallas_call(
            kernel,
            out_shape=jax.ShapeDtypeStruct((B, Np, C), x.dtype),
            grid_spec=pltpu.PrefetchScalarGridSpec(
                num_scalar_prefetch=0,
                grid=(B,),
                in_specs=[
                    pl.BlockSpec((None, Np, C), lambda b: (b, 0, 0)),   # x (squeezed batch)
                    w_spec((1, C)), w_spec((1, C)),                     # ln1 gamma / beta
                    w_spec((C, 3 * C)),                                 # W_qkv
                    w_spec((C, C)), w_spec((1, C)),                     # W_proj, b_proj
                    w_spec((1, C)), w_spec((1, C)),                     # ln2 gamma / beta
                    w_spec((C, H)), w_spec((1, H)),                     # W_fc1, b_fc1
                    w_spec((H, C)), w_spec((1, C)),                     # W_fc2, b_fc2
                ],
                out_specs=pl.BlockSpec((None, Np, C), lambda b: (b, 0, 0)),
            ),
            compiler_params=pltpu.CompilerParams(
                dimension_semantics=("parallel",),
                vmem_limit_bytes=_vmem_limit_bytes(Np, C, H, num_heads),
            ),
        )

    try:
        out = build(single_buffer_weights=True)(*args)
        out.block_until_ready()
    except Exception:
        # Fallback for jax versions where single-buffered (Buffered(1)) pipeline
        # blocks are not supported: default double-buffering, same semantics.
        out = build(single_buffer_weights=False)(*args)

    return out[:, :N, :] if Np != N else out


def reference_block(x, p, num_heads):
    """Pure-JAX f32 reference mirroring the PyTorch Block forward (eval, no noise)."""
    B, N, C = x.shape
    hd = C // num_heads
    scale = hd ** -0.5

    def ln(y, g, b):
        mu = jnp.mean(y, axis=-1, keepdims=True)
        var = jnp.mean((y - mu) ** 2, axis=-1, keepdims=True)
        return (y - mu) * jax.lax.rsqrt(var + 1e-5) * g + b

    xn = ln(x, p["ln1_g"], p["ln1_b"])
    qkv = xn @ p["wqkv"]                                      # (B, N, 3C)
    qkv = qkv.reshape(B, N, 3, num_heads, hd).transpose(2, 0, 3, 1, 4)
    q, k, v = qkv[0], qkv[1], qkv[2]                          # (B, h, N, hd)
    att = (q @ jnp.swapaxes(k, -2, -1)) * scale
    att = jax.nn.softmax(att, axis=-1)
    out = (att @ v).transpose(0, 2, 1, 3).reshape(B, N, C)
    out = out @ p["wproj"] + p["bproj"]
    x = x + out
    xn2 = ln(x, p["ln2_g"], p["ln2_b"])
    h = jax.nn.gelu(xn2 @ p["wfc1"] + p["bfc1"], approximate=False)
    h = h @ p["wfc2"] + p["bfc2"]
    return x + h


def make_params(key, dim, num_heads, mlp_ratio=4.0):
    hidden = int(dim * mlp_ratio)
    ks = jax.random.split(key, 6)
    s = 0.02
    return {
        "ln1_g": jnp.ones((1, dim), jnp.float32),
        "ln1_b": jnp.zeros((1, dim), jnp.float32),
        # stored transposed: y = x @ W^T  ->  we store W^T directly
        "wqkv": s * jax.random.normal(ks[0], (dim, 3 * dim), jnp.float32),
        "wproj": s * jax.random.normal(ks[1], (dim, dim), jnp.float32),
        "bproj": s * jax.random.normal(ks[2], (1, dim), jnp.float32),
        "ln2_g": jnp.ones((1, dim), jnp.float32),
        "ln2_b": jnp.zeros((1, dim), jnp.float32),
        "wfc1": s * jax.random.normal(ks[3], (dim, hidden), jnp.float32),
        "bfc1": s * jax.random.normal(ks[4], (1, hidden), jnp.float32),
        "wfc2": s * jax.random.normal(ks[5], (hidden, dim), jnp.float32),
        "bfc2": jnp.zeros((1, dim), jnp.float32),
    }


if __name__ == "__main__":
    B, N, C = 2, 16, 128
    num_heads = 4

    key = jax.random.PRNGKey(0)
    kx, kp = jax.random.split(key)
    x = jax.random.normal(kx, (B, N, C), jnp.float32)
    params = make_params(kp, C, num_heads)

    out = jax.block_until_ready(vit_block(x, params, num_heads))

    ref = reference_block(x, params, num_heads)
    # bf16 matmul operands + approx-reciprocal softmax + tanh GELU -> looser tolerance
    # vs the f32 exact-GELU reference.
    np.testing.assert_allclose(np.asarray(out), np.asarray(ref), rtol=2e-2, atol=2e-2)
    print("KERNEL_OK")
</pallas_src>

<mosaic_0001>
module attributes {stable_mosaic.version = 11 : i64} {
  func.func @block_kernel(%arg0: i32, %arg1: memref<1x128x128xf32, #tpu.memory_space<vmem>>, %arg2: memref<1x128xf32, #tpu.memory_space<vmem>>, %arg3: memref<1x128xf32, #tpu.memory_space<vmem>>, %arg4: memref<128x384xbf16, #tpu.memory_space<vmem>>, %arg5: memref<128x128xbf16, #tpu.memory_space<vmem>>, %arg6: memref<1x128xf32, #tpu.memory_space<vmem>>, %arg7: memref<1x128xf32, #tpu.memory_space<vmem>>, %arg8: memref<1x128xf32, #tpu.memory_space<vmem>>, %arg9: memref<128x512xbf16, #tpu.memory_space<vmem>>, %arg10: memref<1x512xf32, #tpu.memory_space<vmem>>, %arg11: memref<512x128xbf16, #tpu.memory_space<vmem>>, %arg12: memref<1x128xf32, #tpu.memory_space<vmem>>, %arg13: memref<1x128x128xf32, #tpu.memory_space<vmem>>) attributes {dimension_semantics = [#tpu.dimension_semantics<parallel>], iteration_bounds = array<i64: 2>, scalar_prefetch = 0 : i64, scratch_operands = 0 : i64, tpu.core_type = #tpu.core_type<tc>, window_params = [{transform_indices = @transform_0, window_bounds = array<i64: 1, 128, 128>}, {pipeline_mode = #tpu.pipeline_mode<synchronous>, transform_indices = @transform_1, window_bounds = array<i64: 1, 128>}, {pipeline_mode = #tpu.pipeline_mode<synchronous>, transform_indices = @transform_2, window_bounds = array<i64: 1, 128>}, {pipeline_mode = #tpu.pipeline_mode<synchronous>, transform_indices = @transform_3, window_bounds = array<i64: 128, 384>}, {pipeline_mode = #tpu.pipeline_mode<synchronous>, transform_indices = @transform_4, window_bounds = array<i64: 128, 128>}, {pipeline_mode = #tpu.pipeline_mode<synchronous>, transform_indices = @transform_5, window_bounds = array<i64: 1, 128>}, {pipeline_mode = #tpu.pipeline_mode<synchronous>, transform_indices = @transform_6, window_bounds = array<i64: 1, 128>}, {pipeline_mode = #tpu.pipeline_mode<synchronous>, transform_indices = @transform_7, window_bounds = array<i64: 1, 128>}, {pipeline_mode = #tpu.pipeline_mode<synchronous>, transform_indices = @transform_8, window_bounds = array<i64: 128, 512>}, {pipeline_mode = #tpu.pipeline_mode<synchronous>, transform_indices = @transform_9, window_bounds = array<i64: 1, 512>}, {pipeline_mode = #tpu.pipeline_mode<synchronous>, transform_indices = @transform_10, window_bounds = array<i64: 512, 128>}, {pipeline_mode = #tpu.pipeline_mode<synchronous>, transform_indices = @transform_11, window_bounds = array<i64: 1, 128>}, {transform_indices = @transform_12, window_bounds = array<i64: 1, 128, 128>}]} {
    %c0 = arith.constant 0 : index
    %c0_0 = arith.constant 0 : index
    %c0_1 = arith.constant 0 : index
    %0 = vector.load %arg1[%c0, %c0_0, %c0_1] : memref<1x128x128xf32, #tpu.memory_space<vmem>>, vector<1x128x128xf32>
    %1 = vector.shape_cast %0 : vector<1x128x128xf32> to vector<128x128xf32>
    %c0_2 = arith.constant 0 : index
    %c0_3 = arith.constant 0 : index
    %2 = vector.load %arg2[%c0_2, %c0_3] : memref<1x128xf32, #tpu.memory_space<vmem>>, vector<1x128xf32>
    %c0_4 = arith.constant 0 : index
    %c0_5 = arith.constant 0 : index
    %3 = vector.load %arg3[%c0_4, %c0_5] : memref<1x128xf32, #tpu.memory_space<vmem>>, vector<1x128xf32>
    %cst = arith.constant dense<0.000000e+00> : vector<128xf32>
    %4 = vector.multi_reduction <add>, %1, %cst [1] : vector<128x128xf32> to vector<128xf32>
    %5 = vector.shape_cast %4 : vector<128xf32> to vector<128x1xf32>
    %cst_6 = arith.constant 1.280000e+02 : f32
    %6 = vector.broadcast %cst_6 : f32 to vector<128x1xf32>
    %7 = arith.divf %5, %6 : vector<128x1xf32>
    %8 = vector.broadcast %7 : vector<128x1xf32> to vector<128x128xf32>
    %9 = arith.subf %1, %8 : vector<128x128xf32>
    %10 = arith.mulf %9, %9 : vector<128x128xf32>
    %cst_7 = arith.constant dense<0.000000e+00> : vector<128xf32>
    %11 = vector.multi_reduction <add>, %10, %cst_7 [1] : vector<128x128xf32> to vector<128xf32>
    %12 = vector.shape_cast %11 : vector<128xf32> to vector<128x1xf32>
    %cst_8 = arith.constant 1.280000e+02 : f32
    %13 = vector.broadcast %cst_8 : f32 to vector<128x1xf32>
    %14 = arith.divf %12, %13 : vector<128x1xf32>
    %15 = vector.broadcast %7 : vector<128x1xf32> to vector<128x128xf32>
    %16 = arith.subf %1, %15 : vector<128x128xf32>
    %cst_9 = arith.constant 9.99999974E-6 : f32
    %17 = vector.broadcast %cst_9 : f32 to vector<128x1xf32>
    %18 = arith.addf %14, %17 : vector<128x1xf32>
    %19 = math.rsqrt %18 : vector<128x1xf32>
    %20 = vector.broadcast %19 : vector<128x1xf32> to vector<128x128xf32>
    %21 = arith.mulf %16, %20 : vector<128x128xf32>
    %22 = vector.broadcast %2 : vector<1x128xf32> to vector<128x128xf32>
    %23 = arith.mulf %21, %22 : vector<128x128xf32>
    %24 = vector.broadcast %3 : vector<1x128xf32> to vector<128x128xf32>
    %25 = arith.addf %23, %24 : vector<128x128xf32>
    %26 = arith.truncf %25 : vector<128x128xf32> to vector<128x128xbf16>
    %c0_10 = arith.constant 0 : index
    %c0_11 = arith.constant 0 : index
    %27 = vector.load %arg4[%c0_10, %c0_11] : memref<128x384xbf16, #tpu.memory_space<vmem>>, vector<128x384xbf16>
    %cst_12 = arith.constant dense<0.000000e+00> : vector<128x384xf32>
    %28 = tpu.matmul %26, %27, %cst_12 {dimension_numbers = #tpu.dot_dimension_numbers<[1], [0], [0], [1], [0, 0, 1, 1], [], []>} : vector<128x128xbf16>, vector<128x384xbf16>, vector<128x384xf32> -> vector<128x384xf32>
    %29 = tpu.iota {dimensions = array<i32: 1>} : vector<1x128xi32>
    %c16_i32 = arith.constant 16 : i32
    %30 = vector.broadcast %c16_i32 : i32 to vector<1x128xi32>
    %31 = arith.cmpi slt, %29, %30 : vector<1x128xi32>
    %cst_13 = arith.constant 0.000000e+00 : f32
    %cst_14 = arith.constant -1.000000e+30 : f32
    %32 = vector.broadcast %cst_13 : f32 to vector<1x128xf32>
    %33 = vector.broadcast %cst_14 : f32 to vector<1x128xf32>
    %34 = arith.select %31, %32, %33 : vector<1x128xi1>, vector<1x128xf32>
    %cst_15 = arith.constant 0.000000e+00 : f32
    %35 = vector.broadcast %cst_15 : f32 to vector<128x128xf32>
    %36 = vector.extract_strided_slice %28 {offsets = [0, 0], sizes = [128, 32], strides = [1, 1]} : vector<128x384xf32> to vector<128x32xf32>
    %cst_16 = arith.constant 0.176776692 : f32
    %37 = vector.broadcast %cst_16 : f32 to vector<128x32xf32>
    %38 = arith.mulf %36, %37 : vector<128x32xf32>
    %39 = arith.truncf %38 : vector<128x32xf32> to vector<128x32xbf16>
    %40 = vector.extract_strided_slice %28 {offsets = [0, 128], sizes = [128, 32], strides = [1, 1]} : vector<128x384xf32> to vector<128x32xf32>
    %41 = arith.truncf %40 : vector<128x32xf32> to vector<128x32xbf16>
    %42 = vector.extract_strided_slice %28 {offsets = [0, 256], sizes = [128, 32], strides = [1, 1]} : vector<128x384xf32> to vector<128x32xf32>
    %43 = arith.truncf %42 : vector<128x32xf32> to vector<128x32xbf16>
    %cst_17 = arith.constant dense<0.000000e+00> : vector<128x128xf32>
    %44 = tpu.matmul %39, %41, %cst_17 {dimension_numbers = #tpu.dot_dimension_numbers<[1], [1], [0], [0], [0, 0, 1, 0], [], []>} : vector<128x32xbf16>, vector<128x32xbf16>, vector<128x128xf32> -> vector<128x128xf32>
    %45 = vector.broadcast %34 : vector<1x128xf32> to vector<128x128xf32>
    %46 = arith.addf %44, %45 : vector<128x128xf32>
    %cst_18 = arith.constant dense<0xFF800000> : vector<128xf32>
    %47 = vector.multi_reduction <maximumf>, %46, %cst_18 [1] : vector<128x128xf32> to vector<128xf32>
    %48 = vector.shape_cast %47 : vector<128xf32> to vector<128x1xf32>
    %49 = vector.broadcast %48 : vector<128x1xf32> to vector<128x128xf32>
    %50 = arith.subf %46, %49 : vector<128x128xf32>
    %51 = math.exp %50 : vector<128x128xf32>
    %cst_19 = arith.constant dense<0.000000e+00> : vector<128xf32>
    %52 = vector.multi_reduction <add>, %51, %cst_19 [1] : vector<128x128xf32> to vector<128xf32>
    %53 = vector.shape_cast %52 : vector<128xf32> to vector<128x1xf32>
    %54 = arith.truncf %51 : vector<128x128xf32> to vector<128x128xbf16>
    %cst_20 = arith.constant dense<0.000000e+00> : vector<128x32xf32>
    %55 = tpu.matmul %54, %43, %cst_20 {dimension_numbers = #tpu.dot_dimension_numbers<[1], [0], [0], [1], [0, 0, 1, 1], [], []>} : vector<128x128xbf16>, vector<128x32xbf16>, vector<128x32xf32> -> vector<128x32xf32>
    %56 = tpu.reciprocal %53 {approx = true} : vector<128x1xf32> -> vector<128x1xf32>
    %57 = vector.broadcast %56 : vector<128x1xf32> to vector<128x32xf32>
    %58 = arith.mulf %55, %57 : vector<128x32xf32>
    %59 = arith.truncf %58 : vector<128x32xf32> to vector<128x32xbf16>
    %c0_21 = arith.constant 0 : index
    %c0_22 = arith.constant 0 : index
    %60 = vector.load %arg5[%c0_21, %c0_22] : memref<128x128xbf16, #tpu.memory_space<vmem>>, vector<32x128xbf16>
    %cst_23 = arith.constant dense<0.000000e+00> : vector<128x128xf32>
    %61 = tpu.matmul %59, %60, %cst_23 {dimension_numbers = #tpu.dot_dimension_numbers<[1], [0], [0], [1], [0, 0, 1, 1], [], []>} : vector<128x32xbf16>, vector<32x128xbf16>, vector<128x128xf32> -> vector<128x128xf32>
    %62 = arith.addf %35, %61 : vector<128x128xf32>
    %63 = vector.extract_strided_slice %28 {offsets = [0, 32], sizes = [128, 32], strides = [1, 1]} : vector<128x384xf32> to vector<128x32xf32>
    %cst_24 = arith.constant 0.176776692 : f32
    %64 = vector.broadcast %cst_24 : f32 to vector<128x32xf32>
    %65 = arith.mulf %63, %64 : vector<128x32xf32>
    %66 = arith.truncf %65 : vector<128x32xf32> to vector<128x32xbf16>
    %67 = vector.extract_strided_slice %28 {offsets = [0, 160], sizes = [128, 32], strides = [1, 1]} : vector<128x384xf32> to vector<128x32xf32>
    %68 = arith.truncf %67 : vector<128x32xf32> to vector<128x32xbf16>
    %69 = vector.extract_strided_slice %28 {offsets = [0, 288], sizes = [128, 32], strides = [1, 1]} : vector<128x384xf32> to vector<128x32xf32>
    %70 = arith.truncf %69 : vector<128x32xf32> to vector<128x32xbf16>
    %cst_25 = arith.constant dense<0.000000e+00> : vector<128x128xf32>
    %71 = tpu.matmul %66, %68, %cst_25 {dimension_numbers = #tpu.dot_dimension_numbers<[1], [1], [0], [0], [0, 0, 1, 0], [], []>} : vector<128x32xbf16>, vector<128x32xbf16>, vector<128x128xf32> -> vector<128x128xf32>
    %72 = vector.broadcast %34 : vector<1x128xf32> to vector<128x128xf32>
    %73 = arith.addf %71, %72 : vector<128x128xf32>
    %cst_26 = arith.constant dense<0xFF800000> : vector<128xf32>
    %74 = vector.multi_reduction <maximumf>, %73, %cst_26 [1] : vector<128x128xf32> to vector<128xf32>
    %75 = vector.shape_cast %74 : vector<128xf32> to vector<128x1xf32>
    %76 = vector.broadcast %75 : vector<128x1xf32> to vector<128x128xf32>
    %77 = arith.subf %73, %76 : vector<128x128xf32>
    %78 = math.exp %77 : vector<128x128xf32>
    %cst_27 = arith.constant dense<0.000000e+00> : vector<128xf32>
    %79 = vector.multi_reduction <add>, %78, %cst_27 [1] : vector<128x128xf32> to vector<128xf32>
    %80 = vector.shape_cast %79 : vector<128xf32> to vector<128x1xf32>
    %81 = arith.truncf %78 : vector<128x128xf32> to vector<128x128xbf16>
    %cst_28 = arith.constant dense<0.000000e+00> : vector<128x32xf32>
    %82 = tpu.matmul %81, %70, %cst_28 {dimension_numbers = #tpu.dot_dimension_numbers<[1], [0], [0], [1], [0, 0, 1, 1], [], []>} : vector<128x128xbf16>, vector<128x32xbf16>, vector<128x32xf32> -> vector<128x32xf32>
    %83 = tpu.reciprocal %80 {approx = true} : vector<128x1xf32> -> vector<128x1xf32>
    %84 = vector.broadcast %83 : vector<128x1xf32> to vector<128x32xf32>
    %85 = arith.mulf %82, %84 : vector<128x32xf32>
    %86 = arith.truncf %85 : vector<128x32xf32> to vector<128x32xbf16>
    %c32 = arith.constant 32 : index
    %c0_29 = arith.constant 0 : index
    %87 = vector.load %arg5[%c32, %c0_29] : memref<128x128xbf16, #tpu.memory_space<vmem>>, vector<32x128xbf16>
    %cst_30 = arith.constant dense<0.000000e+00> : vector<128x128xf32>
    %88 = tpu.matmul %86, %87, %cst_30 {dimension_numbers = #tpu.dot_dimension_numbers<[1], [0], [0], [1], [0, 0, 1, 1], [], []>} : vector<128x32xbf16>, vector<32x128xbf16>, vector<128x128xf32> -> vector<128x128xf32>
    %89 = arith.addf %62, %88 : vector<128x128xf32>
    %90 = vector.extract_strided_slice %28 {offsets = [0, 64], sizes = [128, 32], strides = [1, 1]} : vector<128x384xf32> to vector<128x32xf32>
    %cst_31 = arith.constant 0.176776692 : f32
    %91 = vector.broadcast %cst_31 : f32 to vector<128x32xf32>
    %92 = arith.mulf %90, %91 : vector<128x32xf32>
    %93 = arith.truncf %92 : vector<128x32xf32> to vector<128x32xbf16>
    %94 = vector.extract_strided_slice %28 {offsets = [0, 192], sizes = [128, 32], strides = [1, 1]} : vector<128x384xf32> to vector<128x32xf32>
    %95 = arith.truncf %94 : vector<128x32xf32> to vector<128x32xbf16>
    %96 = vector.extract_strided_slice %28 {offsets = [0, 320], sizes = [128, 32], strides = [1, 1]} : vector<128x384xf32> to vector<128x32xf32>
    %97 = arith.truncf %96 : vector<128x32xf32> to vector<128x32xbf16>
    %cst_32 = arith.constant dense<0.000000e+00> : vector<128x128xf32>
    %98 = tpu.matmul %93, %95, %cst_32 {dimension_numbers = #tpu.dot_dimension_numbers<[1], [1], [0], [0], [0, 0, 1, 0], [], []>} : vector<128x32xbf16>, vector<128x32xbf16>, vector<128x128xf32> -> vector<128x128xf32>
    %99 = vector.broadcast %34 : vector<1x128xf32> to vector<128x128xf32>
    %100 = arith.addf %98, %99 : vector<128x128xf32>
    %cst_33 = arith.constant dense<0xFF800000> : vector<128xf32>
    %101 = vector.multi_reduction <maximumf>, %100, %cst_33 [1] : vector<128x128xf32> to vector<128xf32>
    %102 = vector.shape_cast %101 : vector<128xf32> to vector<128x1xf32>
    %103 = vector.broadcast %102 : vector<128x1xf32> to vector<128x128xf32>
    %104 = arith.subf %100, %103 : vector<128x128xf32>
    %105 = math.exp %104 : vector<128x128xf32>
    %cst_34 = arith.constant dense<0.000000e+00> : vector<128xf32>
    %106 = vector.multi_reduction <add>, %105, %cst_34 [1] : vector<128x128xf32> to vector<128xf32>
    %107 = vector.shape_cast %106 : vector<128xf32> to vector<128x1xf32>
    %108 = arith.truncf %105 : vector<128x128xf32> to vector<128x128xbf16>
    %cst_35 = arith.constant dense<0.000000e+00> : vector<128x32xf32>
    %109 = tpu.matmul %108, %97, %cst_35 {dimension_numbers = #tpu.dot_dimension_numbers<[1], [0], [0], [1], [0, 0, 1, 1], [], []>} : vector<128x128xbf16>, vector<128x32xbf16>, vector<128x32xf32> -> vector<128x32xf32>
    %110 = tpu.reciprocal %107 {approx = true} : vector<128x1xf32> -> vector<128x1xf32>
    %111 = vector.broadcast %110 : vector<128x1xf32> to vector<128x32xf32>
    %112 = arith.mulf %109, %111 : vector<128x32xf32>
    %113 = arith.truncf %112 : vector<128x32xf32> to vector<128x32xbf16>
    %c64 = arith.constant 64 : index
    %c0_36 = arith.constant 0 : index
    %114 = vector.load %arg5[%c64, %c0_36] : memref<128x128xbf16, #tpu.memory_space<vmem>>, vector<32x128xbf16>
    %cst_37 = arith.constant dense<0.000000e+00> : vector<128x128xf32>
    %115 = tpu.matmul %113, %114, %cst_37 {dimension_numbers = #tpu.dot_dimension_numbers<[1], [0], [0], [1], [0, 0, 1, 1], [], []>} : vector<128x32xbf16>, vector<32x128xbf16>, vector<128x128xf32> -> vector<128x128xf32>
    %116 = arith.addf %89, %115 : vector<128x128xf32>
    %117 = vector.extract_strided_slice %28 {offsets = [0, 96], sizes = [128, 32], strides = [1, 1]} : vector<128x384xf32> to vector<128x32xf32>
    %cst_38 = arith.constant 0.176776692 : f32
    %118 = vector.broadcast %cst_38 : f32 to vector<128x32xf32>
    %119 = arith.mulf %117, %118 : vector<128x32xf32>
    %120 = arith.truncf %119 : vector<128x32xf32> to vector<128x32xbf16>
    %121 = vector.extract_strided_slice %28 {offsets = [0, 224], sizes = [128, 32], strides = [1, 1]} : vector<128x384xf32> to vector<128x32xf32>
    %122 = arith.truncf %121 : vector<128x32xf32> to vector<128x32xbf16>
    %123 = vector.extract_strided_slice %28 {offsets = [0, 352], sizes = [128, 32], strides = [1, 1]} : vector<128x384xf32> to vector<128x32xf32>
    %124 = arith.truncf %123 : vector<128x32xf32> to vector<128x32xbf16>
    %cst_39 = arith.constant dense<0.000000e+00> : vector<128x128xf32>
    %125 = tpu.matmul %120, %122, %cst_39 {dimension_numbers = #tpu.dot_dimension_numbers<[1], [1], [0], [0], [0, 0, 1, 0], [], []>} : vector<128x32xbf16>, vector<128x32xbf16>, vector<128x128xf32> -> vector<128x128xf32>
    %126 = vector.broadcast %34 : vector<1x128xf32> to vector<128x128xf32>
    %127 = arith.addf %125, %126 : vector<128x128xf32>
    %cst_40 = arith.constant dense<0xFF800000> : vector<128xf32>
    %128 = vector.multi_reduction <maximumf>, %127, %cst_40 [1] : vector<128x128xf32> to vector<128xf32>
    %129 = vector.shape_cast %128 : vector<128xf32> to vector<128x1xf32>
    %130 = vector.broadcast %129 : vector<128x1xf32> to vector<128x128xf32>
    %131 = arith.subf %127, %130 : vector<128x128xf32>
    %132 = math.exp %131 : vector<128x128xf32>
    %cst_41 = arith.constant dense<0.000000e+00> : vector<128xf32>
    %133 = vector.multi_reduction <add>, %132, %cst_41 [1] : vector<128x128xf32> to vector<128xf32>
    %134 = vector.shape_cast %133 : vector<128xf32> to vector<128x1xf32>
    %135 = arith.truncf %132 : vector<128x128xf32> to vector<128x128xbf16>
    %cst_42 = arith.constant dense<0.000000e+00> : vector<128x32xf32>
    %136 = tpu.matmul %135, %124, %cst_42 {dimension_numbers = #tpu.dot_dimension_numbers<[1], [0], [0], [1], [0, 0, 1, 1], [], []>} : vector<128x128xbf16>, vector<128x32xbf16>, vector<128x32xf32> -> vector<128x32xf32>
    %137 = tpu.reciprocal %134 {approx = true} : vector<128x1xf32> -> vector<128x1xf32>
    %138 = vector.broadcast %137 : vector<128x1xf32> to vector<128x32xf32>
    %139 = arith.mulf %136, %138 : vector<128x32xf32>
    %140 = arith.truncf %139 : vector<128x32xf32> to vector<128x32xbf16>
    %c96 = arith.constant 96 : index
    %c0_43 = arith.constant 0 : index
    %141 = vector.load %arg5[%c96, %c0_43] : memref<128x128xbf16, #tpu.memory_space<vmem>>, vector<32x128xbf16>
    %cst_44 = arith.constant dense<0.000000e+00> : vector<128x128xf32>
    %142 = tpu.matmul %140, %141, %cst_44 {dimension_numbers = #tpu.dot_dimension_numbers<[1], [0], [0], [1], [0, 0, 1, 1], [], []>} : vector<128x32xbf16>, vector<32x128xbf16>, vector<128x128xf32> -> vector<128x128xf32>
    %143 = arith.addf %116, %142 : vector<128x128xf32>
    %144 = arith.addf %1, %143 : vector<128x128xf32>
    %c0_45 = arith.constant 0 : index
    %c0_46 = arith.constant 0 : index
    %145 = vector.load %arg6[%c0_45, %c0_46] : memref<1x128xf32, #tpu.memory_space<vmem>>, vector<1x128xf32>
    %146 = vector.broadcast %145 : vector<1x128xf32> to vector<128x128xf32>
    %147 = arith.addf %144, %146 : vector<128x128xf32>
    %c0_47 = arith.constant 0 : index
    %c0_48 = arith.constant 0 : index
    %148 = vector.load %arg7[%c0_47, %c0_48] : memref<1x128xf32, #tpu.memory_space<vmem>>, vector<1x128xf32>
    %c0_49 = arith.constant 0 : index
    %c0_50 = arith.constant 0 : index
    %149 = vector.load %arg8[%c0_49, %c0_50] : memref<1x128xf32, #tpu.memory_space<vmem>>, vector<1x128xf32>
    %cst_51 = arith.constant dense<0.000000e+00> : vector<128xf32>
    %150 = vector.multi_reduction <add>, %147, %cst_51 [1] : vector<128x128xf32> to vector<128xf32>
    %151 = vector.shape_cast %150 : vector<128xf32> to vector<128x1xf32>
    %cst_52 = arith.constant 1.280000e+02 : f32
    %152 = vector.broadcast %cst_52 : f32 to vector<128x1xf32>
    %153 = arith.divf %151, %152 : vector<128x1xf32>
    %154 = vector.broadcast %153 : vector<128x1xf32> to vector<128x128xf32>
    %155 = arith.subf %147, %154 : vector<128x128xf32>
    %156 = arith.mulf %155, %155 : vector<128x128xf32>
    %cst_53 = arith.constant dense<0.000000e+00> : vector<128xf32>
    %157 = vector.multi_reduction <add>, %156, %cst_53 [1] : vector<128x128xf32> to vector<128xf32>
    %158 = vector.shape_cast %157 : vector<128xf32> to vector<128x1xf32>
    %cst_54 = arith.constant 1.280000e+02 : f32
    %159 = vector.broadcast %cst_54 : f32 to vector<128x1xf32>
    %160 = arith.divf %158, %159 : vector<128x1xf32>
    %161 = vector.broadcast %153 : vector<128x1xf32> to vector<128x128xf32>
    %162 = arith.subf %147, %161 : vector<128x128xf32>
    %cst_55 = arith.constant 9.99999974E-6 : f32
    %163 = vector.broadcast %cst_55 : f32 to vector<128x1xf32>
    %164 = arith.addf %160, %163 : vector<128x1xf32>
    %165 = math.rsqrt %164 : vector<128x1xf32>
    %166 = vector.broadcast %165 : vector<128x1xf32> to vector<128x128xf32>
    %167 = arith.mulf %162, %166 : vector<128x128xf32>
    %168 = vector.broadcast %148 : vector<1x128xf32> to vector<128x128xf32>
    %169 = arith.mulf %167, %168 : vector<128x128xf32>
    %170 = vector.broadcast %149 : vector<1x128xf32> to vector<128x128xf32>
    %171 = arith.addf %169, %170 : vector<128x128xf32>
    %172 = arith.truncf %171 : vector<128x128xf32> to vector<128x128xbf16>
    %c0_56 = arith.constant 0 : index
    %c0_57 = arith.constant 0 : index
    %173 = vector.load %arg9[%c0_56, %c0_57] : memref<128x512xbf16, #tpu.memory_space<vmem>>, vector<128x512xbf16>
    %cst_58 = arith.constant dense<0.000000e+00> : vector<128x512xf32>
    %174 = tpu.matmul %172, %173, %cst_58 {dimension_numbers = #tpu.dot_dimension_numbers<[1], [0], [0], [1], [0, 0, 1, 1], [], []>} : vector<128x128xbf16>, vector<128x512xbf16>, vector<128x512xf32> -> vector<128x512xf32>
    %c0_59 = arith.constant 0 : index
    %c0_60 = arith.constant 0 : index
    %175 = vector.load %arg10[%c0_59, %c0_60] : memref<1x512xf32, #tpu.memory_space<vmem>>, vector<1x512xf32>
    %176 = vector.broadcast %175 : vector<1x512xf32> to vector<128x512xf32>
    %177 = arith.addf %174, %176 : vector<128x512xf32>
    %178 = arith.mulf %177, %177 : vector<128x512xf32>
    %179 = arith.mulf %177, %178 : vector<128x512xf32>
    %cst_61 = arith.constant 4.471500e-02 : f32
    %180 = vector.broadcast %cst_61 : f32 to vector<128x512xf32>
    %181 = arith.mulf %180, %179 : vector<128x512xf32>
    %182 = arith.addf %177, %181 : vector<128x512xf32>
    %cst_62 = arith.constant 0.797884583 : f32
    %183 = vector.broadcast %cst_62 : f32 to vector<128x512xf32>
    %184 = arith.mulf %183, %182 : vector<128x512xf32>
    %185 = math.tanh %184 : vector<128x512xf32>
    %cst_63 = arith.constant 1.000000e+00 : f32
    %186 = vector.broadcast %cst_63 : f32 to vector<128x512xf32>
    %187 = arith.addf %186, %185 : vector<128x512xf32>
    %cst_64 = arith.constant 5.000000e-01 : f32
    %188 = vector.broadcast %cst_64 : f32 to vector<128x512xf32>
    %189 = arith.mulf %188, %187 : vector<128x512xf32>
    %190 = arith.mulf %177, %189 : vector<128x512xf32>
    %191 = arith.truncf %190 : vector<128x512xf32> to vector<128x512xbf16>
    %c0_65 = arith.constant 0 : index
    %c0_66 = arith.constant 0 : index
    %192 = vector.load %arg11[%c0_65, %c0_66] : memref<512x128xbf16, #tpu.memory_space<vmem>>, vector<512x128xbf16>
    %cst_67 = arith.constant dense<0.000000e+00> : vector<128x128xf32>
    %193 = tpu.matmul %191, %192, %cst_67 {dimension_numbers = #tpu.dot_dimension_numbers<[1], [0], [0], [1], [0, 0, 1, 1], [], []>} : vector<128x512xbf16>, vector<512x128xbf16>, vector<128x128xf32> -> vector<128x128xf32>
    %c0_68 = arith.constant 0 : index
    %c0_69 = arith.constant 0 : index
    %194 = vector.load %arg12[%c0_68, %c0_69] : memref<1x128xf32, #tpu.memory_space<vmem>>, vector<1x128xf32>
    %195 = vector.broadcast %194 : vector<1x128xf32> to vector<128x128xf32>
    %196 = arith.addf %193, %195 : vector<128x128xf32>
    %197 = arith.addf %147, %196 : vector<128x128xf32>
    %c0_70 = arith.constant 0 : index
    %c0_71 = arith.constant 0 : index
    %c0_72 = arith.constant 0 : index
    %198 = vector.load %arg13[%c0_70, %c0_71, %c0_72] : memref<1x128x128xf32, #tpu.memory_space<vmem>>, vector<1x128x128xf32>
    %199 = vector.shape_cast %198 : vector<1x128x128xf32> to vector<128x128xf32>
    %200 = vector.shape_cast %197 : vector<128x128xf32> to vector<1x128x128xf32>
    tpu.vector_store %arg13[%c0_70, %c0_71, %c0_72], %200 {strides = array<i32>} : memref<1x128x128xf32, #tpu.memory_space<vmem>>, vector<1x128x128xf32>,
    return
  }
  func.func @transform_0(%arg0: i32) -> (i32, i32, i32) {
    %c0_i32 = arith.constant 0 : i32
    %c0_i32_0 = arith.constant 0 : i32
    %c0_i32_1 = arith.constant 0 : i32
    return %arg0, %c0_i32, %c0_i32_0 : i32, i32, i32
  }
  func.func @transform_1(%arg0: i32) -> (i32, i32) {
    %c0_i32 = arith.constant 0 : i32
    %c0_i32_0 = arith.constant 0 : i32
    %c0_i32_1 = arith.constant 0 : i32
    return %c0_i32, %c0_i32_0 : i32, i32
  }
  func.func @transform_2(%arg0: i32) -> (i32, i32) {
    %c0_i32 = arith.constant 0 : i32
    %c0_i32_0 = arith.constant 0 : i32
    %c0_i32_1 = arith.constant 0 : i32
    return %c0_i32, %c0_i32_0 : i32, i32
  }
  func.func @transform_3(%arg0: i32) -> (i32, i32) {
    %c0_i32 = arith.constant 0 : i32
    %c0_i32_0 = arith.constant 0 : i32
    %c0_i32_1 = arith.constant 0 : i32
    return %c0_i32, %c0_i32_0 : i32, i32
  }
  func.func @transform_4(%arg0: i32) -> (i32, i32) {
    %c0_i32 = arith.constant 0 : i32
    %c0_i32_0 = arith.constant 0 : i32
    %c0_i32_1 = arith.constant 0 : i32
    return %c0_i32, %c0_i32_0 : i32, i32
  }
  func.func @transform_5(%arg0: i32) -> (i32, i32) {
    %c0_i32 = arith.constant 0 : i32
    %c0_i32_0 = arith.constant 0 : i32
    %c0_i32_1 = arith.constant 0 : i32
    return %c0_i32, %c0_i32_0 : i32, i32
  }
  func.func @transform_6(%arg0: i32) -> (i32, i32) {
    %c0_i32 = arith.constant 0 : i32
    %c0_i32_0 = arith.constant 0 : i32
    %c0_i32_1 = arith.constant 0 : i32
    return %c0_i32, %c0_i32_0 : i32, i32
  }
  func.func @transform_7(%arg0: i32) -> (i32, i32) {
    %c0_i32 = arith.constant 0 : i32
    %c0_i32_0 = arith.constant 0 : i32
    %c0_i32_1 = arith.constant 0 : i32
    return %c0_i32, %c0_i32_0 : i32, i32
  }
  func.func @transform_8(%arg0: i32) -> (i32, i32) {
    %c0_i32 = arith.constant 0 : i32
    %c0_i32_0 = arith.constant 0 : i32
    %c0_i32_1 = arith.constant 0 : i32
    return %c0_i32, %c0_i32_0 : i32, i32
  }
  func.func @transform_9(%arg0: i32) -> (i32, i32) {
    %c0_i32 = arith.constant 0 : i32
    %c0_i32_0 = arith.constant 0 : i32
    %c0_i32_1 = arith.constant 0 : i32
    return %c0_i32, %c0_i32_0 : i32, i32
  }
  func.func @transform_10(%arg0: i32) -> (i32, i32) {
    %c0_i32 = arith.constant 0 : i32
    %c0_i32_0 = arith.constant 0 : i32
    %c0_i32_1 = arith.constant 0 : i32
    return %c0_i32, %c0_i32_0 : i32, i32
  }
  func.func @transform_11(%arg0: i32) -> (i32, i32) {
    %c0_i32 = arith.constant 0 : i32
    %c0_i32_0 = arith.constant 0 : i32
    %c0_i32_1 = arith.constant 0 : i32
    return %c0_i32, %c0_i32_0 : i32, i32
  }
  func.func @transform_12(%arg0: i32) -> (i32, i32, i32) {
    %c0_i32 = arith.constant 0 : i32
    %c0_i32_0 = arith.constant 0 : i32
    %c0_i32_1 = arith.constant 0 : i32
    return %arg0, %c0_i32, %c0_i32_0 : i32, i32, i32
  }
}

module attributes {stable_mosaic.version = 11 : i64} {
  func.func @block_kernel(%arg0: i32, %arg1: memref<1x128x128xf32, #tpu.memory_space<vmem>>, %arg2: memref<1x128xf32, #tpu.memory_space<vmem>>, %arg3: memref<1x128xf32, #tpu.memory_space<vmem>>, %arg4: memref<128x384xbf16, #tpu.memory_space<vmem>>, %arg5: memref<128x128xbf16, #tpu.memory_space<vmem>>, %arg6: memref<1x128xf32, #tpu.memory_space<vmem>>, %arg7: memref<1x128xf32, #tpu.memory_space<vmem>>, %arg8: memref<1x128xf32, #tpu.memory_space<vmem>>, %arg9: memref<128x512xbf16, #tpu.memory_space<vmem>>, %arg10: memref<1x512xf32, #tpu.memory_space<vmem>>, %arg11: memref<512x128xbf16, #tpu.memory_space<vmem>>, %arg12: memref<1x128xf32, #tpu.memory_space<vmem>>, %arg13: memref<1x128x128xf32, #tpu.memory_space<vmem>>) attributes {dimension_semantics = [#tpu.dimension_semantics<parallel>], iteration_bounds = array<i64: 2>, scalar_prefetch = 0 : i64, scratch_operands = 0 : i64, tpu.core_type = #tpu.core_type<tc>, window_params = [{transform_indices = @transform_0, window_bounds = array<i64: 1, 128, 128>}, {pipeline_mode = #tpu.pipeline_mode<synchronous>, transform_indices = @transform_1, window_bounds = array<i64: 1, 128>}, {pipeline_mode = #tpu.pipeline_mode<synchronous>, transform_indices = @transform_2, window_bounds = array<i64: 1, 128>}, {pipeline_mode = #tpu.pipeline_mode<synchronous>, transform_indices = @transform_3, window_bounds = array<i64: 128, 384>}, {pipeline_mode = #tpu.pipeline_mode<synchronous>, transform_indices = @transform_4, window_bounds = array<i64: 128, 128>}, {pipeline_mode = #tpu.pipeline_mode<synchronous>, transform_indices = @transform_5, window_bounds = array<i64: 1, 128>}, {pipeline_mode = #tpu.pipeline_mode<synchronous>, transform_indices = @transform_6, window_bounds = array<i64: 1, 128>}, {pipeline_mode = #tpu.pipeline_mode<synchronous>, transform_indices = @transform_7, window_bounds = array<i64: 1, 128>}, {pipeline_mode = #tpu.pipeline_mode<synchronous>, transform_indices = @transform_8, window_bounds = array<i64: 128, 512>}, {pipeline_mode = #tpu.pipeline_mode<synchronous>, transform_indices = @transform_9, window_bounds = array<i64: 1, 512>}, {pipeline_mode = #tpu.pipeline_mode<synchronous>, transform_indices = @transform_10, window_bounds = array<i64: 512, 128>}, {pipeline_mode = #tpu.pipeline_mode<synchronous>, transform_indices = @transform_11, window_bounds = array<i64: 1, 128>}, {transform_indices = @transform_12, window_bounds = array<i64: 1, 128, 128>}]} {
    %c0 = arith.constant 0 : index
    %c0_0 = arith.constant 0 : index
    %c0_1 = arith.constant 0 : index
    %0 = vector.load %arg1[%c0, %c0_0, %c0_1] : memref<1x128x128xf32, #tpu.memory_space<vmem>>, vector<1x128x128xf32>
    %1 = vector.shape_cast %0 : vector<1x128x128xf32> to vector<128x128xf32>
    %c0_2 = arith.constant 0 : index
    %c0_3 = arith.constant 0 : index
    %2 = vector.load %arg2[%c0_2, %c0_3] : memref<1x128xf32, #tpu.memory_space<vmem>>, vector<1x128xf32>
    %c0_4 = arith.constant 0 : index
    %c0_5 = arith.constant 0 : index
    %3 = vector.load %arg3[%c0_4, %c0_5] : memref<1x128xf32, #tpu.memory_space<vmem>>, vector<1x128xf32>
    %cst = arith.constant dense<0.000000e+00> : vector<128xf32>
    %4 = vector.multi_reduction <add>, %1, %cst [1] : vector<128x128xf32> to vector<128xf32>
    %5 = vector.shape_cast %4 : vector<128xf32> to vector<128x1xf32>
    %cst_6 = arith.constant 1.280000e+02 : f32
    %6 = vector.broadcast %cst_6 : f32 to vector<128x1xf32>
    %7 = arith.divf %5, %6 : vector<128x1xf32>
    %8 = vector.broadcast %7 : vector<128x1xf32> to vector<128x128xf32>
    %9 = arith.subf %1, %8 : vector<128x128xf32>
    %10 = arith.mulf %9, %9 : vector<128x128xf32>
    %cst_7 = arith.constant dense<0.000000e+00> : vector<128xf32>
    %11 = vector.multi_reduction <add>, %10, %cst_7 [1] : vector<128x128xf32> to vector<128xf32>
    %12 = vector.shape_cast %11 : vector<128xf32> to vector<128x1xf32>
    %cst_8 = arith.constant 1.280000e+02 : f32
    %13 = vector.broadcast %cst_8 : f32 to vector<128x1xf32>
    %14 = arith.divf %12, %13 : vector<128x1xf32>
    %15 = vector.broadcast %7 : vector<128x1xf32> to vector<128x128xf32>
    %16 = arith.subf %1, %15 : vector<128x128xf32>
    %cst_9 = arith.constant 9.99999974E-6 : f32
    %17 = vector.broadcast %cst_9 : f32 to vector<128x1xf32>
    %18 = arith.addf %14, %17 : vector<128x1xf32>
    %19 = math.rsqrt %18 : vector<128x1xf32>
    %20 = vector.broadcast %19 : vector<128x1xf32> to vector<128x128xf32>
    %21 = arith.mulf %16, %20 : vector<128x128xf32>
    %22 = vector.broadcast %2 : vector<1x128xf32> to vector<128x128xf32>
    %23 = arith.mulf %21, %22 : vector<128x128xf32>
    %24 = vector.broadcast %3 : vector<1x128xf32> to vector<128x128xf32>
    %25 = arith.addf %23, %24 : vector<128x128xf32>
    %26 = arith.truncf %25 : vector<128x128xf32> to vector<128x128xbf16>
    %c0_10 = arith.constant 0 : index
    %c0_11 = arith.constant 0 : index
    %27 = vector.load %arg4[%c0_10, %c0_11] : memref<128x384xbf16, #tpu.memory_space<vmem>>, vector<128x384xbf16>
    %cst_12 = arith.constant dense<0.000000e+00> : vector<128x384xf32>
    %28 = tpu.matmul %26, %27, %cst_12 {dimension_numbers = #tpu.dot_dimension_numbers<[1], [0], [0], [1], [0, 0, 1, 1], [], []>} : vector<128x128xbf16>, vector<128x384xbf16>, vector<128x384xf32> -> vector<128x384xf32>
    %29 = tpu.iota {dimensions = array<i32: 1>} : vector<1x128xi32>
    %c16_i32 = arith.constant 16 : i32
    %30 = vector.broadcast %c16_i32 : i32 to vector<1x128xi32>
    %31 = arith.cmpi slt, %29, %30 : vector<1x128xi32>
    %cst_13 = arith.constant 0.000000e+00 : f32
    %cst_14 = arith.constant -1.000000e+30 : f32
    %32 = vector.broadcast %cst_13 : f32 to vector<1x128xf32>
    %33 = vector.broadcast %cst_14 : f32 to vector<1x128xf32>
    %34 = arith.select %31, %32, %33 : vector<1x128xi1>, vector<1x128xf32>
    %cst_15 = arith.constant 0.000000e+00 : f32
    %35 = vector.broadcast %cst_15 : f32 to vector<128x128xf32>
    %36 = vector.extract_strided_slice %28 {offsets = [0, 0], sizes = [128, 32], strides = [1, 1]} : vector<128x384xf32> to vector<128x32xf32>
    %cst_16 = arith.constant 0.176776692 : f32
    %37 = vector.broadcast %cst_16 : f32 to vector<128x32xf32>
    %38 = arith.mulf %36, %37 : vector<128x32xf32>
    %39 = arith.truncf %38 : vector<128x32xf32> to vector<128x32xbf16>
    %40 = vector.extract_strided_slice %28 {offsets = [0, 128], sizes = [128, 32], strides = [1, 1]} : vector<128x384xf32> to vector<128x32xf32>
    %41 = arith.truncf %40 : vector<128x32xf32> to vector<128x32xbf16>
    %42 = vector.extract_strided_slice %28 {offsets = [0, 256], sizes = [128, 32], strides = [1, 1]} : vector<128x384xf32> to vector<128x32xf32>
    %43 = arith.truncf %42 : vector<128x32xf32> to vector<128x32xbf16>
    %cst_17 = arith.constant dense<0.000000e+00> : vector<128x128xf32>
    %44 = tpu.matmul %39, %41, %cst_17 {dimension_numbers = #tpu.dot_dimension_numbers<[1], [1], [0], [0], [0, 0, 1, 0], [], []>} : vector<128x32xbf16>, vector<128x32xbf16>, vector<128x128xf32> -> vector<128x128xf32>
    %45 = vector.broadcast %34 : vector<1x128xf32> to vector<128x128xf32>
    %46 = arith.addf %44, %45 : vector<128x128xf32>
    %cst_18 = arith.constant dense<0xFF800000> : vector<128xf32>
    %47 = vector.multi_reduction <maximumf>, %46, %cst_18 [1] : vector<128x128xf32> to vector<128xf32>
    %48 = vector.shape_cast %47 : vector<128xf32> to vector<128x1xf32>
    %49 = vector.broadcast %48 : vector<128x1xf32> to vector<128x128xf32>
    %50 = arith.subf %46, %49 : vector<128x128xf32>
    %51 = math.exp %50 : vector<128x128xf32>
    %cst_19 = arith.constant dense<0.000000e+00> : vector<128xf32>
    %52 = vector.multi_reduction <add>, %51, %cst_19 [1] : vector<128x128xf32> to vector<128xf32>
    %53 = vector.shape_cast %52 : vector<128xf32> to vector<128x1xf32>
    %54 = arith.truncf %51 : vector<128x128xf32> to vector<128x128xbf16>
    %cst_20 = arith.constant dense<0.000000e+00> : vector<128x32xf32>
    %55 = tpu.matmul %54, %43, %cst_20 {dimension_numbers = #tpu.dot_dimension_numbers<[1], [0], [0], [1], [0, 0, 1, 1], [], []>} : vector<128x128xbf16>, vector<128x32xbf16>, vector<128x32xf32> -> vector<128x32xf32>
    %56 = tpu.reciprocal %53 {approx = true} : vector<128x1xf32> -> vector<128x1xf32>
    %57 = vector.broadcast %56 : vector<128x1xf32> to vector<128x32xf32>
    %58 = arith.mulf %55, %57 : vector<128x32xf32>
    %59 = arith.truncf %58 : vector<128x32xf32> to vector<128x32xbf16>
    %c0_21 = arith.constant 0 : index
    %c0_22 = arith.constant 0 : index
    %60 = vector.load %arg5[%c0_21, %c0_22] : memref<128x128xbf16, #tpu.memory_space<vmem>>, vector<32x128xbf16>
    %cst_23 = arith.constant dense<0.000000e+00> : vector<128x128xf32>
    %61 = tpu.matmul %59, %60, %cst_23 {dimension_numbers = #tpu.dot_dimension_numbers<[1], [0], [0], [1], [0, 0, 1, 1], [], []>} : vector<128x32xbf16>, vector<32x128xbf16>, vector<128x128xf32> -> vector<128x128xf32>
    %62 = arith.addf %35, %61 : vector<128x128xf32>
    %63 = vector.extract_strided_slice %28 {offsets = [0, 32], sizes = [128, 32], strides = [1, 1]} : vector<128x384xf32> to vector<128x32xf32>
    %cst_24 = arith.constant 0.176776692 : f32
    %64 = vector.broadcast %cst_24 : f32 to vector<128x32xf32>
    %65 = arith.mulf %63, %64 : vector<128x32xf32>
    %66 = arith.truncf %65 : vector<128x32xf32> to vector<128x32xbf16>
    %67 = vector.extract_strided_slice %28 {offsets = [0, 160], sizes = [128, 32], strides = [1, 1]} : vector<128x384xf32> to vector<128x32xf32>
    %68 = arith.truncf %67 : vector<128x32xf32> to vector<128x32xbf16>
    %69 = vector.extract_strided_slice %28 {offsets = [0, 288], sizes = [128, 32], strides = [1, 1]} : vector<128x384xf32> to vector<128x32xf32>
    %70 = arith.truncf %69 : vector<128x32xf32> to vector<128x32xbf16>
    %cst_25 = arith.constant dense<0.000000e+00> : vector<128x128xf32>
    %71 = tpu.matmul %66, %68, %cst_25 {dimension_numbers = #tpu.dot_dimension_numbers<[1], [1], [0], [0], [0, 0, 1, 0], [], []>} : vector<128x32xbf16>, vector<128x32xbf16>, vector<128x128xf32> -> vector<128x128xf32>
    %72 = vector.broadcast %34 : vector<1x128xf32> to vector<128x128xf32>
    %73 = arith.addf %71, %72 : vector<128x128xf32>
    %cst_26 = arith.constant dense<0xFF800000> : vector<128xf32>
    %74 = vector.multi_reduction <maximumf>, %73, %cst_26 [1] : vector<128x128xf32> to vector<128xf32>
    %75 = vector.shape_cast %74 : vector<128xf32> to vector<128x1xf32>
    %76 = vector.broadcast %75 : vector<128x1xf32> to vector<128x128xf32>
    %77 = arith.subf %73, %76 : vector<128x128xf32>
    %78 = math.exp %77 : vector<128x128xf32>
    %cst_27 = arith.constant dense<0.000000e+00> : vector<128xf32>
    %79 = vector.multi_reduction <add>, %78, %cst_27 [1] : vector<128x128xf32> to vector<128xf32>
    %80 = vector.shape_cast %79 : vector<128xf32> to vector<128x1xf32>
    %81 = arith.truncf %78 : vector<128x128xf32> to vector<128x128xbf16>
    %cst_28 = arith.constant dense<0.000000e+00> : vector<128x32xf32>
    %82 = tpu.matmul %81, %70, %cst_28 {dimension_numbers = #tpu.dot_dimension_numbers<[1], [0], [0], [1], [0, 0, 1, 1], [], []>} : vector<128x128xbf16>, vector<128x32xbf16>, vector<128x32xf32> -> vector<128x32xf32>
    %83 = tpu.reciprocal %80 {approx = true} : vector<128x1xf32> -> vector<128x1xf32>
    %84 = vector.broadcast %83 : vector<128x1xf32> to vector<128x32xf32>
    %85 = arith.mulf %82, %84 : vector<128x32xf32>
    %86 = arith.truncf %85 : vector<128x32xf32> to vector<128x32xbf16>
    %c32 = arith.constant 32 : index
    %c0_29 = arith.constant 0 : index
    %87 = vector.load %arg5[%c32, %c0_29] : memref<128x128xbf16, #tpu.memory_space<vmem>>, vector<32x128xbf16>
    %cst_30 = arith.constant dense<0.000000e+00> : vector<128x128xf32>
    %88 = tpu.matmul %86, %87, %cst_30 {dimension_numbers = #tpu.dot_dimension_numbers<[1], [0], [0], [1], [0, 0, 1, 1], [], []>} : vector<128x32xbf16>, vector<32x128xbf16>, vector<128x128xf32> -> vector<128x128xf32>
    %89 = arith.addf %62, %88 : vector<128x128xf32>
    %90 = vector.extract_strided_slice %28 {offsets = [0, 64], sizes = [128, 32], strides = [1, 1]} : vector<128x384xf32> to vector<128x32xf32>
    %cst_31 = arith.constant 0.176776692 : f32
    %91 = vector.broadcast %cst_31 : f32 to vector<128x32xf32>
    %92 = arith.mulf %90, %91 : vector<128x32xf32>
    %93 = arith.truncf %92 : vector<128x32xf32> to vector<128x32xbf16>
    %94 = vector.extract_strided_slice %28 {offsets = [0, 192], sizes = [128, 32], strides = [1, 1]} : vector<128x384xf32> to vector<128x32xf32>
    %95 = arith.truncf %94 : vector<128x32xf32> to vector<128x32xbf16>
    %96 = vector.extract_strided_slice %28 {offsets = [0, 320], sizes = [128, 32], strides = [1, 1]} : vector<128x384xf32> to vector<128x32xf32>
    %97 = arith.truncf %96 : vector<128x32xf32> to vector<128x32xbf16>
    %cst_32 = arith.constant dense<0.000000e+00> : vector<128x128xf32>
    %98 = tpu.matmul %93, %95, %cst_32 {dimension_numbers = #tpu.dot_dimension_numbers<[1], [1], [0], [0], [0, 0, 1, 0], [], []>} : vector<128x32xbf16>, vector<128x32xbf16>, vector<128x128xf32> -> vector<128x128xf32>
    %99 = vector.broadcast %34 : vector<1x128xf32> to vector<128x128xf32>
    %100 = arith.addf %98, %99 : vector<128x128xf32>
    %cst_33 = arith.constant dense<0xFF800000> : vector<128xf32>
    %101 = vector.multi_reduction <maximumf>, %100, %cst_33 [1] : vector<128x128xf32> to vector<128xf32>
    %102 = vector.shape_cast %101 : vector<128xf32> to vector<128x1xf32>
    %103 = vector.broadcast %102 : vector<128x1xf32> to vector<128x128xf32>
    %104 = arith.subf %100, %103 : vector<128x128xf32>
    %105 = math.exp %104 : vector<128x128xf32>
    %cst_34 = arith.constant dense<0.000000e+00> : vector<128xf32>
    %106 = vector.multi_reduction <add>, %105, %cst_34 [1] : vector<128x128xf32> to vector<128xf32>
    %107 = vector.shape_cast %106 : vector<128xf32> to vector<128x1xf32>
    %108 = arith.truncf %105 : vector<128x128xf32> to vector<128x128xbf16>
    %cst_35 = arith.constant dense<0.000000e+00> : vector<128x32xf32>
    %109 = tpu.matmul %108, %97, %cst_35 {dimension_numbers = #tpu.dot_dimension_numbers<[1], [0], [0], [1], [0, 0, 1, 1], [], []>} : vector<128x128xbf16>, vector<128x32xbf16>, vector<128x32xf32> -> vector<128x32xf32>
    %110 = tpu.reciprocal %107 {approx = true} : vector<128x1xf32> -> vector<128x1xf32>
    %111 = vector.broadcast %110 : vector<128x1xf32> to vector<128x32xf32>
    %112 = arith.mulf %109, %111 : vector<128x32xf32>
    %113 = arith.truncf %112 : vector<128x32xf32> to vector<128x32xbf16>
    %c64 = arith.constant 64 : index
    %c0_36 = arith.constant 0 : index
    %114 = vector.load %arg5[%c64, %c0_36] : memref<128x128xbf16, #tpu.memory_space<vmem>>, vector<32x128xbf16>
    %cst_37 = arith.constant dense<0.000000e+00> : vector<128x128xf32>
    %115 = tpu.matmul %113, %114, %cst_37 {dimension_numbers = #tpu.dot_dimension_numbers<[1], [0], [0], [1], [0, 0, 1, 1], [], []>} : vector<128x32xbf16>, vector<32x128xbf16>, vector<128x128xf32> -> vector<128x128xf32>
    %116 = arith.addf %89, %115 : vector<128x128xf32>
    %117 = vector.extract_strided_slice %28 {offsets = [0, 96], sizes = [128, 32], strides = [1, 1]} : vector<128x384xf32> to vector<128x32xf32>
    %cst_38 = arith.constant 0.176776692 : f32
    %118 = vector.broadcast %cst_38 : f32 to vector<128x32xf32>
    %119 = arith.mulf %117, %118 : vector<128x32xf32>
    %120 = arith.truncf %119 : vector<128x32xf32> to vector<128x32xbf16>
    %121 = vector.extract_strided_slice %28 {offsets = [0, 224], sizes = [128, 32], strides = [1, 1]} : vector<128x384xf32> to vector<128x32xf32>
    %122 = arith.truncf %121 : vector<128x32xf32> to vector<128x32xbf16>
    %123 = vector.extract_strided_slice %28 {offsets = [0, 352], sizes = [128, 32], strides = [1, 1]} : vector<128x384xf32> to vector<128x32xf32>
    %124 = arith.truncf %123 : vector<128x32xf32> to vector<128x32xbf16>
    %cst_39 = arith.constant dense<0.000000e+00> : vector<128x128xf32>
    %125 = tpu.matmul %120, %122, %cst_39 {dimension_numbers = #tpu.dot_dimension_numbers<[1], [1], [0], [0], [0, 0, 1, 0], [], []>} : vector<128x32xbf16>, vector<128x32xbf16>, vector<128x128xf32> -> vector<128x128xf32>
    %126 = vector.broadcast %34 : vector<1x128xf32> to vector<128x128xf32>
    %127 = arith.addf %125, %126 : vector<128x128xf32>
    %cst_40 = arith.constant dense<0xFF800000> : vector<128xf32>
    %128 = vector.multi_reduction <maximumf>, %127, %cst_40 [1] : vector<128x128xf32> to vector<128xf32>
    %129 = vector.shape_cast %128 : vector<128xf32> to vector<128x1xf32>
    %130 = vector.broadcast %129 : vector<128x1xf32> to vector<128x128xf32>
    %131 = arith.subf %127, %130 : vector<128x128xf32>
    %132 = math.exp %131 : vector<128x128xf32>
    %cst_41 = arith.constant dense<0.000000e+00> : vector<128xf32>
    %133 = vector.multi_reduction <add>, %132, %cst_41 [1] : vector<128x128xf32> to vector<128xf32>
    %134 = vector.shape_cast %133 : vector<128xf32> to vector<128x1xf32>
    %135 = arith.truncf %132 : vector<128x128xf32> to vector<128x128xbf16>
    %cst_42 = arith.constant dense<0.000000e+00> : vector<128x32xf32>
    %136 = tpu.matmul %135, %124, %cst_42 {dimension_numbers = #tpu.dot_dimension_numbers<[1], [0], [0], [1], [0, 0, 1, 1], [], []>} : vector<128x128xbf16>, vector<128x32xbf16>, vector<128x32xf32> -> vector<128x32xf32>
    %137 = tpu.reciprocal %134 {approx = true} : vector<128x1xf32> -> vector<128x1xf32>
    %138 = vector.broadcast %137 : vector<128x1xf32> to vector<128x32xf32>
    %139 = arith.mulf %136, %138 : vector<128x32xf32>
    %140 = arith.truncf %139 : vector<128x32xf32> to vector<128x32xbf16>
    %c96 = arith.constant 96 : index
    %c0_43 = arith.constant 0 : index
    %141 = vector.load %arg5[%c96, %c0_43] : memref<128x128xbf16, #tpu.memory_space<vmem>>, vector<32x128xbf16>
    %cst_44 = arith.constant dense<0.000000e+00> : vector<128x128xf32>
    %142 = tpu.matmul %140, %141, %cst_44 {dimension_numbers = #tpu.dot_dimension_numbers<[1], [0], [0], [1], [0, 0, 1, 1], [], []>} : vector<128x32xbf16>, vector<32x128xbf16>, vector<128x128xf32> -> vector<128x128xf32>
    %143 = arith.addf %116, %142 : vector<128x128xf32>
    %144 = arith.addf %1, %143 : vector<128x128xf32>
    %c0_45 = arith.constant 0 : index
    %c0_46 = arith.constant 0 : index
    %145 = vector.load %arg6[%c0_45, %c0_46] : memref<1x128xf32, #tpu.memory_space<vmem>>, vector<1x128xf32>
    %146 = vector.broadcast %145 : vector<1x128xf32> to vector<128x128xf32>
    %147 = arith.addf %144, %146 : vector<128x128xf32>
    %c0_47 = arith.constant 0 : index
    %c0_48 = arith.constant 0 : index
    %148 = vector.load %arg7[%c0_47, %c0_48] : memref<1x128xf32, #tpu.memory_space<vmem>>, vector<1x128xf32>
    %c0_49 = arith.constant 0 : index
    %c0_50 = arith.constant 0 : index
    %149 = vector.load %arg8[%c0_49, %c0_50] : memref<1x128xf32, #tpu.memory_space<vmem>>, vector<1x128xf32>
    %cst_51 = arith.constant dense<0.000000e+00> : vector<128xf32>
    %150 = vector.multi_reduction <add>, %147, %cst_51 [1] : vector<128x128xf32> to vector<128xf32>
    %151 = vector.shape_cast %150 : vector<128xf32> to vector<128x1xf32>
    %cst_52 = arith.constant 1.280000e+02 : f32
    %152 = vector.broadcast %cst_52 : f32 to vector<128x1xf32>
    %153 = arith.divf %151, %152 : vector<128x1xf32>
    %154 = vector.broadcast %153 : vector<128x1xf32> to vector<128x128xf32>
    %155 = arith.subf %147, %154 : vector<128x128xf32>
    %156 = arith.mulf %155, %155 : vector<128x128xf32>
    %cst_53 = arith.constant dense<0.000000e+00> : vector<128xf32>
    %157 = vector.multi_reduction <add>, %156, %cst_53 [1] : vector<128x128xf32> to vector<128xf32>
    %158 = vector.shape_cast %157 : vector<128xf32> to vector<128x1xf32>
    %cst_54 = arith.constant 1.280000e+02 : f32
    %159 = vector.broadcast %cst_54 : f32 to vector<128x1xf32>
    %160 = arith.divf %158, %159 : vector<128x1xf32>
    %161 = vector.broadcast %153 : vector<128x1xf32> to vector<128x128xf32>
    %162 = arith.subf %147, %161 : vector<128x128xf32>
    %cst_55 = arith.constant 9.99999974E-6 : f32
    %163 = vector.broadcast %cst_55 : f32 to vector<128x1xf32>
    %164 = arith.addf %160, %163 : vector<128x1xf32>
    %165 = math.rsqrt %164 : vector<128x1xf32>
    %166 = vector.broadcast %165 : vector<128x1xf32> to vector<128x128xf32>
    %167 = arith.mulf %162, %166 : vector<128x128xf32>
    %168 = vector.broadcast %148 : vector<1x128xf32> to vector<128x128xf32>
    %169 = arith.mulf %167, %168 : vector<128x128xf32>
    %170 = vector.broadcast %149 : vector<1x128xf32> to vector<128x128xf32>
    %171 = arith.addf %169, %170 : vector<128x128xf32>
    %172 = arith.truncf %171 : vector<128x128xf32> to vector<128x128xbf16>
    %c0_56 = arith.constant 0 : index
    %c0_57 = arith.constant 0 : index
    %173 = vector.load %arg9[%c0_56, %c0_57] : memref<128x512xbf16, #tpu.memory_space<vmem>>, vector<128x512xbf16>
    %cst_58 = arith.constant dense<0.000000e+00> : vector<128x512xf32>
    %174 = tpu.matmul %172, %173, %cst_58 {dimension_numbers = #tpu.dot_dimension_numbers<[1], [0], [0], [1], [0, 0, 1, 1], [], []>} : vector<128x128xbf16>, vector<128x512xbf16>, vector<128x512xf32> -> vector<128x512xf32>
    %c0_59 = arith.constant 0 : index
    %c0_60 = arith.constant 0 : index
    %175 = vector.load %arg10[%c0_59, %c0_60] : memref<1x512xf32, #tpu.memory_space<vmem>>, vector<1x512xf32>
    %176 = vector.broadcast %175 : vector<1x512xf32> to vector<128x512xf32>
    %177 = arith.addf %174, %176 : vector<128x512xf32>
    %178 = arith.mulf %177, %177 : vector<128x512xf32>
    %179 = arith.mulf %177, %178 : vector<128x512xf32>
    %cst_61 = arith.constant 4.471500e-02 : f32
    %180 = vector.broadcast %cst_61 : f32 to vector<128x512xf32>
    %181 = arith.mulf %180, %179 : vector<128x512xf32>
    %182 = arith.addf %177, %181 : vector<128x512xf32>
    %cst_62 = arith.constant 0.797884583 : f32
    %183 = vector.broadcast %cst_62 : f32 to vector<128x512xf32>
    %184 = arith.mulf %183, %182 : vector<128x512xf32>
    %185 = math.tanh %184 : vector<128x512xf32>
    %cst_63 = arith.constant 1.000000e+00 : f32
    %186 = vector.broadcast %cst_63 : f32 to vector<128x512xf32>
    %187 = arith.addf %186, %185 : vector<128x512xf32>
    %cst_64 = arith.constant 5.000000e-01 : f32
    %188 = vector.broadcast %cst_64 : f32 to vector<128x512xf32>
    %189 = arith.mulf %188, %187 : vector<128x512xf32>
    %190 = arith.mulf %177, %189 : vector<128x512xf32>
    %191 = arith.truncf %190 : vector<128x512xf32> to vector<128x512xbf16>
    %c0_65 = arith.constant 0 : index
    %c0_66 = arith.constant 0 : index
    %192 = vector.load %arg11[%c0_65, %c0_66] : memref<512x128xbf16, #tpu.memory_space<vmem>>, vector<512x128xbf16>
    %cst_67 = arith.constant dense<0.000000e+00> : vector<128x128xf32>
    %193 = tpu.matmul %191, %192, %cst_67 {dimension_numbers = #tpu.dot_dimension_numbers<[1], [0], [0], [1], [0, 0, 1, 1], [], []>} : vector<128x512xbf16>, vector<512x128xbf16>, vector<128x128xf32> -> vector<128x128xf32>
    %c0_68 = arith.constant 0 : index
    %c0_69 = arith.constant 0 : index
    %194 = vector.load %arg12[%c0_68, %c0_69] : memref<1x128xf32, #tpu.memory_space<vmem>>, vector<1x128xf32>
    %195 = vector.broadcast %194 : vector<1x128xf32> to vector<128x128xf32>
    %196 = arith.addf %193, %195 : vector<128x128xf32>
    %197 = arith.addf %147, %196 : vector<128x128xf32>
    %c0_70 = arith.constant 0 : index
    %c0_71 = arith.constant 0 : index
    %c0_72 = arith.constant 0 : index
    %198 = vector.load %arg13[%c0_70, %c0_71, %c0_72] : memref<1x128x128xf32, #tpu.memory_space<vmem>>, vector<1x128x128xf32>
    %199 = vector.shape_cast %198 : vector<1x128x128xf32> to vector<128x128xf32>
    %200 = vector.shape_cast %197 : vector<128x128xf32> to vector<1x128x128xf32>
    tpu.vector_store %arg13[%c0_70, %c0_71, %c0_72], %200 {strides = array<i32>} : memref<1x128x128xf32, #tpu.memory_space<vmem>>, vector<1x128x128xf32>,
    return
  }
  func.func @transform_0(%arg0: i32) -> (i32, i32, i32) {
    %c0_i32 = arith.constant 0 : i32
    %c0_i32_0 = arith.constant 0 : i32
    %c0_i32_1 = arith.constant 0 : i32
    return %arg0, %c0_i32, %c0_i32_0 : i32, i32, i32
  }
  func.func @transform_1(%arg0: i32) -> (i32, i32) {
    %c0_i32 = arith.constant 0 : i32
    %c0_i32_0 = arith.constant 0 : i32
    %c0_i32_1 = arith.constant 0 : i32
    return %c0_i32, %c0_i32_0 : i32, i32
  }
  func.func @transform_2(%arg0: i32) -> (i32, i32) {
    %c0_i32 = arith.constant 0 : i32
    %c0_i32_0 = arith.constant 0 : i32
    %c0_i32_1 = arith.constant 0 : i32
    return %c0_i32, %c0_i32_0 : i32, i32
  }
  func.func @transform_3(%arg0: i32) -> (i32, i32) {
    %c0_i32 = arith.constant 0 : i32
    %c0_i32_0 = arith.constant 0 : i32
    %c0_i32_1 = arith.constant 0 : i32
    return %c0_i32, %c0_i32_0 : i32, i32
  }
  func.func @transform_4(%arg0: i32) -> (i32, i32) {
    %c0_i32 = arith.constant 0 : i32
    %c0_i32_0 = arith.constant 0 : i32
    %c0_i32_1 = arith.constant 0 : i32
    return %c0_i32, %c0_i32_0 : i32, i32
  }
  func.func @transform_5(%arg0: i32) -> (i32, i32) {
    %c0_i32 = arith.constant 0 : i32
    %c0_i32_0 = arith.constant 0 : i32
    %c0_i32_1 = arith.constant 0 : i32
    return %c0_i32, %c0_i32_0 : i32, i32
  }
  func.func @transform_6(%arg0: i32) -> (i32, i32) {
    %c0_i32 = arith.constant 0 : i32
    %c0_i32_0 = arith.constant 0 : i32
    %c0_i32_1 = arith.constant 0 : i32
    return %c0_i32, %c0_i32_0 : i32, i32
  }
  func.func @transform_7(%arg0: i32) -> (i32, i32) {
    %c0_i32 = arith.constant 0 : i32
    %c0_i32_0 = arith.constant 0 : i32
    %c0_i32_1 = arith.constant 0 : i32
    return %c0_i32, %c0_i32_0 : i32, i32
  }
  func.func @transform_8(%arg0: i32) -> (i32, i32) {
    %c0_i32 = arith.constant 0 : i32
    %c0_i32_0 = arith.constant 0 : i32
    %c0_i32_1 = arith.constant 0 : i32
    return %c0_i32, %c0_i32_0 : i32, i32
  }
  func.func @transform_9(%arg0: i32) -> (i32, i32) {
    %c0_i32 = arith.constant 0 : i32
    %c0_i32_0 = arith.constant 0 : i32
    %c0_i32_1 = arith.constant 0 : i32
    return %c0_i32, %c0_i32_0 : i32, i32
  }
  func.func @transform_10(%arg0: i32) -> (i32, i32) {
    %c0_i32 = arith.constant 0 : i32
    %c0_i32_0 = arith.constant 0 : i32
    %c0_i32_1 = arith.constant 0 : i32
    return %c0_i32, %c0_i32_0 : i32, i32
  }
  func.func @transform_11(%arg0: i32) -> (i32, i32) {
    %c0_i32 = arith.constant 0 : i32
    %c0_i32_0 = arith.constant 0 : i32
    %c0_i32_1 = arith.constant 0 : i32
    return %c0_i32, %c0_i32_0 : i32, i32
  }
  func.func @transform_12(%arg0: i32) -> (i32, i32, i32) {
    %c0_i32 = arith.constant 0 : i32
    %c0_i32_0 = arith.constant 0 : i32
    %c0_i32_1 = arith.constant 0 : i32
    return %arg0, %c0_i32, %c0_i32_0 : i32, i32, i32
  }
}

</mosaic_0001>

<llo_original>
// kernel: tpu_custom_call.1
$region0: #{tpu_custom_call.1}
  #allocation0 [shape = 'u32[]', space=smem, size = 0x4, offset = 0x4, fixed_abs, tag = 'smem constant byte address 0x4 - core index']
  #allocation1 [shape = 'u32[72,128]{1,0:T(1,128)}', space=vmem, size = 0x9000, scoped, tag = 'internal scratch']
  %s0 = inlined_call_operand.hbm [shape: f32[2,128,128], index: 0, kind: input, shape index: {}]
  %s1 = inlined_call_operand.hbm [shape: f32[1,128], index: 1, kind: input, shape index: {}]
  %s2 = inlined_call_operand.vmem [shape: f32[1,128], index: 2, kind: input, shape index: {}]
  %s3 = inlined_call_operand.hbm [shape: bf16[128,384], index: 3, kind: input, shape index: {}]
  %s4 = inlined_call_operand.hbm [shape: bf16[128,128], index: 4, kind: input, shape index: {}]
  %s5 = inlined_call_operand.vmem [shape: f32[1,128], index: 5, kind: input, shape index: {}]
  %s6 = inlined_call_operand.vmem [shape: f32[1,128], index: 6, kind: input, shape index: {}]
  %s7 = inlined_call_operand.hbm [shape: f32[1,128], index: 7, kind: input, shape index: {}]
  %s8 = inlined_call_operand.hbm [shape: bf16[128,512], index: 8, kind: input, shape index: {}]
  %s9 = inlined_call_operand.vmem [shape: f32[1,512], index: 9, kind: input, shape index: {}]
  %s10 = inlined_call_operand.hbm [shape: bf16[512,128], index: 10, kind: input, shape index: {}]
  %s11 = inlined_call_operand.vmem [shape: f32[1,128], index: 11, kind: input, shape index: {}]
  %s12 = inlined_call_operand.hbm [shape: f32[2,128,128], index: 12, kind: output, shape index: {}]
  %s13 = sld [smem:[#allocation0]]
  $region109: #{tpu_custom_call.1} parent=0
    _
  %s15 = ssub.s32 1, %s13
  %s16 = scalar_select 0, %s15, %s13
  $region1: #{tpu_custom_call.1} parent=0
    #allocation2 [shape = 'u8[131072]{0}', space=vmem, size = 0x20000, scoped, tag = 'input window, operand 0']
    #allocation3 [shape = 's32[2]{0}', space=sflag, size = 0x8, scoped, tag = 'scoped memory for tpu_custom_call.1']
    #allocation4 [shape = 's32[2]{0}', space=sflag, size = 0x8, scoped, tag = 'scoped memory for tpu_custom_call.1']
    #allocation5 [shape = 'u8[512]{0}', space=vmem, size = 0x400, scoped, tag = 'input window, operand 1, single buffered']
    #allocation6 [shape = 's32[1]{0}', space=sflag, size = 0x4, scoped, tag = 'scoped memory for tpu_custom_call.1']
    #allocation7 [shape = 'u8[98304]{0}', space=vmem, size = 0x18000, scoped, tag = 'input window, operand 3, single buffered']
    #allocation8 [shape = 'u8[32768]{0}', space=vmem, size = 0x8000, scoped, tag = 'input window, operand 4, single buffered']
    #allocation9 [shape = 's32[1]{0}', space=sflag, size = 0x4, scoped, tag = 'scoped memory for tpu_custom_call.1']
    #allocation10 [shape = 'u8[512]{0}', space=vmem, size = 0x400, scoped, tag = 'input window, operand 7, single buffered']
    #allocation11 [shape = 'u8[131072]{0}', space=vmem, size = 0x20000, scoped, tag = 'input window, operand 8, single buffered']
    #allocation12 [shape = 's32[1]{0}', space=sflag, size = 0x4, scoped, tag = 'scoped memory for tpu_custom_call.1']
    #allocation13 [shape = 'u8[131072]{0}', space=vmem, size = 0x20000, scoped, tag = 'input window, operand 10, single buffered']
    #allocation14 [shape = 'u8[131072]{0}', space=vmem, size = 0x20000, scoped, tag = 'output window, operand 0']
    %17 = vsyncpa [#allocation3], 0
    %s18 = scalar_lea.sflag [#allocation3], 1
    %19 = vsyncpa %s18, 0
    %20 = vsyncpa [#allocation6], 0
    %21 = vsyncpa [#allocation9], 0
    %22 = vsyncpa [#allocation12], 0
    %23 = vsyncpa [#allocation4], 0
    %s24 = scalar_lea.sflag [#allocation4], 1
    %25 = vsyncpa %s24, 0
    loop: start=0, step=1, limit=4
    $region2: #{tpu_custom_call.1} parent=1 // loop_pre_header
      _
    $region3: #{tpu_custom_call.1} parent=1 // loop_header
      %s27 = sphi 0, %s31
      %p28 = scmp.ge.s32.totalorder %s27, 4
      %s37 = sphi 0, %s39
      %s40 = sphi 0, %s37
      %s41 = sphi 0, %s40
      %s57 = sphi 0, %s41
      %s61 = sphi 0, %s61
      %s63 = sphi 0, %s61
      %s64 = sphi 0, %s63
      %s78 = sphi 0, %s64
      %s82 = sphi 0, %s82
      %s84 = sphi 0, %s82
      %s85 = sphi 0, %s84
      %s99 = sphi 0, %s85
      %s103 = sphi 0, %s103
      %s105 = sphi 0, %s103
      %s106 = sphi 0, %s105
      %s120 = sphi 0, %s106
      %s124 = sphi 0, %s124
      %s126 = sphi 0, %s124
      %s127 = sphi 0, %s126
      %s141 = sphi 0, %s127
      %s145 = sphi 0, %s145
      %s147 = sphi 0, %s145
      %s148 = sphi 0, %s147
      %s162 = sphi 0, %s148
      %s166 = sphi 0, %s166
      %s168 = sphi 0, %s166
      %s169 = sphi 0, %s168
      %s183 = sphi 0, %s169
      %s187 = sphi 0, %s187
      %s189 = sphi 0, %s187
      %s190 = sphi 0, %s189
      %s204 = sphi 0, %s190
      %s208 = sphi 0, %s208
      %s210 = sphi 0, %s208
      %s211 = sphi 0, %s210
      %s225 = sphi 0, %s211
      %s229 = sphi 0, %s229
      %s231 = sphi 0, %s229
      %s232 = sphi 0, %s231
      %s246 = sphi 0, %s232
      %s250 = sphi 0, %s250
      %s252 = sphi 0, %s250
      %s253 = sphi 0, %s252
      %s267 = sphi 0, %s253
      %s271 = sphi 0, %s271
      %s273 = sphi 0, %s271
      %s274 = sphi 0, %s273
      %s288 = sphi 0, %s274
      %s294 = sphi 0, %s296
      %s297 = sphi 0, %s294
      %s298 = sphi 0, %s297
      %s314 = sphi 0, %s298
    $region4: #{tpu_custom_call.1} parent=1 // loop_header_branch
      %30 = sbr.rel (%p28) target = $region8
    $region5: #{tpu_custom_call.1} parent=1 // loop_body
      %s32 = ssub.s32 %s27, 1
      %s33 = ssub.s32 %s27, 2
      %s34 = sadd.s32 %s27, 1
      %s35 = ssub.s32 %s27, %s34
      %p36 = scmp.eq.s32.totalorder %s35, 0
      %s38 = sadd.s32 %s37, 1
      %s39 = scalar_select %p36, %s37, %s38
      %p42 = pneg %p36
      %p43 = scmp.eq.s32.totalorder %s27, 1
      %p44 = por %p42, %p43
      %p45 = scmp.ne.s32.totalorder %s37, %s40
      %p46 = scmp.eq.s32.totalorder %s27, 0
      %p47 = por %p45, %p46
      %p48 = scmp.ne.s32.totalorder %s37, %s40
      %p49 = scmp.eq.s32.totalorder %s32, 1
      %p50 = por %p48, %p49
      %p51 = scmp.ne.s32.totalorder %s40, %s41
      %p52 = scmp.eq.s32.totalorder %s32, 0
      %p53 = por %p51, %p52
      %p54 = scmp.ne.s32.totalorder %s40, %s41
      %p55 = scmp.eq.s32.totalorder %s33, 1
      %p56 = por %p54, %p55
      %p58 = scmp.ne.s32.totalorder %s41, %s57
      %p59 = scmp.eq.s32.totalorder %s33, 0
      %p60 = por %p58, %p59
      %s62 = sadd.s32 %s61, 1
      %p65 = scmp.eq.s32.totalorder %s27, 1
      %p66 = scmp.ne.s32.totalorder %s61, %s63
      %p67 = scmp.eq.s32.totalorder %s27, 0
      %p68 = por %p66, %p67
      %p69 = scmp.ne.s32.totalorder %s61, %s63
      %p70 = scmp.eq.s32.totalorder %s32, 1
      %p71 = por %p69, %p70
      %p72 = scmp.ne.s32.totalorder %s63, %s64
      %p73 = scmp.eq.s32.totalorder %s32, 0
      %p74 = por %p72, %p73
      %p75 = scmp.ne.s32.totalorder %s63, %s64
      %p76 = scmp.eq.s32.totalorder %s33, 1
      %p77 = por %p75, %p76
      %p79 = scmp.ne.s32.totalorder %s64, %s78
      %p80 = scmp.eq.s32.totalorder %s33, 0
      %p81 = por %p79, %p80
      %s83 = sadd.s32 %s82, 1
      %p86 = scmp.eq.s32.totalorder %s27, 1
      %p87 = scmp.ne.s32.totalorder %s82, %s84
      %p88 = scmp.eq.s32.totalorder %s27, 0
      %p89 = por %p87, %p88
      %p90 = scmp.ne.s32.totalorder %s82, %s84
      %p91 = scmp.eq.s32.totalorder %s32, 1
      %p92 = por %p90, %p91
      %p93 = scmp.ne.s32.totalorder %s84, %s85
      %p94 = scmp.eq.s32.totalorder %s32, 0
      %p95 = por %p93, %p94
      %p96 = scmp.ne.s32.totalorder %s84, %s85
      %p97 = scmp.eq.s32.totalorder %s33, 1
      %p98 = por %p96, %p97
      %p100 = scmp.ne.s32.totalorder %s85, %s99
      %p101 = scmp.eq.s32.totalorder %s33, 0
      %p102 = por %p100, %p101
      %s104 = sadd.s32 %s103, 1
      %p107 = scmp.eq.s32.totalorder %s27, 1
      %p108 = scmp.ne.s32.totalorder %s103, %s105
      %p109 = scmp.eq.s32.totalorder %s27, 0
      %p110 = por %p108, %p109
      %p111 = scmp.ne.s32.totalorder %s103, %s105
      %p112 = scmp.eq.s32.totalorder %s32, 1
      %p113 = por %p111, %p112
      %p114 = scmp.ne.s32.totalorder %s105, %s106
      %p115 = scmp.eq.s32.totalorder %s32, 0
      %p116 = por %p114, %p115
      %p117 = scmp.ne.s32.totalorder %s105, %s106
      %p118 = scmp.eq.s32.totalorder %s33, 1
      %p119 = por %p117, %p118
      %p121 = scmp.ne.s32.totalorder %s106, %s120
      %p122 = scmp.eq.s32.totalorder %s33, 0
      %p123 = por %p121, %p122
      %s125 = sadd.s32 %s124, 1
      %p128 = scmp.eq.s32.totalorder %s27, 1
      %p129 = scmp.ne.s32.totalorder %s124, %s126
      %p130 = scmp.eq.s32.totalorder %s27, 0
      %p131 = por %p129, %p130
      %p132 = scmp.ne.s32.totalorder %s124, %s126
      %p133 = scmp.eq.s32.totalorder %s32, 1
      %p134 = por %p132, %p133
      %p135 = scmp.ne.s32.totalorder %s126, %s127
      %p136 = scmp.eq.s32.totalorder %s32, 0
      %p137 = por %p135, %p136
      %p138 = scmp.ne.s32.totalorder %s126, %s127
      %p139 = scmp.eq.s32.totalorder %s33, 1
      %p140 = por %p138, %p139
      %p142 = scmp.ne.s32.totalorder %s127, %s141
      %p143 = scmp.eq.s32.totalorder %s33, 0
      %p144 = por %p142, %p143
      %s146 = sadd.s32 %s145, 1
      %p149 = scmp.eq.s32.totalorder %s27, 1
      %p150 = scmp.ne.s32.totalorder %s145, %s147
      %p151 = scmp.eq.s32.totalorder %s27, 0
      %p152 = por %p150, %p151
      %p153 = scmp.ne.s32.totalorder %s145, %s147
      %p154 = scmp.eq.s32.totalorder %s32, 1
      %p155 = por %p153, %p154
      %p156 = scmp.ne.s32.totalorder %s147, %s148
      %p157 = scmp.eq.s32.totalorder %s32, 0
      %p158 = por %p156, %p157
      %p159 = scmp.ne.s32.totalorder %s147, %s148
      %p160 = scmp.eq.s32.totalorder %s33, 1
      %p161 = por %p159, %p160
      %p163 = scmp.ne.s32.totalorder %s148, %s162
      %p164 = scmp.eq.s32.totalorder %s33, 0
      %p165 = por %p163, %p164
      %s167 = sadd.s32 %s166, 1
      %p170 = scmp.eq.s32.totalorder %s27, 1
      %p171 = scmp.ne.s32.totalorder %s166, %s168
      %p172 = scmp.eq.s32.totalorder %s27, 0
      %p173 = por %p171, %p172
      %p174 = scmp.ne.s32.totalorder %s166, %s168
      %p175 = scmp.eq.s32.totalorder %s32, 1
      %p176 = por %p174, %p175
      %p177 = scmp.ne.s32.totalorder %s168, %s169
      %p178 = scmp.eq.s32.totalorder %s32, 0
      %p179 = por %p177, %p178
      %p180 = scmp.ne.s32.totalorder %s168, %s169
      %p181 = scmp.eq.s32.totalorder %s33, 1
      %p182 = por %p180, %p181
      %p184 = scmp.ne.s32.totalorder %s169, %s183
      %p185 = scmp.eq.s32.totalorder %s33, 0
      %p186 = por %p184, %p185
      %s188 = sadd.s32 %s187, 1
      %p191 = scmp.eq.s32.totalorder %s27, 1
      %p192 = scmp.ne.s32.totalorder %s187, %s189
      %p193 = scmp.eq.s32.totalorder %s27, 0
      %p194 = por %p192, %p193
      %p195 = scmp.ne.s32.totalorder %s187, %s189
      %p196 = scmp.eq.s32.totalorder %s32, 1
      %p197 = por %p195, %p196
      %p198 = scmp.ne.s32.totalorder %s189, %s190
      %p199 = scmp.eq.s32.totalorder %s32, 0
      %p200 = por %p198, %p199
      %p201 = scmp.ne.s32.totalorder %s189, %s190
      %p202 = scmp.eq.s32.totalorder %s33, 1
      %p203 = por %p201, %p202
      %p205 = scmp.ne.s32.totalorder %s190, %s204
      %p206 = scmp.eq.s32.totalorder %s33, 0
      %p207 = por %p205, %p206
      %s209 = sadd.s32 %s208, 1
      %p212 = scmp.eq.s32.totalorder %s27, 1
      %p213 = scmp.ne.s32.totalorder %s208, %s210
      %p214 = scmp.eq.s32.totalorder %s27, 0
      %p215 = por %p213, %p214
      %p216 = scmp.ne.s32.totalorder %s208, %s210
      %p217 = scmp.eq.s32.totalorder %s32, 1
      %p218 = por %p216, %p217
      %p219 = scmp.ne.s32.totalorder %s210, %s211
      %p220 = scmp.eq.s32.totalorder %s32, 0
      %p221 = por %p219, %p220
      %p222 = scmp.ne.s32.totalorder %s210, %s211
      %p223 = scmp.eq.s32.totalorder %s33, 1
      %p224 = por %p222, %p223
      %p226 = scmp.ne.s32.totalorder %s211, %s225
      %p227 = scmp.eq.s32.totalorder %s33, 0
      %p228 = por %p226, %p227
      %s230 = sadd.s32 %s229, 1
      %p233 = scmp.eq.s32.totalorder %s27, 1
      %p234 = scmp.ne.s32.totalorder %s229, %s231
      %p235 = scmp.eq.s32.totalorder %s27, 0
      %p236 = por %p234, %p235
      %p237 = scmp.ne.s32.totalorder %s229, %s231
      %p238 = scmp.eq.s32.totalorder %s32, 1
      %p239 = por %p237, %p238
      %p240 = scmp.ne.s32.totalorder %s231, %s232
      %p241 = scmp.eq.s32.totalorder %s32, 0
      %p242 = por %p240, %p241
      %p243 = scmp.ne.s32.totalorder %s231, %s232
      %p244 = scmp.eq.s32.totalorder %s33, 1
      %p245 = por %p243, %p244
      %p247 = scmp.ne.s32.totalorder %s232, %s246
      %p248 = scmp.eq.s32.totalorder %s33, 0
      %p249 = por %p247, %p248
      %s251 = sadd.s32 %s250, 1
      %p254 = scmp.eq.s32.totalorder %s27, 1
      %p255 = scmp.ne.s32.totalorder %s250, %s252
      %p256 = scmp.eq.s32.totalorder %s27, 0
      %p257 = por %p255, %p256
      %p258 = scmp.ne.s32.totalorder %s250, %s252
      %p259 = scmp.eq.s32.totalorder %s32, 1
      %p260 = por %p258, %p259
      %p261 = scmp.ne.s32.totalorder %s252, %s253
      %p262 = scmp.eq.s32.totalorder %s32, 0
      %p263 = por %p261, %p262
      %p264 = scmp.ne.s32.totalorder %s252, %s253
      %p265 = scmp.eq.s32.totalorder %s33, 1
      %p266 = por %p264, %p265
      %p268 = scmp.ne.s32.totalorder %s253, %s267
      %p269 = scmp.eq.s32.totalorder %s33, 0
      %p270 = por %p268, %p269
      %s272 = sadd.s32 %s271, 1
      %p275 = scmp.eq.s32.totalorder %s27, 1
      %p276 = scmp.ne.s32.totalorder %s271, %s273
      %p277 = scmp.eq.s32.totalorder %s27, 0
      %p278 = por %p276, %p277
      %p279 = scmp.ne.s32.totalorder %s271, %s273
      %p280 = scmp.eq.s32.totalorder %s32, 1
      %p281 = por %p279, %p280
      %p282 = scmp.ne.s32.totalorder %s273, %s274
      %p283 = scmp.eq.s32.totalorder %s32, 0
      %p284 = por %p282, %p283
      %p285 = scmp.ne.s32.totalorder %s273, %s274
      %p286 = scmp.eq.s32.totalorder %s33, 1
      %p287 = por %p285, %p286
      %p289 = scmp.ne.s32.totalorder %s274, %s288
      %p290 = scmp.eq.s32.totalorder %s33, 0
      %p291 = por %p289, %p290
      %s292 = ssub.s32 %s27, %s34
      %p293 = scmp.eq.s32.totalorder %s292, 0
      %s295 = sadd.s32 %s294, 1
      %s296 = scalar_select %p293, %s294, %s295
      %p299 = pneg %p293
      %p300 = scmp.eq.s32.totalorder %s27, 1
      %p301 = por %p299, %p300
      %p302 = scmp.ne.s32.totalorder %s294, %s297
      %p303 = scmp.eq.s32.totalorder %s27, 0
      %p304 = por %p302, %p303
      %p305 = scmp.ne.s32.totalorder %s294, %s297
      %p306 = scmp.eq.s32.totalorder %s32, 1
      %p307 = por %p305, %p306
      %p308 = scmp.ne.s32.totalorder %s297, %s298
      %p309 = scmp.eq.s32.totalorder %s32, 0
      %p310 = por %p308, %p309
      %p311 = scmp.ne.s32.totalorder %s297, %s298
      %p312 = scmp.eq.s32.totalorder %s33, 1
      %p313 = por %p311, %p312
      %p315 = scmp.ne.s32.totalorder %s298, %s314
      %p316 = scmp.eq.s32.totalorder %s33, 0
      %p317 = por %p315, %p316
      %p318 = scmp.le.s32.totalorder 1, %s27
      %p319 = scmp.lt.s32.totalorder %s27, 3
      %p320 = pnand %p318, %p319
      %p321 = pneg %p320
      // Predicated region
      $region9: #{tpu_custom_call.1} parent=5 // pred_check
        _
      $region10: #{tpu_custom_call.1} parent=5 // pred_check_branch
        %323 = sbr.rel (%p320) target = $region12
      $region11: #{tpu_custom_call.1} parent=5 // pred_region
        %s324 = ssub.s32 %s27, 1
        // Predicated region
        $region13: #{tpu_custom_call.1} parent=11 // pred_check
          %p325 = pneg %p74
        $region14: #{tpu_custom_call.1} parent=11 // pred_check_branch
          %327 = sbr.rel (%p325) target = $region16
        $region15: #{tpu_custom_call.1} parent=11 // pred_region
          %329 = vsyncadd [#allocation6], 0
          %s331 = sshll.u32 %s1, 4
          %s332 = int_to_ptr.hbm [resolvable:$true] %s331
          %s333 = sshll.u32 [#allocation5], 4
          %s334 = int_to_ptr.vmem [resolvable:$true] %s333
          %336 = dma.hbm_to_vmem [thread:$0]  %s332, 16, %s334, [#allocation6]
        $region16: #{tpu_custom_call.1} parent=11 // pred_fallthru
          _
        // Predicated region
        $region17: #{tpu_custom_call.1} parent=11 // pred_check
          %p337 = pneg %p95
        $region18: #{tpu_custom_call.1} parent=11 // pred_check_branch
          %339 = sbr.rel (%p337) target = $region20
        $region19: #{tpu_custom_call.1} parent=11 // pred_region
          _
        $region20: #{tpu_custom_call.1} parent=11 // pred_fallthru
          _
        // Predicated region
        $region21: #{tpu_custom_call.1} parent=11 // pred_check
          %p340 = pneg %p116
        $region22: #{tpu_custom_call.1} parent=11 // pred_check_branch
          %342 = sbr.rel (%p340) target = $region24
        $region23: #{tpu_custom_call.1} parent=11 // pred_region
          %344 = vsyncadd [#allocation6], 0
          %s345 = sshll.u32 %s3, 4
          %s346 = int_to_ptr.hbm [resolvable:$true] %s345
          %s347 = sshll.u32 [#allocation7], 4
          %s348 = int_to_ptr.vmem [resolvable:$true] %s347
          %353 = dma.hbm_to_vmem [thread:$0]  %s346, 3072, %s348, [#allocation6], 192, 192, 12
        $region24: #{tpu_custom_call.1} parent=11 // pred_fallthru
          _
        // Predicated region
        $region25: #{tpu_custom_call.1} parent=11 // pred_check
          %p354 = pneg %p137
        $region26: #{tpu_custom_call.1} parent=11 // pred_check_branch
          %356 = sbr.rel (%p354) target = $region28
        $region27: #{tpu_custom_call.1} parent=11 // pred_region
          %358 = vsyncadd [#allocation9], 0
          %s359 = sshll.u32 %s4, 4
          %s360 = int_to_ptr.hbm [resolvable:$true] %s359
          %s361 = sshll.u32 [#allocation8], 4
          %s362 = int_to_ptr.vmem [resolvable:$true] %s361
          %367 = dma.hbm_to_vmem [thread:$0]  %s360, 1024, %s362, [#allocation9], 64, 64, 4
        $region28: #{tpu_custom_call.1} parent=11 // pred_fallthru
          _
        // Predicated region
        $region29: #{tpu_custom_call.1} parent=11 // pred_check
          %p368 = pneg %p158
        $region30: #{tpu_custom_call.1} parent=11 // pred_check_branch
          %370 = sbr.rel (%p368) target = $region32
        $region31: #{tpu_custom_call.1} parent=11 // pred_region
          _
        $region32: #{tpu_custom_call.1} parent=11 // pred_fallthru
          _
        // Predicated region
        $region33: #{tpu_custom_call.1} parent=11 // pred_check
          %p371 = pneg %p179
        $region34: #{tpu_custom_call.1} parent=11 // pred_check_branch
          %373 = sbr.rel (%p371) target = $region36
        $region35: #{tpu_custom_call.1} parent=11 // pred_region
          _
        $region36: #{tpu_custom_call.1} parent=11 // pred_fallthru
          _
        // Predicated region
        $region37: #{tpu_custom_call.1} parent=11 // pred_check
          %p374 = pneg %p200
        $region38: #{tpu_custom_call.1} parent=11 // pred_check_branch
          %376 = sbr.rel (%p374) target = $region40
        $region39: #{tpu_custom_call.1} parent=11 // pred_region
          %378 = vsyncadd [#allocation9], 0
          %s380 = sshll.u32 %s7, 4
          %s381 = int_to_ptr.hbm [resolvable:$true] %s380
          %s382 = sshll.u32 [#allocation10], 4
          %s383 = int_to_ptr.vmem [resolvable:$true] %s382
          %385 = dma.hbm_to_vmem [thread:$0]  %s381, 16, %s383, [#allocation9]
        $region40: #{tpu_custom_call.1} parent=11 // pred_fallthru
          _
        // Predicated region
        $region41: #{tpu_custom_call.1} parent=11 // pred_check
          %p386 = pneg %p221
        $region42: #{tpu_custom_call.1} parent=11 // pred_check_branch
          %388 = sbr.rel (%p386) target = $region44
        $region43: #{tpu_custom_call.1} parent=11 // pred_region
          %390 = vsyncadd [#allocation12], 0
          %s391 = sshll.u32 %s8, 4
          %s392 = int_to_ptr.hbm [resolvable:$true] %s391
          %s393 = sshll.u32 [#allocation11], 4
          %s394 = int_to_ptr.vmem [resolvable:$true] %s393
          %399 = dma.hbm_to_vmem [thread:$0]  %s392, 4096, %s394, [#allocation12], 256, 256, 16
        $region44: #{tpu_custom_call.1} parent=11 // pred_fallthru
          _
        // Predicated region
        $region45: #{tpu_custom_call.1} parent=11 // pred_check
          %p400 = pneg %p242
        $region46: #{tpu_custom_call.1} parent=11 // pred_check_branch
          %402 = sbr.rel (%p400) target = $region48
        $region47: #{tpu_custom_call.1} parent=11 // pred_region
          _
        $region48: #{tpu_custom_call.1} parent=11 // pred_fallthru
          _
        // Predicated region
        $region49: #{tpu_custom_call.1} parent=11 // pred_check
          %p403 = pneg %p263
        $region50: #{tpu_custom_call.1} parent=11 // pred_check_branch
          %405 = sbr.rel (%p403) target = $region52
        $region51: #{tpu_custom_call.1} parent=11 // pred_region
          %407 = vsyncadd [#allocation12], 0
          %s408 = sshll.u32 %s10, 4
          %s409 = int_to_ptr.hbm [resolvable:$true] %s408
          %s410 = sshll.u32 [#allocation13], 4
          %s411 = int_to_ptr.vmem [resolvable:$true] %s410
          %416 = dma.hbm_to_vmem [thread:$0]  %s409, 4096, %s411, [#allocation12], 64, 64, 4
        $region52: #{tpu_custom_call.1} parent=11 // pred_fallthru
          _
        // Predicated region
        $region53: #{tpu_custom_call.1} parent=11 // pred_check
          %p417 = pneg %p284
        $region54: #{tpu_custom_call.1} parent=11 // pred_check_branch
          %419 = sbr.rel (%p417) target = $region56
        $region55: #{tpu_custom_call.1} parent=11 // pred_region
          _
        $region56: #{tpu_custom_call.1} parent=11 // pred_fallthru
          _
      $region12: #{tpu_custom_call.1} parent=5 // pred_fallthru
        _
      %p420 = scmp.lt.s32.totalorder %s27, 2
      // Predicated region
      $region57: #{tpu_custom_call.1} parent=5 // pred_check
        %p421 = pneg %p420
      $region58: #{tpu_custom_call.1} parent=5 // pred_check_branch
        %423 = sbr.rel (%p421) target = $region60
      $region59: #{tpu_custom_call.1} parent=5 // pred_region
        // Predicated region
        $region61: #{tpu_custom_call.1} parent=59 // pred_check
          %p424 = pneg %p47
        $region62: #{tpu_custom_call.1} parent=59 // pred_check_branch
          %426 = sbr.rel (%p424) target = $region64
        $region63: #{tpu_custom_call.1} parent=59 // pred_region
          %s427 = sand.u32 %s37, 1
          %s428 = scalar_lea.sflag [#allocation3], %s427
          %s429 = sand.u32 %s37, 1
          %s430 = smul.addr %s429, 128
          %s431 = scalar_lea.vmem [#allocation2], %s430
          %433 = vsyncadd %s428, 0
          %s434 = smul.addr %s27, 16
          %s435 = smul.addr %s434, 8
          %s436 = scalar_lea.hbm %s0, %s435
          %s437 = sshll.u32 %s436, 4
          %s438 = int_to_ptr.hbm [resolvable:$true] %s437
          %s439 = sshll.u32 %s431, 4
          %s440 = int_to_ptr.vmem [resolvable:$true] %s439
          %445 = dma.hbm_to_vmem [thread:$0]  %s438, 2048, %s440, %s428, 128, 128, 8
        $region64: #{tpu_custom_call.1} parent=59 // pred_fallthru
          _
      $region60: #{tpu_custom_call.1} parent=5 // pred_fallthru
        _
      %p446 = scmp.le.s32.totalorder 1, %s27
      %p447 = scmp.lt.s32.totalorder %s27, 3
      %p448 = pnand %p446, %p447
      %p449 = pneg %p448
      // Predicated region
      $region65: #{tpu_custom_call.1} parent=5 // pred_check
        _
      $region66: #{tpu_custom_call.1} parent=5 // pred_check_branch
        %451 = sbr.rel (%p448) target = $region68
      $region67: #{tpu_custom_call.1} parent=5 // pred_region
        %s452 = ssub.s32 %s27, 1
        %s453 = sand.u32 %s40, 1
        %s454 = scalar_lea.sflag [#allocation3], %s453
        %s455 = sand.u32 %s40, 1
        %s456 = smul.addr %s455, 128
        %s457 = scalar_lea.vmem [#allocation2], %s456
        // Predicated region
        $region69: #{tpu_custom_call.1} parent=67 // pred_check
          %p458 = pneg %p53
        $region70: #{tpu_custom_call.1} parent=67 // pred_check_branch
          %460 = sbr.rel (%p458) target = $region72
        $region71: #{tpu_custom_call.1} parent=67 // pred_region
          %462 = dma.done %s454, 2048
        $region72: #{tpu_custom_call.1} parent=67 // pred_fallthru
          _
        // Predicated region
        $region73: #{tpu_custom_call.1} parent=67 // pred_check
          %p463 = pneg %p74
        $region74: #{tpu_custom_call.1} parent=67 // pred_check_branch
          %465 = sbr.rel (%p463) target = $region76
        $region75: #{tpu_custom_call.1} parent=67 // pred_region
          %467 = dma.done [#allocation6], 16
        $region76: #{tpu_custom_call.1} parent=67 // pred_fallthru
          _
        // Predicated region
        $region77: #{tpu_custom_call.1} parent=67 // pred_check
          %p468 = pneg %p116
        $region78: #{tpu_custom_call.1} parent=67 // pred_check_branch
          %470 = sbr.rel (%p468) target = $region80
        $region79: #{tpu_custom_call.1} parent=67 // pred_region
          %472 = dma.done [#allocation6], 3072
        $region80: #{tpu_custom_call.1} parent=67 // pred_fallthru
          _
        // Predicated region
        $region81: #{tpu_custom_call.1} parent=67 // pred_check
          %p473 = pneg %p137
        $region82: #{tpu_custom_call.1} parent=67 // pred_check_branch
          %475 = sbr.rel (%p473) target = $region84
        $region83: #{tpu_custom_call.1} parent=67 // pred_region
          %477 = dma.done [#allocation9], 1024
        $region84: #{tpu_custom_call.1} parent=67 // pred_fallthru
          _
        // Predicated region
        $region85: #{tpu_custom_call.1} parent=67 // pred_check
          %p478 = pneg %p200
        $region86: #{tpu_custom_call.1} parent=67 // pred_check_branch
          %480 = sbr.rel (%p478) target = $region88
        $region87: #{tpu_custom_call.1} parent=67 // pred_region
          %482 = dma.done [#allocation9], 16
        $region88: #{tpu_custom_call.1} parent=67 // pred_fallthru
          _
        // Predicated region
        $region89: #{tpu_custom_call.1} parent=67 // pred_check
          %p483 = pneg %p221
        $region90: #{tpu_custom_call.1} parent=67 // pred_check_branch
          %485 = sbr.rel (%p483) target = $region92
        $region91: #{tpu_custom_call.1} parent=67 // pred_region
          %487 = dma.done [#allocation12], 4096
        $region92: #{tpu_custom_call.1} parent=67 // pred_fallthru
          _
        // Predicated region
        $region93: #{tpu_custom_call.1} parent=67 // pred_check
          %p488 = pneg %p263
        $region94: #{tpu_custom_call.1} parent=67 // pred_check_branch
          %490 = sbr.rel (%p488) target = $region96
        $region95: #{tpu_custom_call.1} parent=67 // pred_region
          %492 = dma.done [#allocation12], 4096
        $region96: #{tpu_custom_call.1} parent=67 // pred_fallthru
          _
        %s493 = sand.u32 %s40, 1
        %s494 = scalar_lea.sflag [#allocation3], %s493
        %s495 = sand.u32 %s40, 1
        %s496 = smul.addr %s495, 128
        %s497 = scalar_lea.vmem [#allocation2], %s496
        %p498 = pneg %p53
        %p499 = pneg %p50
        %p500 = pneg %p74
        %p501 = pneg %p71
        %p502 = pneg %p95
        %p503 = pneg %p92
        %p504 = pneg %p116
        %p505 = pneg %p113
        %p506 = pneg %p137
        %p507 = pneg %p134
        %p508 = pneg %p158
        %p509 = pneg %p155
        %p510 = pneg %p179
        %p511 = pneg %p176
        %p512 = pneg %p200
        %p513 = pneg %p197
        %p514 = pneg %p221
        %p515 = pneg %p218
        %p516 = pneg %p242
        %p517 = pneg %p239
        %p518 = pneg %p263
        %p519 = pneg %p260
        %p520 = pneg %p284
        %p521 = pneg %p281
        %p522 = pneg %p310
        %p523 = pneg %p307
        %s524 = sand.u32 %s297, 1
        %s525 = scalar_lea.sflag [#allocation4], %s524
        %s526 = sand.u32 %s297, 1
        %s527 = smul.addr %s526, 128
        %s528 = scalar_lea.vmem [#allocation14], %s527
        %v530 = vld [vmem:[%s457] sm:$0xff]
        %v531 = vld [vmem:[%s457 + $0x8] sm:$0xff]
        %v532 = vld [vmem:[%s457 + $0x10] sm:$0xff]
        %v533 = vld [vmem:[%s457 + $0x18] sm:$0xff]
        %v534 = vld [vmem:[%s457 + $0x20] sm:$0xff]
        %v535 = vld [vmem:[%s457 + $0x28] sm:$0xff]
        %v536 = vld [vmem:[%s457 + $0x30] sm:$0xff]
        %v537 = vld [vmem:[%s457 + $0x38] sm:$0xff]
        %v538 = vld [vmem:[%s457 + $0x40] sm:$0xff]
        %v539 = vld [vmem:[%s457 + $0x48] sm:$0xff]
        %v540 = vld [vmem:[%s457 + $0x50] sm:$0xff]
        %v541 = vld [vmem:[%s457 + $0x58] sm:$0xff]
        %v542 = vld [vmem:[%s457 + $0x60] sm:$0xff]
        %v543 = vld [vmem:[%s457 + $0x68] sm:$0xff]
        %v544 = vld [vmem:[%s457 + $0x70] sm:$0xff]
        %v545 = vld [vmem:[%s457 + $0x78] sm:$0xff]
        %v546 = vld [vmem:[#allocation5] sm:$0x1]
        %v547 = vld [vmem:[%s2] sm:$0x1]
        %548 = vadd.xlane.f32.xlu0 %v530
        %v549 = vpop.xlane.xlu0 %548
        %550 = vadd.xlane.f32.xlu0 %v531
        %v551 = vpop.xlane.xlu0 %550
        %552 = vadd.xlane.f32.xlu0 %v532
        %v553 = vpop.xlane.xlu0 %552
        %554 = vadd.xlane.f32.xlu0 %v533
        %v555 = vpop.xlane.xlu0 %554
        %556 = vadd.xlane.f32.xlu0 %v534
        %v557 = vpop.xlane.xlu0 %556
        %558 = vadd.xlane.f32.xlu0 %v535
        %v559 = vpop.xlane.xlu0 %558
        %560 = vadd.xlane.f32.xlu0 %v536
        %v561 = vpop.xlane.xlu0 %560
        %562 = vadd.xlane.f32.xlu0 %v537
        %v563 = vpop.xlane.xlu0 %562
        %564 = vadd.xlane.f32.xlu0 %v538
        %v565 = vpop.xlane.xlu0 %564
        %566 = vadd.xlane.f32.xlu0 %v539
        %v567 = vpop.xlane.xlu0 %566
        %568 = vadd.xlane.f32.xlu0 %v540
        %v569 = vpop.xlane.xlu0 %568
        %570 = vadd.xlane.f32.xlu0 %v541
        %v571 = vpop.xlane.xlu0 %570
        %572 = vadd.xlane.f32.xlu0 %v542
        %v573 = vpop.xlane.xlu0 %572
        %574 = vadd.xlane.f32.xlu0 %v543
        %v575 = vpop.xlane.xlu0 %574
        %576 = vadd.xlane.f32.xlu0 %v544
        %v577 = vpop.xlane.xlu0 %576
        %578 = vadd.xlane.f32.xlu0 %v545
        %v579 = vpop.xlane.xlu0 %578
        %v580 = vrcp.pop 128.0
        %v581 = vmul.f32 128.0, %v580
        %v582 = vsub.f32 1.0, %v581
        %v583 = vmul.f32 %v580, %v582
        %v584 = vadd.f32 %v580, %v583
        %vm585 = vweird.f32 %v580
        %v586 = vsel %vm585, %v580, %v584
        %v587 = vmul.f32 %v549, %v586
        %v588 = vmul.f32 %v551, %v586
        %v589 = vmul.f32 %v553, %v586
        %v590 = vmul.f32 %v555, %v586
        %v591 = vmul.f32 %v557, %v586
        %v592 = vmul.f32 %v559, %v586
        %v593 = vmul.f32 %v561, %v586
        %v594 = vmul.f32 %v563, %v586
        %v595 = vmul.f32 %v565, %v586
        %v596 = vmul.f32 %v567, %v586
        %v597 = vmul.f32 %v569, %v586
        %v598 = vmul.f32 %v571, %v586
        %v599 = vmul.f32 %v573, %v586
        %v600 = vmul.f32 %v575, %v586
        %v601 = vmul.f32 %v577, %v586
        %v602 = vmul.f32 %v579, %v586
        %v603 = vsub.f32 %v530, %v587
        %v604 = vsub.f32 %v531, %v588
        %v605 = vsub.f32 %v532, %v589
        %v606 = vsub.f32 %v533, %v590
        %v607 = vsub.f32 %v534, %v591
        %v608 = vsub.f32 %v535, %v592
        %v609 = vsub.f32 %v536, %v593
        %v610 = vsub.f32 %v537, %v594
        %v611 = vsub.f32 %v538, %v595
        %v612 = vsub.f32 %v539, %v596
        %v613 = vsub.f32 %v540, %v597
        %v614 = vsub.f32 %v541, %v598
        %v615 = vsub.f32 %v542, %v599
        %v616 = vsub.f32 %v543, %v600
        %v617 = vsub.f32 %v544, %v601
        %v618 = vsub.f32 %v545, %v602
        %v619 = vmul.f32 %v603, %v603
        %v620 = vmul.f32 %v604, %v604
        %v621 = vmul.f32 %v605, %v605
        %v622 = vmul.f32 %v606, %v606
        %v623 = vmul.f32 %v607, %v607
        %v624 = vmul.f32 %v608, %v608
        %v625 = vmul.f32 %v609, %v609
        %v626 = vmul.f32 %v610, %v610
        %v627 = vmul.f32 %v611, %v611
        %v628 = vmul.f32 %v612, %v612
        %v629 = vmul.f32 %v613, %v613
        %v630 = vmul.f32 %v614, %v614
        %v631 = vmul.f32 %v615, %v615
        %v632 = vmul.f32 %v616, %v616
        %v633 = vmul.f32 %v617, %v617
        %v634 = vmul.f32 %v618, %v618
        %635 = vadd.xlane.f32.xlu0 %v619
        %v636 = vpop.xlane.xlu0 %635
        %637 = vadd.xlane.f32.xlu0 %v620
        %v638 = vpop.xlane.xlu0 %637
        %639 = vadd.xlane.f32.xlu0 %v621
        %v640 = vpop.xlane.xlu0 %639
        %641 = vadd.xlane.f32.xlu0 %v622
        %v642 = vpop.xlane.xlu0 %641
        %643 = vadd.xlane.f32.xlu0 %v623
        %v644 = vpop.xlane.xlu0 %643
        %645 = vadd.xlane.f32.xlu0 %v624
        %v646 = vpop.xlane.xlu0 %645
        %647 = vadd.xlane.f32.xlu0 %v625
        %v648 = vpop.xlane.xlu0 %647
        %649 = vadd.xlane.f32.xlu0 %v626
        %v650 = vpop.xlane.xlu0 %649
        %651 = vadd.xlane.f32.xlu0 %v627
        %v652 = vpop.xlane.xlu0 %651
        %653 = vadd.xlane.f32.xlu0 %v628
        %v654 = vpop.xlane.xlu0 %653
        %655 = vadd.xlane.f32.xlu0 %v629
        %v656 = vpop.xlane.xlu0 %655
        %657 = vadd.xlane.f32.xlu0 %v630
        %v658 = vpop.xlane.xlu0 %657
        %659 = vadd.xlane.f32.xlu0 %v631
        %v660 = vpop.xlane.xlu0 %659
        %661 = vadd.xlane.f32.xlu0 %v632
        %v662 = vpop.xlane.xlu0 %661
        %663 = vadd.xlane.f32.xlu0 %v633
        %v664 = vpop.xlane.xlu0 %663
        %665 = vadd.xlane.f32.xlu0 %v634
        %v666 = vpop.xlane.xlu0 %665
        %v667 = vmul.f32 %v636, %v586
        %v668 = vmul.f32 %v638, %v586
        %v669 = vmul.f32 %v640, %v586
        %v670 = vmul.f32 %v642, %v586
        %v671 = vmul.f32 %v644, %v586
        %v672 = vmul.f32 %v646, %v586
        %v673 = vmul.f32 %v648, %v586
        %v674 = vmul.f32 %v650, %v586
        %v675 = vmul.f32 %v652, %v586
        %v676 = vmul.f32 %v654, %v586
        %v677 = vmul.f32 %v656, %v586
        %v678 = vmul.f32 %v658, %v586
        %v679 = vmul.f32 %v660, %v586
        %v680 = vmul.f32 %v662, %v586
        %v681 = vmul.f32 %v664, %v586
        %v682 = vmul.f32 %v666, %v586
        %v683 = vadd.f32 %v667, 1e-05
        %v684 = vadd.f32 %v668, 1e-05
        %v685 = vadd.f32 %v669, 1e-05
        %v686 = vadd.f32 %v670, 1e-05
        %v687 = vadd.f32 %v671, 1e-05
        %v688 = vadd.f32 %v672, 1e-05
        %v689 = vadd.f32 %v673, 1e-05
        %v690 = vadd.f32 %v674, 1e-05
        %v691 = vadd.f32 %v675, 1e-05
        %v692 = vadd.f32 %v676, 1e-05
        %v693 = vadd.f32 %v677, 1e-05
        %v694 = vadd.f32 %v678, 1e-05
        %v695 = vadd.f32 %v679, 1e-05
        %v696 = vadd.f32 %v680, 1e-05
        %v697 = vadd.f32 %v681, 1e-05
        %v698 = vadd.f32 %v682, 1e-05
        %v699 = vrsqrt.pop %v683
        %v700 = vmul.f32 %v699, %v683
        %v701 = vmul.f32 %v700, %v699
        %v702 = vmul.f32 0.5, %v701
        %v703 = vsub.f32 1.5, %v702
        %v704 = vmul.f32 %v699, %v703
        %vm705 = vweird.f32 %v683
        %vm706 = vweird.f32 %v699
        %vm707 = vmor %vm705, %vm706
        %v708 = vsel %vm707, %v699, %v704
        %v709 = vrsqrt.pop %v684
        %v710 = vmul.f32 %v709, %v684
        %v711 = vmul.f32 %v710, %v709
        %v712 = vmul.f32 0.5, %v711
        %v713 = vsub.f32 1.5, %v712
        %v714 = vmul.f32 %v709, %v713
        %vm715 = vweird.f32 %v684
        %vm716 = vweird.f32 %v709
        %vm717 = vmor %vm715, %vm716
        %v718 = vsel %vm717, %v709, %v714
        %v719 = vrsqrt.pop %v685
        %v720 = vmul.f32 %v719, %v685
        %v721 = vmul.f32 %v720, %v719
        %v722 = vmul.f32 0.5, %v721
        %v723 = vsub.f32 1.5, %v722
        %v724 = vmul.f32 %v719, %v723
        %vm725 = vweird.f32 %v685
        %vm726 = vweird.f32 %v719
        %vm727 = vmor %vm725, %vm726
        %v728 = vsel %vm727, %v719, %v724
        %v729 = vrsqrt.pop %v686
        %v730 = vmul.f32 %v729, %v686
        %v731 = vmul.f32 %v730, %v729
        %v732 = vmul.f32 0.5, %v731
        %v733 = vsub.f32 1.5, %v732
        %v734 = vmul.f32 %v729, %v733
        %vm735 = vweird.f32 %v686
        %vm736 = vweird.f32 %v729
        %vm737 = vmor %vm735, %vm736
        %v738 = vsel %vm737, %v729, %v734
        %v739 = vrsqrt.pop %v687
        %v740 = vmul.f32 %v739, %v687
        %v741 = vmul.f32 %v740, %v739
        %v742 = vmul.f32 0.5, %v741
        %v743 = vsub.f32 1.5, %v742
        %v744 = vmul.f32 %v739, %v743
        %vm745 = vweird.f32 %v687
        %vm746 = vweird.f32 %v739
        %vm747 = vmor %vm745, %vm746
        %v748 = vsel %vm747, %v739, %v744
        %v749 = vrsqrt.pop %v688
        %v750 = vmul.f32 %v749, %v688
        %v751 = vmul.f32 %v750, %v749
        %v752 = vmul.f32 0.5, %v751
        %v753 = vsub.f32 1.5, %v752
        %v754 = vmul.f32 %v749, %v753
        %vm755 = vweird.f32 %v688
        %vm756 = vweird.f32 %v749
        %vm757 = vmor %vm755, %vm756
        %v758 = vsel %vm757, %v749, %v754
        %v759 = vrsqrt.pop %v689
        %v760 = vmul.f32 %v759, %v689
        %v761 = vmul.f32 %v760, %v759
        %v762 = vmul.f32 0.5, %v761
        %v763 = vsub.f32 1.5, %v762
        %v764 = vmul.f32 %v759, %v763
        %vm765 = vweird.f32 %v689
        %vm766 = vweird.f32 %v759
        %vm767 = vmor %vm765, %vm766
        %v768 = vsel %vm767, %v759, %v764
        %v769 = vrsqrt.pop %v690
        %v770 = vmul.f32 %v769, %v690
        %v771 = vmul.f32 %v770, %v769
        %v772 = vmul.f32 0.5, %v771
        %v773 = vsub.f32 1.5, %v772
        %v774 = vmul.f32 %v769, %v773
        %vm775 = vweird.f32 %v690
        %vm776 = vweird.f32 %v769
        %vm777 = vmor %vm775, %vm776
        %v778 = vsel %vm777, %v769, %v774
        %v779 = vrsqrt.pop %v691
        %v780 = vmul.f32 %v779, %v691
        %v781 = vmul.f32 %v780, %v779
        %v782 = vmul.f32 0.5, %v781
        %v783 = vsub.f32 1.5, %v782
        %v784 = vmul.f32 %v779, %v783
        %vm785 = vweird.f32 %v691
        %vm786 = vweird.f32 %v779
        %vm787 = vmor %vm785, %vm786
        %v788 = vsel %vm787, %v779, %v784
        %v789 = vrsqrt.pop %v692
        %v790 = vmul.f32 %v789, %v692
        %v791 = vmul.f32 %v790, %v789
        %v792 = vmul.f32 0.5, %v791
        %v793 = vsub.f32 1.5, %v792
        %v794 = vmul.f32 %v789, %v793
        %vm795 = vweird.f32 %v692
        %vm796 = vweird.f32 %v789
        %vm797 = vmor %vm795, %vm796
        %v798 = vsel %vm797, %v789, %v794
        %v799 = vrsqrt.pop %v693
        %v800 = vmul.f32 %v799, %v693
        %v801 = vmul.f32 %v800, %v799
        %v802 = vmul.f32 0.5, %v801
        %v803 = vsub.f32 1.5, %v802
        %v804 = vmul.f32 %v799, %v803
        %vm805 = vweird.f32 %v693
        %vm806 = vweird.f32 %v799
        %vm807 = vmor %vm805, %vm806
        %v808 = vsel %vm807, %v799, %v804
        %v809 = vrsqrt.pop %v694
        %v810 = vmul.f32 %v809, %v694
        %v811 = vmul.f32 %v810, %v809
        %v812 = vmul.f32 0.5, %v811
        %v813 = vsub.f32 1.5, %v812
        %v814 = vmul.f32 %v809, %v813
        %vm815 = vweird.f32 %v694
        %vm816 = vweird.f32 %v809
        %vm817 = vmor %vm815, %vm816
        %v818 = vsel %vm817, %v809, %v814
        %v819 = vrsqrt.pop %v695
        %v820 = vmul.f32 %v819, %v695
        %v821 = vmul.f32 %v820, %v819
        %v822 = vmul.f32 0.5, %v821
        %v823 = vsub.f32 1.5, %v822
        %v824 = vmul.f32 %v819, %v823
        %vm825 = vweird.f32 %v695
        %vm826 = vweird.f32 %v819
        %vm827 = vmor %vm825, %vm826
        %v828 = vsel %vm827, %v819, %v824
        %v829 = vrsqrt.pop %v696
        %v830 = vmul.f32 %v829, %v696
        %v831 = vmul.f32 %v830, %v829
        %v832 = vmul.f32 0.5, %v831
        %v833 = vsub.f32 1.5, %v832
        %v834 = vmul.f32 %v829, %v833
        %vm835 = vweird.f32 %v696
        %vm836 = vweird.f32 %v829
        %vm837 = vmor %vm835, %vm836
        %v838 = vsel %vm837, %v829, %v834
        %v839 = vrsqrt.pop %v697
        %v840 = vmul.f32 %v839, %v697
        %v841 = vmul.f32 %v840, %v839
        %v842 = vmul.f32 0.5, %v841
        %v843 = vsub.f32 1.5, %v842
        %v844 = vmul.f32 %v839, %v843
        %vm845 = vweird.f32 %v697
        %vm846 = vweird.f32 %v839
        %vm847 = vmor %vm845, %vm846
        %v848 = vsel %vm847, %v839, %v844
        %v849 = vrsqrt.pop %v698
        %v850 = vmul.f32 %v849, %v698
        %v851 = vmul.f32 %v850, %v849
        %v852 = vmul.f32 0.5, %v851
        %v853 = vsub.f32 1.5, %v852
        %v854 = vmul.f32 %v849, %v853
        %vm855 = vweird.f32 %v698
        %vm856 = vweird.f32 %v849
        %vm857 = vmor %vm855, %vm856
        %v858 = vsel %vm857, %v849, %v854
        %v859 = vmul.f32 %v603, %v708
        %v860 = vmul.f32 %v604, %v718
        %v861 = vmul.f32 %v605, %v728
        %v862 = vmul.f32 %v606, %v738
        %v863 = vmul.f32 %v607, %v748
        %v864 = vmul.f32 %v608, %v758
        %v865 = vmul.f32 %v609, %v768
        %v866 = vmul.f32 %v610, %v778
        %v867 = vmul.f32 %v611, %v788
        %v868 = vmul.f32 %v612, %v798
        %v869 = vmul.f32 %v613, %v808
        %v870 = vmul.f32 %v614, %v818
        %v871 = vmul.f32 %v615, %v828
        %v872 = vmul.f32 %v616, %v838
        %v873 = vmul.f32 %v617, %v848
        %v874 = vmul.f32 %v618, %v858
        %v876 = vperm.slane %v546, 0
        %v878 = vmul.f32 %v859, %v876
        %v879 = vmul.f32 %v860, %v876
        %v880 = vmul.f32 %v861, %v876
        %v881 = vmul.f32 %v862, %v876
        %v882 = vmul.f32 %v863, %v876
        %v883 = vmul.f32 %v864, %v876
        %v884 = vmul.f32 %v865, %v876
        %v885 = vmul.f32 %v866, %v876
        %v886 = vmul.f32 %v867, %v876
        %v887 = vmul.f32 %v868, %v876
        %v888 = vmul.f32 %v869, %v876
        %v889 = vmul.f32 %v870, %v876
        %v890 = vmul.f32 %v871, %v876
        %v891 = vmul.f32 %v872, %v876
        %v892 = vmul.f32 %v873, %v876
        %v893 = vmul.f32 %v874, %v876
        %v895 = vperm.slane %v547, 0
        %v897 = vadd.f32 %v878, %v895
        %v898 = vadd.f32 %v879, %v895
        %v899 = vadd.f32 %v880, %v895
        %v900 = vadd.f32 %v881, %v895
        %v901 = vadd.f32 %v882, %v895
        %v902 = vadd.f32 %v883, %v895
        %v903 = vadd.f32 %v884, %v895
        %v904 = vadd.f32 %v885, %v895
        %v905 = vadd.f32 %v886, %v895
        %v906 = vadd.f32 %v887, %v895
        %v907 = vadd.f32 %v888, %v895
        %v908 = vadd.f32 %v889, %v895
        %v909 = vadd.f32 %v890, %v895
        %v910 = vadd.f32 %v891, %v895
        %v911 = vadd.f32 %v892, %v895
        %v912 = vadd.f32 %v893, %v895
        %v913 = vpack.c.bf16 %v898, %v897
        %v914 = vpack.c.bf16 %v900, %v899
        %v915 = vpack.c.bf16 %v902, %v901
        %v916 = vpack.c.bf16 %v904, %v903
        %v917 = vpack.c.bf16 %v906, %v905
        %v918 = vpack.c.bf16 %v908, %v907
        %v919 = vpack.c.bf16 %v910, %v909
        %v920 = vpack.c.bf16 %v912, %v911
        %v921 = vld [vmem:[#allocation7] sm:$0xff]
        %v922 = vld [vmem:[#allocation7 + $0x8] sm:$0xf]
        %v923 = vld [vmem:[#allocation7 + $0xc] sm:$0xff]
        %v924 = vld [vmem:[#allocation7 + $0x14] sm:$0xf]
        %v925 = vld [vmem:[#allocation7 + $0x18] sm:$0xff]
        %v926 = vld [vmem:[#allocation7 + $0x20] sm:$0xf]
        %v927 = vld [vmem:[#allocation7 + $0x24] sm:$0xff]
        %v928 = vld [vmem:[#allocation7 + $0x2c] sm:$0xf]
        %v929 = vld [vmem:[#allocation7 + $0x30] sm:$0xff]
        %v930 = vld [vmem:[#allocation7 + $0x38] sm:$0xf]
        %v931 = vld [vmem:[#allocation7 + $0x3c] sm:$0xff]
        %v932 = vld [vmem:[#allocation7 + $0x44] sm:$0xf]
        %v933 = vld [vmem:[#allocation7 + $0x48] sm:$0xff]
        %v934 = vld [vmem:[#allocation7 + $0x50] sm:$0xf]
        %v935 = vld [vmem:[#allocation7 + $0x54] sm:$0xff]
        %v936 = vld [vmem:[#allocation7 + $0x5c] sm:$0xf]
        %v937 = vld [vmem:[#allocation7 + $0x60] sm:$0xff]
        %v938 = vld [vmem:[#allocation7 + $0x68] sm:$0xf]
        %v939 = vld [vmem:[#allocation7 + $0x6c] sm:$0xff]
        %v940 = vld [vmem:[#allocation7 + $0x74] sm:$0xf]
        %v941 = vld [vmem:[#allocation7 + $0x78] sm:$0xff]
        %v942 = vld [vmem:[#allocation7 + $0x80] sm:$0xf]
        %v943 = vld [vmem:[#allocation7 + $0x84] sm:$0xff]
        %v944 = vld [vmem:[#allocation7 + $0x8c] sm:$0xf]
        %v945 = vld [vmem:[#allocation7 + $0x90] sm:$0xff]
        %v946 = vld [vmem:[#allocation7 + $0x98] sm:$0xf]
        %v947 = vld [vmem:[#allocation7 + $0x9c] sm:$0xff]
        %v948 = vld [vmem:[#allocation7 + $0xa4] sm:$0xf]
        %v949 = vld [vmem:[#allocation7 + $0xa8] sm:$0xff]
        %v950 = vld [vmem:[#allocation7 + $0xb0] sm:$0xf]
        %v951 = vld [vmem:[#allocation7 + $0xb4] sm:$0xff]
        %v952 = vld [vmem:[#allocation7 + $0xbc] sm:$0xf]
        %v985 = vunpack.c.l.b16 %v921
        %v986 = vunpack.c.h.b16 %v921
        %v987 = vunpack.c.l.b16 %v922
        %v988 = vunpack.c.l.b16 %v923
        %v989 = vunpack.c.h.b16 %v923
        %v990 = vunpack.c.l.b16 %v924
        %v991 = vunpack.c.l.b16 %v925
        %v992 = vunpack.c.h.b16 %v925
        %v993 = vunpack.c.l.b16 %v926
        %v994 = vunpack.c.l.b16 %v927
        %v995 = vunpack.c.h.b16 %v927
        %v996 = vunpack.c.l.b16 %v928
        %v997 = vunpack.c.l.b16 %v929
        %v998 = vunpack.c.h.b16 %v929
        %v999 = vunpack.c.l.b16 %v930
        %v1000 = vunpack.c.l.b16 %v931
        %v1001 = vunpack.c.h.b16 %v931
        %v1002 = vunpack.c.l.b16 %v932
        %v1003 = vunpack.c.l.b16 %v933
        %v1004 = vunpack.c.h.b16 %v933
        %v1005 = vunpack.c.l.b16 %v934
        %v1006 = vunpack.c.l.b16 %v935
        %v1007 = vunpack.c.h.b16 %v935
        %v1008 = vunpack.c.l.b16 %v936
        %v1009 = vunpack.c.l.b16 %v937
        %v1010 = vunpack.c.h.b16 %v937
        %v1011 = vunpack.c.l.b16 %v938
        %v1012 = vunpack.c.l.b16 %v939
        %v1013 = vunpack.c.h.b16 %v939
        %v1014 = vunpack.c.l.b16 %v940
        %v1015 = vunpack.c.l.b16 %v941
        %v1016 = vunpack.c.h.b16 %v941
        %v1017 = vunpack.c.l.b16 %v942
        %v1018 = vunpack.c.l.b16 %v943
        %v1019 = vunpack.c.h.b16 %v943
        %v1020 = vunpack.c.l.b16 %v944
        %v1021 = vunpack.c.l.b16 %v945
        %v1022 = vunpack.c.h.b16 %v945
        %v1023 = vunpack.c.l.b16 %v946
        %v1024 = vunpack.c.l.b16 %v947
        %v1025 = vunpack.c.h.b16 %v947
        %v1026 = vunpack.c.l.b16 %v948
        %v1027 = vunpack.c.l.b16 %v949
        %v1028 = vunpack.c.h.b16 %v949
        %v1029 = vunpack.c.l.b16 %v950
        %v1030 = vunpack.c.l.b16 %v951
        %v1031 = vunpack.c.h.b16 %v951
        %v1032 = vunpack.c.l.b16 %v952
        %v1033 = vpack.c.b16 %v988, %v985
        %v1034 = vpack.c.b16 %v989, %v986
        %v1035 = vpack.c.b16 %v990, %v987
        %v1036 = vpack.c.b16 %v994, %v991
        %v1037 = vpack.c.b16 %v995, %v992
        %v1038 = vpack.c.b16 %v996, %v993
        %v1039 = vpack.c.b16 %v1000, %v997
        %v1040 = vpack.c.b16 %v1001, %v998
        %v1041 = vpack.c.b16 %v1002, %v999
        %v1042 = vpack.c.b16 %v1006, %v1003
        %v1043 = vpack.c.b16 %v1007, %v1004
        %v1044 = vpack.c.b16 %v1008, %v1005
        %v1045 = vpack.c.b16 %v1012, %v1009
        %v1046 = vpack.c.b16 %v1013, %v1010
        %v1047 = vpack.c.b16 %v1014, %v1011
        %v1048 = vpack.c.b16 %v1018, %v1015
        %v1049 = vpack.c.b16 %v1019, %v1016
        %v1050 = vpack.c.b16 %v1020, %v1017
        %v1051 = vpack.c.b16 %v1024, %v1021
        %v1052 = vpack.c.b16 %v1025, %v1022
        %v1053 = vpack.c.b16 %v1026, %v1023
        %v1054 = vpack.c.b16 %v1030, %v1027
        %v1055 = vpack.c.b16 %v1031, %v1028
        %v1056 = vpack.c.b16 %v1032, %v1029
        %1081 = vmatpush.bf16.msra.mxu0 %v1054
        %1082 = vmatpush.bf16.msra.mxu0 %v1051
        %1083 = vmatpush.bf16.msra.mxu0 %v1048
        %1084 = vmatpush.bf16.msra.mxu0 %v1045
        %1085 = vmatpush.bf16.msra.mxu0 %v1042
        %1086 = vmatpush.bf16.msra.mxu0 %v1039
        %1087 = vmatpush.bf16.msra.mxu0 %v1036
        %1088 = vmatpush.bf16.msra.mxu0 %v1033
        %1089 = vmatmul.bf16.gmra.mxu0 %v913
        %v1090 = vpop.f32.mrf.mxu0
        %v1091 = vadd.f32 0.0, %v1090
        %v1092 = vpop.f32.mrf.mxu0
        %v1093 = vadd.f32 0.0, %v1092
        %1094 = vmatmul.bf16.gmra.mxu0 %v914
        %v1095 = vpop.f32.mrf.mxu0
        %v1096 = vadd.f32 0.0, %v1095
        %v1097 = vpop.f32.mrf.mxu0
        %v1098 = vadd.f32 0.0, %v1097
        %1099 = vmatmul.bf16.gmra.mxu0 %v915
        %v1100 = vpop.f32.mrf.mxu0
        %v1101 = vadd.f32 0.0, %v1100
        %v1102 = vpop.f32.mrf.mxu0
        %v1103 = vadd.f32 0.0, %v1102
        %1104 = vmatmul.bf16.gmra.mxu0 %v916
        %v1105 = vpop.f32.mrf.mxu0
        %v1106 = vadd.f32 0.0, %v1105
        %v1107 = vpop.f32.mrf.mxu0
        %v1108 = vadd.f32 0.0, %v1107
        %1109 = vmatmul.bf16.gmra.mxu0 %v917
        %v1110 = vpop.f32.mrf.mxu0
        %v1111 = vadd.f32 0.0, %v1110
        %v1112 = vpop.f32.mrf.mxu0
        %v1113 = vadd.f32 0.0, %v1112
        %1114 = vmatmul.bf16.gmra.mxu0 %v918
        %v1115 = vpop.f32.mrf.mxu0
        %v1116 = vadd.f32 0.0, %v1115
        %v1117 = vpop.f32.mrf.mxu0
        %v1118 = vadd.f32 0.0, %v1117
        %1119 = vmatmul.bf16.gmra.mxu0 %v919
        %v1120 = vpop.f32.mrf.mxu0
        %v1121 = vadd.f32 0.0, %v1120
        %v1122 = vpop.f32.mrf.mxu0
        %v1123 = vadd.f32 0.0, %v1122
        %1124 = vmatmul.bf16.gmra.mxu0 %v920
        %v1125 = vpop.f32.mrf.mxu0
        %v1126 = vadd.f32 0.0, %v1125
        %v1127 = vpop.f32.mrf.mxu0
        %v1128 = vadd.f32 0.0, %v1127
        %1129 = vdwg.mxu0
        %1130 = vmatpush.bf16.msra.mxu0 %v1055
        %1131 = vmatpush.bf16.msra.mxu0 %v1052
        %1132 = vmatpush.bf16.msra.mxu0 %v1049
        %1133 = vmatpush.bf16.msra.mxu0 %v1046
        %1134 = vmatpush.bf16.msra.mxu0 %v1043
        %1135 = vmatpush.bf16.msra.mxu0 %v1040
        %1136 = vmatpush.bf16.msra.mxu0 %v1037
        %1137 = vmatpush.bf16.msra.mxu0 %v1034
        %1138 = vmatmul.bf16.gmra.mxu0 %v913
        %v1139 = vpop.f32.mrf.mxu0
        %v1140 = vadd.f32 0.0, %v1139
        %v1141 = vpop.f32.mrf.mxu0
        %v1142 = vadd.f32 0.0, %v1141
        %1143 = vmatmul.bf16.gmra.mxu0 %v914
        %v1144 = vpop.f32.mrf.mxu0
        %v1145 = vadd.f32 0.0, %v1144
        %v1146 = vpop.f32.mrf.mxu0
        %v1147 = vadd.f32 0.0, %v1146
        %1148 = vmatmul.bf16.gmra.mxu0 %v915
        %v1149 = vpop.f32.mrf.mxu0
        %v1150 = vadd.f32 0.0, %v1149
        %v1151 = vpop.f32.mrf.mxu0
        %v1152 = vadd.f32 0.0, %v1151
        %1153 = vmatmul.bf16.gmra.mxu0 %v916
        %v1154 = vpop.f32.mrf.mxu0
        %v1155 = vadd.f32 0.0, %v1154
        %v1156 = vpop.f32.mrf.mxu0
        %v1157 = vadd.f32 0.0, %v1156
        %1158 = vmatmul.bf16.gmra.mxu0 %v917
        %v1159 = vpop.f32.mrf.mxu0
        %v1160 = vadd.f32 0.0, %v1159
        %v1161 = vpop.f32.mrf.mxu0
        %v1162 = vadd.f32 0.0, %v1161
        %1163 = vmatmul.bf16.gmra.mxu0 %v918
        %v1164 = vpop.f32.mrf.mxu0
        %v1165 = vadd.f32 0.0, %v1164
        %v1166 = vpop.f32.mrf.mxu0
        %v1167 = vadd.f32 0.0, %v1166
        %1168 = vmatmul.bf16.gmra.mxu0 %v919
        %v1169 = vpop.f32.mrf.mxu0
        %v1170 = vadd.f32 0.0, %v1169
        %v1171 = vpop.f32.mrf.mxu0
        %v1172 = vadd.f32 0.0, %v1171
        %1173 = vmatmul.bf16.gmra.mxu0 %v920
        %v1174 = vpop.f32.mrf.mxu0
        %v1175 = vadd.f32 0.0, %v1174
        %v1176 = vpop.f32.mrf.mxu0
        %v1177 = vadd.f32 0.0, %v1176
        %1178 = vdwg.mxu0
        %1179 = vmatpush.bf16.msra.mxu0 %v1056
        %1180 = vmatpush.bf16.msra.mxu0 %v1053
        %1181 = vmatpush.bf16.msra.mxu0 %v1050
        %1182 = vmatpush.bf16.msra.mxu0 %v1047
        %1183 = vmatpush.bf16.msra.mxu0 %v1044
        %1184 = vmatpush.bf16.msra.mxu0 %v1041
        %1185 = vmatpush.bf16.msra.mxu0 %v1038
        %1186 = vmatpush.bf16.msra.mxu0 %v1035
        %1187 = vmatmul.bf16.gmra.mxu0 %v913
        %v1188 = vpop.f32.mrf.mxu0
        %v1189 = vadd.f32 0.0, %v1188
        %v1190 = vpop.f32.mrf.mxu0
        %v1191 = vadd.f32 0.0, %v1190
        %1192 = vmatmul.bf16.gmra.mxu0 %v914
        %v1193 = vpop.f32.mrf.mxu0
        %v1194 = vadd.f32 0.0, %v1193
        %v1195 = vpop.f32.mrf.mxu0
        %v1196 = vadd.f32 0.0, %v1195
        %1197 = vmatmul.bf16.gmra.mxu0 %v915
        %v1198 = vpop.f32.mrf.mxu0
        %v1199 = vadd.f32 0.0, %v1198
        %v1200 = vpop.f32.mrf.mxu0
        %v1201 = vadd.f32 0.0, %v1200
        %1202 = vmatmul.bf16.gmra.mxu0 %v916
        %v1203 = vpop.f32.mrf.mxu0
        %v1204 = vadd.f32 0.0, %v1203
        %v1205 = vpop.f32.mrf.mxu0
        %v1206 = vadd.f32 0.0, %v1205
        %1207 = vmatmul.bf16.gmra.mxu0 %v917
        %v1208 = vpop.f32.mrf.mxu0
        %v1209 = vadd.f32 0.0, %v1208
        %v1210 = vpop.f32.mrf.mxu0
        %v1211 = vadd.f32 0.0, %v1210
        %1212 = vmatmul.bf16.gmra.mxu0 %v918
        %v1213 = vpop.f32.mrf.mxu0
        %v1214 = vadd.f32 0.0, %v1213
        %v1215 = vpop.f32.mrf.mxu0
        %v1216 = vadd.f32 0.0, %v1215
        %1217 = vmatmul.bf16.gmra.mxu0 %v919
        %v1218 = vpop.f32.mrf.mxu0
        %v1219 = vadd.f32 0.0, %v1218
        %v1220 = vpop.f32.mrf.mxu0
        %v1221 = vadd.f32 0.0, %v1220
        %1222 = vmatmul.bf16.gmra.mxu0 %v920
        %v1223 = vpop.f32.mrf.mxu0
        %v1224 = vadd.f32 0.0, %v1223
        %v1225 = vpop.f32.mrf.mxu0
        %v1226 = vadd.f32 0.0, %v1225
        %1227 = vdwg.mxu0
        %v1228 = vlaneseq
        %v1229 = vand.u32 %v1228, 127
        %vm1230 = vcmp.lt.s32.totalorder %v1229, 16
        %v1231 = vsel %vm1230, 0.0, -1e+30
        %v1232 = vmul.f32 %v1091, 0.17677669
        %v1233 = vmul.f32 %v1093, 0.17677669
        %v1234 = vmul.f32 %v1096, 0.17677669
        %v1235 = vmul.f32 %v1098, 0.17677669
        %v1236 = vmul.f32 %v1101, 0.17677669
        %v1237 = vmul.f32 %v1103, 0.17677669
        %v1238 = vmul.f32 %v1106, 0.17677669
        %v1239 = vmul.f32 %v1108, 0.17677669
        %v1240 = vmul.f32 %v1111, 0.17677669
        %v1241 = vmul.f32 %v1113, 0.17677669
        %v1242 = vmul.f32 %v1116, 0.17677669
        %v1243 = vmul.f32 %v1118, 0.17677669
        %v1244 = vmul.f32 %v1121, 0.17677669
        %v1245 = vmul.f32 %v1123, 0.17677669
        %v1246 = vmul.f32 %v1126, 0.17677669
        %v1247 = vmul.f32 %v1128, 0.17677669
        %v1248 = vpack.c.bf16 %v1233, %v1232
        %v1249 = vpack.c.bf16 %v1235, %v1234
        %v1250 = vpack.c.bf16 %v1237, %v1236
        %v1251 = vpack.c.bf16 %v1239, %v1238
        %v1252 = vpack.c.bf16 %v1241, %v1240
        %v1253 = vpack.c.bf16 %v1243, %v1242
        %v1254 = vpack.c.bf16 %v1245, %v1244
        %v1255 = vpack.c.bf16 %v1247, %v1246
        %v1256 = vpack.c.bf16 %v1142, %v1140
        %v1257 = vpack.c.bf16 %v1147, %v1145
        %v1258 = vpack.c.bf16 %v1152, %v1150
        %v1259 = vpack.c.bf16 %v1157, %v1155
        %v1260 = vpack.c.bf16 %v1162, %v1160
        %v1261 = vpack.c.bf16 %v1167, %v1165
        %v1262 = vpack.c.bf16 %v1172, %v1170
        %v1263 = vpack.c.bf16 %v1177, %v1175
        %v1264 = vpack.c.bf16 %v1191, %v1189
        %v1265 = vpack.c.bf16 %v1196, %v1194
        %v1266 = vpack.c.bf16 %v1201, %v1199
        %v1267 = vpack.c.bf16 %v1206, %v1204
        %v1268 = vpack.c.bf16 %v1211, %v1209
        %v1269 = vpack.c.bf16 %v1216, %v1214
        %v1270 = vpack.c.bf16 %v1221, %v1219
        %v1271 = vpack.c.bf16 %v1226, %v1224
        %vm1272 = vcmask 261120
        %v1274 = vsel %vm1272, %v1248, 0
        %v1277 = vsel %vm1272, %v1249, 0
        %v1280 = vsel %vm1272, %v1250, 0
        %v1283 = vsel %vm1272, %v1251, 0
        %v1286 = vsel %vm1272, %v1252, 0
        %v1289 = vsel %vm1272, %v1253, 0
        %v1292 = vsel %vm1272, %v1254, 0
        %v1295 = vsel %vm1272, %v1255, 0
        %v1298 = vsel %vm1272, %v1256, 0
        %v1301 = vsel %vm1272, %v1257, 0
        %v1304 = vsel %vm1272, %v1258, 0
        %v1307 = vsel %vm1272, %v1259, 0
        %v1310 = vsel %vm1272, %v1260, 0
        %v1313 = vsel %vm1272, %v1261, 0
        %v1316 = vsel %vm1272, %v1262, 0
        %v1319 = vsel %vm1272, %v1263, 0
        %1321 = vmatpush.bf16.xpose.msra.mxu0 %v1319
        %1322 = vmatpush.bf16.xpose.msra.mxu0 %v1316
        %1323 = vmatpush.bf16.xpose.msra.mxu0 %v1313
        %1324 = vmatpush.bf16.xpose.msra.mxu0 %v1310
        %1325 = vmatpush.bf16.xpose.msra.mxu0 %v1307
        %1326 = vmatpush.bf16.xpose.msra.mxu0 %v1304
        %1327 = vmatpush.bf16.xpose.msra.mxu0 %v1301
        %1328 = vmatpush.bf16.xpose.msra.mxu0 %v1298
        %1329 = vmatmul.bf16.gmra.mxu0 %v1274
        %v1330 = vpop.f32.mrf.mxu0
        %v1331 = vadd.f32 %v1231, %v1330
        %v1332 = vpop.f32.mrf.mxu0
        %v1333 = vadd.f32 %v1231, %v1332
        %1334 = vmatmul.bf16.gmra.mxu0 %v1277
        %v1335 = vpop.f32.mrf.mxu0
        %v1336 = vadd.f32 %v1231, %v1335
        %v1337 = vpop.f32.mrf.mxu0
        %v1338 = vadd.f32 %v1231, %v1337
        %1339 = vmatmul.bf16.gmra.mxu0 %v1280
        %v1340 = vpop.f32.mrf.mxu0
        %v1341 = vadd.f32 %v1231, %v1340
        %v1342 = vpop.f32.mrf.mxu0
        %v1343 = vadd.f32 %v1231, %v1342
        %1344 = vmatmul.bf16.gmra.mxu0 %v1283
        %v1345 = vpop.f32.mrf.mxu0
        %v1346 = vadd.f32 %v1231, %v1345
        %v1347 = vpop.f32.mrf.mxu0
        %v1348 = vadd.f32 %v1231, %v1347
        %1349 = vmatmul.bf16.gmra.mxu0 %v1286
        %v1350 = vpop.f32.mrf.mxu0
        %v1351 = vadd.f32 %v1231, %v1350
        %v1352 = vpop.f32.mrf.mxu0
        %v1353 = vadd.f32 %v1231, %v1352
        %1354 = vmatmul.bf16.gmra.mxu0 %v1289
        %v1355 = vpop.f32.mrf.mxu0
        %v1356 = vadd.f32 %v1231, %v1355
        %v1357 = vpop.f32.mrf.mxu0
        %v1358 = vadd.f32 %v1231, %v1357
        %1359 = vmatmul.bf16.gmra.mxu0 %v1292
        %v1360 = vpop.f32.mrf.mxu0
        %v1361 = vadd.f32 %v1231, %v1360
        %v1362 = vpop.f32.mrf.mxu0
        %v1363 = vadd.f32 %v1231, %v1362
        %1364 = vmatmul.bf16.gmra.mxu0 %v1295
        %v1365 = vpop.f32.mrf.mxu0
        %v1366 = vadd.f32 %v1231, %v1365
        %v1367 = vpop.f32.mrf.mxu0
        %v1368 = vadd.f32 %v1231, %v1367
        %1369 = vdwg.mxu0
        %1370 = vmax.xlane.f32.xlu0 %v1331
        %v1371 = vpop.xlane.xlu0 %1370
        %1372 = vmax.xlane.f32.xlu0 %v1333
        %v1373 = vpop.xlane.xlu0 %1372
        %1374 = vmax.xlane.f32.xlu0 %v1336
        %v1375 = vpop.xlane.xlu0 %1374
        %1376 = vmax.xlane.f32.xlu0 %v1338
        %v1377 = vpop.xlane.xlu0 %1376
        %1378 = vmax.xlane.f32.xlu0 %v1341
        %v1379 = vpop.xlane.xlu0 %1378
        %1380 = vmax.xlane.f32.xlu0 %v1343
        %v1381 = vpop.xlane.xlu0 %1380
        %1382 = vmax.xlane.f32.xlu0 %v1346
        %v1383 = vpop.xlane.xlu0 %1382
        %1384 = vmax.xlane.f32.xlu0 %v1348
        %v1385 = vpop.xlane.xlu0 %1384
        %1386 = vmax.xlane.f32.xlu0 %v1351
        %v1387 = vpop.xlane.xlu0 %1386
        %1388 = vmax.xlane.f32.xlu0 %v1353
        %v1389 = vpop.xlane.xlu0 %1388
        %1390 = vmax.xlane.f32.xlu0 %v1356
        %v1391 = vpop.xlane.xlu0 %1390
        %1392 = vmax.xlane.f32.xlu0 %v1358
        %v1393 = vpop.xlane.xlu0 %1392
        %1394 = vmax.xlane.f32.xlu0 %v1361
        %v1395 = vpop.xlane.xlu0 %1394
        %1396 = vmax.xlane.f32.xlu0 %v1363
        %v1397 = vpop.xlane.xlu0 %1396
        %1398 = vmax.xlane.f32.xlu0 %v1366
        %v1399 = vpop.xlane.xlu0 %1398
        %1400 = vmax.xlane.f32.xlu0 %v1368
        %v1401 = vpop.xlane.xlu0 %1400
        %v1402 = vsub.f32 %v1331, %v1371
        %v1403 = vsub.f32 %v1333, %v1373
        %v1404 = vsub.f32 %v1336, %v1375
        %v1405 = vsub.f32 %v1338, %v1377
        %v1406 = vsub.f32 %v1341, %v1379
        %v1407 = vsub.f32 %v1343, %v1381
        %v1408 = vsub.f32 %v1346, %v1383
        %v1409 = vsub.f32 %v1348, %v1385
        %v1410 = vsub.f32 %v1351, %v1387
        %v1411 = vsub.f32 %v1353, %v1389
        %v1412 = vsub.f32 %v1356, %v1391
        %v1413 = vsub.f32 %v1358, %v1393
        %v1414 = vsub.f32 %v1361, %v1395
        %v1415 = vsub.f32 %v1363, %v1397
        %v1416 = vsub.f32 %v1366, %v1399
        %v1417 = vsub.f32 %v1368, %v1401
        %v1418 = vmul.f32 %v1402, 1.442695
        %v1419 = vpow.pop %v1418
        %v1420 = vmul.f32 %v1403, 1.442695
        %v1421 = vpow.pop %v1420
        %v1422 = vmul.f32 %v1404, 1.442695
        %v1423 = vpow.pop %v1422
        %v1424 = vmul.f32 %v1405, 1.442695
        %v1425 = vpow.pop %v1424
        %v1426 = vmul.f32 %v1406, 1.442695
        %v1427 = vpow.pop %v1426
        %v1428 = vmul.f32 %v1407, 1.442695
        %v1429 = vpow.pop %v1428
        %v1430 = vmul.f32 %v1408, 1.442695
        %v1431 = vpow.pop %v1430
        %v1432 = vmul.f32 %v1409, 1.442695
        %v1433 = vpow.pop %v1432
        %v1434 = vmul.f32 %v1410, 1.442695
        %v1435 = vpow.pop %v1434
        %v1436 = vmul.f32 %v1411, 1.442695
        %v1437 = vpow.pop %v1436
        %v1438 = vmul.f32 %v1412, 1.442695
        %v1439 = vpow.pop %v1438
        %v1440 = vmul.f32 %v1413, 1.442695
        %v1441 = vpow.pop %v1440
        %v1442 = vmul.f32 %v1414, 1.442695
        %v1443 = vpow.pop %v1442
        %v1444 = vmul.f32 %v1415, 1.442695
        %v1445 = vpow.pop %v1444
        %v1446 = vmul.f32 %v1416, 1.442695
        %v1447 = vpow.pop %v1446
        %v1448 = vmul.f32 %v1417, 1.442695
        %v1449 = vpow.pop %v1448
        %1450 = vadd.xlane.f32.xlu0 %v1419
        %v1451 = vpop.xlane.xlu0 %1450
        %1452 = vadd.xlane.f32.xlu0 %v1421
        %v1453 = vpop.xlane.xlu0 %1452
        %1454 = vadd.xlane.f32.xlu0 %v1423
        %v1455 = vpop.xlane.xlu0 %1454
        %1456 = vadd.xlane.f32.xlu0 %v1425
        %v1457 = vpop.xlane.xlu0 %1456
        %1458 = vadd.xlane.f32.xlu0 %v1427
        %v1459 = vpop.xlane.xlu0 %1458
        %1460 = vadd.xlane.f32.xlu0 %v1429
        %v1461 = vpop.xlane.xlu0 %1460
        %1462 = vadd.xlane.f32.xlu0 %v1431
        %v1463 = vpop.xlane.xlu0 %1462
        %1464 = vadd.xlane.f32.xlu0 %v1433
        %v1465 = vpop.xlane.xlu0 %1464
        %1466 = vadd.xlane.f32.xlu0 %v1435
        %v1467 = vpop.xlane.xlu0 %1466
        %1468 = vadd.xlane.f32.xlu0 %v1437
        %v1469 = vpop.xlane.xlu0 %1468
        %1470 = vadd.xlane.f32.xlu0 %v1439
        %v1471 = vpop.xlane.xlu0 %1470
        %1472 = vadd.xlane.f32.xlu0 %v1441
        %v1473 = vpop.xlane.xlu0 %1472
        %1474 = vadd.xlane.f32.xlu0 %v1443
        %v1475 = vpop.xlane.xlu0 %1474
        %1476 = vadd.xlane.f32.xlu0 %v1445
        %v1477 = vpop.xlane.xlu0 %1476
        %1478 = vadd.xlane.f32.xlu0 %v1447
        %v1479 = vpop.xlane.xlu0 %1478
        %1480 = vadd.xlane.f32.xlu0 %v1449
        %v1481 = vpop.xlane.xlu0 %1480
        %v1482 = vpack.c.bf16 %v1421, %v1419
        %v1483 = vpack.c.bf16 %v1425, %v1423
        %v1484 = vpack.c.bf16 %v1429, %v1427
        %v1485 = vpack.c.bf16 %v1433, %v1431
        %v1486 = vpack.c.bf16 %v1437, %v1435
        %v1487 = vpack.c.bf16 %v1441, %v1439
        %v1488 = vpack.c.bf16 %v1445, %v1443
        %v1489 = vpack.c.bf16 %v1449, %v1447
        %1490 = vmatpush.bf16.msra.mxu0 %v1271
        %1491 = vmatpush.bf16.msra.mxu0 %v1270
        %1492 = vmatpush.bf16.msra.mxu0 %v1269
        %1493 = vmatpush.bf16.msra.mxu0 %v1268
        %1494 = vmatpush.bf16.msra.mxu0 %v1267
        %1495 = vmatpush.bf16.msra.mxu0 %v1266
        %1496 = vmatpush.bf16.msra.mxu0 %v1265
        %1497 = vmatpush.bf16.msra.mxu0 %v1264
        %1498 = vmatmul.bf16.gmra.mxu0 %v1482
        %v1499 = vpop.f32.mrf.mxu0
        %v1500 = vadd.f32 0.0, %v1499
        %v1501 = vpop.f32.mrf.mxu0
        %v1502 = vadd.f32 0.0, %v1501
        %1503 = vmatmul.bf16.gmra.mxu0 %v1483
        %v1504 = vpop.f32.mrf.mxu0
        %v1505 = vadd.f32 0.0, %v1504
        %v1506 = vpop.f32.mrf.mxu0
        %v1507 = vadd.f32 0.0, %v1506
        %1508 = vmatmul.bf16.gmra.mxu0 %v1484
        %v1509 = vpop.f32.mrf.mxu0
        %v1510 = vadd.f32 0.0, %v1509
        %v1511 = vpop.f32.mrf.mxu0
        %v1512 = vadd.f32 0.0, %v1511
        %1513 = vmatmul.bf16.gmra.mxu0 %v1485
        %v1514 = vpop.f32.mrf.mxu0
        %v1515 = vadd.f32 0.0, %v1514
        %v1516 = vpop.f32.mrf.mxu0
        %v1517 = vadd.f32 0.0, %v1516
        %1518 = vmatmul.bf16.gmra.mxu0 %v1486
        %v1519 = vpop.f32.mrf.mxu0
        %v1520 = vadd.f32 0.0, %v1519
        %v1521 = vpop.f32.mrf.mxu0
        %v1522 = vadd.f32 0.0, %v1521
        %1523 = vmatmul.bf16.gmra.mxu0 %v1487
        %v1524 = vpop.f32.mrf.mxu0
        %v1525 = vadd.f32 0.0, %v1524
        %v1526 = vpop.f32.mrf.mxu0
        %v1527 = vadd.f32 0.0, %v1526
        %1528 = vmatmul.bf16.gmra.mxu0 %v1488
        %v1529 = vpop.f32.mrf.mxu0
        %v1530 = vadd.f32 0.0, %v1529
        %v1531 = vpop.f32.mrf.mxu0
        %v1532 = vadd.f32 0.0, %v1531
        %1533 = vmatmul.bf16.gmra.mxu0 %v1489
        %v1534 = vpop.f32.mrf.mxu0
        %v1535 = vadd.f32 0.0, %v1534
        %v1536 = vpop.f32.mrf.mxu0
        %v1537 = vadd.f32 0.0, %v1536
        %1538 = vdwg.mxu0
        %v1539 = vrcp.pop %v1451
        %v1540 = vrcp.pop %v1453
        %v1541 = vrcp.pop %v1455
        %v1542 = vrcp.pop %v1457
        %v1543 = vrcp.pop %v1459
        %v1544 = vrcp.pop %v1461
        %v1545 = vrcp.pop %v1463
        %v1546 = vrcp.pop %v1465
        %v1547 = vrcp.pop %v1467
        %v1548 = vrcp.pop %v1469
        %v1549 = vrcp.pop %v1471
        %v1550 = vrcp.pop %v1473
        %v1551 = vrcp.pop %v1475
        %v1552 = vrcp.pop %v1477
        %v1553 = vrcp.pop %v1479
        %v1554 = vrcp.pop %v1481
        %v1555 = vmul.f32 %v1500, %v1539
        %v1556 = vmul.f32 %v1502, %v1540
        %v1557 = vmul.f32 %v1505, %v1541
        %v1558 = vmul.f32 %v1507, %v1542
        %v1559 = vmul.f32 %v1510, %v1543
        %v1560 = vmul.f32 %v1512, %v1544
        %v1561 = vmul.f32 %v1515, %v1545
        %v1562 = vmul.f32 %v1517, %v1546
        %v1563 = vmul.f32 %v1520, %v1547
        %v1564 = vmul.f32 %v1522, %v1548
        %v1565 = vmul.f32 %v1525, %v1549
        %v1566 = vmul.f32 %v1527, %v1550
        %v1567 = vmul.f32 %v1530, %v1551
        %v1568 = vmul.f32 %v1532, %v1552
        %v1569 = vmul.f32 %v1535, %v1553
        %v1570 = vmul.f32 %v1537, %v1554
        %v1571 = vpack.c.bf16 %v1556, %v1555
        %v1572 = vpack.c.bf16 %v1558, %v1557
        %v1573 = vpack.c.bf16 %v1560, %v1559
        %v1574 = vpack.c.bf16 %v1562, %v1561
        %v1575 = vpack.c.bf16 %v1564, %v1563
        %v1576 = vpack.c.bf16 %v1566, %v1565
        %v1577 = vpack.c.bf16 %v1568, %v1567
        %v1578 = vpack.c.bf16 %v1570, %v1569
        %v1579 = vld [vmem:[#allocation8] sm:$0xf]
        %v1580 = vld [vmem:[#allocation8 + $0x4] sm:$0xf]
        %v1581 = vld [vmem:[#allocation8 + $0x8] sm:$0xf]
        %v1582 = vld [vmem:[#allocation8 + $0xc] sm:$0xf]
        %1591 = vrot.lane.b32.xlu0 %v1248, 96
        %v1592 = vpop.permute.xlu0 %1591
        %1593 = vrot.lane.b32.xlu0 %v1249, 96
        %v1594 = vpop.permute.xlu0 %1593
        %1595 = vrot.lane.b32.xlu0 %v1250, 96
        %v1596 = vpop.permute.xlu0 %1595
        %1597 = vrot.lane.b32.xlu0 %v1251, 96
        %v1598 = vpop.permute.xlu0 %1597
        %1599 = vrot.lane.b32.xlu0 %v1252, 96
        %v1600 = vpop.permute.xlu0 %1599
        %1601 = vrot.lane.b32.xlu0 %v1253, 96
        %v1602 = vpop.permute.xlu0 %1601
        %1603 = vrot.lane.b32.xlu0 %v1254, 96
        %v1604 = vpop.permute.xlu0 %1603
        %1605 = vrot.lane.b32.xlu0 %v1255, 96
        %v1606 = vpop.permute.xlu0 %1605
        %1615 = vrot.lane.b32.xlu0 %v1256, 96
        %v1616 = vpop.permute.xlu0 %1615
        %1617 = vrot.lane.b32.xlu0 %v1257, 96
        %v1618 = vpop.permute.xlu0 %1617
        %1619 = vrot.lane.b32.xlu0 %v1258, 96
        %v1620 = vpop.permute.xlu0 %1619
        %1621 = vrot.lane.b32.xlu0 %v1259, 96
        %v1622 = vpop.permute.xlu0 %1621
        %1623 = vrot.lane.b32.xlu0 %v1260, 96
        %v1624 = vpop.permute.xlu0 %1623
        %1625 = vrot.lane.b32.xlu0 %v1261, 96
        %v1626 = vpop.permute.xlu0 %1625
        %1627 = vrot.lane.b32.xlu0 %v1262, 96
        %v1628 = vpop.permute.xlu0 %1627
        %1629 = vrot.lane.b32.xlu0 %v1263, 96
        %v1630 = vpop.permute.xlu0 %1629
        %v1632 = vsel %vm1272, %v1592, 0
        %v1635 = vsel %vm1272, %v1594, 0
        %v1638 = vsel %vm1272, %v1596, 0
        %v1641 = vsel %vm1272, %v1598, 0
        %v1644 = vsel %vm1272, %v1600, 0
        %v1647 = vsel %vm1272, %v1602, 0
        %v1650 = vsel %vm1272, %v1604, 0
        %v1653 = vsel %vm1272, %v1606, 0
        %v1656 = vsel %vm1272, %v1616, 0
        %v1659 = vsel %vm1272, %v1618, 0
        %v1662 = vsel %vm1272, %v1620, 0
        %v1665 = vsel %vm1272, %v1622, 0
        %v1668 = vsel %vm1272, %v1624, 0
        %v1671 = vsel %vm1272, %v1626, 0
        %v1674 = vsel %vm1272, %v1628, 0
        %v1677 = vsel %vm1272, %v1630, 0
        %1679 = vmatpush.bf16.xpose.msra.mxu0 %v1677
        %1680 = vmatpush.bf16.xpose.msra.mxu0 %v1674
        %1681 = vmatpush.bf16.xpose.msra.mxu0 %v1671
        %1682 = vmatpush.bf16.xpose.msra.mxu0 %v1668
        %1683 = vmatpush.bf16.xpose.msra.mxu0 %v1665
        %1684 = vmatpush.bf16.xpose.msra.mxu0 %v1662
        %1685 = vmatpush.bf16.xpose.msra.mxu0 %v1659
        %1686 = vmatpush.bf16.xpose.msra.mxu0 %v1656
        %1687 = vmatmul.bf16.gmra.mxu0 %v1632
        %v1688 = vpop.f32.mrf.mxu0
        %v1689 = vadd.f32 %v1231, %v1688
        %v1690 = vpop.f32.mrf.mxu0
        %v1691 = vadd.f32 %v1231, %v1690
        %1692 = vmatmul.bf16.gmra.mxu0 %v1635
        %v1693 = vpop.f32.mrf.mxu0
        %v1694 = vadd.f32 %v1231, %v1693
        %v1695 = vpop.f32.mrf.mxu0
        %v1696 = vadd.f32 %v1231, %v1695
        %1697 = vmatmul.bf16.gmra.mxu0 %v1638
        %v1698 = vpop.f32.mrf.mxu0
        %v1699 = vadd.f32 %v1231, %v1698
        %v1700 = vpop.f32.mrf.mxu0
        %v1701 = vadd.f32 %v1231, %v1700
        %1702 = vmatmul.bf16.gmra.mxu0 %v1641
        %v1703 = vpop.f32.mrf.mxu0
        %v1704 = vadd.f32 %v1231, %v1703
        %v1705 = vpop.f32.mrf.mxu0
        %v1706 = vadd.f32 %v1231, %v1705
        %1707 = vmatmul.bf16.gmra.mxu0 %v1644
        %v1708 = vpop.f32.mrf.mxu0
        %v1709 = vadd.f32 %v1231, %v1708
        %v1710 = vpop.f32.mrf.mxu0
        %v1711 = vadd.f32 %v1231, %v1710
        %1712 = vmatmul.bf16.gmra.mxu0 %v1647
        %v1713 = vpop.f32.mrf.mxu0
        %v1714 = vadd.f32 %v1231, %v1713
        %v1715 = vpop.f32.mrf.mxu0
        %v1716 = vadd.f32 %v1231, %v1715
        %1717 = vmatmul.bf16.gmra.mxu0 %v1650
        %v1718 = vpop.f32.mrf.mxu0
        %v1719 = vadd.f32 %v1231, %v1718
        %v1720 = vpop.f32.mrf.mxu0
        %v1721 = vadd.f32 %v1231, %v1720
        %1722 = vmatmul.bf16.gmra.mxu0 %v1653
        %v1723 = vpop.f32.mrf.mxu0
        %v1724 = vadd.f32 %v1231, %v1723
        %v1725 = vpop.f32.mrf.mxu0
        %v1726 = vadd.f32 %v1231, %v1725
        %1727 = vdwg.mxu0
        %1728 = vmax.xlane.f32.xlu0 %v1689
        %v1729 = vpop.xlane.xlu0 %1728
        %1730 = vmax.xlane.f32.xlu0 %v1691
        %v1731 = vpop.xlane.xlu0 %1730
        %1732 = vmax.xlane.f32.xlu0 %v1694
        %v1733 = vpop.xlane.xlu0 %1732
        %1734 = vmax.xlane.f32.xlu0 %v1696
        %v1735 = vpop.xlane.xlu0 %1734
        %1736 = vmax.xlane.f32.xlu0 %v1699
        %v1737 = vpop.xlane.xlu0 %1736
        %1738 = vmax.xlane.f32.xlu0 %v1701
        %v1739 = vpop.xlane.xlu0 %1738
        %1740 = vmax.xlane.f32.xlu0 %v1704
        %v1741 = vpop.xlane.xlu0 %1740
        %1742 = vmax.xlane.f32.xlu0 %v1706
        %v1743 = vpop.xlane.xlu0 %1742
        %1744 = vmax.xlane.f32.xlu0 %v1709
        %v1745 = vpop.xlane.xlu0 %1744
        %1746 = vmax.xlane.f32.xlu0 %v1711
        %v1747 = vpop.xlane.xlu0 %1746
        %1748 = vmax.xlane.f32.xlu0 %v1714
        %v1749 = vpop.xlane.xlu0 %1748
        %1750 = vmax.xlane.f32.xlu0 %v1716
        %v1751 = vpop.xlane.xlu0 %1750
        %1752 = vmax.xlane.f32.xlu0 %v1719
        %v1753 = vpop.xlane.xlu0 %1752
        %1754 = vmax.xlane.f32.xlu0 %v1721
        %v1755 = vpop.xlane.xlu0 %1754
        %1756 = vmax.xlane.f32.xlu0 %v1724
        %v1757 = vpop.xlane.xlu0 %1756
        %1758 = vmax.xlane.f32.xlu0 %v1726
        %v1759 = vpop.xlane.xlu0 %1758
        %v1760 = vsub.f32 %v1689, %v1729
        %v1761 = vsub.f32 %v1691, %v1731
        %v1762 = vsub.f32 %v1694, %v1733
        %v1763 = vsub.f32 %v1696, %v1735
        %v1764 = vsub.f32 %v1699, %v1737
        %v1765 = vsub.f32 %v1701, %v1739
        %v1766 = vsub.f32 %v1704, %v1741
        %v1767 = vsub.f32 %v1706, %v1743
        %v1768 = vsub.f32 %v1709, %v1745
        %v1769 = vsub.f32 %v1711, %v1747
        %v1770 = vsub.f32 %v1714, %v1749
        %v1771 = vsub.f32 %v1716, %v1751
        %v1772 = vsub.f32 %v1719, %v1753
        %v1773 = vsub.f32 %v1721, %v1755
        %v1774 = vsub.f32 %v1724, %v1757
        %v1775 = vsub.f32 %v1726, %v1759
        %v1776 = vmul.f32 %v1760, 1.442695
        %v1777 = vpow.pop %v1776
        %v1778 = vmul.f32 %v1761, 1.442695
        %v1779 = vpow.pop %v1778
        %v1780 = vmul.f32 %v1762, 1.442695
        %v1781 = vpow.pop %v1780
        %v1782 = vmul.f32 %v1763, 1.442695
        %v1783 = vpow.pop %v1782
        %v1784 = vmul.f32 %v1764, 1.442695
        %v1785 = vpow.pop %v1784
        %v1786 = vmul.f32 %v1765, 1.442695
        %v1787 = vpow.pop %v1786
        %v1788 = vmul.f32 %v1766, 1.442695
        %v1789 = vpow.pop %v1788
        %v1790 = vmul.f32 %v1767, 1.442695
        %v1791 = vpow.pop %v1790
        %v1792 = vmul.f32 %v1768, 1.442695
        %v1793 = vpow.pop %v1792
        %v1794 = vmul.f32 %v1769, 1.442695
        %v1795 = vpow.pop %v1794
        %v1796 = vmul.f32 %v1770, 1.442695
        %v1797 = vpow.pop %v1796
        %v1798 = vmul.f32 %v1771, 1.442695
        %v1799 = vpow.pop %v1798
        %v1800 = vmul.f32 %v1772, 1.442695
        %v1801 = vpow.pop %v1800
        %v1802 = vmul.f32 %v1773, 1.442695
        %v1803 = vpow.pop %v1802
        %v1804 = vmul.f32 %v1774, 1.442695
        %v1805 = vpow.pop %v1804
        %v1806 = vmul.f32 %v1775, 1.442695
        %v1807 = vpow.pop %v1806
        %1808 = vadd.xlane.f32.xlu0 %v1777
        %v1809 = vpop.xlane.xlu0 %1808
        %1810 = vadd.xlane.f32.xlu0 %v1779
        %v1811 = vpop.xlane.xlu0 %1810
        %1812 = vadd.xlane.f32.xlu0 %v1781
        %v1813 = vpop.xlane.xlu0 %1812
        %1814 = vadd.xlane.f32.xlu0 %v1783
        %v1815 = vpop.xlane.xlu0 %1814
        %1816 = vadd.xlane.f32.xlu0 %v1785
        %v1817 = vpop.xlane.xlu0 %1816
        %1818 = vadd.xlane.f32.xlu0 %v1787
        %v1819 = vpop.xlane.xlu0 %1818
        %1820 = vadd.xlane.f32.xlu0 %v1789
        %v1821 = vpop.xlane.xlu0 %1820
        %1822 = vadd.xlane.f32.xlu0 %v1791
        %v1823 = vpop.xlane.xlu0 %1822
        %1824 = vadd.xlane.f32.xlu0 %v1793
        %v1825 = vpop.xlane.xlu0 %1824
        %1826 = vadd.xlane.f32.xlu0 %v1795
        %v1827 = vpop.xlane.xlu0 %1826
        %1828 = vadd.xlane.f32.xlu0 %v1797
        %v1829 = vpop.xlane.xlu0 %1828
        %1830 = vadd.xlane.f32.xlu0 %v1799
        %v1831 = vpop.xlane.xlu0 %1830
        %1832 = vadd.xlane.f32.xlu0 %v1801
        %v1833 = vpop.xlane.xlu0 %1832
        %1834 = vadd.xlane.f32.xlu0 %v1803
        %v1835 = vpop.xlane.xlu0 %1834
        %1836 = vadd.xlane.f32.xlu0 %v1805
        %v1837 = vpop.xlane.xlu0 %1836
        %1838 = vadd.xlane.f32.xlu0 %v1807
        %v1839 = vpop.xlane.xlu0 %1838
        %v1840 = vpack.c.bf16 %v1779, %v1777
        %v1841 = vpack.c.bf16 %v1783, %v1781
        %v1842 = vpack.c.bf16 %v1787, %v1785
        %v1843 = vpack.c.bf16 %v1791, %v1789
        %v1844 = vpack.c.bf16 %v1795, %v1793
        %v1845 = vpack.c.bf16 %v1799, %v1797
        %v1846 = vpack.c.bf16 %v1803, %v1801
        %v1847 = vpack.c.bf16 %v1807, %v1805
        %1856 = vrot.lane.b32.xlu0 %v1264, 96
        %v1857 = vpop.permute.xlu0 %1856
        %1858 = vrot.lane.b32.xlu0 %v1265, 96
        %v1859 = vpop.permute.xlu0 %1858
        %1860 = vrot.lane.b32.xlu0 %v1266, 96
        %v1861 = vpop.permute.xlu0 %1860
        %1862 = vrot.lane.b32.xlu0 %v1267, 96
        %v1863 = vpop.permute.xlu0 %1862
        %1864 = vrot.lane.b32.xlu0 %v1268, 96
        %v1865 = vpop.permute.xlu0 %1864
        %1866 = vrot.lane.b32.xlu0 %v1269, 96
        %v1867 = vpop.permute.xlu0 %1866
        %1868 = vrot.lane.b32.xlu0 %v1270, 96
        %v1869 = vpop.permute.xlu0 %1868
        %1870 = vrot.lane.b32.xlu0 %v1271, 96
        %v1871 = vpop.permute.xlu0 %1870
        %1880 = vmatpush.bf16.msra.mxu0 %v1871
        %1881 = vmatpush.bf16.msra.mxu0 %v1869
        %1882 = vmatpush.bf16.msra.mxu0 %v1867
        %1883 = vmatpush.bf16.msra.mxu0 %v1865
        %1884 = vmatpush.bf16.msra.mxu0 %v1863
        %1885 = vmatpush.bf16.msra.mxu0 %v1861
        %1886 = vmatpush.bf16.msra.mxu0 %v1859
        %1887 = vmatpush.bf16.msra.mxu0 %v1857
        %1888 = vmatmul.bf16.gmra.mxu0 %v1840
        %v1889 = vpop.f32.mrf.mxu0
        %v1890 = vadd.f32 0.0, %v1889
        %v1891 = vpop.f32.mrf.mxu0
        %v1892 = vadd.f32 0.0, %v1891
        %1893 = vmatmul.bf16.gmra.mxu0 %v1841
        %v1894 = vpop.f32.mrf.mxu0
        %v1895 = vadd.f32 0.0, %v1894
        %v1896 = vpop.f32.mrf.mxu0
        %v1897 = vadd.f32 0.0, %v1896
        %1898 = vmatmul.bf16.gmra.mxu0 %v1842
        %v1899 = vpop.f32.mrf.mxu0
        %v1900 = vadd.f32 0.0, %v1899
        %v1901 = vpop.f32.mrf.mxu0
        %v1902 = vadd.f32 0.0, %v1901
        %1903 = vmatmul.bf16.gmra.mxu0 %v1843
        %v1904 = vpop.f32.mrf.mxu0
        %v1905 = vadd.f32 0.0, %v1904
        %v1906 = vpop.f32.mrf.mxu0
        %v1907 = vadd.f32 0.0, %v1906
        %1908 = vmatmul.bf16.gmra.mxu0 %v1844
        %v1909 = vpop.f32.mrf.mxu0
        %v1910 = vadd.f32 0.0, %v1909
        %v1911 = vpop.f32.mrf.mxu0
        %v1912 = vadd.f32 0.0, %v1911
        %1913 = vmatmul.bf16.gmra.mxu0 %v1845
        %v1914 = vpop.f32.mrf.mxu0
        %v1915 = vadd.f32 0.0, %v1914
        %v1916 = vpop.f32.mrf.mxu0
        %v1917 = vadd.f32 0.0, %v1916
        %1918 = vmatmul.bf16.gmra.mxu0 %v1846
        %v1919 = vpop.f32.mrf.mxu0
        %v1920 = vadd.f32 0.0, %v1919
        %v1921 = vpop.f32.mrf.mxu0
        %v1922 = vadd.f32 0.0, %v1921
        %1923 = vmatmul.bf16.gmra.mxu0 %v1847
        %v1924 = vpop.f32.mrf.mxu0
        %v1925 = vadd.f32 0.0, %v1924
        %v1926 = vpop.f32.mrf.mxu0
        %v1927 = vadd.f32 0.0, %v1926
        %1928 = vdwg.mxu0
        %v1929 = vrcp.pop %v1809
        %v1930 = vrcp.pop %v1811
        %v1931 = vrcp.pop %v1813
        %v1932 = vrcp.pop %v1815
        %v1933 = vrcp.pop %v1817
        %v1934 = vrcp.pop %v1819
        %v1935 = vrcp.pop %v1821
        %v1936 = vrcp.pop %v1823
        %v1937 = vrcp.pop %v1825
        %v1938 = vrcp.pop %v1827
        %v1939 = vrcp.pop %v1829
        %v1940 = vrcp.pop %v1831
        %v1941 = vrcp.pop %v1833
        %v1942 = vrcp.pop %v1835
        %v1943 = vrcp.pop %v1837
        %v1944 = vrcp.pop %v1839
        %v1945 = vmul.f32 %v1890, %v1929
        %v1946 = vmul.f32 %v1892, %v1930
        %v1947 = vmul.f32 %v1895, %v1931
        %v1948 = vmul.f32 %v1897, %v1932
        %v1949 = vmul.f32 %v1900, %v1933
        %v1950 = vmul.f32 %v1902, %v1934
        %v1951 = vmul.f32 %v1905, %v1935
        %v1952 = vmul.f32 %v1907, %v1936
        %v1953 = vmul.f32 %v1910, %v1937
        %v1954 = vmul.f32 %v1912, %v1938
        %v1955 = vmul.f32 %v1915, %v1939
        %v1956 = vmul.f32 %v1917, %v1940
        %v1957 = vmul.f32 %v1920, %v1941
        %v1958 = vmul.f32 %v1922, %v1942
        %v1959 = vmul.f32 %v1925, %v1943
        %v1960 = vmul.f32 %v1927, %v1944
        %v1961 = vpack.c.bf16 %v1946, %v1945
        %v1962 = vpack.c.bf16 %v1948, %v1947
        %v1963 = vpack.c.bf16 %v1950, %v1949
        %v1964 = vpack.c.bf16 %v1952, %v1951
        %v1965 = vpack.c.bf16 %v1954, %v1953
        %v1966 = vpack.c.bf16 %v1956, %v1955
        %v1967 = vpack.c.bf16 %v1958, %v1957
        %v1968 = vpack.c.bf16 %v1960, %v1959
        %v1969 = vld [vmem:[#allocation8 + $0x10] sm:$0xf]
        %v1970 = vld [vmem:[#allocation8 + $0x14] sm:$0xf]
        %v1971 = vld [vmem:[#allocation8 + $0x18] sm:$0xf]
        %v1972 = vld [vmem:[#allocation8 + $0x1c] sm:$0xf]
        %v1977 = vunpack.c.l.b16 %v1969
        %v1978 = vunpack.c.l.b16 %v1970
        %v1979 = vunpack.c.l.b16 %v1971
        %v1980 = vunpack.c.l.b16 %v1972
        %v1981 = vpack.c.b16 %v1978, %v1977
        %v1982 = vpack.c.b16 %v1980, %v1979
        %v1986 = vsel %vm1272, %v1961, 0
        %v1989 = vsel %vm1272, %v1962, 0
        %v1992 = vsel %vm1272, %v1963, 0
        %v1995 = vsel %vm1272, %v1964, 0
        %v1998 = vsel %vm1272, %v1965, 0
        %v2001 = vsel %vm1272, %v1966, 0
        %v2004 = vsel %vm1272, %v1967, 0
        %v2007 = vsel %vm1272, %v1968, 0
        %2009 = vmatpush.bf16.msra.mxu0 0
        %2010 = vmatpush.bf16.msra.mxu0 0
        %2011 = vmatpush.bf16.msra.mxu0 0
        %2012 = vmatpush.bf16.msra.mxu0 0
        %2013 = vmatpush.bf16.msra.mxu0 0
        %2014 = vmatpush.bf16.msra.mxu0 0
        %2015 = vmatpush.bf16.msra.mxu0 %v1982
        %2016 = vmatpush.bf16.msra.mxu0 %v1981
        %2017 = vmatmul.bf16.gmra.mxu0 %v1986
        %v2018 = vpop.f32.mrf.mxu0
        %v2019 = vadd.f32 0.0, %v2018
        %v2020 = vpop.f32.mrf.mxu0
        %v2021 = vadd.f32 0.0, %v2020
        %2022 = vmatmul.bf16.gmra.mxu0 %v1989
        %v2023 = vpop.f32.mrf.mxu0
        %v2024 = vadd.f32 0.0, %v2023
        %v2025 = vpop.f32.mrf.mxu0
        %v2026 = vadd.f32 0.0, %v2025
        %2027 = vmatmul.bf16.gmra.mxu0 %v1992
        %v2028 = vpop.f32.mrf.mxu0
        %v2029 = vadd.f32 0.0, %v2028
        %v2030 = vpop.f32.mrf.mxu0
        %v2031 = vadd.f32 0.0, %v2030
        %2032 = vmatmul.bf16.gmra.mxu0 %v1995
        %v2033 = vpop.f32.mrf.mxu0
        %v2034 = vadd.f32 0.0, %v2033
        %v2035 = vpop.f32.mrf.mxu0
        %v2036 = vadd.f32 0.0, %v2035
        %2037 = vmatmul.bf16.gmra.mxu0 %v1998
        %v2038 = vpop.f32.mrf.mxu0
        %v2039 = vadd.f32 0.0, %v2038
        %v2040 = vpop.f32.mrf.mxu0
        %v2041 = vadd.f32 0.0, %v2040
        %2042 = vmatmul.bf16.gmra.mxu0 %v2001
        %v2043 = vpop.f32.mrf.mxu0
        %v2044 = vadd.f32 0.0, %v2043
        %v2045 = vpop.f32.mrf.mxu0
        %v2046 = vadd.f32 0.0, %v2045
        %2047 = vmatmul.bf16.gmra.mxu0 %v2004
        %v2048 = vpop.f32.mrf.mxu0
        %v2049 = vadd.f32 0.0, %v2048
        %v2050 = vpop.f32.mrf.mxu0
        %v2051 = vadd.f32 0.0, %v2050
        %2052 = vmatmul.bf16.gmra.mxu0 %v2007
        %v2053 = vpop.f32.mrf.mxu0
        %v2054 = vadd.f32 0.0, %v2053
        %v2055 = vpop.f32.mrf.mxu0
        %v2056 = vadd.f32 0.0, %v2055
        %2057 = vdwg.mxu0
        %v2062 = vunpack.c.l.b16 %v1579
        %v2063 = vunpack.c.l.b16 %v1580
        %v2064 = vunpack.c.l.b16 %v1581
        %v2065 = vunpack.c.l.b16 %v1582
        %v2066 = vpack.c.b16 %v2063, %v2062
        %v2067 = vpack.c.b16 %v2065, %v2064
        %v2071 = vsel %vm1272, %v1571, 0
        %v2074 = vsel %vm1272, %v1572, 0
        %v2077 = vsel %vm1272, %v1573, 0
        %v2080 = vsel %vm1272, %v1574, 0
        %v2083 = vsel %vm1272, %v1575, 0
        %v2086 = vsel %vm1272, %v1576, 0
        %v2089 = vsel %vm1272, %v1577, 0
        %v2092 = vsel %vm1272, %v1578, 0
        %2094 = vmatpush.bf16.msra.mxu0 0
        %2095 = vmatpush.bf16.msra.mxu0 0
        %2096 = vmatpush.bf16.msra.mxu0 0
        %2097 = vmatpush.bf16.msra.mxu0 0
        %2098 = vmatpush.bf16.msra.mxu0 0
        %2099 = vmatpush.bf16.msra.mxu0 0
        %2100 = vmatpush.bf16.msra.mxu0 %v2067
        %2101 = vmatpush.bf16.msra.mxu0 %v2066
        %2102 = vmatmul.bf16.gmra.mxu0 %v2071
        %v2103 = vpop.f32.mrf.mxu0
        %v2104 = vadd.f32 %v2019, %v2103
        %v2105 = vpop.f32.mrf.mxu0
        %v2106 = vadd.f32 %v2021, %v2105
        %2107 = vmatmul.bf16.gmra.mxu0 %v2074
        %v2108 = vpop.f32.mrf.mxu0
        %v2109 = vadd.f32 %v2024, %v2108
        %v2110 = vpop.f32.mrf.mxu0
        %v2111 = vadd.f32 %v2026, %v2110
        %2112 = vmatmul.bf16.gmra.mxu0 %v2077
        %v2113 = vpop.f32.mrf.mxu0
        %v2114 = vadd.f32 %v2029, %v2113
        %v2115 = vpop.f32.mrf.mxu0
        %v2116 = vadd.f32 %v2031, %v2115
        %2117 = vmatmul.bf16.gmra.mxu0 %v2080
        %v2118 = vpop.f32.mrf.mxu0
        %v2119 = vadd.f32 %v2034, %v2118
        %v2120 = vpop.f32.mrf.mxu0
        %v2121 = vadd.f32 %v2036, %v2120
        %2122 = vmatmul.bf16.gmra.mxu0 %v2083
        %v2123 = vpop.f32.mrf.mxu0
        %v2124 = vadd.f32 %v2039, %v2123
        %v2125 = vpop.f32.mrf.mxu0
        %v2126 = vadd.f32 %v2041, %v2125
        %2127 = vmatmul.bf16.gmra.mxu0 %v2086
        %v2128 = vpop.f32.mrf.mxu0
        %v2129 = vadd.f32 %v2044, %v2128
        %v2130 = vpop.f32.mrf.mxu0
        %v2131 = vadd.f32 %v2046, %v2130
        %2132 = vmatmul.bf16.gmra.mxu0 %v2089
        %v2133 = vpop.f32.mrf.mxu0
        %v2134 = vadd.f32 %v2049, %v2133
        %v2135 = vpop.f32.mrf.mxu0
        %v2136 = vadd.f32 %v2051, %v2135
        %2137 = vmatmul.bf16.gmra.mxu0 %v2092
        %v2138 = vpop.f32.mrf.mxu0
        %v2139 = vadd.f32 %v2054, %v2138
        %v2140 = vpop.f32.mrf.mxu0
        %v2141 = vadd.f32 %v2056, %v2140
        %2142 = vdwg.mxu0
        %2143 = vrot.lane.b32.xlu0 %v1248, 64
        %v2144 = vpop.permute.xlu0 %2143
        %2145 = vrot.lane.b32.xlu0 %v1249, 64
        %v2146 = vpop.permute.xlu0 %2145
        %2147 = vrot.lane.b32.xlu0 %v1250, 64
        %v2148 = vpop.permute.xlu0 %2147
        %2149 = vrot.lane.b32.xlu0 %v1251, 64
        %v2150 = vpop.permute.xlu0 %2149
        %2151 = vrot.lane.b32.xlu0 %v1252, 64
        %v2152 = vpop.permute.xlu0 %2151
        %2153 = vrot.lane.b32.xlu0 %v1253, 64
        %v2154 = vpop.permute.xlu0 %2153
        %2155 = vrot.lane.b32.xlu0 %v1254, 64
        %v2156 = vpop.permute.xlu0 %2155
        %2157 = vrot.lane.b32.xlu0 %v1255, 64
        %v2158 = vpop.permute.xlu0 %2157
        %2159 = vrot.lane.b32.xlu0 %v1256, 64
        %v2160 = vpop.permute.xlu0 %2159
        %2161 = vrot.lane.b32.xlu0 %v1257, 64
        %v2162 = vpop.permute.xlu0 %2161
        %2163 = vrot.lane.b32.xlu0 %v1258, 64
        %v2164 = vpop.permute.xlu0 %2163
        %2165 = vrot.lane.b32.xlu0 %v1259, 64
        %v2166 = vpop.permute.xlu0 %2165
        %2167 = vrot.lane.b32.xlu0 %v1260, 64
        %v2168 = vpop.permute.xlu0 %2167
        %2169 = vrot.lane.b32.xlu0 %v1261, 64
        %v2170 = vpop.permute.xlu0 %2169
        %2171 = vrot.lane.b32.xlu0 %v1262, 64
        %v2172 = vpop.permute.xlu0 %2171
        %2173 = vrot.lane.b32.xlu0 %v1263, 64
        %v2174 = vpop.permute.xlu0 %2173
        %v2176 = vsel %vm1272, %v2144, 0
        %v2179 = vsel %vm1272, %v2146, 0
        %v2182 = vsel %vm1272, %v2148, 0
        %v2185 = vsel %vm1272, %v2150, 0
        %v2188 = vsel %vm1272, %v2152, 0
        %v2191 = vsel %vm1272, %v2154, 0
        %v2194 = vsel %vm1272, %v2156, 0
        %v2197 = vsel %vm1272, %v2158, 0
        %v2200 = vsel %vm1272, %v2160, 0
        %v2203 = vsel %vm1272, %v2162, 0
        %v2206 = vsel %vm1272, %v2164, 0
        %v2209 = vsel %vm1272, %v2166, 0
        %v2212 = vsel %vm1272, %v2168, 0
        %v2215 = vsel %vm1272, %v2170, 0
        %v2218 = vsel %vm1272, %v2172, 0
        %v2221 = vsel %vm1272, %v2174, 0
        %2223 = vmatpush.bf16.xpose.msra.mxu0 %v2221
        %2224 = vmatpush.bf16.xpose.msra.mxu0 %v2218
        %2225 = vmatpush.bf16.xpose.msra.mxu0 %v2215
        %2226 = vmatpush.bf16.xpose.msra.mxu0 %v2212
        %2227 = vmatpush.bf16.xpose.msra.mxu0 %v2209
        %2228 = vmatpush.bf16.xpose.msra.mxu0 %v2206
        %2229 = vmatpush.bf16.xpose.msra.mxu0 %v2203
        %2230 = vmatpush.bf16.xpose.msra.mxu0 %v2200
        %2231 = vmatmul.bf16.gmra.mxu0 %v2176
        %v2232 = vpop.f32.mrf.mxu0
        %v2233 = vadd.f32 %v1231, %v2232
        %v2234 = vpop.f32.mrf.mxu0
        %v2235 = vadd.f32 %v1231, %v2234
        %2236 = vmatmul.bf16.gmra.mxu0 %v2179
        %v2237 = vpop.f32.mrf.mxu0
        %v2238 = vadd.f32 %v1231, %v2237
        %v2239 = vpop.f32.mrf.mxu0
        %v2240 = vadd.f32 %v1231, %v2239
        %2241 = vmatmul.bf16.gmra.mxu0 %v2182
        %v2242 = vpop.f32.mrf.mxu0
        %v2243 = vadd.f32 %v1231, %v2242
        %v2244 = vpop.f32.mrf.mxu0
        %v2245 = vadd.f32 %v1231, %v2244
        %2246 = vmatmul.bf16.gmra.mxu0 %v2185
        %v2247 = vpop.f32.mrf.mxu0
        %v2248 = vadd.f32 %v1231, %v2247
        %v2249 = vpop.f32.mrf.mxu0
        %v2250 = vadd.f32 %v1231, %v2249
        %2251 = vmatmul.bf16.gmra.mxu0 %v2188
        %v2252 = vpop.f32.mrf.mxu0
        %v2253 = vadd.f32 %v1231, %v2252
        %v2254 = vpop.f32.mrf.mxu0
        %v2255 = vadd.f32 %v1231, %v2254
        %2256 = vmatmul.bf16.gmra.mxu0 %v2191
        %v2257 = vpop.f32.mrf.mxu0
        %v2258 = vadd.f32 %v1231, %v2257
        %v2259 = vpop.f32.mrf.mxu0
        %v2260 = vadd.f32 %v1231, %v2259
        %2261 = vmatmul.bf16.gmra.mxu0 %v2194
        %v2262 = vpop.f32.mrf.mxu0
        %v2263 = vadd.f32 %v1231, %v2262
        %v2264 = vpop.f32.mrf.mxu0
        %v2265 = vadd.f32 %v1231, %v2264
        %2266 = vmatmul.bf16.gmra.mxu0 %v2197
        %v2267 = vpop.f32.mrf.mxu0
        %v2268 = vadd.f32 %v1231, %v2267
        %v2269 = vpop.f32.mrf.mxu0
        %v2270 = vadd.f32 %v1231, %v2269
        %2271 = vdwg.mxu0
        %2272 = vmax.xlane.f32.xlu0 %v2233
        %v2273 = vpop.xlane.xlu0 %2272
        %2274 = vmax.xlane.f32.xlu0 %v2235
        %v2275 = vpop.xlane.xlu0 %2274
        %2276 = vmax.xlane.f32.xlu0 %v2238
        %v2277 = vpop.xlane.xlu0 %2276
        %2278 = vmax.xlane.f32.xlu0 %v2240
        %v2279 = vpop.xlane.xlu0 %2278
        %2280 = vmax.xlane.f32.xlu0 %v2243
        %v2281 = vpop.xlane.xlu0 %2280
        %2282 = vmax.xlane.f32.xlu0 %v2245
        %v2283 = vpop.xlane.xlu0 %2282
        %2284 = vmax.xlane.f32.xlu0 %v2248
        %v2285 = vpop.xlane.xlu0 %2284
        %2286 = vmax.xlane.f32.xlu0 %v2250
        %v2287 = vpop.xlane.xlu0 %2286
        %2288 = vmax.xlane.f32.xlu0 %v2253
        %v2289 = vpop.xlane.xlu0 %2288
        %2290 = vmax.xlane.f32.xlu0 %v2255
        %v2291 = vpop.xlane.xlu0 %2290
        %2292 = vmax.xlane.f32.xlu0 %v2258
        %v2293 = vpop.xlane.xlu0 %2292
        %2294 = vmax.xlane.f32.xlu0 %v2260
        %v2295 = vpop.xlane.xlu0 %2294
        %2296 = vmax.xlane.f32.xlu0 %v2263
        %v2297 = vpop.xlane.xlu0 %2296
        %2298 = vmax.xlane.f32.xlu0 %v2265
        %v2299 = vpop.xlane.xlu0 %2298
        %2300 = vmax.xlane.f32.xlu0 %v2268
        %v2301 = vpop.xlane.xlu0 %2300
        %2302 = vmax.xlane.f32.xlu0 %v2270
        %v2303 = vpop.xlane.xlu0 %2302
        %v2304 = vsub.f32 %v2233, %v2273
        %v2305 = vsub.f32 %v2235, %v2275
        %v2306 = vsub.f32 %v2238, %v2277
        %v2307 = vsub.f32 %v2240, %v2279
        %v2308 = vsub.f32 %v2243, %v2281
        %v2309 = vsub.f32 %v2245, %v2283
        %v2310 = vsub.f32 %v2248, %v2285
        %v2311 = vsub.f32 %v2250, %v2287
        %v2312 = vsub.f32 %v2253, %v2289
        %v2313 = vsub.f32 %v2255, %v2291
        %v2314 = vsub.f32 %v2258, %v2293
        %v2315 = vsub.f32 %v2260, %v2295
        %v2316 = vsub.f32 %v2263, %v2297
        %v2317 = vsub.f32 %v2265, %v2299
        %v2318 = vsub.f32 %v2268, %v2301
        %v2319 = vsub.f32 %v2270, %v2303
        %v2320 = vmul.f32 %v2304, 1.442695
        %v2321 = vpow.pop %v2320
        %v2322 = vmul.f32 %v2305, 1.442695
        %v2323 = vpow.pop %v2322
        %v2324 = vmul.f32 %v2306, 1.442695
        %v2325 = vpow.pop %v2324
        %v2326 = vmul.f32 %v2307, 1.442695
        %v2327 = vpow.pop %v2326
        %v2328 = vmul.f32 %v2308, 1.442695
        %v2329 = vpow.pop %v2328
        %v2330 = vmul.f32 %v2309, 1.442695
        %v2331 = vpow.pop %v2330
        %v2332 = vmul.f32 %v2310, 1.442695
        %v2333 = vpow.pop %v2332
        %v2334 = vmul.f32 %v2311, 1.442695
        %v2335 = vpow.pop %v2334
        %v2336 = vmul.f32 %v2312, 1.442695
        %v2337 = vpow.pop %v2336
        %v2338 = vmul.f32 %v2313, 1.442695
        %v2339 = vpow.pop %v2338
        %v2340 = vmul.f32 %v2314, 1.442695
        %v2341 = vpow.pop %v2340
        %v2342 = vmul.f32 %v2315, 1.442695
        %v2343 = vpow.pop %v2342
        %v2344 = vmul.f32 %v2316, 1.442695
        %v2345 = vpow.pop %v2344
        %v2346 = vmul.f32 %v2317, 1.442695
        %v2347 = vpow.pop %v2346
        %v2348 = vmul.f32 %v2318, 1.442695
        %v2349 = vpow.pop %v2348
        %v2350 = vmul.f32 %v2319, 1.442695
        %v2351 = vpow.pop %v2350
        %2352 = vadd.xlane.f32.xlu0 %v2321
        %v2353 = vpop.xlane.xlu0 %2352
        %2354 = vadd.xlane.f32.xlu0 %v2323
        %v2355 = vpop.xlane.xlu0 %2354
        %2356 = vadd.xlane.f32.xlu0 %v2325
        %v2357 = vpop.xlane.xlu0 %2356
        %2358 = vadd.xlane.f32.xlu0 %v2327
        %v2359 = vpop.xlane.xlu0 %2358
        %2360 = vadd.xlane.f32.xlu0 %v2329
        %v2361 = vpop.xlane.xlu0 %2360
        %2362 = vadd.xlane.f32.xlu0 %v2331
        %v2363 = vpop.xlane.xlu0 %2362
        %2364 = vadd.xlane.f32.xlu0 %v2333
        %v2365 = vpop.xlane.xlu0 %2364
        %2366 = vadd.xlane.f32.xlu0 %v2335
        %v2367 = vpop.xlane.xlu0 %2366
        %2368 = vadd.xlane.f32.xlu0 %v2337
        %v2369 = vpop.xlane.xlu0 %2368
        %2370 = vadd.xlane.f32.xlu0 %v2339
        %v2371 = vpop.xlane.xlu0 %2370
        %2372 = vadd.xlane.f32.xlu0 %v2341
        %v2373 = vpop.xlane.xlu0 %2372
        %2374 = vadd.xlane.f32.xlu0 %v2343
        %v2375 = vpop.xlane.xlu0 %2374
        %2376 = vadd.xlane.f32.xlu0 %v2345
        %v2377 = vpop.xlane.xlu0 %2376
        %2378 = vadd.xlane.f32.xlu0 %v2347
        %v2379 = vpop.xlane.xlu0 %2378
        %2380 = vadd.xlane.f32.xlu0 %v2349
        %v2381 = vpop.xlane.xlu0 %2380
        %2382 = vadd.xlane.f32.xlu0 %v2351
        %v2383 = vpop.xlane.xlu0 %2382
        %v2384 = vpack.c.bf16 %v2323, %v2321
        %v2385 = vpack.c.bf16 %v2327, %v2325
        %v2386 = vpack.c.bf16 %v2331, %v2329
        %v2387 = vpack.c.bf16 %v2335, %v2333
        %v2388 = vpack.c.bf16 %v2339, %v2337
        %v2389 = vpack.c.bf16 %v2343, %v2341
        %v2390 = vpack.c.bf16 %v2347, %v2345
        %v2391 = vpack.c.bf16 %v2351, %v2349
        %2392 = vrot.lane.b32.xlu0 %v1264, 64
        %v2393 = vpop.permute.xlu0 %2392
        %2394 = vrot.lane.b32.xlu0 %v1265, 64
        %v2395 = vpop.permute.xlu0 %2394
        %2396 = vrot.lane.b32.xlu0 %v1266, 64
        %v2397 = vpop.permute.xlu0 %2396
        %2398 = vrot.lane.b32.xlu0 %v1267, 64
        %v2399 = vpop.permute.xlu0 %2398
        %2400 = vrot.lane.b32.xlu0 %v1268, 64
        %v2401 = vpop.permute.xlu0 %2400
        %2402 = vrot.lane.b32.xlu0 %v1269, 64
        %v2403 = vpop.permute.xlu0 %2402
        %2404 = vrot.lane.b32.xlu0 %v1270, 64
        %v2405 = vpop.permute.xlu0 %2404
        %2406 = vrot.lane.b32.xlu0 %v1271, 64
        %v2407 = vpop.permute.xlu0 %2406
        %2416 = vmatpush.bf16.msra.mxu0 %v2407
        %2417 = vmatpush.bf16.msra.mxu0 %v2405
        %2418 = vmatpush.bf16.msra.mxu0 %v2403
        %2419 = vmatpush.bf16.msra.mxu0 %v2401
        %2420 = vmatpush.bf16.msra.mxu0 %v2399
        %2421 = vmatpush.bf16.msra.mxu0 %v2397
        %2422 = vmatpush.bf16.msra.mxu0 %v2395
        %2423 = vmatpush.bf16.msra.mxu0 %v2393
        %2424 = vmatmul.bf16.gmra.mxu0 %v2384
        %v2425 = vpop.f32.mrf.mxu0
        %v2426 = vadd.f32 0.0, %v2425
        %v2427 = vpop.f32.mrf.mxu0
        %v2428 = vadd.f32 0.0, %v2427
        %2429 = vmatmul.bf16.gmra.mxu0 %v2385
        %v2430 = vpop.f32.mrf.mxu0
        %v2431 = vadd.f32 0.0, %v2430
        %v2432 = vpop.f32.mrf.mxu0
        %v2433 = vadd.f32 0.0, %v2432
        %2434 = vmatmul.bf16.gmra.mxu0 %v2386
        %v2435 = vpop.f32.mrf.mxu0
        %v2436 = vadd.f32 0.0, %v2435
        %v2437 = vpop.f32.mrf.mxu0
        %v2438 = vadd.f32 0.0, %v2437
        %2439 = vmatmul.bf16.gmra.mxu0 %v2387
        %v2440 = vpop.f32.mrf.mxu0
        %v2441 = vadd.f32 0.0, %v2440
        %v2442 = vpop.f32.mrf.mxu0
        %v2443 = vadd.f32 0.0, %v2442
        %2444 = vmatmul.bf16.gmra.mxu0 %v2388
        %v2445 = vpop.f32.mrf.mxu0
        %v2446 = vadd.f32 0.0, %v2445
        %v2447 = vpop.f32.mrf.mxu0
        %v2448 = vadd.f32 0.0, %v2447
        %2449 = vmatmul.bf16.gmra.mxu0 %v2389
        %v2450 = vpop.f32.mrf.mxu0
        %v2451 = vadd.f32 0.0, %v2450
        %v2452 = vpop.f32.mrf.mxu0
        %v2453 = vadd.f32 0.0, %v2452
        %2454 = vmatmul.bf16.gmra.mxu0 %v2390
        %v2455 = vpop.f32.mrf.mxu0
        %v2456 = vadd.f32 0.0, %v2455
        %v2457 = vpop.f32.mrf.mxu0
        %v2458 = vadd.f32 0.0, %v2457
        %2459 = vmatmul.bf16.gmra.mxu0 %v2391
        %v2460 = vpop.f32.mrf.mxu0
        %v2461 = vadd.f32 0.0, %v2460
        %v2462 = vpop.f32.mrf.mxu0
        %v2463 = vadd.f32 0.0, %v2462
        %2464 = vdwg.mxu0
        %v2465 = vrcp.pop %v2353
        %v2466 = vrcp.pop %v2355
        %v2467 = vrcp.pop %v2357
        %v2468 = vrcp.pop %v2359
        %v2469 = vrcp.pop %v2361
        %v2470 = vrcp.pop %v2363
        %v2471 = vrcp.pop %v2365
        %v2472 = vrcp.pop %v2367
        %v2473 = vrcp.pop %v2369
        %v2474 = vrcp.pop %v2371
        %v2475 = vrcp.pop %v2373
        %v2476 = vrcp.pop %v2375
        %v2477 = vrcp.pop %v2377
        %v2478 = vrcp.pop %v2379
        %v2479 = vrcp.pop %v2381
        %v2480 = vrcp.pop %v2383
        %v2481 = vmul.f32 %v2426, %v2465
        %v2482 = vmul.f32 %v2428, %v2466
        %v2483 = vmul.f32 %v2431, %v2467
        %v2484 = vmul.f32 %v2433, %v2468
        %v2485 = vmul.f32 %v2436, %v2469
        %v2486 = vmul.f32 %v2438, %v2470
        %v2487 = vmul.f32 %v2441, %v2471
        %v2488 = vmul.f32 %v2443, %v2472
        %v2489 = vmul.f32 %v2446, %v2473
        %v2490 = vmul.f32 %v2448, %v2474
        %v2491 = vmul.f32 %v2451, %v2475
        %v2492 = vmul.f32 %v2453, %v2476
        %v2493 = vmul.f32 %v2456, %v2477
        %v2494 = vmul.f32 %v2458, %v2478
        %v2495 = vmul.f32 %v2461, %v2479
        %v2496 = vmul.f32 %v2463, %v2480
        %v2497 = vpack.c.bf16 %v2482, %v2481
        %v2498 = vpack.c.bf16 %v2484, %v2483
        %v2499 = vpack.c.bf16 %v2486, %v2485
        %v2500 = vpack.c.bf16 %v2488, %v2487
        %v2501 = vpack.c.bf16 %v2490, %v2489
        %v2502 = vpack.c.bf16 %v2492, %v2491
        %v2503 = vpack.c.bf16 %v2494, %v2493
        %v2504 = vpack.c.bf16 %v2496, %v2495
        %v2505 = vld [vmem:[#allocation8 + $0x20] sm:$0xf]
        %v2506 = vld [vmem:[#allocation8 + $0x24] sm:$0xf]
        %v2507 = vld [vmem:[#allocation8 + $0x28] sm:$0xf]
        %v2508 = vld [vmem:[#allocation8 + $0x2c] sm:$0xf]
        %v2513 = vunpack.c.l.b16 %v2505
        %v2514 = vunpack.c.l.b16 %v2506
        %v2515 = vunpack.c.l.b16 %v2507
        %v2516 = vunpack.c.l.b16 %v2508
        %v2517 = vpack.c.b16 %v2514, %v2513
        %v2518 = vpack.c.b16 %v2516, %v2515
        %v2522 = vsel %vm1272, %v2497, 0
        %v2525 = vsel %vm1272, %v2498, 0
        %v2528 = vsel %vm1272, %v2499, 0
        %v2531 = vsel %vm1272, %v2500, 0
        %v2534 = vsel %vm1272, %v2501, 0
        %v2537 = vsel %vm1272, %v2502, 0
        %v2540 = vsel %vm1272, %v2503, 0
        %v2543 = vsel %vm1272, %v2504, 0
        %2545 = vmatpush.bf16.msra.mxu0 0
        %2546 = vmatpush.bf16.msra.mxu0 0
        %2547 = vmatpush.bf16.msra.mxu0 0
        %2548 = vmatpush.bf16.msra.mxu0 0
        %2549 = vmatpush.bf16.msra.mxu0 0
        %2550 = vmatpush.bf16.msra.mxu0 0
        %2551 = vmatpush.bf16.msra.mxu0 %v2518
        %2552 = vmatpush.bf16.msra.mxu0 %v2517
        %2553 = vmatmul.bf16.gmra.mxu0 %v2522
        %v2554 = vpop.f32.mrf.mxu0
        %v2555 = vadd.f32 0.0, %v2554
        %v2556 = vpop.f32.mrf.mxu0
        %v2557 = vadd.f32 0.0, %v2556
        %2558 = vmatmul.bf16.gmra.mxu0 %v2525
        %v2559 = vpop.f32.mrf.mxu0
        %v2560 = vadd.f32 0.0, %v2559
        %v2561 = vpop.f32.mrf.mxu0
        %v2562 = vadd.f32 0.0, %v2561
        %2563 = vmatmul.bf16.gmra.mxu0 %v2528
        %v2564 = vpop.f32.mrf.mxu0
        %v2565 = vadd.f32 0.0, %v2564
        %v2566 = vpop.f32.mrf.mxu0
        %v2567 = vadd.f32 0.0, %v2566
        %2568 = vmatmul.bf16.gmra.mxu0 %v2531
        %v2569 = vpop.f32.mrf.mxu0
        %v2570 = vadd.f32 0.0, %v2569
        %v2571 = vpop.f32.mrf.mxu0
        %v2572 = vadd.f32 0.0, %v2571
        %2573 = vmatmul.bf16.gmra.mxu0 %v2534
        %v2574 = vpop.f32.mrf.mxu0
        %v2575 = vadd.f32 0.0, %v2574
        %v2576 = vpop.f32.mrf.mxu0
        %v2577 = vadd.f32 0.0, %v2576
        %2578 = vmatmul.bf16.gmra.mxu0 %v2537
        %v2579 = vpop.f32.mrf.mxu0
        %v2580 = vadd.f32 0.0, %v2579
        %v2581 = vpop.f32.mrf.mxu0
        %v2582 = vadd.f32 0.0, %v2581
        %2583 = vmatmul.bf16.gmra.mxu0 %v2540
        %v2584 = vpop.f32.mrf.mxu0
        %v2585 = vadd.f32 0.0, %v2584
        %v2586 = vpop.f32.mrf.mxu0
        %v2587 = vadd.f32 0.0, %v2586
        %2588 = vmatmul.bf16.gmra.mxu0 %v2543
        %v2589 = vpop.f32.mrf.mxu0
        %v2590 = vadd.f32 0.0, %v2589
        %v2591 = vpop.f32.mrf.mxu0
        %v2592 = vadd.f32 0.0, %v2591
        %2593 = vdwg.mxu0
        %v2594 = vadd.f32 %v2104, %v2555
        %v2595 = vadd.f32 %v2106, %v2557
        %v2596 = vadd.f32 %v2109, %v2560
        %v2597 = vadd.f32 %v2111, %v2562
        %v2598 = vadd.f32 %v2114, %v2565
        %v2599 = vadd.f32 %v2116, %v2567
        %v2600 = vadd.f32 %v2119, %v2570
        %v2601 = vadd.f32 %v2121, %v2572
        %v2602 = vadd.f32 %v2124, %v2575
        %v2603 = vadd.f32 %v2126, %v2577
        %v2604 = vadd.f32 %v2129, %v2580
        %v2605 = vadd.f32 %v2131, %v2582
        %v2606 = vadd.f32 %v2134, %v2585
        %v2607 = vadd.f32 %v2136, %v2587
        %v2608 = vadd.f32 %v2139, %v2590
        %v2609 = vadd.f32 %v2141, %v2592
        %2610 = vrot.lane.b32.xlu0 %v1248, 32
        %v2611 = vpop.permute.xlu0 %2610
        %2612 = vrot.lane.b32.xlu0 %v1249, 32
        %v2613 = vpop.permute.xlu0 %2612
        %2614 = vrot.lane.b32.xlu0 %v1250, 32
        %v2615 = vpop.permute.xlu0 %2614
        %2616 = vrot.lane.b32.xlu0 %v1251, 32
        %v2617 = vpop.permute.xlu0 %2616
        %2618 = vrot.lane.b32.xlu0 %v1252, 32
        %v2619 = vpop.permute.xlu0 %2618
        %2620 = vrot.lane.b32.xlu0 %v1253, 32
        %v2621 = vpop.permute.xlu0 %2620
        %2622 = vrot.lane.b32.xlu0 %v1254, 32
        %v2623 = vpop.permute.xlu0 %2622
        %2624 = vrot.lane.b32.xlu0 %v1255, 32
        %v2625 = vpop.permute.xlu0 %2624
        %2626 = vrot.lane.b32.xlu0 %v1256, 32
        %v2627 = vpop.permute.xlu0 %2626
        %2628 = vrot.lane.b32.xlu0 %v1257, 32
        %v2629 = vpop.permute.xlu0 %2628
        %2630 = vrot.lane.b32.xlu0 %v1258, 32
        %v2631 = vpop.permute.xlu0 %2630
        %2632 = vrot.lane.b32.xlu0 %v1259, 32
        %v2633 = vpop.permute.xlu0 %2632
        %2634 = vrot.lane.b32.xlu0 %v1260, 32
        %v2635 = vpop.permute.xlu0 %2634
        %2636 = vrot.lane.b32.xlu0 %v1261, 32
        %v2637 = vpop.permute.xlu0 %2636
        %2638 = vrot.lane.b32.xlu0 %v1262, 32
        %v2639 = vpop.permute.xlu0 %2638
        %2640 = vrot.lane.b32.xlu0 %v1263, 32
        %v2641 = vpop.permute.xlu0 %2640
        %v2643 = vsel %vm1272, %v2611, 0
        %v2646 = vsel %vm1272, %v2613, 0
        %v2649 = vsel %vm1272, %v2615, 0
        %v2652 = vsel %vm1272, %v2617, 0
        %v2655 = vsel %vm1272, %v2619, 0
        %v2658 = vsel %vm1272, %v2621, 0
        %v2661 = vsel %vm1272, %v2623, 0
        %v2664 = vsel %vm1272, %v2625, 0
        %v2667 = vsel %vm1272, %v2627, 0
        %v2670 = vsel %vm1272, %v2629, 0
        %v2673 = vsel %vm1272, %v2631, 0
        %v2676 = vsel %vm1272, %v2633, 0
        %v2679 = vsel %vm1272, %v2635, 0
        %v2682 = vsel %vm1272, %v2637, 0
        %v2685 = vsel %vm1272, %v2639, 0
        %v2688 = vsel %vm1272, %v2641, 0
        %2690 = vmatpush.bf16.xpose.msra.mxu0 %v2688
        %2691 = vmatpush.bf16.xpose.msra.mxu0 %v2685
        %2692 = vmatpush.bf16.xpose.msra.mxu0 %v2682
        %2693 = vmatpush.bf16.xpose.msra.mxu0 %v2679
        %2694 = vmatpush.bf16.xpose.msra.mxu0 %v2676
        %2695 = vmatpush.bf16.xpose.msra.mxu0 %v2673
        %2696 = vmatpush.bf16.xpose.msra.mxu0 %v2670
        %2697 = vmatpush.bf16.xpose.msra.mxu0 %v2667
        %2698 = vmatmul.bf16.gmra.mxu0 %v2643
        %v2699 = vpop.f32.mrf.mxu0
        %v2700 = vadd.f32 %v1231, %v2699
        %v2701 = vpop.f32.mrf.mxu0
        %v2702 = vadd.f32 %v1231, %v2701
        %2703 = vmatmul.bf16.gmra.mxu0 %v2646
        %v2704 = vpop.f32.mrf.mxu0
        %v2705 = vadd.f32 %v1231, %v2704
        %v2706 = vpop.f32.mrf.mxu0
        %v2707 = vadd.f32 %v1231, %v2706
        %2708 = vmatmul.bf16.gmra.mxu0 %v2649
        %v2709 = vpop.f32.mrf.mxu0
        %v2710 = vadd.f32 %v1231, %v2709
        %v2711 = vpop.f32.mrf.mxu0
        %v2712 = vadd.f32 %v1231, %v2711
        %2713 = vmatmul.bf16.gmra.mxu0 %v2652
        %v2714 = vpop.f32.mrf.mxu0
        %v2715 = vadd.f32 %v1231, %v2714
        %v2716 = vpop.f32.mrf.mxu0
        %v2717 = vadd.f32 %v1231, %v2716
        %2718 = vmatmul.bf16.gmra.mxu0 %v2655
        %v2719 = vpop.f32.mrf.mxu0
        %v2720 = vadd.f32 %v1231, %v2719
        %v2721 = vpop.f32.mrf.mxu0
        %v2722 = vadd.f32 %v1231, %v2721
        %2723 = vmatmul.bf16.gmra.mxu0 %v2658
        %v2724 = vpop.f32.mrf.mxu0
        %v2725 = vadd.f32 %v1231, %v2724
        %v2726 = vpop.f32.mrf.mxu0
        %v2727 = vadd.f32 %v1231, %v2726
        %2728 = vmatmul.bf16.gmra.mxu0 %v2661
        %v2729 = vpop.f32.mrf.mxu0
        %v2730 = vadd.f32 %v1231, %v2729
        %v2731 = vpop.f32.mrf.mxu0
        %v2732 = vadd.f32 %v1231, %v2731
        %2733 = vmatmul.bf16.gmra.mxu0 %v2664
        %v2734 = vpop.f32.mrf.mxu0
        %v2735 = vadd.f32 %v1231, %v2734
        %v2736 = vpop.f32.mrf.mxu0
        %v2737 = vadd.f32 %v1231, %v2736
        %2738 = vdwg.mxu0
        %2739 = vmax.xlane.f32.xlu0 %v2700
        %v2740 = vpop.xlane.xlu0 %2739
        %2741 = vmax.xlane.f32.xlu0 %v2702
        %v2742 = vpop.xlane.xlu0 %2741
        %2743 = vmax.xlane.f32.xlu0 %v2705
        %v2744 = vpop.xlane.xlu0 %2743
        %2745 = vmax.xlane.f32.xlu0 %v2707
        %v2746 = vpop.xlane.xlu0 %2745
        %2747 = vmax.xlane.f32.xlu0 %v2710
        %v2748 = vpop.xlane.xlu0 %2747
        %2749 = vmax.xlane.f32.xlu0 %v2712
        %v2750 = vpop.xlane.xlu0 %2749
        %2751 = vmax.xlane.f32.xlu0 %v2715
        %v2752 = vpop.xlane.xlu0 %2751
        %2753 = vmax.xlane.f32.xlu0 %v2717
        %v2754 = vpop.xlane.xlu0 %2753
        %2755 = vmax.xlane.f32.xlu0 %v2720
        %v2756 = vpop.xlane.xlu0 %2755
        %2757 = vmax.xlane.f32.xlu0 %v2722
        %v2758 = vpop.xlane.xlu0 %2757
        %2759 = vmax.xlane.f32.xlu0 %v2725
        %v2760 = vpop.xlane.xlu0 %2759
        %2761 = vmax.xlane.f32.xlu0 %v2727
        %v2762 = vpop.xlane.xlu0 %2761
        %2763 = vmax.xlane.f32.xlu0 %v2730
        %v2764 = vpop.xlane.xlu0 %2763
        %2765 = vmax.xlane.f32.xlu0 %v2732
        %v2766 = vpop.xlane.xlu0 %2765
        %2767 = vmax.xlane.f32.xlu0 %v2735
        %v2768 = vpop.xlane.xlu0 %2767
        %2769 = vmax.xlane.f32.xlu0 %v2737
        %v2770 = vpop.xlane.xlu0 %2769
        %v2771 = vsub.f32 %v2700, %v2740
        %v2772 = vsub.f32 %v2702, %v2742
        %v2773 = vsub.f32 %v2705, %v2744
        %v2774 = vsub.f32 %v2707, %v2746
        %v2775 = vsub.f32 %v2710, %v2748
        %v2776 = vsub.f32 %v2712, %v2750
        %v2777 = vsub.f32 %v2715, %v2752
        %v2778 = vsub.f32 %v2717, %v2754
        %v2779 = vsub.f32 %v2720, %v2756
        %v2780 = vsub.f32 %v2722, %v2758
        %v2781 = vsub.f32 %v2725, %v2760
        %v2782 = vsub.f32 %v2727, %v2762
        %v2783 = vsub.f32 %v2730, %v2764
        %v2784 = vsub.f32 %v2732, %v2766
        %v2785 = vsub.f32 %v2735, %v2768
        %v2786 = vsub.f32 %v2737, %v2770
        %v2787 = vmul.f32 %v2771, 1.442695
        %v2788 = vpow.pop %v2787
        %v2789 = vmul.f32 %v2772, 1.442695
        %v2790 = vpow.pop %v2789
        %v2791 = vmul.f32 %v2773, 1.442695
        %v2792 = vpow.pop %v2791
        %v2793 = vmul.f32 %v2774, 1.442695
        %v2794 = vpow.pop %v2793
        %v2795 = vmul.f32 %v2775, 1.442695
        %v2796 = vpow.pop %v2795
        %v2797 = vmul.f32 %v2776, 1.442695
        %v2798 = vpow.pop %v2797
        %v2799 = vmul.f32 %v2777, 1.442695
        %v2800 = vpow.pop %v2799
        %v2801 = vmul.f32 %v2778, 1.442695
        %v2802 = vpow.pop %v2801
        %v2803 = vmul.f32 %v2779, 1.442695
        %v2804 = vpow.pop %v2803
        %v2805 = vmul.f32 %v2780, 1.442695
        %v2806 = vpow.pop %v2805
        %v2807 = vmul.f32 %v2781, 1.442695
        %v2808 = vpow.pop %v2807
        %v2809 = vmul.f32 %v2782, 1.442695
        %v2810 = vpow.pop %v2809
        %v2811 = vmul.f32 %v2783, 1.442695
        %v2812 = vpow.pop %v2811
        %v2813 = vmul.f32 %v2784, 1.442695
        %v2814 = vpow.pop %v2813
        %v2815 = vmul.f32 %v2785, 1.442695
        %v2816 = vpow.pop %v2815
        %v2817 = vmul.f32 %v2786, 1.442695
        %v2818 = vpow.pop %v2817
        %2819 = vadd.xlane.f32.xlu0 %v2788
        %v2820 = vpop.xlane.xlu0 %2819
        %2821 = vadd.xlane.f32.xlu0 %v2790
        %v2822 = vpop.xlane.xlu0 %2821
        %2823 = vadd.xlane.f32.xlu0 %v2792
        %v2824 = vpop.xlane.xlu0 %2823
        %2825 = vadd.xlane.f32.xlu0 %v2794
        %v2826 = vpop.xlane.xlu0 %2825
        %2827 = vadd.xlane.f32.xlu0 %v2796
        %v2828 = vpop.xlane.xlu0 %2827
        %2829 = vadd.xlane.f32.xlu0 %v2798
        %v2830 = vpop.xlane.xlu0 %2829
        %2831 = vadd.xlane.f32.xlu0 %v2800
        %v2832 = vpop.xlane.xlu0 %2831
        %2833 = vadd.xlane.f32.xlu0 %v2802
        %v2834 = vpop.xlane.xlu0 %2833
        %2835 = vadd.xlane.f32.xlu0 %v2804
        %v2836 = vpop.xlane.xlu0 %2835
        %2837 = vadd.xlane.f32.xlu0 %v2806
        %v2838 = vpop.xlane.xlu0 %2837
        %2839 = vadd.xlane.f32.xlu0 %v2808
        %v2840 = vpop.xlane.xlu0 %2839
        %2841 = vadd.xlane.f32.xlu0 %v2810
        %v2842 = vpop.xlane.xlu0 %2841
        %2843 = vadd.xlane.f32.xlu0 %v2812
        %v2844 = vpop.xlane.xlu0 %2843
        %2845 = vadd.xlane.f32.xlu0 %v2814
        %v2846 = vpop.xlane.xlu0 %2845
        %2847 = vadd.xlane.f32.xlu0 %v2816
        %v2848 = vpop.xlane.xlu0 %2847
        %2849 = vadd.xlane.f32.xlu0 %v2818
        %v2850 = vpop.xlane.xlu0 %2849
        %v2851 = vpack.c.bf16 %v2790, %v2788
        %v2852 = vpack.c.bf16 %v2794, %v2792
        %v2853 = vpack.c.bf16 %v2798, %v2796
        %v2854 = vpack.c.bf16 %v2802, %v2800
        %v2855 = vpack.c.bf16 %v2806, %v2804
        %v2856 = vpack.c.bf16 %v2810, %v2808
        %v2857 = vpack.c.bf16 %v2814, %v2812
        %v2858 = vpack.c.bf16 %v2818, %v2816
        %2859 = vrot.lane.b32.xlu0 %v1264, 32
        %v2860 = vpop.permute.xlu0 %2859
        %2861 = vrot.lane.b32.xlu0 %v1265, 32
        %v2862 = vpop.permute.xlu0 %2861
        %2863 = vrot.lane.b32.xlu0 %v1266, 32
        %v2864 = vpop.permute.xlu0 %2863
        %2865 = vrot.lane.b32.xlu0 %v1267, 32
        %v2866 = vpop.permute.xlu0 %2865
        %2867 = vrot.lane.b32.xlu0 %v1268, 32
        %v2868 = vpop.permute.xlu0 %2867
        %2869 = vrot.lane.b32.xlu0 %v1269, 32
        %v2870 = vpop.permute.xlu0 %2869
        %2871 = vrot.lane.b32.xlu0 %v1270, 32
        %v2872 = vpop.permute.xlu0 %2871
        %2873 = vrot.lane.b32.xlu0 %v1271, 32
        %v2874 = vpop.permute.xlu0 %2873
        %2883 = vmatpush.bf16.msra.mxu0 %v2874
        %2884 = vmatpush.bf16.msra.mxu0 %v2872
        %2885 = vmatpush.bf16.msra.mxu0 %v2870
        %2886 = vmatpush.bf16.msra.mxu0 %v2868
        %2887 = vmatpush.bf16.msra.mxu0 %v2866
        %2888 = vmatpush.bf16.msra.mxu0 %v2864
        %2889 = vmatpush.bf16.msra.mxu0 %v2862
        %2890 = vmatpush.bf16.msra.mxu0 %v2860
        %2891 = vmatmul.bf16.gmra.mxu0 %v2851
        %v2892 = vpop.f32.mrf.mxu0
        %v2893 = vadd.f32 0.0, %v2892
        %v2894 = vpop.f32.mrf.mxu0
        %v2895 = vadd.f32 0.0, %v2894
        %2896 = vmatmul.bf16.gmra.mxu0 %v2852
        %v2897 = vpop.f32.mrf.mxu0
        %v2898 = vadd.f32 0.0, %v2897
        %v2899 = vpop.f32.mrf.mxu0
        %v2900 = vadd.f32 0.0, %v2899
        %2901 = vmatmul.bf16.gmra.mxu0 %v2853
        %v2902 = vpop.f32.mrf.mxu0
        %v2903 = vadd.f32 0.0, %v2902
        %v2904 = vpop.f32.mrf.mxu0
        %v2905 = vadd.f32 0.0, %v2904
        %2906 = vmatmul.bf16.gmra.mxu0 %v2854
        %v2907 = vpop.f32.mrf.mxu0
        %v2908 = vadd.f32 0.0, %v2907
        %v2909 = vpop.f32.mrf.mxu0
        %v2910 = vadd.f32 0.0, %v2909
        %2911 = vmatmul.bf16.gmra.mxu0 %v2855
        %v2912 = vpop.f32.mrf.mxu0
        %v2913 = vadd.f32 0.0, %v2912
        %v2914 = vpop.f32.mrf.mxu0
        %v2915 = vadd.f32 0.0, %v2914
        %2916 = vmatmul.bf16.gmra.mxu0 %v2856
        %v2917 = vpop.f32.mrf.mxu0
        %v2918 = vadd.f32 0.0, %v2917
        %v2919 = vpop.f32.mrf.mxu0
        %v2920 = vadd.f32 0.0, %v2919
        %2921 = vmatmul.bf16.gmra.mxu0 %v2857
        %v2922 = vpop.f32.mrf.mxu0
        %v2923 = vadd.f32 0.0, %v2922
        %v2924 = vpop.f32.mrf.mxu0
        %v2925 = vadd.f32 0.0, %v2924
        %2926 = vmatmul.bf16.gmra.mxu0 %v2858
        %v2927 = vpop.f32.mrf.mxu0
        %v2928 = vadd.f32 0.0, %v2927
        %v2929 = vpop.f32.mrf.mxu0
        %v2930 = vadd.f32 0.0, %v2929
        %2931 = vdwg.mxu0
        %v2932 = vrcp.pop %v2820
        %v2933 = vrcp.pop %v2822
        %v2934 = vrcp.pop %v2824
        %v2935 = vrcp.pop %v2826
        %v2936 = vrcp.pop %v2828
        %v2937 = vrcp.pop %v2830
        %v2938 = vrcp.pop %v2832
        %v2939 = vrcp.pop %v2834
        %v2940 = vrcp.pop %v2836
        %v2941 = vrcp.pop %v2838
        %v2942 = vrcp.pop %v2840
        %v2943 = vrcp.pop %v2842
        %v2944 = vrcp.pop %v2844
        %v2945 = vrcp.pop %v2846
        %v2946 = vrcp.pop %v2848
        %v2947 = vrcp.pop %v2850
        %v2948 = vmul.f32 %v2893, %v2932
        %v2949 = vmul.f32 %v2895, %v2933
        %v2950 = vmul.f32 %v2898, %v2934
        %v2951 = vmul.f32 %v2900, %v2935
        %v2952 = vmul.f32 %v2903, %v2936
        %v2953 = vmul.f32 %v2905, %v2937
        %v2954 = vmul.f32 %v2908, %v2938
        %v2955 = vmul.f32 %v2910, %v2939
        %v2956 = vmul.f32 %v2913, %v2940
        %v2957 = vmul.f32 %v2915, %v2941
        %v2958 = vmul.f32 %v2918, %v2942
        %v2959 = vmul.f32 %v2920, %v2943
        %v2960 = vmul.f32 %v2923, %v2944
        %v2961 = vmul.f32 %v2925, %v2945
        %v2962 = vmul.f32 %v2928, %v2946
        %v2963 = vmul.f32 %v2930, %v2947
        %v2964 = vpack.c.bf16 %v2949, %v2948
        %v2965 = vpack.c.bf16 %v2951, %v2950
        %v2966 = vpack.c.bf16 %v2953, %v2952
        %v2967 = vpack.c.bf16 %v2955, %v2954
        %v2968 = vpack.c.bf16 %v2957, %v2956
        %v2969 = vpack.c.bf16 %v2959, %v2958
        %v2970 = vpack.c.bf16 %v2961, %v2960
        %v2971 = vpack.c.bf16 %v2963, %v2962
        %v2972 = vld [vmem:[#allocation8 + $0x30] sm:$0xf]
        %v2973 = vld [vmem:[#allocation8 + $0x34] sm:$0xf]
        %v2974 = vld [vmem:[#allocation8 + $0x38] sm:$0xf]
        %v2975 = vld [vmem:[#allocation8 + $0x3c] sm:$0xf]
        %v2980 = vunpack.c.l.b16 %v2972
        %v2981 = vunpack.c.l.b16 %v2973
        %v2982 = vunpack.c.l.b16 %v2974
        %v2983 = vunpack.c.l.b16 %v2975
        %v2984 = vpack.c.b16 %v2981, %v2980
        %v2985 = vpack.c.b16 %v2983, %v2982
        %v2989 = vsel %vm1272, %v2964, 0
        %v2992 = vsel %vm1272, %v2965, 0
        %v2995 = vsel %vm1272, %v2966, 0
        %v2998 = vsel %vm1272, %v2967, 0
        %v3001 = vsel %vm1272, %v2968, 0
        %v3004 = vsel %vm1272, %v2969, 0
        %v3007 = vsel %vm1272, %v2970, 0
        %v3010 = vsel %vm1272, %v2971, 0
        %3012 = vmatpush.bf16.msra.mxu0 0
        %3013 = vmatpush.bf16.msra.mxu0 0
        %3014 = vmatpush.bf16.msra.mxu0 0
        %3015 = vmatpush.bf16.msra.mxu0 0
        %3016 = vmatpush.bf16.msra.mxu0 0
        %3017 = vmatpush.bf16.msra.mxu0 0
        %3018 = vmatpush.bf16.msra.mxu0 %v2985
        %3019 = vmatpush.bf16.msra.mxu0 %v2984
        %3020 = vmatmul.bf16.gmra.mxu0 %v2989
        %v3021 = vpop.f32.mrf.mxu0
        %v3022 = vadd.f32 0.0, %v3021
        %v3023 = vpop.f32.mrf.mxu0
        %v3024 = vadd.f32 0.0, %v3023
        %3025 = vmatmul.bf16.gmra.mxu0 %v2992
        %v3026 = vpop.f32.mrf.mxu0
        %v3027 = vadd.f32 0.0, %v3026
        %v3028 = vpop.f32.mrf.mxu0
        %v3029 = vadd.f32 0.0, %v3028
        %3030 = vmatmul.bf16.gmra.mxu0 %v2995
        %v3031 = vpop.f32.mrf.mxu0
        %v3032 = vadd.f32 0.0, %v3031
        %v3033 = vpop.f32.mrf.mxu0
        %v3034 = vadd.f32 0.0, %v3033
        %3035 = vmatmul.bf16.gmra.mxu0 %v2998
        %v3036 = vpop.f32.mrf.mxu0
        %v3037 = vadd.f32 0.0, %v3036
        %v3038 = vpop.f32.mrf.mxu0
        %v3039 = vadd.f32 0.0, %v3038
        %3040 = vmatmul.bf16.gmra.mxu0 %v3001
        %v3041 = vpop.f32.mrf.mxu0
        %v3042 = vadd.f32 0.0, %v3041
        %v3043 = vpop.f32.mrf.mxu0
        %v3044 = vadd.f32 0.0, %v3043
        %3045 = vmatmul.bf16.gmra.mxu0 %v3004
        %v3046 = vpop.f32.mrf.mxu0
        %v3047 = vadd.f32 0.0, %v3046
        %v3048 = vpop.f32.mrf.mxu0
        %v3049 = vadd.f32 0.0, %v3048
        %3050 = vmatmul.bf16.gmra.mxu0 %v3007
        %v3051 = vpop.f32.mrf.mxu0
        %v3052 = vadd.f32 0.0, %v3051
        %v3053 = vpop.f32.mrf.mxu0
        %v3054 = vadd.f32 0.0, %v3053
        %3055 = vmatmul.bf16.gmra.mxu0 %v3010
        %v3056 = vpop.f32.mrf.mxu0
        %v3057 = vadd.f32 0.0, %v3056
        %v3058 = vpop.f32.mrf.mxu0
        %v3059 = vadd.f32 0.0, %v3058
        %3060 = vdwg.mxu0
        %v3061 = vadd.f32 %v2594, %v3022
        %v3062 = vadd.f32 %v2595, %v3024
        %v3063 = vadd.f32 %v2596, %v3027
        %v3064 = vadd.f32 %v2597, %v3029
        %v3065 = vadd.f32 %v2598, %v3032
        %v3066 = vadd.f32 %v2599, %v3034
        %v3067 = vadd.f32 %v2600, %v3037
        %v3068 = vadd.f32 %v2601, %v3039
        %v3069 = vadd.f32 %v2602, %v3042
        %v3070 = vadd.f32 %v2603, %v3044
        %v3071 = vadd.f32 %v2604, %v3047
        %v3072 = vadd.f32 %v2605, %v3049
        %v3073 = vadd.f32 %v2606, %v3052
        %v3074 = vadd.f32 %v2607, %v3054
        %v3075 = vadd.f32 %v2608, %v3057
        %v3076 = vadd.f32 %v2609, %v3059
        %v3077 = vadd.f32 %v530, %v3061
        %v3078 = vadd.f32 %v531, %v3062
        %v3079 = vadd.f32 %v532, %v3063
        %v3080 = vadd.f32 %v533, %v3064
        %v3081 = vadd.f32 %v534, %v3065
        %v3082 = vadd.f32 %v535, %v3066
        %v3083 = vadd.f32 %v536, %v3067
        %v3084 = vadd.f32 %v537, %v3068
        %v3085 = vadd.f32 %v538, %v3069
        %v3086 = vadd.f32 %v539, %v3070
        %v3087 = vadd.f32 %v540, %v3071
        %v3088 = vadd.f32 %v541, %v3072
        %v3089 = vadd.f32 %v542, %v3073
        %v3090 = vadd.f32 %v543, %v3074
        %v3091 = vadd.f32 %v544, %v3075
        %v3092 = vadd.f32 %v545, %v3076
        %v3093 = vld [vmem:[%s5] sm:$0x1]
        %v3095 = vperm.slane %v3093, 0
        %v3097 = vadd.f32 %v3077, %v3095
        %v3098 = vadd.f32 %v3078, %v3095
        %v3099 = vadd.f32 %v3079, %v3095
        %v3100 = vadd.f32 %v3080, %v3095
        %v3101 = vadd.f32 %v3081, %v3095
        %v3102 = vadd.f32 %v3082, %v3095
        %v3103 = vadd.f32 %v3083, %v3095
        %v3104 = vadd.f32 %v3084, %v3095
        %v3105 = vadd.f32 %v3085, %v3095
        %v3106 = vadd.f32 %v3086, %v3095
        %v3107 = vadd.f32 %v3087, %v3095
        %v3108 = vadd.f32 %v3088, %v3095
        %v3109 = vadd.f32 %v3089, %v3095
        %v3110 = vadd.f32 %v3090, %v3095
        %v3111 = vadd.f32 %v3091, %v3095
        %v3112 = vadd.f32 %v3092, %v3095
        %v3113 = vld [vmem:[%s6] sm:$0x1]
        %v3114 = vld [vmem:[#allocation10] sm:$0x1]
        %3115 = vadd.xlane.f32.xlu0 %v3097
        %v3116 = vpop.xlane.xlu0 %3115
        %3117 = vadd.xlane.f32.xlu0 %v3098
        %v3118 = vpop.xlane.xlu0 %3117
        %3119 = vadd.xlane.f32.xlu0 %v3099
        %v3120 = vpop.xlane.xlu0 %3119
        %3121 = vadd.xlane.f32.xlu0 %v3100
        %v3122 = vpop.xlane.xlu0 %3121
        %3123 = vadd.xlane.f32.xlu0 %v3101
        %v3124 = vpop.xlane.xlu0 %3123
        %3125 = vadd.xlane.f32.xlu0 %v3102
        %v3126 = vpop.xlane.xlu0 %3125
        %3127 = vadd.xlane.f32.xlu0 %v3103
        %v3128 = vpop.xlane.xlu0 %3127
        %3129 = vadd.xlane.f32.xlu0 %v3104
        %v3130 = vpop.xlane.xlu0 %3129
        %3131 = vadd.xlane.f32.xlu0 %v3105
        %v3132 = vpop.xlane.xlu0 %3131
        %3133 = vadd.xlane.f32.xlu0 %v3106
        %v3134 = vpop.xlane.xlu0 %3133
        %3135 = vadd.xlane.f32.xlu0 %v3107
        %v3136 = vpop.xlane.xlu0 %3135
        %3137 = vadd.xlane.f32.xlu0 %v3108
        %v3138 = vpop.xlane.xlu0 %3137
        %3139 = vadd.xlane.f32.xlu0 %v3109
        %v3140 = vpop.xlane.xlu0 %3139
        %3141 = vadd.xlane.f32.xlu0 %v3110
        %v3142 = vpop.xlane.xlu0 %3141
        %3143 = vadd.xlane.f32.xlu0 %v3111
        %v3144 = vpop.xlane.xlu0 %3143
        %3145 = vadd.xlane.f32.xlu0 %v3112
        %v3146 = vpop.xlane.xlu0 %3145
        %v3147 = vmul.f32 %v3116, %v586
        %v3148 = vmul.f32 %v3118, %v586
        %v3149 = vmul.f32 %v3120, %v586
        %v3150 = vmul.f32 %v3122, %v586
        %v3151 = vmul.f32 %v3124, %v586
        %v3152 = vmul.f32 %v3126, %v586
        %v3153 = vmul.f32 %v3128, %v586
        %v3154 = vmul.f32 %v3130, %v586
        %v3155 = vmul.f32 %v3132, %v586
        %v3156 = vmul.f32 %v3134, %v586
        %v3157 = vmul.f32 %v3136, %v586
        %v3158 = vmul.f32 %v3138, %v586
        %v3159 = vmul.f32 %v3140, %v586
        %v3160 = vmul.f32 %v3142, %v586
        %v3161 = vmul.f32 %v3144, %v586
        %v3162 = vmul.f32 %v3146, %v586
        %v3163 = vsub.f32 %v3097, %v3147
        %v3164 = vsub.f32 %v3098, %v3148
        %v3165 = vsub.f32 %v3099, %v3149
        %v3166 = vsub.f32 %v3100, %v3150
        %v3167 = vsub.f32 %v3101, %v3151
        %v3168 = vsub.f32 %v3102, %v3152
        %v3169 = vsub.f32 %v3103, %v3153
        %v3170 = vsub.f32 %v3104, %v3154
        %v3171 = vsub.f32 %v3105, %v3155
        %v3172 = vsub.f32 %v3106, %v3156
        %v3173 = vsub.f32 %v3107, %v3157
        %v3174 = vsub.f32 %v3108, %v3158
        %v3175 = vsub.f32 %v3109, %v3159
        %v3176 = vsub.f32 %v3110, %v3160
        %v3177 = vsub.f32 %v3111, %v3161
        %v3178 = vsub.f32 %v3112, %v3162
        %v3179 = vmul.f32 %v3163, %v3163
        %v3180 = vmul.f32 %v3164, %v3164
        %v3181 = vmul.f32 %v3165, %v3165
        %v3182 = vmul.f32 %v3166, %v3166
        %v3183 = vmul.f32 %v3167, %v3167
        %v3184 = vmul.f32 %v3168, %v3168
        %v3185 = vmul.f32 %v3169, %v3169
        %v3186 = vmul.f32 %v3170, %v3170
        %v3187 = vmul.f32 %v3171, %v3171
        %v3188 = vmul.f32 %v3172, %v3172
        %v3189 = vmul.f32 %v3173, %v3173
        %v3190 = vmul.f32 %v3174, %v3174
        %v3191 = vmul.f32 %v3175, %v3175
        %v3192 = vmul.f32 %v3176, %v3176
        %v3193 = vmul.f32 %v3177, %v3177
        %v3194 = vmul.f32 %v3178, %v3178
        %3195 = vadd.xlane.f32.xlu0 %v3179
        %v3196 = vpop.xlane.xlu0 %3195
        %3197 = vadd.xlane.f32.xlu0 %v3180
        %v3198 = vpop.xlane.xlu0 %3197
        %3199 = vadd.xlane.f32.xlu0 %v3181
        %v3200 = vpop.xlane.xlu0 %3199
        %3201 = vadd.xlane.f32.xlu0 %v3182
        %v3202 = vpop.xlane.xlu0 %3201
        %3203 = vadd.xlane.f32.xlu0 %v3183
        %v3204 = vpop.xlane.xlu0 %3203
        %3205 = vadd.xlane.f32.xlu0 %v3184
        %v3206 = vpop.xlane.xlu0 %3205
        %3207 = vadd.xlane.f32.xlu0 %v3185
        %v3208 = vpop.xlane.xlu0 %3207
        %3209 = vadd.xlane.f32.xlu0 %v3186
        %v3210 = vpop.xlane.xlu0 %3209
        %3211 = vadd.xlane.f32.xlu0 %v3187
        %v3212 = vpop.xlane.xlu0 %3211
        %3213 = vadd.xlane.f32.xlu0 %v3188
        %v3214 = vpop.xlane.xlu0 %3213
        %3215 = vadd.xlane.f32.xlu0 %v3189
        %v3216 = vpop.xlane.xlu0 %3215
        %3217 = vadd.xlane.f32.xlu0 %v3190
        %v3218 = vpop.xlane.xlu0 %3217
        %3219 = vadd.xlane.f32.xlu0 %v3191
        %v3220 = vpop.xlane.xlu0 %3219
        %3221 = vadd.xlane.f32.xlu0 %v3192
        %v3222 = vpop.xlane.xlu0 %3221
        %3223 = vadd.xlane.f32.xlu0 %v3193
        %v3224 = vpop.xlane.xlu0 %3223
        %3225 = vadd.xlane.f32.xlu0 %v3194
        %v3226 = vpop.xlane.xlu0 %3225
        %v3227 = vmul.f32 %v3196, %v586
        %v3228 = vmul.f32 %v3198, %v586
        %v3229 = vmul.f32 %v3200, %v586
        %v3230 = vmul.f32 %v3202, %v586
        %v3231 = vmul.f32 %v3204, %v586
        %v3232 = vmul.f32 %v3206, %v586
        %v3233 = vmul.f32 %v3208, %v586
        %v3234 = vmul.f32 %v3210, %v586
        %v3235 = vmul.f32 %v3212, %v586
        %v3236 = vmul.f32 %v3214, %v586
        %v3237 = vmul.f32 %v3216, %v586
        %v3238 = vmul.f32 %v3218, %v586
        %v3239 = vmul.f32 %v3220, %v586
        %v3240 = vmul.f32 %v3222, %v586
        %v3241 = vmul.f32 %v3224, %v586
        %v3242 = vmul.f32 %v3226, %v586
        %v3243 = vadd.f32 %v3227, 1e-05
        %v3244 = vadd.f32 %v3228, 1e-05
        %v3245 = vadd.f32 %v3229, 1e-05
        %v3246 = vadd.f32 %v3230, 1e-05
        %v3247 = vadd.f32 %v3231, 1e-05
        %v3248 = vadd.f32 %v3232, 1e-05
        %v3249 = vadd.f32 %v3233, 1e-05
        %v3250 = vadd.f32 %v3234, 1e-05
        %v3251 = vadd.f32 %v3235, 1e-05
        %v3252 = vadd.f32 %v3236, 1e-05
        %v3253 = vadd.f32 %v3237, 1e-05
        %v3254 = vadd.f32 %v3238, 1e-05
        %v3255 = vadd.f32 %v3239, 1e-05
        %v3256 = vadd.f32 %v3240, 1e-05
        %v3257 = vadd.f32 %v3241, 1e-05
        %v3258 = vadd.f32 %v3242, 1e-05
        %v3259 = vrsqrt.pop %v3243
        %v3260 = vmul.f32 %v3259, %v3243
        %v3261 = vmul.f32 %v3260, %v3259
        %v3262 = vmul.f32 0.5, %v3261
        %v3263 = vsub.f32 1.5, %v3262
        %v3264 = vmul.f32 %v3259, %v3263
        %vm3265 = vweird.f32 %v3243
        %vm3266 = vweird.f32 %v3259
        %vm3267 = vmor %vm3265, %vm3266
        %v3268 = vsel %vm3267, %v3259, %v3264
        %v3269 = vrsqrt.pop %v3244
        %v3270 = vmul.f32 %v3269, %v3244
        %v3271 = vmul.f32 %v3270, %v3269
        %v3272 = vmul.f32 0.5, %v3271
        %v3273 = vsub.f32 1.5, %v3272
        %v3274 = vmul.f32 %v3269, %v3273
        %vm3275 = vweird.f32 %v3244
        %vm3276 = vweird.f32 %v3269
        %vm3277 = vmor %vm3275, %vm3276
        %v3278 = vsel %vm3277, %v3269, %v3274
        %v3279 = vrsqrt.pop %v3245
        %v3280 = vmul.f32 %v3279, %v3245
        %v3281 = vmul.f32 %v3280, %v3279
        %v3282 = vmul.f32 0.5, %v3281
        %v3283 = vsub.f32 1.5, %v3282
        %v3284 = vmul.f32 %v3279, %v3283
        %vm3285 = vweird.f32 %v3245
        %vm3286 = vweird.f32 %v3279
        %vm3287 = vmor %vm3285, %vm3286
        %v3288 = vsel %vm3287, %v3279, %v3284
        %v3289 = vrsqrt.pop %v3246
        %v3290 = vmul.f32 %v3289, %v3246
        %v3291 = vmul.f32 %v3290, %v3289
        %v3292 = vmul.f32 0.5, %v3291
        %v3293 = vsub.f32 1.5, %v3292
        %v3294 = vmul.f32 %v3289, %v3293
        %vm3295 = vweird.f32 %v3246
        %vm3296 = vweird.f32 %v3289
        %vm3297 = vmor %vm3295, %vm3296
        %v3298 = vsel %vm3297, %v3289, %v3294
        %v3299 = vrsqrt.pop %v3247
        %v3300 = vmul.f32 %v3299, %v3247
        %v3301 = vmul.f32 %v3300, %v3299
        %v3302 = vmul.f32 0.5, %v3301
        %v3303 = vsub.f32 1.5, %v3302
        %v3304 = vmul.f32 %v3299, %v3303
        %vm3305 = vweird.f32 %v3247
        %vm3306 = vweird.f32 %v3299
        %vm3307 = vmor %vm3305, %vm3306
        %v3308 = vsel %vm3307, %v3299, %v3304
        %v3309 = vrsqrt.pop %v3248
        %v3310 = vmul.f32 %v3309, %v3248
        %v3311 = vmul.f32 %v3310, %v3309
        %v3312 = vmul.f32 0.5, %v3311
        %v3313 = vsub.f32 1.5, %v3312
        %v3314 = vmul.f32 %v3309, %v3313
        %vm3315 = vweird.f32 %v3248
        %vm3316 = vweird.f32 %v3309
        %vm3317 = vmor %vm3315, %vm3316
        %v3318 = vsel %vm3317, %v3309, %v3314
        %v3319 = vrsqrt.pop %v3249
        %v3320 = vmul.f32 %v3319, %v3249
        %v3321 = vmul.f32 %v3320, %v3319
        %v3322 = vmul.f32 0.5, %v3321
        %v3323 = vsub.f32 1.5, %v3322
        %v3324 = vmul.f32 %v3319, %v3323
        %vm3325 = vweird.f32 %v3249
        %vm3326 = vweird.f32 %v3319
        %vm3327 = vmor %vm3325, %vm3326
        %v3328 = vsel %vm3327, %v3319, %v3324
        %v3329 = vrsqrt.pop %v3250
        %v3330 = vmul.f32 %v3329, %v3250
        %v3331 = vmul.f32 %v3330, %v3329
        %v3332 = vmul.f32 0.5, %v3331
        %v3333 = vsub.f32 1.5, %v3332
        %v3334 = vmul.f32 %v3329, %v3333
        %vm3335 = vweird.f32 %v3250
        %vm3336 = vweird.f32 %v3329
        %vm3337 = vmor %vm3335, %vm3336
        %v3338 = vsel %vm3337, %v3329, %v3334
        %v3339 = vrsqrt.pop %v3251
        %v3340 = vmul.f32 %v3339, %v3251
        %v3341 = vmul.f32 %v3340, %v3339
        %v3342 = vmul.f32 0.5, %v3341
        %v3343 = vsub.f32 1.5, %v3342
        %v3344 = vmul.f32 %v3339, %v3343
        %vm3345 = vweird.f32 %v3251
        %vm3346 = vweird.f32 %v3339
        %vm3347 = vmor %vm3345, %vm3346
        %v3348 = vsel %vm3347, %v3339, %v3344
        %v3349 = vrsqrt.pop %v3252
        %v3350 = vmul.f32 %v3349, %v3252
        %v3351 = vmul.f32 %v3350, %v3349
        %v3352 = vmul.f32 0.5, %v3351
        %v3353 = vsub.f32 1.5, %v3352
        %v3354 = vmul.f32 %v3349, %v3353
        %vm3355 = vweird.f32 %v3252
        %vm3356 = vweird.f32 %v3349
        %vm3357 = vmor %vm3355, %vm3356
        %v3358 = vsel %vm3357, %v3349, %v3354
        %v3359 = vrsqrt.pop %v3253
        %v3360 = vmul.f32 %v3359, %v3253
        %v3361 = vmul.f32 %v3360, %v3359
        %v3362 = vmul.f32 0.5, %v3361
        %v3363 = vsub.f32 1.5, %v3362
        %v3364 = vmul.f32 %v3359, %v3363
        %vm3365 = vweird.f32 %v3253
        %vm3366 = vweird.f32 %v3359
        %vm3367 = vmor %vm3365, %vm3366
        %v3368 = vsel %vm3367, %v3359, %v3364
        %v3369 = vrsqrt.pop %v3254
        %v3370 = vmul.f32 %v3369, %v3254
        %v3371 = vmul.f32 %v3370, %v3369
        %v3372 = vmul.f32 0.5, %v3371
        %v3373 = vsub.f32 1.5, %v3372
        %v3374 = vmul.f32 %v3369, %v3373
        %vm3375 = vweird.f32 %v3254
        %vm3376 = vweird.f32 %v3369
        %vm3377 = vmor %vm3375, %vm3376
        %v3378 = vsel %vm3377, %v3369, %v3374
        %v3379 = vrsqrt.pop %v3255
        %v3380 = vmul.f32 %v3379, %v3255
        %v3381 = vmul.f32 %v3380, %v3379
        %v3382 = vmul.f32 0.5, %v3381
        %v3383 = vsub.f32 1.5, %v3382
        %v3384 = vmul.f32 %v3379, %v3383
        %vm3385 = vweird.f32 %v3255
        %vm3386 = vweird.f32 %v3379
        %vm3387 = vmor %vm3385, %vm3386
        %v3388 = vsel %vm3387, %v3379, %v3384
        %v3389 = vrsqrt.pop %v3256
        %v3390 = vmul.f32 %v3389, %v3256
        %v3391 = vmul.f32 %v3390, %v3389
        %v3392 = vmul.f32 0.5, %v3391
        %v3393 = vsub.f32 1.5, %v3392
        %v3394 = vmul.f32 %v3389, %v3393
        %vm3395 = vweird.f32 %v3256
        %vm3396 = vweird.f32 %v3389
        %vm3397 = vmor %vm3395, %vm3396
        %v3398 = vsel %vm3397, %v3389, %v3394
        %v3399 = vrsqrt.pop %v3257
        %v3400 = vmul.f32 %v3399, %v3257
        %v3401 = vmul.f32 %v3400, %v3399
        %v3402 = vmul.f32 0.5, %v3401
        %v3403 = vsub.f32 1.5, %v3402
        %v3404 = vmul.f32 %v3399, %v3403
        %vm3405 = vweird.f32 %v3257
        %vm3406 = vweird.f32 %v3399
        %vm3407 = vmor %vm3405, %vm3406
        %v3408 = vsel %vm3407, %v3399, %v3404
        %v3409 = vrsqrt.pop %v3258
        %v3410 = vmul.f32 %v3409, %v3258
        %v3411 = vmul.f32 %v3410, %v3409
        %v3412 = vmul.f32 0.5, %v3411
        %v3413 = vsub.f32 1.5, %v3412
        %v3414 = vmul.f32 %v3409, %v3413
        %vm3415 = vweird.f32 %v3258
        %vm3416 = vweird.f32 %v3409
        %vm3417 = vmor %vm3415, %vm3416
        %v3418 = vsel %vm3417, %v3409, %v3414
        %v3419 = vmul.f32 %v3163, %v3268
        %v3420 = vmul.f32 %v3164, %v3278
        %v3421 = vmul.f32 %v3165, %v3288
        %v3422 = vmul.f32 %v3166, %v3298
        %v3423 = vmul.f32 %v3167, %v3308
        %v3424 = vmul.f32 %v3168, %v3318
        %v3425 = vmul.f32 %v3169, %v3328
        %v3426 = vmul.f32 %v3170, %v3338
        %v3427 = vmul.f32 %v3171, %v3348
        %v3428 = vmul.f32 %v3172, %v3358
        %v3429 = vmul.f32 %v3173, %v3368
        %v3430 = vmul.f32 %v3174, %v3378
        %v3431 = vmul.f32 %v3175, %v3388
        %v3432 = vmul.f32 %v3176, %v3398
        %v3433 = vmul.f32 %v3177, %v3408
        %v3434 = vmul.f32 %v3178, %v3418
        %v3436 = vperm.slane %v3113, 0
        %v3438 = vmul.f32 %v3419, %v3436
        %v3439 = vmul.f32 %v3420, %v3436
        %v3440 = vmul.f32 %v3421, %v3436
        %v3441 = vmul.f32 %v3422, %v3436
        %v3442 = vmul.f32 %v3423, %v3436
        %v3443 = vmul.f32 %v3424, %v3436
        %v3444 = vmul.f32 %v3425, %v3436
        %v3445 = vmul.f32 %v3426, %v3436
        %v3446 = vmul.f32 %v3427, %v3436
        %v3447 = vmul.f32 %v3428, %v3436
        %v3448 = vmul.f32 %v3429, %v3436
        %v3449 = vmul.f32 %v3430, %v3436
        %v3450 = vmul.f32 %v3431, %v3436
        %v3451 = vmul.f32 %v3432, %v3436
        %v3452 = vmul.f32 %v3433, %v3436
        %v3453 = vmul.f32 %v3434, %v3436
        %v3455 = vperm.slane %v3114, 0
        %v3457 = vadd.f32 %v3438, %v3455
        %v3458 = vadd.f32 %v3439, %v3455
        %v3459 = vadd.f32 %v3440, %v3455
        %v3460 = vadd.f32 %v3441, %v3455
        %v3461 = vadd.f32 %v3442, %v3455
        %v3462 = vadd.f32 %v3443, %v3455
        %v3463 = vadd.f32 %v3444, %v3455
        %v3464 = vadd.f32 %v3445, %v3455
        %v3465 = vadd.f32 %v3446, %v3455
        %v3466 = vadd.f32 %v3447, %v3455
        %v3467 = vadd.f32 %v3448, %v3455
        %v3468 = vadd.f32 %v3449, %v3455
        %v3469 = vadd.f32 %v3450, %v3455
        %v3470 = vadd.f32 %v3451, %v3455
        %v3471 = vadd.f32 %v3452, %v3455
        %v3472 = vadd.f32 %v3453, %v3455
        %v3473 = vpack.c.bf16 %v3458, %v3457
        %v3474 = vpack.c.bf16 %v3460, %v3459
        %v3475 = vpack.c.bf16 %v3462, %v3461
        %v3476 = vpack.c.bf16 %v3464, %v3463
        %v3477 = vpack.c.bf16 %v3466, %v3465
        %v3478 = vpack.c.bf16 %v3468, %v3467
        %v3479 = vpack.c.bf16 %v3470, %v3469
        %v3480 = vpack.c.bf16 %v3472, %v3471
        %v3481 = vld [vmem:[#allocation11] sm:$0xff]
        %v3482 = vld [vmem:[#allocation11 + $0x8] sm:$0xff]
        %v3483 = vld [vmem:[#allocation11 + $0x10] sm:$0xff]
        %v3484 = vld [vmem:[#allocation11 + $0x18] sm:$0xff]
        %v3485 = vld [vmem:[#allocation11 + $0x20] sm:$0xff]
        %v3486 = vld [vmem:[#allocation11 + $0x28] sm:$0xff]
        %v3487 = vld [vmem:[#allocation11 + $0x30] sm:$0xff]
        %v3488 = vld [vmem:[#allocation11 + $0x38] sm:$0xff]
        %v3489 = vld [vmem:[#allocation11 + $0x40] sm:$0xff]
        %v3490 = vld [vmem:[#allocation11 + $0x48] sm:$0xff]
        %v3491 = vld [vmem:[#allocation11 + $0x50] sm:$0xff]
        %v3492 = vld [vmem:[#allocation11 + $0x58] sm:$0xff]
        %v3493 = vld [vmem:[#allocation11 + $0x60] sm:$0xff]
        %v3494 = vld [vmem:[#allocation11 + $0x68] sm:$0xff]
        %v3495 = vld [vmem:[#allocation11 + $0x70] sm:$0xff]
        %v3496 = vld [vmem:[#allocation11 + $0x78] sm:$0xff]
        %v3497 = vld [vmem:[#allocation11 + $0x80] sm:$0xff]
        %v3498 = vld [vmem:[#allocation11 + $0x88] sm:$0xff]
        %v3499 = vld [vmem:[#allocation11 + $0x90] sm:$0xff]
        %v3500 = vld [vmem:[#allocation11 + $0x98] sm:$0xff]
        %v3501 = vld [vmem:[#allocation11 + $0xa0] sm:$0xff]
        %v3502 = vld [vmem:[#allocation11 + $0xa8] sm:$0xff]
        %v3503 = vld [vmem:[#allocation11 + $0xb0] sm:$0xff]
        %v3504 = vld [vmem:[#allocation11 + $0xb8] sm:$0xff]
        %v3505 = vld [vmem:[#allocation11 + $0xc0] sm:$0xff]
        %v3506 = vld [vmem:[#allocation11 + $0xc8] sm:$0xff]
        %v3507 = vld [vmem:[#allocation11 + $0xd0] sm:$0xff]
        %v3508 = vld [vmem:[#allocation11 + $0xd8] sm:$0xff]
        %v3509 = vld [vmem:[#allocation11 + $0xe0] sm:$0xff]
        %v3510 = vld [vmem:[#allocation11 + $0xe8] sm:$0xff]
        %v3511 = vld [vmem:[#allocation11 + $0xf0] sm:$0xff]
        %v3512 = vld [vmem:[#allocation11 + $0xf8] sm:$0xff]
        %v3513 = vld [vmem:[%s9] sm:$0xf]
        %v3515 = vperm.slane %v3513, 0
        %v3516 = vperm.slane %v3513, 1
        %v3517 = vperm.slane %v3513, 2
        %v3518 = vperm.slane %v3513, 3
        %v3555 = vunpack.c.l.b16 %v3481
        %v3556 = vunpack.c.h.b16 %v3481
        %v3557 = vunpack.c.l.b16 %v3482
        %v3558 = vunpack.c.h.b16 %v3482
        %v3559 = vunpack.c.l.b16 %v3483
        %v3560 = vunpack.c.h.b16 %v3483
        %v3561 = vunpack.c.l.b16 %v3484
        %v3562 = vunpack.c.h.b16 %v3484
        %v3563 = vunpack.c.l.b16 %v3485
        %v3564 = vunpack.c.h.b16 %v3485
        %v3565 = vunpack.c.l.b16 %v3486
        %v3566 = vunpack.c.h.b16 %v3486
        %v3567 = vunpack.c.l.b16 %v3487
        %v3568 = vunpack.c.h.b16 %v3487
        %v3569 = vunpack.c.l.b16 %v3488
        %v3570 = vunpack.c.h.b16 %v3488
        %v3571 = vunpack.c.l.b16 %v3489
        %v3572 = vunpack.c.h.b16 %v3489
        %v3573 = vunpack.c.l.b16 %v3490
        %v3574 = vunpack.c.h.b16 %v3490
        %v3575 = vunpack.c.l.b16 %v3491
        %v3576 = vunpack.c.h.b16 %v3491
        %v3577 = vunpack.c.l.b16 %v3492
        %v3578 = vunpack.c.h.b16 %v3492
        %v3579 = vunpack.c.l.b16 %v3493
        %v3580 = vunpack.c.h.b16 %v3493
        %v3581 = vunpack.c.l.b16 %v3494
        %v3582 = vunpack.c.h.b16 %v3494
        %v3583 = vunpack.c.l.b16 %v3495
        %v3584 = vunpack.c.h.b16 %v3495
        %v3585 = vunpack.c.l.b16 %v3496
        %v3586 = vunpack.c.h.b16 %v3496
        %v3587 = vunpack.c.l.b16 %v3497
        %v3588 = vunpack.c.h.b16 %v3497
        %v3589 = vunpack.c.l.b16 %v3498
        %v3590 = vunpack.c.h.b16 %v3498
        %v3591 = vunpack.c.l.b16 %v3499
        %v3592 = vunpack.c.h.b16 %v3499
        %v3593 = vunpack.c.l.b16 %v3500
        %v3594 = vunpack.c.h.b16 %v3500
        %v3595 = vunpack.c.l.b16 %v3501
        %v3596 = vunpack.c.h.b16 %v3501
        %v3597 = vunpack.c.l.b16 %v3502
        %v3598 = vunpack.c.h.b16 %v3502
        %v3599 = vunpack.c.l.b16 %v3503
        %v3600 = vunpack.c.h.b16 %v3503
        %v3601 = vunpack.c.l.b16 %v3504
        %v3602 = vunpack.c.h.b16 %v3504
        %v3603 = vunpack.c.l.b16 %v3505
        %v3604 = vunpack.c.h.b16 %v3505
        %v3605 = vunpack.c.l.b16 %v3506
        %v3606 = vunpack.c.h.b16 %v3506
        %v3607 = vunpack.c.l.b16 %v3507
        %v3608 = vunpack.c.h.b16 %v3507
        %v3609 = vunpack.c.l.b16 %v3508
        %v3610 = vunpack.c.h.b16 %v3508
        %v3611 = vunpack.c.l.b16 %v3509
        %v3612 = vunpack.c.h.b16 %v3509
        %v3613 = vunpack.c.l.b16 %v3510
        %v3614 = vunpack.c.h.b16 %v3510
        %v3615 = vunpack.c.l.b16 %v3511
        %v3616 = vunpack.c.h.b16 %v3511
        %v3617 = vunpack.c.l.b16 %v3512
        %v3618 = vunpack.c.h.b16 %v3512
        %v3619 = vpack.c.b16 %v3559, %v3555
        %v3620 = vpack.c.b16 %v3560, %v3556
        %v3621 = vpack.c.b16 %v3561, %v3557
        %v3622 = vpack.c.b16 %v3562, %v3558
        %v3623 = vpack.c.b16 %v3567, %v3563
        %v3624 = vpack.c.b16 %v3568, %v3564
        %v3625 = vpack.c.b16 %v3569, %v3565
        %v3626 = vpack.c.b16 %v3570, %v3566
        %v3627 = vpack.c.b16 %v3575, %v3571
        %v3628 = vpack.c.b16 %v3576, %v3572
        %v3629 = vpack.c.b16 %v3577, %v3573
        %v3630 = vpack.c.b16 %v3578, %v3574
        %v3631 = vpack.c.b16 %v3583, %v3579
        %v3632 = vpack.c.b16 %v3584, %v3580
        %v3633 = vpack.c.b16 %v3585, %v3581
        %v3634 = vpack.c.b16 %v3586, %v3582
        %v3635 = vpack.c.b16 %v3591, %v3587
        %v3636 = vpack.c.b16 %v3592, %v3588
        %v3637 = vpack.c.b16 %v3593, %v3589
        %v3638 = vpack.c.b16 %v3594, %v3590
        %v3639 = vpack.c.b16 %v3599, %v3595
        %v3640 = vpack.c.b16 %v3600, %v3596
        %v3641 = vpack.c.b16 %v3601, %v3597
        %v3642 = vpack.c.b16 %v3602, %v3598
        %v3643 = vpack.c.b16 %v3607, %v3603
        %v3644 = vpack.c.b16 %v3608, %v3604
        %v3645 = vpack.c.b16 %v3609, %v3605
        %v3646 = vpack.c.b16 %v3610, %v3606
        %v3647 = vpack.c.b16 %v3615, %v3611
        %v3648 = vpack.c.b16 %v3616, %v3612
        %v3649 = vpack.c.b16 %v3617, %v3613
        %v3650 = vpack.c.b16 %v3618, %v3614
        %3683 = vmatpush.bf16.msra.mxu0 %v3647
        %3684 = vmatpush.bf16.msra.mxu0 %v3643
        %3685 = vmatpush.bf16.msra.mxu0 %v3639
        %3686 = vmatpush.bf16.msra.mxu0 %v3635
        %3687 = vmatpush.bf16.msra.mxu0 %v3631
        %3688 = vmatpush.bf16.msra.mxu0 %v3627
        %3689 = vmatpush.bf16.msra.mxu0 %v3623
        %3690 = vmatpush.bf16.msra.mxu0 %v3619
        %3691 = vmatmul.bf16.gmra.mxu0 %v3473
        %v3692 = vpop.f32.mrf.mxu0
        %v3693 = vadd.f32 %v3515, %v3692
        %v3694 = vpop.f32.mrf.mxu0
        %v3695 = vadd.f32 %v3515, %v3694
        %3696 = vmatmul.bf16.gmra.mxu0 %v3474
        %v3697 = vpop.f32.mrf.mxu0
        %v3698 = vadd.f32 %v3515, %v3697
        %v3699 = vpop.f32.mrf.mxu0
        %v3700 = vadd.f32 %v3515, %v3699
        %3701 = vmatmul.bf16.gmra.mxu0 %v3475
        %v3702 = vpop.f32.mrf.mxu0
        %v3703 = vadd.f32 %v3515, %v3702
        %v3704 = vpop.f32.mrf.mxu0
        %v3705 = vadd.f32 %v3515, %v3704
        %3706 = vmatmul.bf16.gmra.mxu0 %v3476
        %v3707 = vpop.f32.mrf.mxu0
        %v3708 = vadd.f32 %v3515, %v3707
        %v3709 = vpop.f32.mrf.mxu0
        %v3710 = vadd.f32 %v3515, %v3709
        %3711 = vmatmul.bf16.gmra.mxu0 %v3477
        %v3712 = vpop.f32.mrf.mxu0
        %v3713 = vadd.f32 %v3515, %v3712
        %v3714 = vpop.f32.mrf.mxu0
        %v3715 = vadd.f32 %v3515, %v3714
        %3716 = vmatmul.bf16.gmra.mxu0 %v3478
        %v3717 = vpop.f32.mrf.mxu0
        %v3718 = vadd.f32 %v3515, %v3717
        %v3719 = vpop.f32.mrf.mxu0
        %v3720 = vadd.f32 %v3515, %v3719
        %3721 = vmatmul.bf16.gmra.mxu0 %v3479
        %v3722 = vpop.f32.mrf.mxu0
        %v3723 = vadd.f32 %v3515, %v3722
        %v3724 = vpop.f32.mrf.mxu0
        %v3725 = vadd.f32 %v3515, %v3724
        %3726 = vmatmul.bf16.gmra.mxu0 %v3480
        %v3727 = vpop.f32.mrf.mxu0
        %v3728 = vadd.f32 %v3515, %v3727
        %v3729 = vpop.f32.mrf.mxu0
        %v3730 = vadd.f32 %v3515, %v3729
        %3731 = vdwg.mxu0
        %3732 = vmatpush.bf16.msra.mxu0 %v3648
        %3733 = vmatpush.bf16.msra.mxu0 %v3644
        %3734 = vmatpush.bf16.msra.mxu0 %v3640
        %3735 = vmatpush.bf16.msra.mxu0 %v3636
        %3736 = vmatpush.bf16.msra.mxu0 %v3632
        %3737 = vmatpush.bf16.msra.mxu0 %v3628
        %3738 = vmatpush.bf16.msra.mxu0 %v3624
        %3739 = vmatpush.bf16.msra.mxu0 %v3620
        %3740 = vmatmul.bf16.gmra.mxu0 %v3473
        %v3741 = vpop.f32.mrf.mxu0
        %v3742 = vadd.f32 %v3516, %v3741
        %v3743 = vpop.f32.mrf.mxu0
        %v3744 = vadd.f32 %v3516, %v3743
        %3745 = vmatmul.bf16.gmra.mxu0 %v3474
        %v3746 = vpop.f32.mrf.mxu0
        %v3747 = vadd.f32 %v3516, %v3746
        %v3748 = vpop.f32.mrf.mxu0
        %v3749 = vadd.f32 %v3516, %v3748
        %3750 = vmatmul.bf16.gmra.mxu0 %v3475
        %v3751 = vpop.f32.mrf.mxu0
        %v3752 = vadd.f32 %v3516, %v3751
        %v3753 = vpop.f32.mrf.mxu0
        %v3754 = vadd.f32 %v3516, %v3753
        %3755 = vmatmul.bf16.gmra.mxu0 %v3476
        %v3756 = vpop.f32.mrf.mxu0
        %v3757 = vadd.f32 %v3516, %v3756
        %v3758 = vpop.f32.mrf.mxu0
        %v3759 = vadd.f32 %v3516, %v3758
        %3760 = vmatmul.bf16.gmra.mxu0 %v3477
        %v3761 = vpop.f32.mrf.mxu0
        %v3762 = vadd.f32 %v3516, %v3761
        %v3763 = vpop.f32.mrf.mxu0
        %v3764 = vadd.f32 %v3516, %v3763
        %3765 = vmatmul.bf16.gmra.mxu0 %v3478
        %v3766 = vpop.f32.mrf.mxu0
        %v3767 = vadd.f32 %v3516, %v3766
        %v3768 = vpop.f32.mrf.mxu0
        %v3769 = vadd.f32 %v3516, %v3768
        %3770 = vmatmul.bf16.gmra.mxu0 %v3479
        %v3771 = vpop.f32.mrf.mxu0
        %v3772 = vadd.f32 %v3516, %v3771
        %v3773 = vpop.f32.mrf.mxu0
        %v3774 = vadd.f32 %v3516, %v3773
        %3775 = vmatmul.bf16.gmra.mxu0 %v3480
        %v3776 = vpop.f32.mrf.mxu0
        %v3777 = vadd.f32 %v3516, %v3776
        %v3778 = vpop.f32.mrf.mxu0
        %v3779 = vadd.f32 %v3516, %v3778
        %3780 = vdwg.mxu0
        %3781 = vmatpush.bf16.msra.mxu0 %v3649
        %3782 = vmatpush.bf16.msra.mxu0 %v3645
        %3783 = vmatpush.bf16.msra.mxu0 %v3641
        %3784 = vmatpush.bf16.msra.mxu0 %v3637
        %3785 = vmatpush.bf16.msra.mxu0 %v3633
        %3786 = vmatpush.bf16.msra.mxu0 %v3629
        %3787 = vmatpush.bf16.msra.mxu0 %v3625
        %3788 = vmatpush.bf16.msra.mxu0 %v3621
        %3789 = vmatmul.bf16.gmra.mxu0 %v3473
        %v3790 = vpop.f32.mrf.mxu0
        %v3791 = vadd.f32 %v3517, %v3790
        %v3792 = vpop.f32.mrf.mxu0
        %v3793 = vadd.f32 %v3517, %v3792
        %3794 = vmatmul.bf16.gmra.mxu0 %v3474
        %v3795 = vpop.f32.mrf.mxu0
        %v3796 = vadd.f32 %v3517, %v3795
        %v3797 = vpop.f32.mrf.mxu0
        %v3798 = vadd.f32 %v3517, %v3797
        %3799 = vmatmul.bf16.gmra.mxu0 %v3475
        %v3800 = vpop.f32.mrf.mxu0
        %v3801 = vadd.f32 %v3517, %v3800
        %v3802 = vpop.f32.mrf.mxu0
        %v3803 = vadd.f32 %v3517, %v3802
        %3804 = vmatmul.bf16.gmra.mxu0 %v3476
        %v3805 = vpop.f32.mrf.mxu0
        %v3806 = vadd.f32 %v3517, %v3805
        %v3807 = vpop.f32.mrf.mxu0
        %v3808 = vadd.f32 %v3517, %v3807
        %3809 = vmatmul.bf16.gmra.mxu0 %v3477
        %v3810 = vpop.f32.mrf.mxu0
        %v3811 = vadd.f32 %v3517, %v3810
        %v3812 = vpop.f32.mrf.mxu0
        %v3813 = vadd.f32 %v3517, %v3812
        %3814 = vmatmul.bf16.gmra.mxu0 %v3478
        %v3815 = vpop.f32.mrf.mxu0
        %v3816 = vadd.f32 %v3517, %v3815
        %v3817 = vpop.f32.mrf.mxu0
        %v3818 = vadd.f32 %v3517, %v3817
        %3819 = vmatmul.bf16.gmra.mxu0 %v3479
        %v3820 = vpop.f32.mrf.mxu0
        %v3821 = vadd.f32 %v3517, %v3820
        %v3822 = vpop.f32.mrf.mxu0
        %v3823 = vadd.f32 %v3517, %v3822
        %3824 = vmatmul.bf16.gmra.mxu0 %v3480
        %v3825 = vpop.f32.mrf.mxu0
        %v3826 = vadd.f32 %v3517, %v3825
        %v3827 = vpop.f32.mrf.mxu0
        %v3828 = vadd.f32 %v3517, %v3827
        %3829 = vdwg.mxu0
        %3830 = vmatpush.bf16.msra.mxu0 %v3650
        %3831 = vmatpush.bf16.msra.mxu0 %v3646
        %3832 = vmatpush.bf16.msra.mxu0 %v3642
        %3833 = vmatpush.bf16.msra.mxu0 %v3638
        %3834 = vmatpush.bf16.msra.mxu0 %v3634
        %3835 = vmatpush.bf16.msra.mxu0 %v3630
        %3836 = vmatpush.bf16.msra.mxu0 %v3626
        %3837 = vmatpush.bf16.msra.mxu0 %v3622
        %3838 = vmatmul.bf16.gmra.mxu0 %v3473
        %v3839 = vpop.f32.mrf.mxu0
        %v3840 = vadd.f32 %v3518, %v3839
        %v3841 = vpop.f32.mrf.mxu0
        %v3842 = vadd.f32 %v3518, %v3841
        %3843 = vmatmul.bf16.gmra.mxu0 %v3474
        %v3844 = vpop.f32.mrf.mxu0
        %v3845 = vadd.f32 %v3518, %v3844
        %v3846 = vpop.f32.mrf.mxu0
        %v3847 = vadd.f32 %v3518, %v3846
        %3848 = vmatmul.bf16.gmra.mxu0 %v3475
        %v3849 = vpop.f32.mrf.mxu0
        %v3850 = vadd.f32 %v3518, %v3849
        %v3851 = vpop.f32.mrf.mxu0
        %v3852 = vadd.f32 %v3518, %v3851
        %3853 = vmatmul.bf16.gmra.mxu0 %v3476
        %v3854 = vpop.f32.mrf.mxu0
        %v3855 = vadd.f32 %v3518, %v3854
        %v3856 = vpop.f32.mrf.mxu0
        %v3857 = vadd.f32 %v3518, %v3856
        %3858 = vmatmul.bf16.gmra.mxu0 %v3477
        %v3859 = vpop.f32.mrf.mxu0
        %v3860 = vadd.f32 %v3518, %v3859
        %v3861 = vpop.f32.mrf.mxu0
        %v3862 = vadd.f32 %v3518, %v3861
        %3863 = vmatmul.bf16.gmra.mxu0 %v3478
        %v3864 = vpop.f32.mrf.mxu0
        %v3865 = vadd.f32 %v3518, %v3864
        %v3866 = vpop.f32.mrf.mxu0
        %v3867 = vadd.f32 %v3518, %v3866
        %3868 = vmatmul.bf16.gmra.mxu0 %v3479
        %v3869 = vpop.f32.mrf.mxu0
        %v3870 = vadd.f32 %v3518, %v3869
        %v3871 = vpop.f32.mrf.mxu0
        %v3872 = vadd.f32 %v3518, %v3871
        %3873 = vmatmul.bf16.gmra.mxu0 %v3480
        %v3874 = vpop.f32.mrf.mxu0
        %v3875 = vadd.f32 %v3518, %v3874
        %v3876 = vpop.f32.mrf.mxu0
        %v3877 = vadd.f32 %v3518, %v3876
        %3878 = vdwg.mxu0
        %v3879 = vmul.f32 %v3693, %v3693
        %v3880 = vmul.f32 %v3742, %v3742
        %v3881 = vmul.f32 %v3791, %v3791
        %v3882 = vmul.f32 %v3840, %v3840
        %v3883 = vmul.f32 %v3695, %v3695
        %v3884 = vmul.f32 %v3744, %v3744
        %v3885 = vmul.f32 %v3793, %v3793
        %v3886 = vmul.f32 %v3842, %v3842
        %v3887 = vmul.f32 %v3698, %v3698
        %v3888 = vmul.f32 %v3747, %v3747
        %v3889 = vmul.f32 %v3796, %v3796
        %v3890 = vmul.f32 %v3845, %v3845
        %v3891 = vmul.f32 %v3700, %v3700
        %v3892 = vmul.f32 %v3749, %v3749
        %v3893 = vmul.f32 %v3798, %v3798
        %v3894 = vmul.f32 %v3847, %v3847
        %v3895 = vmul.f32 %v3703, %v3703
        %v3896 = vmul.f32 %v3752, %v3752
        %v3897 = vmul.f32 %v3801, %v3801
        %v3898 = vmul.f32 %v3850, %v3850
        %v3899 = vmul.f32 %v3705, %v3705
        %v3900 = vmul.f32 %v3754, %v3754
        %v3901 = vmul.f32 %v3803, %v3803
        %v3902 = vmul.f32 %v3852, %v3852
        %v3903 = vmul.f32 %v3708, %v3708
        %v3904 = vmul.f32 %v3757, %v3757
        %v3905 = vmul.f32 %v3806, %v3806
        %v3906 = vmul.f32 %v3855, %v3855
        %v3907 = vmul.f32 %v3710, %v3710
        %v3908 = vmul.f32 %v3759, %v3759
        %v3909 = vmul.f32 %v3808, %v3808
        %v3910 = vmul.f32 %v3857, %v3857
        %v3911 = vmul.f32 %v3713, %v3713
        %v3912 = vmul.f32 %v3762, %v3762
        %v3913 = vmul.f32 %v3811, %v3811
        %v3914 = vmul.f32 %v3860, %v3860
        %v3915 = vmul.f32 %v3715, %v3715
        %v3916 = vmul.f32 %v3764, %v3764
        %v3917 = vmul.f32 %v3813, %v3813
        %v3918 = vmul.f32 %v3862, %v3862
        %v3919 = vmul.f32 %v3718, %v3718
        %v3920 = vmul.f32 %v3767, %v3767
        %v3921 = vmul.f32 %v3816, %v3816
        %v3922 = vmul.f32 %v3865, %v3865
        %v3923 = vmul.f32 %v3720, %v3720
        %v3924 = vmul.f32 %v3769, %v3769
        %v3925 = vmul.f32 %v3818, %v3818
        %v3926 = vmul.f32 %v3867, %v3867
        %v3927 = vmul.f32 %v3723, %v3723
        %v3928 = vmul.f32 %v3772, %v3772
        %v3929 = vmul.f32 %v3821, %v3821
        %v3930 = vmul.f32 %v3870, %v3870
        %v3931 = vmul.f32 %v3725, %v3725
        %v3932 = vmul.f32 %v3774, %v3774
        %v3933 = vmul.f32 %v3823, %v3823
        %v3934 = vmul.f32 %v3872, %v3872
        %v3935 = vmul.f32 %v3728, %v3728
        %v3936 = vmul.f32 %v3777, %v3777
        %v3937 = vmul.f32 %v3826, %v3826
        %v3938 = vmul.f32 %v3875, %v3875
        %v3939 = vmul.f32 %v3730, %v3730
        %v3940 = vmul.f32 %v3779, %v3779
        %v3941 = vmul.f32 %v3828, %v3828
        %v3942 = vmul.f32 %v3877, %v3877
        %v3943 = vmul.f32 %v3693, %v3879
        %v3944 = vmul.f32 %v3742, %v3880
        %v3945 = vmul.f32 %v3791, %v3881
        %v3946 = vmul.f32 %v3840, %v3882
        %v3947 = vmul.f32 %v3695, %v3883
        %v3948 = vmul.f32 %v3744, %v3884
        %v3949 = vmul.f32 %v3793, %v3885
        %v3950 = vmul.f32 %v3842, %v3886
        %v3951 = vmul.f32 %v3698, %v3887
        %v3952 = vmul.f32 %v3747, %v3888
        %v3953 = vmul.f32 %v3796, %v3889
        %v3954 = vmul.f32 %v3845, %v3890
        %v3955 = vmul.f32 %v3700, %v3891
        %v3956 = vmul.f32 %v3749, %v3892
        %v3957 = vmul.f32 %v3798, %v3893
        %v3958 = vmul.f32 %v3847, %v3894
        %v3959 = vmul.f32 %v3703, %v3895
        %v3960 = vmul.f32 %v3752, %v3896
        %v3961 = vmul.f32 %v3801, %v3897
        %v3962 = vmul.f32 %v3850, %v3898
        %v3963 = vmul.f32 %v3705, %v3899
        %v3964 = vmul.f32 %v3754, %v3900
        %v3965 = vmul.f32 %v3803, %v3901
        %v3966 = vmul.f32 %v3852, %v3902
        %v3967 = vmul.f32 %v3708, %v3903
        %v3968 = vmul.f32 %v3757, %v3904
        %v3969 = vmul.f32 %v3806, %v3905
        %v3970 = vmul.f32 %v3855, %v3906
        %v3971 = vmul.f32 %v3710, %v3907
        %v3972 = vmul.f32 %v3759, %v3908
        %v3973 = vmul.f32 %v3808, %v3909
        %v3974 = vmul.f32 %v3857, %v3910
        %v3975 = vmul.f32 %v3713, %v3911
        %v3976 = vmul.f32 %v3762, %v3912
        %v3977 = vmul.f32 %v3811, %v3913
        %v3978 = vmul.f32 %v3860, %v3914
        %v3979 = vmul.f32 %v3715, %v3915
        %v3980 = vmul.f32 %v3764, %v3916
        %v3981 = vmul.f32 %v3813, %v3917
        %v3982 = vmul.f32 %v3862, %v3918
        %v3983 = vmul.f32 %v3718, %v3919
        %v3984 = vmul.f32 %v3767, %v3920
        %v3985 = vmul.f32 %v3816, %v3921
        %v3986 = vmul.f32 %v3865, %v3922
        %v3987 = vmul.f32 %v3720, %v3923
        %v3988 = vmul.f32 %v3769, %v3924
        %v3989 = vmul.f32 %v3818, %v3925
        %v3990 = vmul.f32 %v3867, %v3926
        %v3991 = vmul.f32 %v3723, %v3927
        %v3992 = vmul.f32 %v3772, %v3928
        %v3993 = vmul.f32 %v3821, %v3929
        %v3994 = vmul.f32 %v3870, %v3930
        %v3995 = vmul.f32 %v3725, %v3931
        %v3996 = vmul.f32 %v3774, %v3932
        %v3997 = vmul.f32 %v3823, %v3933
        %v3998 = vmul.f32 %v3872, %v3934
        %v3999 = vmul.f32 %v3728, %v3935
        %v4000 = vmul.f32 %v3777, %v3936
        %v4001 = vmul.f32 %v3826, %v3937
        %v4002 = vmul.f32 %v3875, %v3938
        %v4003 = vmul.f32 %v3730, %v3939
        %v4004 = vmul.f32 %v3779, %v3940
        %v4005 = vmul.f32 %v3828, %v3941
        %v4006 = vmul.f32 %v3877, %v3942
        %v4007 = vmul.f32 %v3943, 0.044715
        %v4008 = vmul.f32 %v3944, 0.044715
        %v4009 = vmul.f32 %v3945, 0.044715
        %v4010 = vmul.f32 %v3946, 0.044715
        %v4011 = vmul.f32 %v3947, 0.044715
        %v4012 = vmul.f32 %v3948, 0.044715
        %v4013 = vmul.f32 %v3949, 0.044715
        %v4014 = vmul.f32 %v3950, 0.044715
        %v4015 = vmul.f32 %v3951, 0.044715
        %v4016 = vmul.f32 %v3952, 0.044715
        %v4017 = vmul.f32 %v3953, 0.044715
        %v4018 = vmul.f32 %v3954, 0.044715
        %v4019 = vmul.f32 %v3955, 0.044715
        %v4020 = vmul.f32 %v3956, 0.044715
        %v4021 = vmul.f32 %v3957, 0.044715
        %v4022 = vmul.f32 %v3958, 0.044715
        %v4023 = vmul.f32 %v3959, 0.044715
        %v4024 = vmul.f32 %v3960, 0.044715
        %v4025 = vmul.f32 %v3961, 0.044715
        %v4026 = vmul.f32 %v3962, 0.044715
        %v4027 = vmul.f32 %v3963, 0.044715
        %v4028 = vmul.f32 %v3964, 0.044715
        %v4029 = vmul.f32 %v3965, 0.044715
        %v4030 = vmul.f32 %v3966, 0.044715
        %v4031 = vmul.f32 %v3967, 0.044715
        %v4032 = vmul.f32 %v3968, 0.044715
        %v4033 = vmul.f32 %v3969, 0.044715
        %v4034 = vmul.f32 %v3970, 0.044715
        %v4035 = vmul.f32 %v3971, 0.044715
        %v4036 = vmul.f32 %v3972, 0.044715
        %v4037 = vmul.f32 %v3973, 0.044715
        %v4038 = vmul.f32 %v3974, 0.044715
        %v4039 = vmul.f32 %v3975, 0.044715
        %v4040 = vmul.f32 %v3976, 0.044715
        %v4041 = vmul.f32 %v3977, 0.044715
        %v4042 = vmul.f32 %v3978, 0.044715
        %v4043 = vmul.f32 %v3979, 0.044715
        %v4044 = vmul.f32 %v3980, 0.044715
        %v4045 = vmul.f32 %v3981, 0.044715
        %v4046 = vmul.f32 %v3982, 0.044715
        %v4047 = vmul.f32 %v3983, 0.044715
        %v4048 = vmul.f32 %v3984, 0.044715
        %v4049 = vmul.f32 %v3985, 0.044715
        %v4050 = vmul.f32 %v3986, 0.044715
        %v4051 = vmul.f32 %v3987, 0.044715
        %v4052 = vmul.f32 %v3988, 0.044715
        %v4053 = vmul.f32 %v3989, 0.044715
        %v4054 = vmul.f32 %v3990, 0.044715
        %v4055 = vmul.f32 %v3991, 0.044715
        %v4056 = vmul.f32 %v3992, 0.044715
        %v4057 = vmul.f32 %v3993, 0.044715
        %v4058 = vmul.f32 %v3994, 0.044715
        %v4059 = vmul.f32 %v3995, 0.044715
        %v4060 = vmul.f32 %v3996, 0.044715
        %v4061 = vmul.f32 %v3997, 0.044715
        %v4062 = vmul.f32 %v3998, 0.044715
        %v4063 = vmul.f32 %v3999, 0.044715
        %v4064 = vmul.f32 %v4000, 0.044715
        %v4065 = vmul.f32 %v4001, 0.044715
        %v4066 = vmul.f32 %v4002, 0.044715
        %v4067 = vmul.f32 %v4003, 0.044715
        %v4068 = vmul.f32 %v4004, 0.044715
        %v4069 = vmul.f32 %v4005, 0.044715
        %v4070 = vmul.f32 %v4006, 0.044715
        %v4071 = vadd.f32 %v3693, %v4007
        %v4072 = vadd.f32 %v3742, %v4008
        %v4073 = vadd.f32 %v3791, %v4009
        %v4074 = vadd.f32 %v3840, %v4010
        %v4075 = vadd.f32 %v3695, %v4011
        %v4076 = vadd.f32 %v3744, %v4012
        %v4077 = vadd.f32 %v3793, %v4013
        %v4078 = vadd.f32 %v3842, %v4014
        %v4079 = vadd.f32 %v3698, %v4015
        %v4080 = vadd.f32 %v3747, %v4016
        %v4081 = vadd.f32 %v3796, %v4017
        %v4082 = vadd.f32 %v3845, %v4018
        %v4083 = vadd.f32 %v3700, %v4019
        %v4084 = vadd.f32 %v3749, %v4020
        %v4085 = vadd.f32 %v3798, %v4021
        %v4086 = vadd.f32 %v3847, %v4022
        %v4087 = vadd.f32 %v3703, %v4023
        %v4088 = vadd.f32 %v3752, %v4024
        %v4089 = vadd.f32 %v3801, %v4025
        %v4090 = vadd.f32 %v3850, %v4026
        %v4091 = vadd.f32 %v3705, %v4027
        %v4092 = vadd.f32 %v3754, %v4028
        %v4093 = vadd.f32 %v3803, %v4029
        %v4094 = vadd.f32 %v3852, %v4030
        %v4095 = vadd.f32 %v3708, %v4031
        %v4096 = vadd.f32 %v3757, %v4032
        %v4097 = vadd.f32 %v3806, %v4033
        %v4098 = vadd.f32 %v3855, %v4034
        %v4099 = vadd.f32 %v3710, %v4035
        %v4100 = vadd.f32 %v3759, %v4036
        %v4101 = vadd.f32 %v3808, %v4037
        %v4102 = vadd.f32 %v3857, %v4038
        %v4103 = vadd.f32 %v3713, %v4039
        %v4104 = vadd.f32 %v3762, %v4040
        %v4105 = vadd.f32 %v3811, %v4041
        %v4106 = vadd.f32 %v3860, %v4042
        %v4107 = vadd.f32 %v3715, %v4043
        %v4108 = vadd.f32 %v3764, %v4044
        %v4109 = vadd.f32 %v3813, %v4045
        %v4110 = vadd.f32 %v3862, %v4046
        %v4111 = vadd.f32 %v3718, %v4047
        %v4112 = vadd.f32 %v3767, %v4048
        %v4113 = vadd.f32 %v3816, %v4049
        %v4114 = vadd.f32 %v3865, %v4050
        %v4115 = vadd.f32 %v3720, %v4051
        %v4116 = vadd.f32 %v3769, %v4052
        %v4117 = vadd.f32 %v3818, %v4053
        %v4118 = vadd.f32 %v3867, %v4054
        %v4119 = vadd.f32 %v3723, %v4055
        %v4120 = vadd.f32 %v3772, %v4056
        %v4121 = vadd.f32 %v3821, %v4057
        %v4122 = vadd.f32 %v3870, %v4058
        %v4123 = vadd.f32 %v3725, %v4059
        %v4124 = vadd.f32 %v3774, %v4060
        %v4125 = vadd.f32 %v3823, %v4061
        %v4126 = vadd.f32 %v3872, %v4062
        %v4127 = vadd.f32 %v3728, %v4063
        %v4128 = vadd.f32 %v3777, %v4064
        %v4129 = vadd.f32 %v3826, %v4065
        %v4130 = vadd.f32 %v3875, %v4066
        %v4131 = vadd.f32 %v3730, %v4067
        %v4132 = vadd.f32 %v3779, %v4068
        %v4133 = vadd.f32 %v3828, %v4069
        %v4134 = vadd.f32 %v3877, %v4070
        %v4135 = vmul.f32 %v4071, 0.7978846
        %v4136 = vmul.f32 %v4072, 0.7978846
        %v4137 = vmul.f32 %v4073, 0.7978846
        %v4138 = vmul.f32 %v4074, 0.7978846
        %v4139 = vmul.f32 %v4075, 0.7978846
        %v4140 = vmul.f32 %v4076, 0.7978846
        %v4141 = vmul.f32 %v4077, 0.7978846
        %v4142 = vmul.f32 %v4078, 0.7978846
        %v4143 = vmul.f32 %v4079, 0.7978846
        %v4144 = vmul.f32 %v4080, 0.7978846
        %v4145 = vmul.f32 %v4081, 0.7978846
        %v4146 = vmul.f32 %v4082, 0.7978846
        %v4147 = vmul.f32 %v4083, 0.7978846
        %v4148 = vmul.f32 %v4084, 0.7978846
        %v4149 = vmul.f32 %v4085, 0.7978846
        %v4150 = vmul.f32 %v4086, 0.7978846
        %v4151 = vmul.f32 %v4087, 0.7978846
        %v4152 = vmul.f32 %v4088, 0.7978846
        %v4153 = vmul.f32 %v4089, 0.7978846
        %v4154 = vmul.f32 %v4090, 0.7978846
        %v4155 = vmul.f32 %v4091, 0.7978846
        %v4156 = vmul.f32 %v4092, 0.7978846
        %v4157 = vmul.f32 %v4093, 0.7978846
        %v4158 = vmul.f32 %v4094, 0.7978846
        %v4159 = vmul.f32 %v4095, 0.7978846
        %v4160 = vmul.f32 %v4096, 0.7978846
        %v4161 = vmul.f32 %v4097, 0.7978846
        %v4162 = vmul.f32 %v4098, 0.7978846
        %v4163 = vmul.f32 %v4099, 0.7978846
        %v4164 = vmul.f32 %v4100, 0.7978846
        %v4165 = vmul.f32 %v4101, 0.7978846
        %v4166 = vmul.f32 %v4102, 0.7978846
        %v4167 = vmul.f32 %v4103, 0.7978846
        %v4168 = vmul.f32 %v4104, 0.7978846
        %v4169 = vmul.f32 %v4105, 0.7978846
        %v4170 = vmul.f32 %v4106, 0.7978846
        %v4171 = vmul.f32 %v4107, 0.7978846
        %v4172 = vmul.f32 %v4108, 0.7978846
        %v4173 = vmul.f32 %v4109, 0.7978846
        %v4174 = vmul.f32 %v4110, 0.7978846
        %v4175 = vmul.f32 %v4111, 0.7978846
        %v4176 = vmul.f32 %v4112, 0.7978846
        %v4177 = vmul.f32 %v4113, 0.7978846
        %v4178 = vmul.f32 %v4114, 0.7978846
        %v4179 = vmul.f32 %v4115, 0.7978846
        %v4180 = vmul.f32 %v4116, 0.7978846
        %v4181 = vmul.f32 %v4117, 0.7978846
        %v4182 = vmul.f32 %v4118, 0.7978846
        %v4183 = vmul.f32 %v4119, 0.7978846
        %v4184 = vmul.f32 %v4120, 0.7978846
        %v4185 = vmul.f32 %v4121, 0.7978846
        %v4186 = vmul.f32 %v4122, 0.7978846
        %v4187 = vmul.f32 %v4123, 0.7978846
        %v4188 = vmul.f32 %v4124, 0.7978846
        %v4189 = vmul.f32 %v4125, 0.7978846
        %v4190 = vmul.f32 %v4126, 0.7978846
        %v4191 = vmul.f32 %v4127, 0.7978846
        %v4192 = vmul.f32 %v4128, 0.7978846
        %v4193 = vmul.f32 %v4129, 0.7978846
        %v4194 = vmul.f32 %v4130, 0.7978846
        %v4195 = vmul.f32 %v4131, 0.7978846
        %v4196 = vmul.f32 %v4132, 0.7978846
        %v4197 = vmul.f32 %v4133, 0.7978846
        %v4198 = vmul.f32 %v4134, 0.7978846
        %v4199 = vtanh.pop %v4135
        %v4200 = vtanh.pop %v4136
        %v4201 = vtanh.pop %v4137
        %v4202 = vtanh.pop %v4138
        %v4203 = vtanh.pop %v4139
        %v4204 = vtanh.pop %v4140
        %v4205 = vtanh.pop %v4141
        %v4206 = vtanh.pop %v4142
        %v4207 = vtanh.pop %v4143
        %v4208 = vtanh.pop %v4144
        %v4209 = vtanh.pop %v4145
        %v4210 = vtanh.pop %v4146
        %v4211 = vtanh.pop %v4147
        %v4212 = vtanh.pop %v4148
        %v4213 = vtanh.pop %v4149
        %v4214 = vtanh.pop %v4150
        %v4215 = vtanh.pop %v4151
        %v4216 = vtanh.pop %v4152
        %v4217 = vtanh.pop %v4153
        %v4218 = vtanh.pop %v4154
        %v4219 = vtanh.pop %v4155
        %v4220 = vtanh.pop %v4156
        %v4221 = vtanh.pop %v4157
        %v4222 = vtanh.pop %v4158
        %v4223 = vtanh.pop %v4159
        %v4224 = vtanh.pop %v4160
        %v4225 = vtanh.pop %v4161
        %v4226 = vtanh.pop %v4162
        %v4227 = vtanh.pop %v4163
        %v4228 = vtanh.pop %v4164
        %v4229 = vtanh.pop %v4165
        %v4230 = vtanh.pop %v4166
        %v4231 = vtanh.pop %v4167
        %v4232 = vtanh.pop %v4168
        %v4233 = vtanh.pop %v4169
        %v4234 = vtanh.pop %v4170
        %v4235 = vtanh.pop %v4171
        %v4236 = vtanh.pop %v4172
        %v4237 = vtanh.pop %v4173
        %v4238 = vtanh.pop %v4174
        %v4239 = vtanh.pop %v4175
        %v4240 = vtanh.pop %v4176
        %v4241 = vtanh.pop %v4177
        %v4242 = vtanh.pop %v4178
        %v4243 = vtanh.pop %v4179
        %v4244 = vtanh.pop %v4180
        %v4245 = vtanh.pop %v4181
        %v4246 = vtanh.pop %v4182
        %v4247 = vtanh.pop %v4183
        %v4248 = vtanh.pop %v4184
        %v4249 = vtanh.pop %v4185
        %v4250 = vtanh.pop %v4186
        %v4251 = vtanh.pop %v4187
        %v4252 = vtanh.pop %v4188
        %v4253 = vtanh.pop %v4189
        %v4254 = vtanh.pop %v4190
        %v4255 = vtanh.pop %v4191
        %v4256 = vtanh.pop %v4192
        %v4257 = vtanh.pop %v4193
        %v4258 = vtanh.pop %v4194
        %v4259 = vtanh.pop %v4195
        %v4260 = vtanh.pop %v4196
        %v4261 = vtanh.pop %v4197
        %v4262 = vtanh.pop %v4198
        %v4263 = vadd.f32 %v4199, 1.0
        %v4264 = vadd.f32 %v4200, 1.0
        %v4265 = vadd.f32 %v4201, 1.0
        %v4266 = vadd.f32 %v4202, 1.0
        %v4267 = vadd.f32 %v4203, 1.0
        %v4268 = vadd.f32 %v4204, 1.0
        %v4269 = vadd.f32 %v4205, 1.0
        %v4270 = vadd.f32 %v4206, 1.0
        %v4271 = vadd.f32 %v4207, 1.0
        %v4272 = vadd.f32 %v4208, 1.0
        %v4273 = vadd.f32 %v4209, 1.0
        %v4274 = vadd.f32 %v4210, 1.0
        %v4275 = vadd.f32 %v4211, 1.0
        %v4276 = vadd.f32 %v4212, 1.0
        %v4277 = vadd.f32 %v4213, 1.0
        %v4278 = vadd.f32 %v4214, 1.0
        %v4279 = vadd.f32 %v4215, 1.0
        %v4280 = vadd.f32 %v4216, 1.0
        %v4281 = vadd.f32 %v4217, 1.0
        %v4282 = vadd.f32 %v4218, 1.0
        %v4283 = vadd.f32 %v4219, 1.0
        %v4284 = vadd.f32 %v4220, 1.0
        %v4285 = vadd.f32 %v4221, 1.0
        %v4286 = vadd.f32 %v4222, 1.0
        %v4287 = vadd.f32 %v4223, 1.0
        %v4288 = vadd.f32 %v4224, 1.0
        %v4289 = vadd.f32 %v4225, 1.0
        %v4290 = vadd.f32 %v4226, 1.0
        %v4291 = vadd.f32 %v4227, 1.0
        %v4292 = vadd.f32 %v4228, 1.0
        %v4293 = vadd.f32 %v4229, 1.0
        %v4294 = vadd.f32 %v4230, 1.0
        %v4295 = vadd.f32 %v4231, 1.0
        %v4296 = vadd.f32 %v4232, 1.0
        %v4297 = vadd.f32 %v4233, 1.0
        %v4298 = vadd.f32 %v4234, 1.0
        %v4299 = vadd.f32 %v4235, 1.0
        %v4300 = vadd.f32 %v4236, 1.0
        %v4301 = vadd.f32 %v4237, 1.0
        %v4302 = vadd.f32 %v4238, 1.0
        %v4303 = vadd.f32 %v4239, 1.0
        %v4304 = vadd.f32 %v4240, 1.0
        %v4305 = vadd.f32 %v4241, 1.0
        %v4306 = vadd.f32 %v4242, 1.0
        %v4307 = vadd.f32 %v4243, 1.0
        %v4308 = vadd.f32 %v4244, 1.0
        %v4309 = vadd.f32 %v4245, 1.0
        %v4310 = vadd.f32 %v4246, 1.0
        %v4311 = vadd.f32 %v4247, 1.0
        %v4312 = vadd.f32 %v4248, 1.0
        %v4313 = vadd.f32 %v4249, 1.0
        %v4314 = vadd.f32 %v4250, 1.0
        %v4315 = vadd.f32 %v4251, 1.0
        %v4316 = vadd.f32 %v4252, 1.0
        %v4317 = vadd.f32 %v4253, 1.0
        %v4318 = vadd.f32 %v4254, 1.0
        %v4319 = vadd.f32 %v4255, 1.0
        %v4320 = vadd.f32 %v4256, 1.0
        %v4321 = vadd.f32 %v4257, 1.0
        %v4322 = vadd.f32 %v4258, 1.0
        %v4323 = vadd.f32 %v4259, 1.0
        %v4324 = vadd.f32 %v4260, 1.0
        %v4325 = vadd.f32 %v4261, 1.0
        %v4326 = vadd.f32 %v4262, 1.0
        %v4327 = vmul.f32 %v4263, 0.5
        %v4328 = vmul.f32 %v4264, 0.5
        %v4329 = vmul.f32 %v4265, 0.5
        %v4330 = vmul.f32 %v4266, 0.5
        %v4331 = vmul.f32 %v4267, 0.5
        %v4332 = vmul.f32 %v4268, 0.5
        %v4333 = vmul.f32 %v4269, 0.5
        %v4334 = vmul.f32 %v4270, 0.5
        %v4335 = vmul.f32 %v4271, 0.5
        %v4336 = vmul.f32 %v4272, 0.5
        %v4337 = vmul.f32 %v4273, 0.5
        %v4338 = vmul.f32 %v4274, 0.5
        %v4339 = vmul.f32 %v4275, 0.5
        %v4340 = vmul.f32 %v4276, 0.5
        %v4341 = vmul.f32 %v4277, 0.5
        %v4342 = vmul.f32 %v4278, 0.5
        %v4343 = vmul.f32 %v4279, 0.5
        %v4344 = vmul.f32 %v4280, 0.5
        %v4345 = vmul.f32 %v4281, 0.5
        %v4346 = vmul.f32 %v4282, 0.5
        %v4347 = vmul.f32 %v4283, 0.5
        %v4348 = vmul.f32 %v4284, 0.5
        %v4349 = vmul.f32 %v4285, 0.5
        %v4350 = vmul.f32 %v4286, 0.5
        %v4351 = vmul.f32 %v4287, 0.5
        %v4352 = vmul.f32 %v4288, 0.5
        %v4353 = vmul.f32 %v4289, 0.5
        %v4354 = vmul.f32 %v4290, 0.5
        %v4355 = vmul.f32 %v4291, 0.5
        %v4356 = vmul.f32 %v4292, 0.5
        %v4357 = vmul.f32 %v4293, 0.5
        %v4358 = vmul.f32 %v4294, 0.5
        %v4359 = vmul.f32 %v4295, 0.5
        %v4360 = vmul.f32 %v4296, 0.5
        %v4361 = vmul.f32 %v4297, 0.5
        %v4362 = vmul.f32 %v4298, 0.5
        %v4363 = vmul.f32 %v4299, 0.5
        %v4364 = vmul.f32 %v4300, 0.5
        %v4365 = vmul.f32 %v4301, 0.5
        %v4366 = vmul.f32 %v4302, 0.5
        %v4367 = vmul.f32 %v4303, 0.5
        %v4368 = vmul.f32 %v4304, 0.5
        %v4369 = vmul.f32 %v4305, 0.5
        %v4370 = vmul.f32 %v4306, 0.5
        %v4371 = vmul.f32 %v4307, 0.5
        %v4372 = vmul.f32 %v4308, 0.5
        %v4373 = vmul.f32 %v4309, 0.5
        %v4374 = vmul.f32 %v4310, 0.5
        %v4375 = vmul.f32 %v4311, 0.5
        %v4376 = vmul.f32 %v4312, 0.5
        %v4377 = vmul.f32 %v4313, 0.5
        %v4378 = vmul.f32 %v4314, 0.5
        %v4379 = vmul.f32 %v4315, 0.5
        %v4380 = vmul.f32 %v4316, 0.5
        %v4381 = vmul.f32 %v4317, 0.5
        %v4382 = vmul.f32 %v4318, 0.5
        %v4383 = vmul.f32 %v4319, 0.5
        %v4384 = vmul.f32 %v4320, 0.5
        %v4385 = vmul.f32 %v4321, 0.5
        %v4386 = vmul.f32 %v4322, 0.5
        %v4387 = vmul.f32 %v4323, 0.5
        %v4388 = vmul.f32 %v4324, 0.5
        %v4389 = vmul.f32 %v4325, 0.5
        %v4390 = vmul.f32 %v4326, 0.5
        %v4391 = vmul.f32 %v3693, %v4327
        %v4392 = vmul.f32 %v3742, %v4328
        %v4393 = vmul.f32 %v3791, %v4329
        %v4394 = vmul.f32 %v3840, %v4330
        %v4395 = vmul.f32 %v3695, %v4331
        %v4396 = vmul.f32 %v3744, %v4332
        %v4397 = vmul.f32 %v3793, %v4333
        %v4398 = vmul.f32 %v3842, %v4334
        %v4399 = vmul.f32 %v3698, %v4335
        %v4400 = vmul.f32 %v3747, %v4336
        %v4401 = vmul.f32 %v3796, %v4337
        %v4402 = vmul.f32 %v3845, %v4338
        %v4403 = vmul.f32 %v3700, %v4339
        %v4404 = vmul.f32 %v3749, %v4340
        %v4405 = vmul.f32 %v3798, %v4341
        %v4406 = vmul.f32 %v3847, %v4342
        %v4407 = vmul.f32 %v3703, %v4343
        %v4408 = vmul.f32 %v3752, %v4344
        %v4409 = vmul.f32 %v3801, %v4345
        %v4410 = vmul.f32 %v3850, %v4346
        %v4411 = vmul.f32 %v3705, %v4347
        %v4412 = vmul.f32 %v3754, %v4348
        %v4413 = vmul.f32 %v3803, %v4349
        %v4414 = vmul.f32 %v3852, %v4350
        %v4415 = vmul.f32 %v3708, %v4351
        %v4416 = vmul.f32 %v3757, %v4352
        %v4417 = vmul.f32 %v3806, %v4353
        %v4418 = vmul.f32 %v3855, %v4354
        %v4419 = vmul.f32 %v3710, %v4355
        %v4420 = vmul.f32 %v3759, %v4356
        %v4421 = vmul.f32 %v3808, %v4357
        %v4422 = vmul.f32 %v3857, %v4358
        %v4423 = vmul.f32 %v3713, %v4359
        %v4424 = vmul.f32 %v3762, %v4360
        %v4425 = vmul.f32 %v3811, %v4361
        %v4426 = vmul.f32 %v3860, %v4362
        %v4427 = vmul.f32 %v3715, %v4363
        %v4428 = vmul.f32 %v3764, %v4364
        %v4429 = vmul.f32 %v3813, %v4365
        %v4430 = vmul.f32 %v3862, %v4366
        %v4431 = vmul.f32 %v3718, %v4367
        %v4432 = vmul.f32 %v3767, %v4368
        %v4433 = vmul.f32 %v3816, %v4369
        %v4434 = vmul.f32 %v3865, %v4370
        %v4435 = vmul.f32 %v3720, %v4371
        %v4436 = vmul.f32 %v3769, %v4372
        %v4437 = vmul.f32 %v3818, %v4373
        %v4438 = vmul.f32 %v3867, %v4374
        %v4439 = vmul.f32 %v3723, %v4375
        %v4440 = vmul.f32 %v3772, %v4376
        %v4441 = vmul.f32 %v3821, %v4377
        %v4442 = vmul.f32 %v3870, %v4378
        %v4443 = vmul.f32 %v3725, %v4379
        %v4444 = vmul.f32 %v3774, %v4380
        %v4445 = vmul.f32 %v3823, %v4381
        %v4446 = vmul.f32 %v3872, %v4382
        %v4447 = vmul.f32 %v3728, %v4383
        %v4448 = vmul.f32 %v3777, %v4384
        %v4449 = vmul.f32 %v3826, %v4385
        %v4450 = vmul.f32 %v3875, %v4386
        %v4451 = vmul.f32 %v3730, %v4387
        %v4452 = vmul.f32 %v3779, %v4388
        %v4453 = vmul.f32 %v3828, %v4389
        %v4454 = vmul.f32 %v3877, %v4390
        %v4455 = vpack.c.bf16 %v4395, %v4391
        %v4456 = vpack.c.bf16 %v4396, %v4392
        %v4457 = vpack.c.bf16 %v4397, %v4393
        %v4458 = vpack.c.bf16 %v4398, %v4394
        %v4459 = vpack.c.bf16 %v4403, %v4399
        %v4460 = vpack.c.bf16 %v4404, %v4400
        %v4461 = vpack.c.bf16 %v4405, %v4401
        %v4462 = vpack.c.bf16 %v4406, %v4402
        %v4463 = vpack.c.bf16 %v4411, %v4407
        %v4464 = vpack.c.bf16 %v4412, %v4408
        %v4465 = vpack.c.bf16 %v4413, %v4409
        %v4466 = vpack.c.bf16 %v4414, %v4410
        %v4467 = vpack.c.bf16 %v4419, %v4415
        %v4468 = vpack.c.bf16 %v4420, %v4416
        %v4469 = vpack.c.bf16 %v4421, %v4417
        %v4470 = vpack.c.bf16 %v4422, %v4418
        %v4471 = vpack.c.bf16 %v4427, %v4423
        %v4472 = vpack.c.bf16 %v4428, %v4424
        %v4473 = vpack.c.bf16 %v4429, %v4425
        %v4474 = vpack.c.bf16 %v4430, %v4426
        %v4475 = vpack.c.bf16 %v4435, %v4431
        %v4476 = vpack.c.bf16 %v4436, %v4432
        %v4477 = vpack.c.bf16 %v4437, %v4433
        %v4478 = vpack.c.bf16 %v4438, %v4434
        %v4479 = vpack.c.bf16 %v4443, %v4439
        %v4480 = vpack.c.bf16 %v4444, %v4440
        %v4481 = vpack.c.bf16 %v4445, %v4441
        %v4482 = vpack.c.bf16 %v4446, %v4442
        %v4483 = vpack.c.bf16 %v4451, %v4447
        %v4484 = vpack.c.bf16 %v4452, %v4448
        %v4485 = vpack.c.bf16 %v4453, %v4449
        %v4486 = vpack.c.bf16 %v4454, %v4450
        %v4487 = vld [vmem:[#allocation13] sm:$0xf]
        %v4488 = vld [vmem:[#allocation13 + $0x4] sm:$0xf]
        %v4489 = vld [vmem:[#allocation13 + $0x8] sm:$0xf]
        %v4490 = vld [vmem:[#allocation13 + $0xc] sm:$0xf]
        %v4491 = vld [vmem:[#allocation13 + $0x10] sm:$0xf]
        %v4492 = vld [vmem:[#allocation13 + $0x14] sm:$0xf]
        %v4493 = vld [vmem:[#allocation13 + $0x18] sm:$0xf]
        %v4494 = vld [vmem:[#allocation13 + $0x1c] sm:$0xf]
        %v4495 = vld [vmem:[#allocation13 + $0x20] sm:$0xf]
        %v4496 = vld [vmem:[#allocation13 + $0x24] sm:$0xf]
        %v4497 = vld [vmem:[#allocation13 + $0x28] sm:$0xf]
        %v4498 = vld [vmem:[#allocation13 + $0x2c] sm:$0xf]
        %v4499 = vld [vmem:[#allocation13 + $0x30] sm:$0xf]
        %v4500 = vld [vmem:[#allocation13 + $0x34] sm:$0xf]
        %v4501 = vld [vmem:[#allocation13 + $0x38] sm:$0xf]
        %v4502 = vld [vmem:[#allocation13 + $0x3c] sm:$0xf]
        %v4503 = vld [vmem:[#allocation13 + $0x40] sm:$0xf]
        %v4504 = vld [vmem:[#allocation13 + $0x44] sm:$0xf]
        %v4505 = vld [vmem:[#allocation13 + $0x48] sm:$0xf]
        %v4506 = vld [vmem:[#allocation13 + $0x4c] sm:$0xf]
        %v4507 = vld [vmem:[#allocation13 + $0x50] sm:$0xf]
        %v4508 = vld [vmem:[#allocation13 + $0x54] sm:$0xf]
        %v4509 = vld [vmem:[#allocation13 + $0x58] sm:$0xf]
        %v4510 = vld [vmem:[#allocation13 + $0x5c] sm:$0xf]
        %v4511 = vld [vmem:[#allocation13 + $0x60] sm:$0xf]
        %v4512 = vld [vmem:[#allocation13 + $0x64] sm:$0xf]
        %v4513 = vld [vmem:[#allocation13 + $0x68] sm:$0xf]
        %v4514 = vld [vmem:[#allocation13 + $0x6c] sm:$0xf]
        %v4515 = vld [vmem:[#allocation13 + $0x70] sm:$0xf]
        %v4516 = vld [vmem:[#allocation13 + $0x74] sm:$0xf]
        %v4517 = vld [vmem:[#allocation13 + $0x78] sm:$0xf]
        %v4518 = vld [vmem:[#allocation13 + $0x7c] sm:$0xf]
        %v4519 = vld [vmem:[#allocation13 + $0x80] sm:$0xf]
        %v4520 = vld [vmem:[#allocation13 + $0x84] sm:$0xf]
        %v4521 = vld [vmem:[#allocation13 + $0x88] sm:$0xf]
        %v4522 = vld [vmem:[#allocation13 + $0x8c] sm:$0xf]
        %v4523 = vld [vmem:[#allocation13 + $0x90] sm:$0xf]
        %v4524 = vld [vmem:[#allocation13 + $0x94] sm:$0xf]
        %v4525 = vld [vmem:[#allocation13 + $0x98] sm:$0xf]
        %v4526 = vld [vmem:[#allocation13 + $0x9c] sm:$0xf]
        %v4527 = vld [vmem:[#allocation13 + $0xa0] sm:$0xf]
        %v4528 = vld [vmem:[#allocation13 + $0xa4] sm:$0xf]
        %v4529 = vld [vmem:[#allocation13 + $0xa8] sm:$0xf]
        %v4530 = vld [vmem:[#allocation13 + $0xac] sm:$0xf]
        %v4531 = vld [vmem:[#allocation13 + $0xb0] sm:$0xf]
        %v4532 = vld [vmem:[#allocation13 + $0xb4] sm:$0xf]
        %v4533 = vld [vmem:[#allocation13 + $0xb8] sm:$0xf]
        %v4534 = vld [vmem:[#allocation13 + $0xbc] sm:$0xf]
        %v4535 = vld [vmem:[#allocation13 + $0xc0] sm:$0xf]
        %v4536 = vld [vmem:[#allocation13 + $0xc4] sm:$0xf]
        %v4537 = vld [vmem:[#allocation13 + $0xc8] sm:$0xf]
        %v4538 = vld [vmem:[#allocation13 + $0xcc] sm:$0xf]
        %v4539 = vld [vmem:[#allocation13 + $0xd0] sm:$0xf]
        %v4540 = vld [vmem:[#allocation13 + $0xd4] sm:$0xf]
        %v4541 = vld [vmem:[#allocation13 + $0xd8] sm:$0xf]
        %v4542 = vld [vmem:[#allocation13 + $0xdc] sm:$0xf]
        %v4543 = vld [vmem:[#allocation13 + $0xe0] sm:$0xf]
        %v4544 = vld [vmem:[#allocation13 + $0xe4] sm:$0xf]
        %v4545 = vld [vmem:[#allocation13 + $0xe8] sm:$0xf]
        %v4546 = vld [vmem:[#allocation13 + $0xec] sm:$0xf]
        %v4547 = vld [vmem:[#allocation13 + $0xf0] sm:$0xf]
        %v4548 = vld [vmem:[#allocation13 + $0xf4] sm:$0xf]
        %v4549 = vld [vmem:[#allocation13 + $0xf8] sm:$0xf]
        %v4550 = vld [vmem:[#allocation13 + $0xfc] sm:$0xf]
        %v4551 = vld [vmem:[%s11] sm:$0x1]
        %v4553 = vperm.slane %v4551, 0
        %v4619 = vunpack.c.l.b16 %v4487
        %v4620 = vunpack.c.l.b16 %v4488
        %v4621 = vunpack.c.l.b16 %v4489
        %v4622 = vunpack.c.l.b16 %v4490
        %v4623 = vunpack.c.l.b16 %v4491
        %v4624 = vunpack.c.l.b16 %v4492
        %v4625 = vunpack.c.l.b16 %v4493
        %v4626 = vunpack.c.l.b16 %v4494
        %v4627 = vunpack.c.l.b16 %v4495
        %v4628 = vunpack.c.l.b16 %v4496
        %v4629 = vunpack.c.l.b16 %v4497
        %v4630 = vunpack.c.l.b16 %v4498
        %v4631 = vunpack.c.l.b16 %v4499
        %v4632 = vunpack.c.l.b16 %v4500
        %v4633 = vunpack.c.l.b16 %v4501
        %v4634 = vunpack.c.l.b16 %v4502
        %v4635 = vunpack.c.l.b16 %v4503
        %v4636 = vunpack.c.l.b16 %v4504
        %v4637 = vunpack.c.l.b16 %v4505
        %v4638 = vunpack.c.l.b16 %v4506
        %v4639 = vunpack.c.l.b16 %v4507
        %v4640 = vunpack.c.l.b16 %v4508
        %v4641 = vunpack.c.l.b16 %v4509
        %v4642 = vunpack.c.l.b16 %v4510
        %v4643 = vunpack.c.l.b16 %v4511
        %v4644 = vunpack.c.l.b16 %v4512
        %v4645 = vunpack.c.l.b16 %v4513
        %v4646 = vunpack.c.l.b16 %v4514
        %v4647 = vunpack.c.l.b16 %v4515
        %v4648 = vunpack.c.l.b16 %v4516
        %v4649 = vunpack.c.l.b16 %v4517
        %v4650 = vunpack.c.l.b16 %v4518
        %v4651 = vunpack.c.l.b16 %v4519
        %v4652 = vunpack.c.l.b16 %v4520
        %v4653 = vunpack.c.l.b16 %v4521
        %v4654 = vunpack.c.l.b16 %v4522
        %v4655 = vunpack.c.l.b16 %v4523
        %v4656 = vunpack.c.l.b16 %v4524
        %v4657 = vunpack.c.l.b16 %v4525
        %v4658 = vunpack.c.l.b16 %v4526
        %v4659 = vunpack.c.l.b16 %v4527
        %v4660 = vunpack.c.l.b16 %v4528
        %v4661 = vunpack.c.l.b16 %v4529
        %v4662 = vunpack.c.l.b16 %v4530
        %v4663 = vunpack.c.l.b16 %v4531
        %v4664 = vunpack.c.l.b16 %v4532
        %v4665 = vunpack.c.l.b16 %v4533
        %v4666 = vunpack.c.l.b16 %v4534
        %v4667 = vunpack.c.l.b16 %v4535
        %v4668 = vunpack.c.l.b16 %v4536
        %v4669 = vunpack.c.l.b16 %v4537
        %v4670 = vunpack.c.l.b16 %v4538
        %v4671 = vunpack.c.l.b16 %v4539
        %v4672 = vunpack.c.l.b16 %v4540
        %v4673 = vunpack.c.l.b16 %v4541
        %v4674 = vunpack.c.l.b16 %v4542
        %v4675 = vunpack.c.l.b16 %v4543
        %v4676 = vunpack.c.l.b16 %v4544
        %v4677 = vunpack.c.l.b16 %v4545
        %v4678 = vunpack.c.l.b16 %v4546
        %v4679 = vunpack.c.l.b16 %v4547
        %v4680 = vunpack.c.l.b16 %v4548
        %v4681 = vunpack.c.l.b16 %v4549
        %v4682 = vunpack.c.l.b16 %v4550
        %v4683 = vpack.c.b16 %v4620, %v4619
        %v4684 = vpack.c.b16 %v4622, %v4621
        %v4685 = vpack.c.b16 %v4624, %v4623
        %v4686 = vpack.c.b16 %v4626, %v4625
        %v4687 = vpack.c.b16 %v4628, %v4627
        %v4688 = vpack.c.b16 %v4630, %v4629
        %v4689 = vpack.c.b16 %v4632, %v4631
        %v4690 = vpack.c.b16 %v4634, %v4633
        %v4691 = vpack.c.b16 %v4636, %v4635
        %v4692 = vpack.c.b16 %v4638, %v4637
        %v4693 = vpack.c.b16 %v4640, %v4639
        %v4694 = vpack.c.b16 %v4642, %v4641
        %v4695 = vpack.c.b16 %v4644, %v4643
        %v4696 = vpack.c.b16 %v4646, %v4645
        %v4697 = vpack.c.b16 %v4648, %v4647
        %v4698 = vpack.c.b16 %v4650, %v4649
        %v4699 = vpack.c.b16 %v4652, %v4651
        %v4700 = vpack.c.b16 %v4654, %v4653
        %v4701 = vpack.c.b16 %v4656, %v4655
        %v4702 = vpack.c.b16 %v4658, %v4657
        %v4703 = vpack.c.b16 %v4660, %v4659
        %v4704 = vpack.c.b16 %v4662, %v4661
        %v4705 = vpack.c.b16 %v4664, %v4663
        %v4706 = vpack.c.b16 %v4666, %v4665
        %v4707 = vpack.c.b16 %v4668, %v4667
        %v4708 = vpack.c.b16 %v4670, %v4669
        %v4709 = vpack.c.b16 %v4672, %v4671
        %v4710 = vpack.c.b16 %v4674, %v4673
        %v4711 = vpack.c.b16 %v4676, %v4675
        %v4712 = vpack.c.b16 %v4678, %v4677
        %v4713 = vpack.c.b16 %v4680, %v4679
        %v4714 = vpack.c.b16 %v4682, %v4681
        %4747 = vmatpush.bf16.msra.mxu0 %v4690
        %4748 = vmatpush.bf16.msra.mxu0 %v4689
        %4749 = vmatpush.bf16.msra.mxu0 %v4688
        %4750 = vmatpush.bf16.msra.mxu0 %v4687
        %4751 = vmatpush.bf16.msra.mxu0 %v4686
        %4752 = vmatpush.bf16.msra.mxu0 %v4685
        %4753 = vmatpush.bf16.msra.mxu0 %v4684
        %4754 = vmatpush.bf16.msra.mxu0 %v4683
        %4755 = vmatmul.bf16.gmra.mxu0 %v4455
        %v4756 = vpop.f32.mrf.mxu0
        %v4757 = vadd.f32 %v4553, %v4756
        %v4758 = vpop.f32.mrf.mxu0
        %v4759 = vadd.f32 %v4553, %v4758
        %4760 = vmatmul.bf16.gmra.mxu0 %v4459
        %v4761 = vpop.f32.mrf.mxu0
        %v4762 = vadd.f32 %v4553, %v4761
        %v4763 = vpop.f32.mrf.mxu0
        %v4764 = vadd.f32 %v4553, %v4763
        %4765 = vmatmul.bf16.gmra.mxu0 %v4463
        %v4766 = vpop.f32.mrf.mxu0
        %v4767 = vadd.f32 %v4553, %v4766
        %v4768 = vpop.f32.mrf.mxu0
        %v4769 = vadd.f32 %v4553, %v4768
        %4770 = vmatmul.bf16.gmra.mxu0 %v4467
        %v4771 = vpop.f32.mrf.mxu0
        %v4772 = vadd.f32 %v4553, %v4771
        %v4773 = vpop.f32.mrf.mxu0
        %v4774 = vadd.f32 %v4553, %v4773
        %4775 = vmatmul.bf16.gmra.mxu0 %v4471
        %v4776 = vpop.f32.mrf.mxu0
        %v4777 = vadd.f32 %v4553, %v4776
        %v4778 = vpop.f32.mrf.mxu0
        %v4779 = vadd.f32 %v4553, %v4778
        %4780 = vmatmul.bf16.gmra.mxu0 %v4475
        %v4781 = vpop.f32.mrf.mxu0
        %v4782 = vadd.f32 %v4553, %v4781
        %v4783 = vpop.f32.mrf.mxu0
        %v4784 = vadd.f32 %v4553, %v4783
        %4785 = vmatmul.bf16.gmra.mxu0 %v4479
        %v4786 = vpop.f32.mrf.mxu0
        %v4787 = vadd.f32 %v4553, %v4786
        %v4788 = vpop.f32.mrf.mxu0
        %v4789 = vadd.f32 %v4553, %v4788
        %4790 = vmatmul.bf16.gmra.mxu0 %v4483
        %v4791 = vpop.f32.mrf.mxu0
        %v4792 = vadd.f32 %v4553, %v4791
        %v4793 = vpop.f32.mrf.mxu0
        %v4794 = vadd.f32 %v4553, %v4793
        %4795 = vdwg.mxu0
        %4796 = vmatpush.bf16.msra.mxu0 %v4698
        %4797 = vmatpush.bf16.msra.mxu0 %v4697
        %4798 = vmatpush.bf16.msra.mxu0 %v4696
        %4799 = vmatpush.bf16.msra.mxu0 %v4695
        %4800 = vmatpush.bf16.msra.mxu0 %v4694
        %4801 = vmatpush.bf16.msra.mxu0 %v4693
        %4802 = vmatpush.bf16.msra.mxu0 %v4692
        %4803 = vmatpush.bf16.msra.mxu0 %v4691
        %4804 = vmatmul.bf16.gmra.mxu0 %v4456
        %v4805 = vpop.f32.mrf.mxu0
        %v4806 = vadd.f32 %v4757, %v4805
        %v4807 = vpop.f32.mrf.mxu0
        %v4808 = vadd.f32 %v4759, %v4807
        %4809 = vmatmul.bf16.gmra.mxu0 %v4460
        %v4810 = vpop.f32.mrf.mxu0
        %v4811 = vadd.f32 %v4762, %v4810
        %v4812 = vpop.f32.mrf.mxu0
        %v4813 = vadd.f32 %v4764, %v4812
        %4814 = vmatmul.bf16.gmra.mxu0 %v4464
        %v4815 = vpop.f32.mrf.mxu0
        %v4816 = vadd.f32 %v4767, %v4815
        %v4817 = vpop.f32.mrf.mxu0
        %v4818 = vadd.f32 %v4769, %v4817
        %4819 = vmatmul.bf16.gmra.mxu0 %v4468
        %v4820 = vpop.f32.mrf.mxu0
        %v4821 = vadd.f32 %v4772, %v4820
        %v4822 = vpop.f32.mrf.mxu0
        %v4823 = vadd.f32 %v4774, %v4822
        %4824 = vmatmul.bf16.gmra.mxu0 %v4472
        %v4825 = vpop.f32.mrf.mxu0
        %v4826 = vadd.f32 %v4777, %v4825
        %v4827 = vpop.f32.mrf.mxu0
        %v4828 = vadd.f32 %v4779, %v4827
        %4829 = vmatmul.bf16.gmra.mxu0 %v4476
        %v4830 = vpop.f32.mrf.mxu0
        %v4831 = vadd.f32 %v4782, %v4830
        %v4832 = vpop.f32.mrf.mxu0
        %v4833 = vadd.f32 %v4784, %v4832
        %4834 = vmatmul.bf16.gmra.mxu0 %v4480
        %v4835 = vpop.f32.mrf.mxu0
        %v4836 = vadd.f32 %v4787, %v4835
        %v4837 = vpop.f32.mrf.mxu0
        %v4838 = vadd.f32 %v4789, %v4837
        %4839 = vmatmul.bf16.gmra.mxu0 %v4484
        %v4840 = vpop.f32.mrf.mxu0
        %v4841 = vadd.f32 %v4792, %v4840
        %v4842 = vpop.f32.mrf.mxu0
        %v4843 = vadd.f32 %v4794, %v4842
        %4844 = vdwg.mxu0
        %4845 = vmatpush.bf16.msra.mxu0 %v4706
        %4846 = vmatpush.bf16.msra.mxu0 %v4705
        %4847 = vmatpush.bf16.msra.mxu0 %v4704
        %4848 = vmatpush.bf16.msra.mxu0 %v4703
        %4849 = vmatpush.bf16.msra.mxu0 %v4702
        %4850 = vmatpush.bf16.msra.mxu0 %v4701
        %4851 = vmatpush.bf16.msra.mxu0 %v4700
        %4852 = vmatpush.bf16.msra.mxu0 %v4699
        %4853 = vmatmul.bf16.gmra.mxu0 %v4457
        %v4854 = vpop.f32.mrf.mxu0
        %v4855 = vadd.f32 %v4806, %v4854
        %v4856 = vpop.f32.mrf.mxu0
        %v4857 = vadd.f32 %v4808, %v4856
        %4858 = vmatmul.bf16.gmra.mxu0 %v4461
        %v4859 = vpop.f32.mrf.mxu0
        %v4860 = vadd.f32 %v4811, %v4859
        %v4861 = vpop.f32.mrf.mxu0
        %v4862 = vadd.f32 %v4813, %v4861
        %4863 = vmatmul.bf16.gmra.mxu0 %v4465
        %v4864 = vpop.f32.mrf.mxu0
        %v4865 = vadd.f32 %v4816, %v4864
        %v4866 = vpop.f32.mrf.mxu0
        %v4867 = vadd.f32 %v4818, %v4866
        %4868 = vmatmul.bf16.gmra.mxu0 %v4469
        %v4869 = vpop.f32.mrf.mxu0
        %v4870 = vadd.f32 %v4821, %v4869
        %v4871 = vpop.f32.mrf.mxu0
        %v4872 = vadd.f32 %v4823, %v4871
        %4873 = vmatmul.bf16.gmra.mxu0 %v4473
        %v4874 = vpop.f32.mrf.mxu0
        %v4875 = vadd.f32 %v4826, %v4874
        %v4876 = vpop.f32.mrf.mxu0
        %v4877 = vadd.f32 %v4828, %v4876
        %4878 = vmatmul.bf16.gmra.mxu0 %v4477
        %v4879 = vpop.f32.mrf.mxu0
        %v4880 = vadd.f32 %v4831, %v4879
        %v4881 = vpop.f32.mrf.mxu0
        %v4882 = vadd.f32 %v4833, %v4881
        %4883 = vmatmul.bf16.gmra.mxu0 %v4481
        %v4884 = vpop.f32.mrf.mxu0
        %v4885 = vadd.f32 %v4836, %v4884
        %v4886 = vpop.f32.mrf.mxu0
        %v4887 = vadd.f32 %v4838, %v4886
        %4888 = vmatmul.bf16.gmra.mxu0 %v4485
        %v4889 = vpop.f32.mrf.mxu0
        %v4890 = vadd.f32 %v4841, %v4889
        %v4891 = vpop.f32.mrf.mxu0
        %v4892 = vadd.f32 %v4843, %v4891
        %4893 = vdwg.mxu0
        %4894 = vmatpush.bf16.msra.mxu0 %v4714
        %4895 = vmatpush.bf16.msra.mxu0 %v4713
        %4896 = vmatpush.bf16.msra.mxu0 %v4712
        %4897 = vmatpush.bf16.msra.mxu0 %v4711
        %4898 = vmatpush.bf16.msra.mxu0 %v4710
        %4899 = vmatpush.bf16.msra.mxu0 %v4709
        %4900 = vmatpush.bf16.msra.mxu0 %v4708
        %4901 = vmatpush.bf16.msra.mxu0 %v4707
        %4902 = vmatmul.bf16.gmra.mxu0 %v4458
        %v4903 = vpop.f32.mrf.mxu0
        %v4904 = vadd.f32 %v4855, %v4903
        %v4905 = vpop.f32.mrf.mxu0
        %v4906 = vadd.f32 %v4857, %v4905
        %4907 = vmatmul.bf16.gmra.mxu0 %v4462
        %v4908 = vpop.f32.mrf.mxu0
        %v4909 = vadd.f32 %v4860, %v4908
        %v4910 = vpop.f32.mrf.mxu0
        %v4911 = vadd.f32 %v4862, %v4910
        %4912 = vmatmul.bf16.gmra.mxu0 %v4466
        %v4913 = vpop.f32.mrf.mxu0
        %v4914 = vadd.f32 %v4865, %v4913
        %v4915 = vpop.f32.mrf.mxu0
        %v4916 = vadd.f32 %v4867, %v4915
        %4917 = vmatmul.bf16.gmra.mxu0 %v4470
        %v4918 = vpop.f32.mrf.mxu0
        %v4919 = vadd.f32 %v4870, %v4918
        %v4920 = vpop.f32.mrf.mxu0
        %v4921 = vadd.f32 %v4872, %v4920
        %4922 = vmatmul.bf16.gmra.mxu0 %v4474
        %v4923 = vpop.f32.mrf.mxu0
        %v4924 = vadd.f32 %v4875, %v4923
        %v4925 = vpop.f32.mrf.mxu0
        %v4926 = vadd.f32 %v4877, %v4925
        %4927 = vmatmul.bf16.gmra.mxu0 %v4478
        %v4928 = vpop.f32.mrf.mxu0
        %v4929 = vadd.f32 %v4880, %v4928
        %v4930 = vpop.f32.mrf.mxu0
        %v4931 = vadd.f32 %v4882, %v4930
        %4932 = vmatmul.bf16.gmra.mxu0 %v4482
        %v4933 = vpop.f32.mrf.mxu0
        %v4934 = vadd.f32 %v4885, %v4933
        %v4935 = vpop.f32.mrf.mxu0
        %v4936 = vadd.f32 %v4887, %v4935
        %4937 = vmatmul.bf16.gmra.mxu0 %v4486
        %v4938 = vpop.f32.mrf.mxu0
        %v4939 = vadd.f32 %v4890, %v4938
        %v4940 = vpop.f32.mrf.mxu0
        %v4941 = vadd.f32 %v4892, %v4940
        %4942 = vdwg.mxu0
        %v4943 = vadd.f32 %v3097, %v4904
        %v4944 = vadd.f32 %v3098, %v4906
        %v4945 = vadd.f32 %v3099, %v4909
        %v4946 = vadd.f32 %v3100, %v4911
        %v4947 = vadd.f32 %v3101, %v4914
        %v4948 = vadd.f32 %v3102, %v4916
        %v4949 = vadd.f32 %v3103, %v4919
        %v4950 = vadd.f32 %v3104, %v4921
        %v4951 = vadd.f32 %v3105, %v4924
        %v4952 = vadd.f32 %v3106, %v4926
        %v4953 = vadd.f32 %v3107, %v4929
        %v4954 = vadd.f32 %v3108, %v4931
        %v4955 = vadd.f32 %v3109, %v4934
        %v4956 = vadd.f32 %v3110, %v4936
        %v4957 = vadd.f32 %v3111, %v4939
        %v4958 = vadd.f32 %v3112, %v4941
        %4959 = vst [vmem:[%s528] sm:$0xff] %v4943
        %4960 = vst [vmem:[%s528 + $0x8] sm:$0xff] %v4944
        %4961 = vst [vmem:[%s528 + $0x10] sm:$0xff] %v4945
        %4962 = vst [vmem:[%s528 + $0x18] sm:$0xff] %v4946
        %4963 = vst [vmem:[%s528 + $0x20] sm:$0xff] %v4947
        %4964 = vst [vmem:[%s528 + $0x28] sm:$0xff] %v4948
        %4965 = vst [vmem:[%s528 + $0x30] sm:$0xff] %v4949
        %4966 = vst [vmem:[%s528 + $0x38] sm:$0xff] %v4950
        %4967 = vst [vmem:[%s528 + $0x40] sm:$0xff] %v4951
        %4968 = vst [vmem:[%s528 + $0x48] sm:$0xff] %v4952
        %4969 = vst [vmem:[%s528 + $0x50] sm:$0xff] %v4953
        %4970 = vst [vmem:[%s528 + $0x58] sm:$0xff] %v4954
        %4971 = vst [vmem:[%s528 + $0x60] sm:$0xff] %v4955
        %4972 = vst [vmem:[%s528 + $0x68] sm:$0xff] %v4956
        %4973 = vst [vmem:[%s528 + $0x70] sm:$0xff] %v4957
        %4974 = vst [vmem:[%s528 + $0x78] sm:$0xff] %v4958
        %s4975 = sand.u32 %s297, 1
        %s4976 = scalar_lea.sflag [#allocation4], %s4975
        %s4977 = sand.u32 %s297, 1
        %s4978 = smul.addr %s4977, 128
        %s4979 = scalar_lea.vmem [#allocation14], %s4978
        // Predicated region
        $region97: #{tpu_custom_call.1} parent=67 // pred_check
          %p4980 = pneg %p307
        $region98: #{tpu_custom_call.1} parent=67 // pred_check_branch
          %4982 = sbr.rel (%p4980) target = $region100
        $region99: #{tpu_custom_call.1} parent=67 // pred_region
          %4984 = vsyncadd %s4976, 0
          %s4985 = smul.addr %s32, 16
          %s4986 = smul.addr %s4985, 8
          %s4987 = scalar_lea.hbm %s12, %s4986
          %s4988 = sshll.u32 %s4979, 4
          %s4989 = int_to_ptr.vmem [resolvable:$true] %s4988
          %s4990 = sshll.u32 %s4987, 4
          %s4991 = int_to_ptr.hbm [resolvable:$true] %s4990
          %4996 = dma.vmem_to_hbm [thread:$0]  %s4989, 2048, %s4991, %s4976, 128, 128, 8
        $region100: #{tpu_custom_call.1} parent=67 // pred_fallthru
          _
      $region68: #{tpu_custom_call.1} parent=5 // pred_fallthru
        _
      %p4997 = scmp.le.s32.totalorder 2, %s27
      // Predicated region
      $region101: #{tpu_custom_call.1} parent=5 // pred_check
        %p4998 = pneg %p4997
      $region102: #{tpu_custom_call.1} parent=5 // pred_check_branch
        %5000 = sbr.rel (%p4998) target = $region104
      $region103: #{tpu_custom_call.1} parent=5 // pred_region
        %s5001 = ssub.s32 %s27, 2
        // Predicated region
        $region105: #{tpu_custom_call.1} parent=103 // pred_check
          %p5002 = pneg %p313
        $region106: #{tpu_custom_call.1} parent=103 // pred_check_branch
          %5004 = sbr.rel (%p5002) target = $region108
        $region107: #{tpu_custom_call.1} parent=103 // pred_region
          %s5005 = sand.u32 %s298, 1
          %s5006 = scalar_lea.sflag [#allocation4], %s5005
          %s5007 = sand.u32 %s298, 1
          %s5008 = smul.addr %s5007, 128
          %s5009 = scalar_lea.vmem [#allocation14], %s5008
          %5011 = dma.done %s5006, 2048
        $region108: #{tpu_custom_call.1} parent=103 // pred_fallthru
          _
      $region104: #{tpu_custom_call.1} parent=5 // pred_fallthru
        _
    $region6: #{tpu_custom_call.1} parent=1 // loop_footer
      %s31 = sadd.s32 1, %s27
    $region7: #{tpu_custom_call.1} parent=1 // loop_footer_branch
      %26 = sbr.rel target = $region3
    $region8: #{tpu_custom_call.1} parent=1 // loop_exit
      _
    %5012 = vsyncpa [#allocation3], 1
    %s5013 = scalar_lea.sflag [#allocation3], 1
    %5014 = vsyncpa %s5013, 1
    %5015 = vsyncpa [#allocation6], 1
    %5016 = vsyncpa [#allocation9], 1
    %5017 = vsyncpa [#allocation12], 1
    %5018 = vsyncpa [#allocation4], 1
    %s5019 = scalar_lea.sflag [#allocation4], 1
    %5020 = vsyncpa %s5019, 1

// kernel: tpu_custom_call.1
$region0: #{tpu_custom_call.1}
  #allocation0 [shape = 'u32[]', space=smem, size = 0x4, offset = 0x4, fixed_abs, tag = 'smem constant byte address 0x4 - core index']
  #allocation1 [shape = 'u32[72,128]{1,0:T(1,128)}', space=vmem, size = 0x9000, scoped, tag = 'internal scratch']
  %s0 = inlined_call_operand.hbm [shape: f32[2,128,128], index: 0, kind: input, shape index: {}]
  %s1 = inlined_call_operand.hbm [shape: f32[1,128], index: 1, kind: input, shape index: {}]
  %s2 = inlined_call_operand.vmem [shape: f32[1,128], index: 2, kind: input, shape index: {}]
  %s3 = inlined_call_operand.hbm [shape: bf16[128,384], index: 3, kind: input, shape index: {}]
  %s4 = inlined_call_operand.hbm [shape: bf16[128,128], index: 4, kind: input, shape index: {}]
  %s5 = inlined_call_operand.vmem [shape: f32[1,128], index: 5, kind: input, shape index: {}]
  %s6 = inlined_call_operand.vmem [shape: f32[1,128], index: 6, kind: input, shape index: {}]
  %s7 = inlined_call_operand.hbm [shape: f32[1,128], index: 7, kind: input, shape index: {}]
  %s8 = inlined_call_operand.hbm [shape: bf16[128,512], index: 8, kind: input, shape index: {}]
  %s9 = inlined_call_operand.vmem [shape: f32[1,512], index: 9, kind: input, shape index: {}]
  %s10 = inlined_call_operand.hbm [shape: bf16[512,128], index: 10, kind: input, shape index: {}]
  %s11 = inlined_call_operand.vmem [shape: f32[1,128], index: 11, kind: input, shape index: {}]
  %s12 = inlined_call_operand.hbm [shape: f32[2,128,128], index: 12, kind: output, shape index: {}]
  %s13 = sld [smem:[#allocation0]]
  $region109: #{tpu_custom_call.1} parent=0
    _
  %s15 = ssub.s32 1, %s13
  %s16 = scalar_select 0, %s15, %s13
  $region1: #{tpu_custom_call.1} parent=0
    #allocation2 [shape = 'u8[131072]{0}', space=vmem, size = 0x20000, scoped, tag = 'input window, operand 0']
    #allocation3 [shape = 's32[2]{0}', space=sflag, size = 0x8, scoped, tag = 'scoped memory for tpu_custom_call.1']
    #allocation4 [shape = 's32[2]{0}', space=sflag, size = 0x8, scoped, tag = 'scoped memory for tpu_custom_call.1']
    #allocation5 [shape = 'u8[512]{0}', space=vmem, size = 0x400, scoped, tag = 'input window, operand 1, single buffered']
    #allocation6 [shape = 's32[1]{0}', space=sflag, size = 0x4, scoped, tag = 'scoped memory for tpu_custom_call.1']
    #allocation7 [shape = 'u8[98304]{0}', space=vmem, size = 0x18000, scoped, tag = 'input window, operand 3, single buffered']
    #allocation8 [shape = 'u8[32768]{0}', space=vmem, size = 0x8000, scoped, tag = 'input window, operand 4, single buffered']
    #allocation9 [shape = 's32[1]{0}', space=sflag, size = 0x4, scoped, tag = 'scoped memory for tpu_custom_call.1']
    #allocation10 [shape = 'u8[512]{0}', space=vmem, size = 0x400, scoped, tag = 'input window, operand 7, single buffered']
    #allocation11 [shape = 'u8[131072]{0}', space=vmem, size = 0x20000, scoped, tag = 'input window, operand 8, single buffered']
    #allocation12 [shape = 's32[1]{0}', space=sflag, size = 0x4, scoped, tag = 'scoped memory for tpu_custom_call.1']
    #allocation13 [shape = 'u8[131072]{0}', space=vmem, size = 0x20000, scoped, tag = 'input window, operand 10, single buffered']
    #allocation14 [shape = 'u8[131072]{0}', space=vmem, size = 0x20000, scoped, tag = 'output window, operand 0']
    %17 = vsyncpa [#allocation3], 0
    %s18 = scalar_lea.sflag [#allocation3], 1
    %19 = vsyncpa %s18, 0
    %20 = vsyncpa [#allocation6], 0
    %21 = vsyncpa [#allocation9], 0
    %22 = vsyncpa [#allocation12], 0
    %23 = vsyncpa [#allocation4], 0
    %s24 = scalar_lea.sflag [#allocation4], 1
    %25 = vsyncpa %s24, 0
    loop: start=0, step=1, limit=4
    $region2: #{tpu_custom_call.1} parent=1 // loop_pre_header
      _
    $region3: #{tpu_custom_call.1} parent=1 // loop_header
      %s27 = sphi 0, %s31
      %p28 = scmp.ge.s32.totalorder %s27, 4
      %s37 = sphi 0, %s39
      %s40 = sphi 0, %s37
      %s41 = sphi 0, %s40
      %s57 = sphi 0, %s41
      %s61 = sphi 0, %s61
      %s63 = sphi 0, %s61
      %s64 = sphi 0, %s63
      %s78 = sphi 0, %s64
      %s82 = sphi 0, %s82
      %s84 = sphi 0, %s82
      %s85 = sphi 0, %s84
      %s99 = sphi 0, %s85
      %s103 = sphi 0, %s103
      %s105 = sphi 0, %s103
      %s106 = sphi 0, %s105
      %s120 = sphi 0, %s106
      %s124 = sphi 0, %s124
      %s126 = sphi 0, %s124
      %s127 = sphi 0, %s126
      %s141 = sphi 0, %s127
      %s145 = sphi 0, %s145
      %s147 = sphi 0, %s145
      %s148 = sphi 0, %s147
      %s162 = sphi 0, %s148
      %s166 = sphi 0, %s166
      %s168 = sphi 0, %s166
      %s169 = sphi 0, %s168
      %s183 = sphi 0, %s169
      %s187 = sphi 0, %s187
      %s189 = sphi 0, %s187
      %s190 = sphi 0, %s189
      %s204 = sphi 0, %s190
      %s208 = sphi 0, %s208
      %s210 = sphi 0, %s208
      %s211 = sphi 0, %s210
      %s225 = sphi 0, %s211
      %s229 = sphi 0, %s229
      %s231 = sphi 0, %s229
      %s232 = sphi 0, %s231
      %s246 = sphi 0, %s232
      %s250 = sphi 0, %s250
      %s252 = sphi 0, %s250
      %s253 = sphi 0, %s252
      %s267 = sphi 0, %s253
      %s271 = sphi 0, %s271
      %s273 = sphi 0, %s271
      %s274 = sphi 0, %s273
      %s288 = sphi 0, %s274
      %s294 = sphi 0, %s296
      %s297 = sphi 0, %s294
      %s298 = sphi 0, %s297
      %s314 = sphi 0, %s298
    $region4: #{tpu_custom_call.1} parent=1 // loop_header_branch
      %30 = sbr.rel (%p28) target = $region8
    $region5: #{tpu_custom_call.1} parent=1 // loop_body
      %s32 = ssub.s32 %s27, 1
      %s33 = ssub.s32 %s27, 2
      %s34 = sadd.s32 %s27, 1
      %s35 = ssub.s32 %s27, %s34
      %p36 = scmp.eq.s32.totalorder %s35, 0
      %s38 = sadd.s32 %s37, 1
      %s39 = scalar_select %p36, %s37, %s38
      %p42 = pneg %p36
      %p43 = scmp.eq.s32.totalorder %s27, 1
      %p44 = por %p42, %p43
      %p45 = scmp.ne.s32.totalorder %s37, %s40
      %p46 = scmp.eq.s32.totalorder %s27, 0
      %p47 = por %p45, %p46
      %p48 = scmp.ne.s32.totalorder %s37, %s40
      %p49 = scmp.eq.s32.totalorder %s32, 1
      %p50 = por %p48, %p49
      %p51 = scmp.ne.s32.totalorder %s40, %s41
      %p52 = scmp.eq.s32.totalorder %s32, 0
      %p53 = por %p51, %p52
      %p54 = scmp.ne.s32.totalorder %s40, %s41
      %p55 = scmp.eq.s32.totalorder %s33, 1
      %p56 = por %p54, %p55
      %p58 = scmp.ne.s32.totalorder %s41, %s57
      %p59 = scmp.eq.s32.totalorder %s33, 0
      %p60 = por %p58, %p59
      %s62 = sadd.s32 %s61, 1
      %p65 = scmp.eq.s32.totalorder %s27, 1
      %p66 = scmp.ne.s32.totalorder %s61, %s63
      %p67 = scmp.eq.s32.totalorder %s27, 0
      %p68 = por %p66, %p67
      %p69 = scmp.ne.s32.totalorder %s61, %s63
      %p70 = scmp.eq.s32.totalorder %s32, 1
      %p71 = por %p69, %p70
      %p72 = scmp.ne.s32.totalorder %s63, %s64
      %p73 = scmp.eq.s32.totalorder %s32, 0
      %p74 = por %p72, %p73
      %p75 = scmp.ne.s32.totalorder %s63, %s64
      %p76 = scmp.eq.s32.totalorder %s33, 1
      %p77 = por %p75, %p76
      %p79 = scmp.ne.s32.totalorder %s64, %s78
      %p80 = scmp.eq.s32.totalorder %s33, 0
      %p81 = por %p79, %p80
      %s83 = sadd.s32 %s82, 1
      %p86 = scmp.eq.s32.totalorder %s27, 1
      %p87 = scmp.ne.s32.totalorder %s82, %s84
      %p88 = scmp.eq.s32.totalorder %s27, 0
      %p89 = por %p87, %p88
      %p90 = scmp.ne.s32.totalorder %s82, %s84
      %p91 = scmp.eq.s32.totalorder %s32, 1
      %p92 = por %p90, %p91
      %p93 = scmp.ne.s32.totalorder %s84, %s85
      %p94 = scmp.eq.s32.totalorder %s32, 0
      %p95 = por %p93, %p94
      %p96 = scmp.ne.s32.totalorder %s84, %s85
      %p97 = scmp.eq.s32.totalorder %s33, 1
      %p98 = por %p96, %p97
      %p100 = scmp.ne.s32.totalorder %s85, %s99
      %p101 = scmp.eq.s32.totalorder %s33, 0
      %p102 = por %p100, %p101
      %s104 = sadd.s32 %s103, 1
      %p107 = scmp.eq.s32.totalorder %s27, 1
      %p108 = scmp.ne.s32.totalorder %s103, %s105
      %p109 = scmp.eq.s32.totalorder %s27, 0
      %p110 = por %p108, %p109
      %p111 = scmp.ne.s32.totalorder %s103, %s105
      %p112 = scmp.eq.s32.totalorder %s32, 1
      %p113 = por %p111, %p112
      %p114 = scmp.ne.s32.totalorder %s105, %s106
      %p115 = scmp.eq.s32.totalorder %s32, 0
      %p116 = por %p114, %p115
      %p117 = scmp.ne.s32.totalorder %s105, %s106
      %p118 = scmp.eq.s32.totalorder %s33, 1
      %p119 = por %p117, %p118
      %p121 = scmp.ne.s32.totalorder %s106, %s120
      %p122 = scmp.eq.s32.totalorder %s33, 0
      %p123 = por %p121, %p122
      %s125 = sadd.s32 %s124, 1
      %p128 = scmp.eq.s32.totalorder %s27, 1
      %p129 = scmp.ne.s32.totalorder %s124, %s126
      %p130 = scmp.eq.s32.totalorder %s27, 0
      %p131 = por %p129, %p130
      %p132 = scmp.ne.s32.totalorder %s124, %s126
      %p133 = scmp.eq.s32.totalorder %s32, 1
      %p134 = por %p132, %p133
      %p135 = scmp.ne.s32.totalorder %s126, %s127
      %p136 = scmp.eq.s32.totalorder %s32, 0
      %p137 = por %p135, %p136
      %p138 = scmp.ne.s32.totalorder %s126, %s127
      %p139 = scmp.eq.s32.totalorder %s33, 1
      %p140 = por %p138, %p139
      %p142 = scmp.ne.s32.totalorder %s127, %s141
      %p143 = scmp.eq.s32.totalorder %s33, 0
      %p144 = por %p142, %p143
      %s146 = sadd.s32 %s145, 1
      %p149 = scmp.eq.s32.totalorder %s27, 1
      %p150 = scmp.ne.s32.totalorder %s145, %s147
      %p151 = scmp.eq.s32.totalorder %s27, 0
      %p152 = por %p150, %p151
      %p153 = scmp.ne.s32.totalorder %s145, %s147
      %p154 = scmp.eq.s32.totalorder %s32, 1
      %p155 = por %p153, %p154
      %p156 = scmp.ne.s32.totalorder %s147, %s148
      %p157 = scmp.eq.s32.totalorder %s32, 0
      %p158 = por %p156, %p157
      %p159 = scmp.ne.s32.totalorder %s147, %s148
      %p160 = scmp.eq.s32.totalorder %s33, 1
      %p161 = por %p159, %p160
      %p163 = scmp.ne.s32.totalorder %s148, %s162
      %p164 = scmp.eq.s32.totalorder %s33, 0
      %p165 = por %p163, %p164
      %s167 = sadd.s32 %s166, 1
      %p170 = scmp.eq.s32.totalorder %s27, 1
      %p171 = scmp.ne.s32.totalorder %s166, %s168
      %p172 = scmp.eq.s32.totalorder %s27, 0
      %p173 = por %p171, %p172
      %p174 = scmp.ne.s32.totalorder %s166, %s168
      %p175 = scmp.eq.s32.totalorder %s32, 1
      %p176 = por %p174, %p175
      %p177 = scmp.ne.s32.totalorder %s168, %s169
      %p178 = scmp.eq.s32.totalorder %s32, 0
      %p179 = por %p177, %p178
      %p180 = scmp.ne.s32.totalorder %s168, %s169
      %p181 = scmp.eq.s32.totalorder %s33, 1
      %p182 = por %p180, %p181
      %p184 = scmp.ne.s32.totalorder %s169, %s183
      %p185 = scmp.eq.s32.totalorder %s33, 0
      %p186 = por %p184, %p185
      %s188 = sadd.s32 %s187, 1
      %p191 = scmp.eq.s32.totalorder %s27, 1
      %p192 = scmp.ne.s32.totalorder %s187, %s189
      %p193 = scmp.eq.s32.totalorder %s27, 0
      %p194 = por %p192, %p193
      %p195 = scmp.ne.s32.totalorder %s187, %s189
      %p196 = scmp.eq.s32.totalorder %s32, 1
      %p197 = por %p195, %p196
      %p198 = scmp.ne.s32.totalorder %s189, %s190
      %p199 = scmp.eq.s32.totalorder %s32, 0
      %p200 = por %p198, %p199
      %p201 = scmp.ne.s32.totalorder %s189, %s190
      %p202 = scmp.eq.s32.totalorder %s33, 1
      %p203 = por %p201, %p202
      %p205 = scmp.ne.s32.totalorder %s190, %s204
      %p206 = scmp.eq.s32.totalorder %s33, 0
      %p207 = por %p205, %p206
      %s209 = sadd.s32 %s208, 1
      %p212 = scmp.eq.s32.totalorder %s27, 1
      %p213 = scmp.ne.s32.totalorder %s208, %s210
      %p214 = scmp.eq.s32.totalorder %s27, 0
      %p215 = por %p213, %p214
      %p216 = scmp.ne.s32.totalorder %s208, %s210
      %p217 = scmp.eq.s32.totalorder %s32, 1
      %p218 = por %p216, %p217
      %p219 = scmp.ne.s32.totalorder %s210, %s211
      %p220 = scmp.eq.s32.totalorder %s32, 0
      %p221 = por %p219, %p220
      %p222 = scmp.ne.s32.totalorder %s210, %s211
      %p223 = scmp.eq.s32.totalorder %s33, 1
      %p224 = por %p222, %p223
      %p226 = scmp.ne.s32.totalorder %s211, %s225
      %p227 = scmp.eq.s32.totalorder %s33, 0
      %p228 = por %p226, %p227
      %s230 = sadd.s32 %s229, 1
      %p233 = scmp.eq.s32.totalorder %s27, 1
      %p234 = scmp.ne.s32.totalorder %s229, %s231
      %p235 = scmp.eq.s32.totalorder %s27, 0
      %p236 = por %p234, %p235
      %p237 = scmp.ne.s32.totalorder %s229, %s231
      %p238 = scmp.eq.s32.totalorder %s32, 1
      %p239 = por %p237, %p238
      %p240 = scmp.ne.s32.totalorder %s231, %s232
      %p241 = scmp.eq.s32.totalorder %s32, 0
      %p242 = por %p240, %p241
      %p243 = scmp.ne.s32.totalorder %s231, %s232
      %p244 = scmp.eq.s32.totalorder %s33, 1
      %p245 = por %p243, %p244
      %p247 = scmp.ne.s32.totalorder %s232, %s246
      %p248 = scmp.eq.s32.totalorder %s33, 0
      %p249 = por %p247, %p248
      %s251 = sadd.s32 %s250, 1
      %p254 = scmp.eq.s32.totalorder %s27, 1
      %p255 = scmp.ne.s32.totalorder %s250, %s252
      %p256 = scmp.eq.s32.totalorder %s27, 0
      %p257 = por %p255, %p256
      %p258 = scmp.ne.s32.totalorder %s250, %s252
      %p259 = scmp.eq.s32.totalorder %s32, 1
      %p260 = por %p258, %p259
      %p261 = scmp.ne.s32.totalorder %s252, %s253
      %p262 = scmp.eq.s32.totalorder %s32, 0
      %p263 = por %p261, %p262
      %p264 = scmp.ne.s32.totalorder %s252, %s253
      %p265 = scmp.eq.s32.totalorder %s33, 1
      %p266 = por %p264, %p265
      %p268 = scmp.ne.s32.totalorder %s253, %s267
      %p269 = scmp.eq.s32.totalorder %s33, 0
      %p270 = por %p268, %p269
      %s272 = sadd.s32 %s271, 1
      %p275 = scmp.eq.s32.totalorder %s27, 1
      %p276 = scmp.ne.s32.totalorder %s271, %s273
      %p277 = scmp.eq.s32.totalorder %s27, 0
      %p278 = por %p276, %p277
      %p279 = scmp.ne.s32.totalorder %s271, %s273
      %p280 = scmp.eq.s32.totalorder %s32, 1
      %p281 = por %p279, %p280
      %p282 = scmp.ne.s32.totalorder %s273, %s274
      %p283 = scmp.eq.s32.totalorder %s32, 0
      %p284 = por %p282, %p283
      %p285 = scmp.ne.s32.totalorder %s273, %s274
      %p286 = scmp.eq.s32.totalorder %s33, 1
      %p287 = por %p285, %p286
      %p289 = scmp.ne.s32.totalorder %s274, %s288
      %p290 = scmp.eq.s32.totalorder %s33, 0
      %p291 = por %p289, %p290
      %s292 = ssub.s32 %s27, %s34
      %p293 = scmp.eq.s32.totalorder %s292, 0
      %s295 = sadd.s32 %s294, 1
      %s296 = scalar_select %p293, %s294, %s295
      %p299 = pneg %p293
      %p300 = scmp.eq.s32.totalorder %s27, 1
      %p301 = por %p299, %p300
      %p302 = scmp.ne.s32.totalorder %s294, %s297
      %p303 = scmp.eq.s32.totalorder %s27, 0
      %p304 = por %p302, %p303
      %p305 = scmp.ne.s32.totalorder %s294, %s297
      %p306 = scmp.eq.s32.totalorder %s32, 1
      %p307 = por %p305, %p306
      %p308 = scmp.ne.s32.totalorder %s297, %s298
      %p309 = scmp.eq.s32.totalorder %s32, 0
      %p310 = por %p308, %p309
      %p311 = scmp.ne.s32.totalorder %s297, %s298
      %p312 = scmp.eq.s32.totalorder %s33, 1
      %p313 = por %p311, %p312
      %p315 = scmp.ne.s32.totalorder %s298, %s314
      %p316 = scmp.eq.s32.totalorder %s33, 0
      %p317 = por %p315, %p316
      %p318 = scmp.le.s32.totalorder 1, %s27
      %p319 = scmp.lt.s32.totalorder %s27, 3
      %p320 = pnand %p318, %p319
      %p321 = pneg %p320
      // Predicated region
      $region9: #{tpu_custom_call.1} parent=5 // pred_check
        _
      $region10: #{tpu_custom_call.1} parent=5 // pred_check_branch
        %323 = sbr.rel (%p320) target = $region12
      $region11: #{tpu_custom_call.1} parent=5 // pred_region
        %s324 = ssub.s32 %s27, 1
        // Predicated region
        $region13: #{tpu_custom_call.1} parent=11 // pred_check
          %p325 = pneg %p74
        $region14: #{tpu_custom_call.1} parent=11 // pred_check_branch
          %327 = sbr.rel (%p325) target = $region16
        $region15: #{tpu_custom_call.1} parent=11 // pred_region
          %329 = vsyncadd [#allocation6], 0
          %s331 = sshll.u32 %s1, 4
          %s332 = int_to_ptr.hbm [resolvable:$true] %s331
          %s333 = sshll.u32 [#allocation5], 4
          %s334 = int_to_ptr.vmem [resolvable:$true] %s333
          %336 = dma.hbm_to_vmem [thread:$0]  %s332, 16, %s334, [#allocation6]
        $region16: #{tpu_custom_call.1} parent=11 // pred_fallthru
          _
        // Predicated region
        $region17: #{tpu_custom_call.1} parent=11 // pred_check
          %p337 = pneg %p95
        $region18: #{tpu_custom_call.1} parent=11 // pred_check_branch
          %339 = sbr.rel (%p337) target = $region20
        $region19: #{tpu_custom_call.1} parent=11 // pred_region
          _
        $region20: #{tpu_custom_call.1} parent=11 // pred_fallthru
          _
        // Predicated region
        $region21: #{tpu_custom_call.1} parent=11 // pred_check
          %p340 = pneg %p116
        $region22: #{tpu_custom_call.1} parent=11 // pred_check_branch
          %342 = sbr.rel (%p340) target = $region24
        $region23: #{tpu_custom_call.1} parent=11 // pred_region
          %344 = vsyncadd [#allocation6], 0
          %s345 = sshll.u32 %s3, 4
          %s346 = int_to_ptr.hbm [resolvable:$true] %s345
          %s347 = sshll.u32 [#allocation7], 4
          %s348 = int_to_ptr.vmem [resolvable:$true] %s347
          %353 = dma.hbm_to_vmem [thread:$0]  %s346, 3072, %s348, [#allocation6], 192, 192, 12
        $region24: #{tpu_custom_call.1} parent=11 // pred_fallthru
          _
        // Predicated region
        $region25: #{tpu_custom_call.1} parent=11 // pred_check
          %p354 = pneg %p137
        $region26: #{tpu_custom_call.1} parent=11 // pred_check_branch
          %356 = sbr.rel (%p354) target = $region28
        $region27: #{tpu_custom_call.1} parent=11 // pred_region
          %358 = vsyncadd [#allocation9], 0
          %s359 = sshll.u32 %s4, 4
          %s360 = int_to_ptr.hbm [resolvable:$true] %s359
          %s361 = sshll.u32 [#allocation8], 4
          %s362 = int_to_ptr.vmem [resolvable:$true] %s361
          %367 = dma.hbm_to_vmem [thread:$0]  %s360, 1024, %s362, [#allocation9], 64, 64, 4
        $region28: #{tpu_custom_call.1} parent=11 // pred_fallthru
          _
        // Predicated region
        $region29: #{tpu_custom_call.1} parent=11 // pred_check
          %p368 = pneg %p158
        $region30: #{tpu_custom_call.1} parent=11 // pred_check_branch
          %370 = sbr.rel (%p368) target = $region32
        $region31: #{tpu_custom_call.1} parent=11 // pred_region
          _
        $region32: #{tpu_custom_call.1} parent=11 // pred_fallthru
          _
        // Predicated region
        $region33: #{tpu_custom_call.1} parent=11 // pred_check
          %p371 = pneg %p179
        $region34: #{tpu_custom_call.1} parent=11 // pred_check_branch
          %373 = sbr.rel (%p371) target = $region36
        $region35: #{tpu_custom_call.1} parent=11 // pred_region
          _
        $region36: #{tpu_custom_call.1} parent=11 // pred_fallthru
          _
        // Predicated region
        $region37: #{tpu_custom_call.1} parent=11 // pred_check
          %p374 = pneg %p200
        $region38: #{tpu_custom_call.1} parent=11 // pred_check_branch
          %376 = sbr.rel (%p374) target = $region40
        $region39: #{tpu_custom_call.1} parent=11 // pred_region
          %378 = vsyncadd [#allocation9], 0
          %s380 = sshll.u32 %s7, 4
          %s381 = int_to_ptr.hbm [resolvable:$true] %s380
          %s382 = sshll.u32 [#allocation10], 4
          %s383 = int_to_ptr.vmem [resolvable:$true] %s382
          %385 = dma.hbm_to_vmem [thread:$0]  %s381, 16, %s383, [#allocation9]
        $region40: #{tpu_custom_call.1} parent=11 // pred_fallthru
          _
        // Predicated region
        $region41: #{tpu_custom_call.1} parent=11 // pred_check
          %p386 = pneg %p221
        $region42: #{tpu_custom_call.1} parent=11 // pred_check_branch
          %388 = sbr.rel (%p386) target = $region44
        $region43: #{tpu_custom_call.1} parent=11 // pred_region
          %390 = vsyncadd [#allocation12], 0
          %s391 = sshll.u32 %s8, 4
          %s392 = int_to_ptr.hbm [resolvable:$true] %s391
          %s393 = sshll.u32 [#allocation11], 4
          %s394 = int_to_ptr.vmem [resolvable:$true] %s393
          %399 = dma.hbm_to_vmem [thread:$0]  %s392, 4096, %s394, [#allocation12], 256, 256, 16
        $region44: #{tpu_custom_call.1} parent=11 // pred_fallthru
          _
        // Predicated region
        $region45: #{tpu_custom_call.1} parent=11 // pred_check
          %p400 = pneg %p242
        $region46: #{tpu_custom_call.1} parent=11 // pred_check_branch
          %402 = sbr.rel (%p400) target = $region48
        $region47: #{tpu_custom_call.1} parent=11 // pred_region
          _
        $region48: #{tpu_custom_call.1} parent=11 // pred_fallthru
          _
        // Predicated region
        $region49: #{tpu_custom_call.1} parent=11 // pred_check
          %p403 = pneg %p263
        $region50: #{tpu_custom_call.1} parent=11 // pred_check_branch
          %405 = sbr.rel (%p403) target = $region52
        $region51: #{tpu_custom_call.1} parent=11 // pred_region
          %407 = vsyncadd [#allocation12], 0
          %s408 = sshll.u32 %s10, 4
          %s409 = int_to_ptr.hbm [resolvable:$true] %s408
          %s410 = sshll.u32 [#allocation13], 4
          %s411 = int_to_ptr.vmem [resolvable:$true] %s410
          %416 = dma.hbm_to_vmem [thread:$0]  %s409, 4096, %s411, [#allocation12], 64, 64, 4
        $region52: #{tpu_custom_call.1} parent=11 // pred_fallthru
          _
        // Predicated region
        $region53: #{tpu_custom_call.1} parent=11 // pred_check
          %p417 = pneg %p284
        $region54: #{tpu_custom_call.1} parent=11 // pred_check_branch
          %419 = sbr.rel (%p417) target = $region56
        $region55: #{tpu_custom_call.1} parent=11 // pred_region
          _
        $region56: #{tpu_custom_call.1} parent=11 // pred_fallthru
          _
      $region12: #{tpu_custom_call.1} parent=5 // pred_fallthru
        _
      %p420 = scmp.lt.s32.totalorder %s27, 2
      // Predicated region
      $region57: #{tpu_custom_call.1} parent=5 // pred_check
        %p421 = pneg %p420
      $region58: #{tpu_custom_call.1} parent=5 // pred_check_branch
        %423 = sbr.rel (%p421) target = $region60
      $region59: #{tpu_custom_call.1} parent=5 // pred_region
        // Predicated region
        $region61: #{tpu_custom_call.1} parent=59 // pred_check
          %p424 = pneg %p47
        $region62: #{tpu_custom_call.1} parent=59 // pred_check_branch
          %426 = sbr.rel (%p424) target = $region64
        $region63: #{tpu_custom_call.1} parent=59 // pred_region
          %s427 = sand.u32 %s37, 1
          %s428 = scalar_lea.sflag [#allocation3], %s427
          %s429 = sand.u32 %s37, 1
          %s430 = smul.addr %s429, 128
          %s431 = scalar_lea.vmem [#allocation2], %s430
          %433 = vsyncadd %s428, 0
          %s434 = smul.addr %s27, 16
          %s435 = smul.addr %s434, 8
          %s436 = scalar_lea.hbm %s0, %s435
          %s437 = sshll.u32 %s436, 4
          %s438 = int_to_ptr.hbm [resolvable:$true] %s437
          %s439 = sshll.u32 %s431, 4
          %s440 = int_to_ptr.vmem [resolvable:$true] %s439
          %445 = dma.hbm_to_vmem [thread:$0]  %s438, 2048, %s440, %s428, 128, 128, 8
        $region64: #{tpu_custom_call.1} parent=59 // pred_fallthru
          _
      $region60: #{tpu_custom_call.1} parent=5 // pred_fallthru
        _
      %p446 = scmp.le.s32.totalorder 1, %s27
      %p447 = scmp.lt.s32.totalorder %s27, 3
      %p448 = pnand %p446, %p447
      %p449 = pneg %p448
      // Predicated region
      $region65: #{tpu_custom_call.1} parent=5 // pred_check
        _
      $region66: #{tpu_custom_call.1} parent=5 // pred_check_branch
        %451 = sbr.rel (%p448) target = $region68
      $region67: #{tpu_custom_call.1} parent=5 // pred_region
        %s452 = ssub.s32 %s27, 1
        %s453 = sand.u32 %s40, 1
        %s454 = scalar_lea.sflag [#allocation3], %s453
        %s455 = sand.u32 %s40, 1
        %s456 = smul.addr %s455, 128
        %s457 = scalar_lea.vmem [#allocation2], %s456
        // Predicated region
        $region69: #{tpu_custom_call.1} parent=67 // pred_check
          %p458 = pneg %p53
        $region70: #{tpu_custom_call.1} parent=67 // pred_check_branch
          %460 = sbr.rel (%p458) target = $region72
        $region71: #{tpu_custom_call.1} parent=67 // pred_region
          %462 = dma.done %s454, 2048
        $region72: #{tpu_custom_call.1} parent=67 // pred_fallthru
          _
        // Predicated region
        $region73: #{tpu_custom_call.1} parent=67 // pred_check
          %p463 = pneg %p74
        $region74: #{tpu_custom_call.1} parent=67 // pred_check_branch
          %465 = sbr.rel (%p463) target = $region76
        $region75: #{tpu_custom_call.1} parent=67 // pred_region
          %467 = dma.done [#allocation6], 16
        $region76: #{tpu_custom_call.1} parent=67 // pred_fallthru
          _
        // Predicated region
        $region77: #{tpu_custom_call.1} parent=67 // pred_check
          %p468 = pneg %p116
        $region78: #{tpu_custom_call.1} parent=67 // pred_check_branch
          %470 = sbr.rel (%p468) target = $region80
        $region79: #{tpu_custom_call.1} parent=67 // pred_region
          %472 = dma.done [#allocation6], 3072
        $region80: #{tpu_custom_call.1} parent=67 // pred_fallthru
          _
        // Predicated region
        $region81: #{tpu_custom_call.1} parent=67 // pred_check
          %p473 = pneg %p137
        $region82: #{tpu_custom_call.1} parent=67 // pred_check_branch
          %475 = sbr.rel (%p473) target = $region84
        $region83: #{tpu_custom_call.1} parent=67 // pred_region
          %477 = dma.done [#allocation9], 1024
        $region84: #{tpu_custom_call.1} parent=67 // pred_fallthru
          _
        // Predicated region
        $region85: #{tpu_custom_call.1} parent=67 // pred_check
          %p478 = pneg %p200
        $region86: #{tpu_custom_call.1} parent=67 // pred_check_branch
          %480 = sbr.rel (%p478) target = $region88
        $region87: #{tpu_custom_call.1} parent=67 // pred_region
          %482 = dma.done [#allocation9], 16
        $region88: #{tpu_custom_call.1} parent=67 // pred_fallthru
          _
        // Predicated region
        $region89: #{tpu_custom_call.1} parent=67 // pred_check
          %p483 = pneg %p221
        $region90: #{tpu_custom_call.1} parent=67 // pred_check_branch
          %485 = sbr.rel (%p483) target = $region92
        $region91: #{tpu_custom_call.1} parent=67 // pred_region
          %487 = dma.done [#allocation12], 4096
        $region92: #{tpu_custom_call.1} parent=67 // pred_fallthru
          _
        // Predicated region
        $region93: #{tpu_custom_call.1} parent=67 // pred_check
          %p488 = pneg %p263
        $region94: #{tpu_custom_call.1} parent=67 // pred_check_branch
          %490 = sbr.rel (%p488) target = $region96
        $region95: #{tpu_custom_call.1} parent=67 // pred_region
          %492 = dma.done [#allocation12], 4096
        $region96: #{tpu_custom_call.1} parent=67 // pred_fallthru
          _
        %s493 = sand.u32 %s40, 1
        %s494 = scalar_lea.sflag [#allocation3], %s493
        %s495 = sand.u32 %s40, 1
        %s496 = smul.addr %s495, 128
        %s497 = scalar_lea.vmem [#allocation2], %s496
        %p498 = pneg %p53
        %p499 = pneg %p50
        %p500 = pneg %p74
        %p501 = pneg %p71
        %p502 = pneg %p95
        %p503 = pneg %p92
        %p504 = pneg %p116
        %p505 = pneg %p113
        %p506 = pneg %p137
        %p507 = pneg %p134
        %p508 = pneg %p158
        %p509 = pneg %p155
        %p510 = pneg %p179
        %p511 = pneg %p176
        %p512 = pneg %p200
        %p513 = pneg %p197
        %p514 = pneg %p221
        %p515 = pneg %p218
        %p516 = pneg %p242
        %p517 = pneg %p239
        %p518 = pneg %p263
        %p519 = pneg %p260
        %p520 = pneg %p284
        %p521 = pneg %p281
        %p522 = pneg %p310
        %p523 = pneg %p307
        %s524 = sand.u32 %s297, 1
        %s525 = scalar_lea.sflag [#allocation4], %s524
        %s526 = sand.u32 %s297, 1
        %s527 = smul.addr %s526, 128
        %s528 = scalar_lea.vmem [#allocation14], %s527
        %v530 = vld [vmem:[%s457] sm:$0xff]
        %v531 = vld [vmem:[%s457 + $0x8] sm:$0xff]
        %v532 = vld [vmem:[%s457 + $0x10] sm:$0xff]
        %v533 = vld [vmem:[%s457 + $0x18] sm:$0xff]
        %v534 = vld [vmem:[%s457 + $0x20] sm:$0xff]
        %v535 = vld [vmem:[%s457 + $0x28] sm:$0xff]
        %v536 = vld [vmem:[%s457 + $0x30] sm:$0xff]
        %v537 = vld [vmem:[%s457 + $0x38] sm:$0xff]
        %v538 = vld [vmem:[%s457 + $0x40] sm:$0xff]
        %v539 = vld [vmem:[%s457 + $0x48] sm:$0xff]
        %v540 = vld [vmem:[%s457 + $0x50] sm:$0xff]
        %v541 = vld [vmem:[%s457 + $0x58] sm:$0xff]
        %v542 = vld [vmem:[%s457 + $0x60] sm:$0xff]
        %v543 = vld [vmem:[%s457 + $0x68] sm:$0xff]
        %v544 = vld [vmem:[%s457 + $0x70] sm:$0xff]
        %v545 = vld [vmem:[%s457 + $0x78] sm:$0xff]
        %v546 = vld [vmem:[#allocation5] sm:$0x1]
        %v547 = vld [vmem:[%s2] sm:$0x1]
        %548 = vadd.xlane.f32.xlu0 %v530
        %v549 = vpop.xlane.xlu0 %548
        %550 = vadd.xlane.f32.xlu0 %v531
        %v551 = vpop.xlane.xlu0 %550
        %552 = vadd.xlane.f32.xlu0 %v532
        %v553 = vpop.xlane.xlu0 %552
        %554 = vadd.xlane.f32.xlu0 %v533
        %v555 = vpop.xlane.xlu0 %554
        %556 = vadd.xlane.f32.xlu0 %v534
        %v557 = vpop.xlane.xlu0 %556
        %558 = vadd.xlane.f32.xlu0 %v535
        %v559 = vpop.xlane.xlu0 %558
        %560 = vadd.xlane.f32.xlu0 %v536
        %v561 = vpop.xlane.xlu0 %560
        %562 = vadd.xlane.f32.xlu0 %v537
        %v563 = vpop.xlane.xlu0 %562
        %564 = vadd.xlane.f32.xlu0 %v538
        %v565 = vpop.xlane.xlu0 %564
        %566 = vadd.xlane.f32.xlu0 %v539
        %v567 = vpop.xlane.xlu0 %566
        %568 = vadd.xlane.f32.xlu0 %v540
        %v569 = vpop.xlane.xlu0 %568
        %570 = vadd.xlane.f32.xlu0 %v541
        %v571 = vpop.xlane.xlu0 %570
        %572 = vadd.xlane.f32.xlu0 %v542
        %v573 = vpop.xlane.xlu0 %572
        %574 = vadd.xlane.f32.xlu0 %v543
        %v575 = vpop.xlane.xlu0 %574
        %576 = vadd.xlane.f32.xlu0 %v544
        %v577 = vpop.xlane.xlu0 %576
        %578 = vadd.xlane.f32.xlu0 %v545
        %v579 = vpop.xlane.xlu0 %578
        %v580 = vrcp.pop 128.0
        %v581 = vmul.f32 128.0, %v580
        %v582 = vsub.f32 1.0, %v581
        %v583 = vmul.f32 %v580, %v582
        %v584 = vadd.f32 %v580, %v583
        %vm585 = vweird.f32 %v580
        %v586 = vsel %vm585, %v580, %v584
        %v587 = vmul.f32 %v549, %v586
        %v588 = vmul.f32 %v551, %v586
        %v589 = vmul.f32 %v553, %v586
        %v590 = vmul.f32 %v555, %v586
        %v591 = vmul.f32 %v557, %v586
        %v592 = vmul.f32 %v559, %v586
        %v593 = vmul.f32 %v561, %v586
        %v594 = vmul.f32 %v563, %v586
        %v595 = vmul.f32 %v565, %v586
        %v596 = vmul.f32 %v567, %v586
        %v597 = vmul.f32 %v569, %v586
        %v598 = vmul.f32 %v571, %v586
        %v599 = vmul.f32 %v573, %v586
        %v600 = vmul.f32 %v575, %v586
        %v601 = vmul.f32 %v577, %v586
        %v602 = vmul.f32 %v579, %v586
        %v603 = vsub.f32 %v530, %v587
        %v604 = vsub.f32 %v531, %v588
        %v605 = vsub.f32 %v532, %v589
        %v606 = vsub.f32 %v533, %v590
        %v607 = vsub.f32 %v534, %v591
        %v608 = vsub.f32 %v535, %v592
        %v609 = vsub.f32 %v536, %v593
        %v610 = vsub.f32 %v537, %v594
        %v611 = vsub.f32 %v538, %v595
        %v612 = vsub.f32 %v539, %v596
        %v613 = vsub.f32 %v540, %v597
        %v614 = vsub.f32 %v541, %v598
        %v615 = vsub.f32 %v542, %v599
        %v616 = vsub.f32 %v543, %v600
        %v617 = vsub.f32 %v544, %v601
        %v618 = vsub.f32 %v545, %v602
        %v619 = vmul.f32 %v603, %v603
        %v620 = vmul.f32 %v604, %v604
        %v621 = vmul.f32 %v605, %v605
        %v622 = vmul.f32 %v606, %v606
        %v623 = vmul.f32 %v607, %v607
        %v624 = vmul.f32 %v608, %v608
        %v625 = vmul.f32 %v609, %v609
        %v626 = vmul.f32 %v610, %v610
        %v627 = vmul.f32 %v611, %v611
        %v628 = vmul.f32 %v612, %v612
        %v629 = vmul.f32 %v613, %v613
        %v630 = vmul.f32 %v614, %v614
        %v631 = vmul.f32 %v615, %v615
        %v632 = vmul.f32 %v616, %v616
        %v633 = vmul.f32 %v617, %v617
        %v634 = vmul.f32 %v618, %v618
        %635 = vadd.xlane.f32.xlu0 %v619
        %v636 = vpop.xlane.xlu0 %635
        %637 = vadd.xlane.f32.xlu0 %v620
        %v638 = vpop.xlane.xlu0 %637
        %639 = vadd.xlane.f32.xlu0 %v621
        %v640 = vpop.xlane.xlu0 %639
        %641 = vadd.xlane.f32.xlu0 %v622
        %v642 = vpop.xlane.xlu0 %641
        %643 = vadd.xlane.f32.xlu0 %v623
        %v644 = vpop.xlane.xlu0 %643
        %645 = vadd.xlane.f32.xlu0 %v624
        %v646 = vpop.xlane.xlu0 %645
        %647 = vadd.xlane.f32.xlu0 %v625
        %v648 = vpop.xlane.xlu0 %647
        %649 = vadd.xlane.f32.xlu0 %v626
        %v650 = vpop.xlane.xlu0 %649
        %651 = vadd.xlane.f32.xlu0 %v627
        %v652 = vpop.xlane.xlu0 %651
        %653 = vadd.xlane.f32.xlu0 %v628
        %v654 = vpop.xlane.xlu0 %653
        %655 = vadd.xlane.f32.xlu0 %v629
        %v656 = vpop.xlane.xlu0 %655
        %657 = vadd.xlane.f32.xlu0 %v630
        %v658 = vpop.xlane.xlu0 %657
        %659 = vadd.xlane.f32.xlu0 %v631
        %v660 = vpop.xlane.xlu0 %659
        %661 = vadd.xlane.f32.xlu0 %v632
        %v662 = vpop.xlane.xlu0 %661
        %663 = vadd.xlane.f32.xlu0 %v633
        %v664 = vpop.xlane.xlu0 %663
        %665 = vadd.xlane.f32.xlu0 %v634
        %v666 = vpop.xlane.xlu0 %665
        %v667 = vmul.f32 %v636, %v586
        %v668 = vmul.f32 %v638, %v586
        %v669 = vmul.f32 %v640, %v586
        %v670 = vmul.f32 %v642, %v586
        %v671 = vmul.f32 %v644, %v586
        %v672 = vmul.f32 %v646, %v586
        %v673 = vmul.f32 %v648, %v586
        %v674 = vmul.f32 %v650, %v586
        %v675 = vmul.f32 %v652, %v586
        %v676 = vmul.f32 %v654, %v586
        %v677 = vmul.f32 %v656, %v586
        %v678 = vmul.f32 %v658, %v586
        %v679 = vmul.f32 %v660, %v586
        %v680 = vmul.f32 %v662, %v586
        %v681 = vmul.f32 %v664, %v586
        %v682 = vmul.f32 %v666, %v586
        %v683 = vadd.f32 %v667, 1e-05
        %v684 = vadd.f32 %v668, 1e-05
        %v685 = vadd.f32 %v669, 1e-05
        %v686 = vadd.f32 %v670, 1e-05
        %v687 = vadd.f32 %v671, 1e-05
        %v688 = vadd.f32 %v672, 1e-05
        %v689 = vadd.f32 %v673, 1e-05
        %v690 = vadd.f32 %v674, 1e-05
        %v691 = vadd.f32 %v675, 1e-05
        %v692 = vadd.f32 %v676, 1e-05
        %v693 = vadd.f32 %v677, 1e-05
        %v694 = vadd.f32 %v678, 1e-05
        %v695 = vadd.f32 %v679, 1e-05
        %v696 = vadd.f32 %v680, 1e-05
        %v697 = vadd.f32 %v681, 1e-05
        %v698 = vadd.f32 %v682, 1e-05
        %v699 = vrsqrt.pop %v683
        %v700 = vmul.f32 %v699, %v683
        %v701 = vmul.f32 %v700, %v699
        %v702 = vmul.f32 0.5, %v701
        %v703 = vsub.f32 1.5, %v702
        %v704 = vmul.f32 %v699, %v703
        %vm705 = vweird.f32 %v683
        %vm706 = vweird.f32 %v699
        %vm707 = vmor %vm705, %vm706
        %v708 = vsel %vm707, %v699, %v704
        %v709 = vrsqrt.pop %v684
        %v710 = vmul.f32 %v709, %v684
        %v711 = vmul.f32 %v710, %v709
        %v712 = vmul.f32 0.5, %v711
        %v713 = vsub.f32 1.5, %v712
        %v714 = vmul.f32 %v709, %v713
        %vm715 = vweird.f32 %v684
        %vm716 = vweird.f32 %v709
        %vm717 = vmor %vm715, %vm716
        %v718 = vsel %vm717, %v709, %v714
        %v719 = vrsqrt.pop %v685
        %v720 = vmul.f32 %v719, %v685
        %v721 = vmul.f32 %v720, %v719
        %v722 = vmul.f32 0.5, %v721
        %v723 = vsub.f32 1.5, %v722
        %v724 = vmul.f32 %v719, %v723
        %vm725 = vweird.f32 %v685
        %vm726 = vweird.f32 %v719
        %vm727 = vmor %vm725, %vm726
        %v728 = vsel %vm727, %v719, %v724
        %v729 = vrsqrt.pop %v686
        %v730 = vmul.f32 %v729, %v686
        %v731 = vmul.f32 %v730, %v729
        %v732 = vmul.f32 0.5, %v731
        %v733 = vsub.f32 1.5, %v732
        %v734 = vmul.f32 %v729, %v733
        %vm735 = vweird.f32 %v686
        %vm736 = vweird.f32 %v729
        %vm737 = vmor %vm735, %vm736
        %v738 = vsel %vm737, %v729, %v734
        %v739 = vrsqrt.pop %v687
        %v740 = vmul.f32 %v739, %v687
        %v741 = vmul.f32 %v740, %v739
        %v742 = vmul.f32 0.5, %v741
        %v743 = vsub.f32 1.5, %v742
        %v744 = vmul.f32 %v739, %v743
        %vm745 = vweird.f32 %v687
        %vm746 = vweird.f32 %v739
        %vm747 = vmor %vm745, %vm746
        %v748 = vsel %vm747, %v739, %v744
        %v749 = vrsqrt.pop %v688
        %v750 = vmul.f32 %v749, %v688
        %v751 = vmul.f32 %v750, %v749
        %v752 = vmul.f32 0.5, %v751
        %v753 = vsub.f32 1.5, %v752
        %v754 = vmul.f32 %v749, %v753
        %vm755 = vweird.f32 %v688
        %vm756 = vweird.f32 %v749
        %vm757 = vmor %vm755, %vm756
        %v758 = vsel %vm757, %v749, %v754
        %v759 = vrsqrt.pop %v689
        %v760 = vmul.f32 %v759, %v689
        %v761 = vmul.f32 %v760, %v759
        %v762 = vmul.f32 0.5, %v761
        %v763 = vsub.f32 1.5, %v762
        %v764 = vmul.f32 %v759, %v763
        %vm765 = vweird.f32 %v689
        %vm766 = vweird.f32 %v759
        %vm767 = vmor %vm765, %vm766
        %v768 = vsel %vm767, %v759, %v764
        %v769 = vrsqrt.pop %v690
        %v770 = vmul.f32 %v769, %v690
        %v771 = vmul.f32 %v770, %v769
        %v772 = vmul.f32 0.5, %v771
        %v773 = vsub.f32 1.5, %v772
        %v774 = vmul.f32 %v769, %v773
        %vm775 = vweird.f32 %v690
        %vm776 = vweird.f32 %v769
        %vm777 = vmor %vm775, %vm776
        %v778 = vsel %vm777, %v769, %v774
        %v779 = vrsqrt.pop %v691
        %v780 = vmul.f32 %v779, %v691
        %v781 = vmul.f32 %v780, %v779
        %v782 = vmul.f32 0.5, %v781
        %v783 = vsub.f32 1.5, %v782
        %v784 = vmul.f32 %v779, %v783
        %vm785 = vweird.f32 %v691
        %vm786 = vweird.f32 %v779
        %vm787 = vmor %vm785, %vm786
        %v788 = vsel %vm787, %v779, %v784
        %v789 = vrsqrt.pop %v692
        %v790 = vmul.f32 %v789, %v692
        %v791 = vmul.f32 %v790, %v789
        %v792 = vmul.f32 0.5, %v791
        %v793 = vsub.f32 1.5, %v792
        %v794 = vmul.f32 %v789, %v793
        %vm795 = vweird.f32 %v692
        %vm796 = vweird.f32 %v789
        %vm797 = vmor %vm795, %vm796
        %v798 = vsel %vm797, %v789, %v794
        %v799 = vrsqrt.pop %v693
        %v800 = vmul.f32 %v799, %v693
        %v801 = vmul.f32 %v800, %v799
        %v802 = vmul.f32 0.5, %v801
        %v803 = vsub.f32 1.5, %v802
        %v804 = vmul.f32 %v799, %v803
        %vm805 = vweird.f32 %v693
        %vm806 = vweird.f32 %v799
        %vm807 = vmor %vm805, %vm806
        %v808 = vsel %vm807, %v799, %v804
        %v809 = vrsqrt.pop %v694
        %v810 = vmul.f32 %v809, %v694
        %v811 = vmul.f32 %v810, %v809
        %v812 = vmul.f32 0.5, %v811
        %v813 = vsub.f32 1.5, %v812
        %v814 = vmul.f32 %v809, %v813
        %vm815 = vweird.f32 %v694
        %vm816 = vweird.f32 %v809
        %vm817 = vmor %vm815, %vm816
        %v818 = vsel %vm817, %v809, %v814
        %v819 = vrsqrt.pop %v695
        %v820 = vmul.f32 %v819, %v695
        %v821 = vmul.f32 %v820, %v819
        %v822 = vmul.f32 0.5, %v821
        %v823 = vsub.f32 1.5, %v822
        %v824 = vmul.f32 %v819, %v823
        %vm825 = vweird.f32 %v695
        %vm826 = vweird.f32 %v819
        %vm827 = vmor %vm825, %vm826
        %v828 = vsel %vm827, %v819, %v824
        %v829 = vrsqrt.pop %v696
        %v830 = vmul.f32 %v829, %v696
        %v831 = vmul.f32 %v830, %v829
        %v832 = vmul.f32 0.5, %v831
        %v833 = vsub.f32 1.5, %v832
        %v834 = vmul.f32 %v829, %v833
        %vm835 = vweird.f32 %v696
        %vm836 = vweird.f32 %v829
        %vm837 = vmor %vm835, %vm836
        %v838 = vsel %vm837, %v829, %v834
        %v839 = vrsqrt.pop %v697
        %v840 = vmul.f32 %v839, %v697
        %v841 = vmul.f32 %v840, %v839
        %v842 = vmul.f32 0.5, %v841
        %v843 = vsub.f32 1.5, %v842
        %v844 = vmul.f32 %v839, %v843
        %vm845 = vweird.f32 %v697
        %vm846 = vweird.f32 %v839
        %vm847 = vmor %vm845, %vm846
        %v848 = vsel %vm847, %v839, %v844
        %v849 = vrsqrt.pop %v698
        %v850 = vmul.f32 %v849, %v698
        %v851 = vmul.f32 %v850, %v849
        %v852 = vmul.f32 0.5, %v851
        %v853 = vsub.f32 1.5, %v852
        %v854 = vmul.f32 %v849, %v853
        %vm855 = vweird.f32 %v698
        %vm856 = vweird.f32 %v849
        %vm857 = vmor %vm855, %vm856
        %v858 = vsel %vm857, %v849, %v854
        %v859 = vmul.f32 %v603, %v708
        %v860 = vmul.f32 %v604, %v718
        %v861 = vmul.f32 %v605, %v728
        %v862 = vmul.f32 %v606, %v738
        %v863 = vmul.f32 %v607, %v748
        %v864 = vmul.f32 %v608, %v758
        %v865 = vmul.f32 %v609, %v768
        %v866 = vmul.f32 %v610, %v778
        %v867 = vmul.f32 %v611, %v788
        %v868 = vmul.f32 %v612, %v798
        %v869 = vmul.f32 %v613, %v808
        %v870 = vmul.f32 %v614, %v818
        %v871 = vmul.f32 %v615, %v828
        %v872 = vmul.f32 %v616, %v838
        %v873 = vmul.f32 %v617, %v848
        %v874 = vmul.f32 %v618, %v858
        %v876 = vperm.slane %v546, 0
        %v878 = vmul.f32 %v859, %v876
        %v879 = vmul.f32 %v860, %v876
        %v880 = vmul.f32 %v861, %v876
        %v881 = vmul.f32 %v862, %v876
        %v882 = vmul.f32 %v863, %v876
        %v883 = vmul.f32 %v864, %v876
        %v884 = vmul.f32 %v865, %v876
        %v885 = vmul.f32 %v866, %v876
        %v886 = vmul.f32 %v867, %v876
        %v887 = vmul.f32 %v868, %v876
        %v888 = vmul.f32 %v869, %v876
        %v889 = vmul.f32 %v870, %v876
        %v890 = vmul.f32 %v871, %v876
        %v891 = vmul.f32 %v872, %v876
        %v892 = vmul.f32 %v873, %v876
        %v893 = vmul.f32 %v874, %v876
        %v895 = vperm.slane %v547, 0
        %v897 = vadd.f32 %v878, %v895
        %v898 = vadd.f32 %v879, %v895
        %v899 = vadd.f32 %v880, %v895
        %v900 = vadd.f32 %v881, %v895
        %v901 = vadd.f32 %v882, %v895
        %v902 = vadd.f32 %v883, %v895
        %v903 = vadd.f32 %v884, %v895
        %v904 = vadd.f32 %v885, %v895
        %v905 = vadd.f32 %v886, %v895
        %v906 = vadd.f32 %v887, %v895
        %v907 = vadd.f32 %v888, %v895
        %v908 = vadd.f32 %v889, %v895
        %v909 = vadd.f32 %v890, %v895
        %v910 = vadd.f32 %v891, %v895
        %v911 = vadd.f32 %v892, %v895
        %v912 = vadd.f32 %v893, %v895
        %v913 = vpack.c.bf16 %v898, %v897
        %v914 = vpack.c.bf16 %v900, %v899
        %v915 = vpack.c.bf16 %v902, %v901
        %v916 = vpack.c.bf16 %v904, %v903
        %v917 = vpack.c.bf16 %v906, %v905
        %v918 = vpack.c.bf16 %v908, %v907
        %v919 = vpack.c.bf16 %v910, %v909
        %v920 = vpack.c.bf16 %v912, %v911
        %v921 = vld [vmem:[#allocation7] sm:$0xff]
        %v922 = vld [vmem:[#allocation7 + $0x8] sm:$0xf]
        %v923 = vld [vmem:[#allocation7 + $0xc] sm:$0xff]
        %v924 = vld [vmem:[#allocation7 + $0x14] sm:$0xf]
        %v925 = vld [vmem:[#allocation7 + $0x18] sm:$0xff]
        %v926 = vld [vmem:[#allocation7 + $0x20] sm:$0xf]
        %v927 = vld [vmem:[#allocation7 + $0x24] sm:$0xff]
        %v928 = vld [vmem:[#allocation7 + $0x2c] sm:$0xf]
        %v929 = vld [vmem:[#allocation7 + $0x30] sm:$0xff]
        %v930 = vld [vmem:[#allocation7 + $0x38] sm:$0xf]
        %v931 = vld [vmem:[#allocation7 + $0x3c] sm:$0xff]
        %v932 = vld [vmem:[#allocation7 + $0x44] sm:$0xf]
        %v933 = vld [vmem:[#allocation7 + $0x48] sm:$0xff]
        %v934 = vld [vmem:[#allocation7 + $0x50] sm:$0xf]
        %v935 = vld [vmem:[#allocation7 + $0x54] sm:$0xff]
        %v936 = vld [vmem:[#allocation7 + $0x5c] sm:$0xf]
        %v937 = vld [vmem:[#allocation7 + $0x60] sm:$0xff]
        %v938 = vld [vmem:[#allocation7 + $0x68] sm:$0xf]
        %v939 = vld [vmem:[#allocation7 + $0x6c] sm:$0xff]
        %v940 = vld [vmem:[#allocation7 + $0x74] sm:$0xf]
        %v941 = vld [vmem:[#allocation7 + $0x78] sm:$0xff]
        %v942 = vld [vmem:[#allocation7 + $0x80] sm:$0xf]
        %v943 = vld [vmem:[#allocation7 + $0x84] sm:$0xff]
        %v944 = vld [vmem:[#allocation7 + $0x8c] sm:$0xf]
        %v945 = vld [vmem:[#allocation7 + $0x90] sm:$0xff]
        %v946 = vld [vmem:[#allocation7 + $0x98] sm:$0xf]
        %v947 = vld [vmem:[#allocation7 + $0x9c] sm:$0xff]
        %v948 = vld [vmem:[#allocation7 + $0xa4] sm:$0xf]
        %v949 = vld [vmem:[#allocation7 + $0xa8] sm:$0xff]
        %v950 = vld [vmem:[#allocation7 + $0xb0] sm:$0xf]
        %v951 = vld [vmem:[#allocation7 + $0xb4] sm:$0xff]
        %v952 = vld [vmem:[#allocation7 + $0xbc] sm:$0xf]
        %v985 = vunpack.c.l.b16 %v921
        %v986 = vunpack.c.h.b16 %v921
        %v987 = vunpack.c.l.b16 %v922
        %v988 = vunpack.c.l.b16 %v923
        %v989 = vunpack.c.h.b16 %v923
        %v990 = vunpack.c.l.b16 %v924
        %v991 = vunpack.c.l.b16 %v925
        %v992 = vunpack.c.h.b16 %v925
        %v993 = vunpack.c.l.b16 %v926
        %v994 = vunpack.c.l.b16 %v927
        %v995 = vunpack.c.h.b16 %v927
        %v996 = vunpack.c.l.b16 %v928
        %v997 = vunpack.c.l.b16 %v929
        %v998 = vunpack.c.h.b16 %v929
        %v999 = vunpack.c.l.b16 %v930
        %v1000 = vunpack.c.l.b16 %v931
        %v1001 = vunpack.c.h.b16 %v931
        %v1002 = vunpack.c.l.b16 %v932
        %v1003 = vunpack.c.l.b16 %v933
        %v1004 = vunpack.c.h.b16 %v933
        %v1005 = vunpack.c.l.b16 %v934
        %v1006 = vunpack.c.l.b16 %v935
        %v1007 = vunpack.c.h.b16 %v935
        %v1008 = vunpack.c.l.b16 %v936
        %v1009 = vunpack.c.l.b16 %v937
        %v1010 = vunpack.c.h.b16 %v937
        %v1011 = vunpack.c.l.b16 %v938
        %v1012 = vunpack.c.l.b16 %v939
        %v1013 = vunpack.c.h.b16 %v939
        %v1014 = vunpack.c.l.b16 %v940
        %v1015 = vunpack.c.l.b16 %v941
        %v1016 = vunpack.c.h.b16 %v941
        %v1017 = vunpack.c.l.b16 %v942
        %v1018 = vunpack.c.l.b16 %v943
        %v1019 = vunpack.c.h.b16 %v943
        %v1020 = vunpack.c.l.b16 %v944
        %v1021 = vunpack.c.l.b16 %v945
        %v1022 = vunpack.c.h.b16 %v945
        %v1023 = vunpack.c.l.b16 %v946
        %v1024 = vunpack.c.l.b16 %v947
        %v1025 = vunpack.c.h.b16 %v947
        %v1026 = vunpack.c.l.b16 %v948
        %v1027 = vunpack.c.l.b16 %v949
        %v1028 = vunpack.c.h.b16 %v949
        %v1029 = vunpack.c.l.b16 %v950
        %v1030 = vunpack.c.l.b16 %v951
        %v1031 = vunpack.c.h.b16 %v951
        %v1032 = vunpack.c.l.b16 %v952
        %v1033 = vpack.c.b16 %v988, %v985
        %v1034 = vpack.c.b16 %v989, %v986
        %v1035 = vpack.c.b16 %v990, %v987
        %v1036 = vpack.c.b16 %v994, %v991
        %v1037 = vpack.c.b16 %v995, %v992
        %v1038 = vpack.c.b16 %v996, %v993
        %v1039 = vpack.c.b16 %v1000, %v997
        %v1040 = vpack.c.b16 %v1001, %v998
        %v1041 = vpack.c.b16 %v1002, %v999
        %v1042 = vpack.c.b16 %v1006, %v1003
        %v1043 = vpack.c.b16 %v1007, %v1004
        %v1044 = vpack.c.b16 %v1008, %v1005
        %v1045 = vpack.c.b16 %v1012, %v1009
        %v1046 = vpack.c.b16 %v1013, %v1010
        %v1047 = vpack.c.b16 %v1014, %v1011
        %v1048 = vpack.c.b16 %v1018, %v1015
        %v1049 = vpack.c.b16 %v1019, %v1016
        %v1050 = vpack.c.b16 %v1020, %v1017
        %v1051 = vpack.c.b16 %v1024, %v1021
        %v1052 = vpack.c.b16 %v1025, %v1022
        %v1053 = vpack.c.b16 %v1026, %v1023
        %v1054 = vpack.c.b16 %v1030, %v1027
        %v1055 = vpack.c.b16 %v1031, %v1028
        %v1056 = vpack.c.b16 %v1032, %v1029
        %1081 = vmatpush.bf16.msra.mxu0 %v1054
        %1082 = vmatpush.bf16.msra.mxu0 %v1051
        %1083 = vmatpush.bf16.msra.mxu0 %v1048
        %1084 = vmatpush.bf16.msra.mxu0 %v1045
        %1085 = vmatpush.bf16.msra.mxu0 %v1042
        %1086 = vmatpush.bf16.msra.mxu0 %v1039
        %1087 = vmatpush.bf16.msra.mxu0 %v1036
        %1088 = vmatpush.bf16.msra.mxu0 %v1033
        %1089 = vmatmul.bf16.gmra.mxu0 %v913
        %v1090 = vpop.f32.mrf.mxu0
        %v1091 = vadd.f32 0.0, %v1090
        %v1092 = vpop.f32.mrf.mxu0
        %v1093 = vadd.f32 0.0, %v1092
        %1094 = vmatmul.bf16.gmra.mxu0 %v914
        %v1095 = vpop.f32.mrf.mxu0
        %v1096 = vadd.f32 0.0, %v1095
        %v1097 = vpop.f32.mrf.mxu0
        %v1098 = vadd.f32 0.0, %v1097
        %1099 = vmatmul.bf16.gmra.mxu0 %v915
        %v1100 = vpop.f32.mrf.mxu0
        %v1101 = vadd.f32 0.0, %v1100
        %v1102 = vpop.f32.mrf.mxu0
        %v1103 = vadd.f32 0.0, %v1102
        %1104 = vmatmul.bf16.gmra.mxu0 %v916
        %v1105 = vpop.f32.mrf.mxu0
        %v1106 = vadd.f32 0.0, %v1105
        %v1107 = vpop.f32.mrf.mxu0
        %v1108 = vadd.f32 0.0, %v1107
        %1109 = vmatmul.bf16.gmra.mxu0 %v917
        %v1110 = vpop.f32.mrf.mxu0
        %v1111 = vadd.f32 0.0, %v1110
        %v1112 = vpop.f32.mrf.mxu0
        %v1113 = vadd.f32 0.0, %v1112
        %1114 = vmatmul.bf16.gmra.mxu0 %v918
        %v1115 = vpop.f32.mrf.mxu0
        %v1116 = vadd.f32 0.0, %v1115
        %v1117 = vpop.f32.mrf.mxu0
        %v1118 = vadd.f32 0.0, %v1117
        %1119 = vmatmul.bf16.gmra.mxu0 %v919
        %v1120 = vpop.f32.mrf.mxu0
        %v1121 = vadd.f32 0.0, %v1120
        %v1122 = vpop.f32.mrf.mxu0
        %v1123 = vadd.f32 0.0, %v1122
        %1124 = vmatmul.bf16.gmra.mxu0 %v920
        %v1125 = vpop.f32.mrf.mxu0
        %v1126 = vadd.f32 0.0, %v1125
        %v1127 = vpop.f32.mrf.mxu0
        %v1128 = vadd.f32 0.0, %v1127
        %1129 = vdwg.mxu0
        %1130 = vmatpush.bf16.msra.mxu0 %v1055
        %1131 = vmatpush.bf16.msra.mxu0 %v1052
        %1132 = vmatpush.bf16.msra.mxu0 %v1049
        %1133 = vmatpush.bf16.msra.mxu0 %v1046
        %1134 = vmatpush.bf16.msra.mxu0 %v1043
        %1135 = vmatpush.bf16.msra.mxu0 %v1040
        %1136 = vmatpush.bf16.msra.mxu0 %v1037
        %1137 = vmatpush.bf16.msra.mxu0 %v1034
        %1138 = vmatmul.bf16.gmra.mxu0 %v913
        %v1139 = vpop.f32.mrf.mxu0
        %v1140 = vadd.f32 0.0, %v1139
        %v1141 = vpop.f32.mrf.mxu0
        %v1142 = vadd.f32 0.0, %v1141
        %1143 = vmatmul.bf16.gmra.mxu0 %v914
        %v1144 = vpop.f32.mrf.mxu0
        %v1145 = vadd.f32 0.0, %v1144
        %v1146 = vpop.f32.mrf.mxu0
        %v1147 = vadd.f32 0.0, %v1146
        %1148 = vmatmul.bf16.gmra.mxu0 %v915
        %v1149 = vpop.f32.mrf.mxu0
        %v1150 = vadd.f32 0.0, %v1149
        %v1151 = vpop.f32.mrf.mxu0
        %v1152 = vadd.f32 0.0, %v1151
        %1153 = vmatmul.bf16.gmra.mxu0 %v916
        %v1154 = vpop.f32.mrf.mxu0
        %v1155 = vadd.f32 0.0, %v1154
        %v1156 = vpop.f32.mrf.mxu0
        %v1157 = vadd.f32 0.0, %v1156
        %1158 = vmatmul.bf16.gmra.mxu0 %v917
        %v1159 = vpop.f32.mrf.mxu0
        %v1160 = vadd.f32 0.0, %v1159
        %v1161 = vpop.f32.mrf.mxu0
        %v1162 = vadd.f32 0.0, %v1161
        %1163 = vmatmul.bf16.gmra.mxu0 %v918
        %v1164 = vpop.f32.mrf.mxu0
        %v1165 = vadd.f32 0.0, %v1164
        %v1166 = vpop.f32.mrf.mxu0
        %v1167 = vadd.f32 0.0, %v1166
        %1168 = vmatmul.bf16.gmra.mxu0 %v919
        %v1169 = vpop.f32.mrf.mxu0
        %v1170 = vadd.f32 0.0, %v1169
        %v1171 = vpop.f32.mrf.mxu0
        %v1172 = vadd.f32 0.0, %v1171
        %1173 = vmatmul.bf16.gmra.mxu0 %v920
        %v1174 = vpop.f32.mrf.mxu0
        %v1175 = vadd.f32 0.0, %v1174
        %v1176 = vpop.f32.mrf.mxu0
        %v1177 = vadd.f32 0.0, %v1176
        %1178 = vdwg.mxu0
        %1179 = vmatpush.bf16.msra.mxu0 %v1056
        %1180 = vmatpush.bf16.msra.mxu0 %v1053
        %1181 = vmatpush.bf16.msra.mxu0 %v1050
        %1182 = vmatpush.bf16.msra.mxu0 %v1047
        %1183 = vmatpush.bf16.msra.mxu0 %v1044
        %1184 = vmatpush.bf16.msra.mxu0 %v1041
        %1185 = vmatpush.bf16.msra.mxu0 %v1038
        %1186 = vmatpush.bf16.msra.mxu0 %v1035
        %1187 = vmatmul.bf16.gmra.mxu0 %v913
        %v1188 = vpop.f32.mrf.mxu0
        %v1189 = vadd.f32 0.0, %v1188
        %v1190 = vpop.f32.mrf.mxu0
        %v1191 = vadd.f32 0.0, %v1190
        %1192 = vmatmul.bf16.gmra.mxu0 %v914
        %v1193 = vpop.f32.mrf.mxu0
        %v1194 = vadd.f32 0.0, %v1193
        %v1195 = vpop.f32.mrf.mxu0
        %v1196 = vadd.f32 0.0, %v1195
        %1197 = vmatmul.bf16.gmra.mxu0 %v915
        %v1198 = vpop.f32.mrf.mxu0
        %v1199 = vadd.f32 0.0, %v1198
        %v1200 = vpop.f32.mrf.mxu0
        %v1201 = vadd.f32 0.0, %v1200
        %1202 = vmatmul.bf16.gmra.mxu0 %v916
        %v1203 = vpop.f32.mrf.mxu0
        %v1204 = vadd.f32 0.0, %v1203
        %v1205 = vpop.f32.mrf.mxu0
        %v1206 = vadd.f32 0.0, %v1205
        %1207 = vmatmul.bf16.gmra.mxu0 %v917
        %v1208 = vpop.f32.mrf.mxu0
        %v1209 = vadd.f32 0.0, %v1208
        %v1210 = vpop.f32.mrf.mxu0
        %v1211 = vadd.f32 0.0, %v1210
        %1212 = vmatmul.bf16.gmra.mxu0 %v918
        %v1213 = vpop.f32.mrf.mxu0
        %v1214 = vadd.f32 0.0, %v1213
        %v1215 = vpop.f32.mrf.mxu0
        %v1216 = vadd.f32 0.0, %v1215
        %1217 = vmatmul.bf16.gmra.mxu0 %v919
        %v1218 = vpop.f32.mrf.mxu0
        %v1219 = vadd.f32 0.0, %v1218
        %v1220 = vpop.f32.mrf.mxu0
        %v1221 = vadd.f32 0.0, %v1220
        %1222 = vmatmul.bf16.gmra.mxu0 %v920
        %v1223 = vpop.f32.mrf.mxu0
        %v1224 = vadd.f32 0.0, %v1223
        %v1225 = vpop.f32.mrf.mxu0
        %v1226 = vadd.f32 0.0, %v1225
        %1227 = vdwg.mxu0
        %v1228 = vlaneseq
        %v1229 = vand.u32 %v1228, 127
        %vm1230 = vcmp.lt.s32.totalorder %v1229, 16
        %v1231 = vsel %vm1230, 0.0, -1e+30
        %v1232 = vmul.f32 %v1091, 0.17677669
        %v1233 = vmul.f32 %v1093, 0.17677669
        %v1234 = vmul.f32 %v1096, 0.17677669
        %v1235 = vmul.f32 %v1098, 0.17677669
        %v1236 = vmul.f32 %v1101, 0.17677669
        %v1237 = vmul.f32 %v1103, 0.17677669
        %v1238 = vmul.f32 %v1106, 0.17677669
        %v1239 = vmul.f32 %v1108, 0.17677669
        %v1240 = vmul.f32 %v1111, 0.17677669
        %v1241 = vmul.f32 %v1113, 0.17677669
        %v1242 = vmul.f32 %v1116, 0.17677669
        %v1243 = vmul.f32 %v1118, 0.17677669
        %v1244 = vmul.f32 %v1121, 0.17677669
        %v1245 = vmul.f32 %v1123, 0.17677669
        %v1246 = vmul.f32 %v1126, 0.17677669
        %v1247 = vmul.f32 %v1128, 0.17677669
        %v1248 = vpack.c.bf16 %v1233, %v1232
        %v1249 = vpack.c.bf16 %v1235, %v1234
        %v1250 = vpack.c.bf16 %v1237, %v1236
        %v1251 = vpack.c.bf16 %v1239, %v1238
        %v1252 = vpack.c.bf16 %v1241, %v1240
        %v1253 = vpack.c.bf16 %v1243, %v1242
        %v1254 = vpack.c.bf16 %v1245, %v1244
        %v1255 = vpack.c.bf16 %v1247, %v1246
        %v1256 = vpack.c.bf16 %v1142, %v1140
        %v1257 = vpack.c.bf16 %v1147, %v1145
        %v1258 = vpack.c.bf16 %v1152, %v1150
        %v1259 = vpack.c.bf16 %v1157, %v1155
        %v1260 = vpack.c.bf16 %v1162, %v1160
        %v1261 = vpack.c.bf16 %v1167, %v1165
        %v1262 = vpack.c.bf16 %v1172, %v1170
        %v1263 = vpack.c.bf16 %v1177, %v1175
        %v1264 = vpack.c.bf16 %v1191, %v1189
        %v1265 = vpack.c.bf16 %v1196, %v1194
        %v1266 = vpack.c.bf16 %v1201, %v1199
        %v1267 = vpack.c.bf16 %v1206, %v1204
        %v1268 = vpack.c.bf16 %v1211, %v1209
        %v1269 = vpack.c.bf16 %v1216, %v1214
        %v1270 = vpack.c.bf16 %v1221, %v1219
        %v1271 = vpack.c.bf16 %v1226, %v1224
        %vm1272 = vcmask 261120
        %v1274 = vsel %vm1272, %v1248, 0
        %v1277 = vsel %vm1272, %v1249, 0
        %v1280 = vsel %vm1272, %v1250, 0
        %v1283 = vsel %vm1272, %v1251, 0
        %v1286 = vsel %vm1272, %v1252, 0
        %v1289 = vsel %vm1272, %v1253, 0
        %v1292 = vsel %vm1272, %v1254, 0
        %v1295 = vsel %vm1272, %v1255, 0
        %v1298 = vsel %vm1272, %v1256, 0
        %v1301 = vsel %vm1272, %v1257, 0
        %v1304 = vsel %vm1272, %v1258, 0
        %v1307 = vsel %vm1272, %v1259, 0
        %v1310 = vsel %vm1272, %v1260, 0
        %v1313 = vsel %vm1272, %v1261, 0
        %v1316 = vsel %vm1272, %v1262, 0
        %v1319 = vsel %vm1272, %v1263, 0
        %1321 = vmatpush.bf16.xpose.msra.mxu0 %v1319
        %1322 = vmatpush.bf16.xpose.msra.mxu0 %v1316
        %1323 = vmatpush.bf16.xpose.msra.mxu0 %v1313
        %1324 = vmatpush.bf16.xpose.msra.mxu0 %v1310
        %1325 = vmatpush.bf16.xpose.msra.mxu0 %v1307
        %1326 = vmatpush.bf16.xpose.msra.mxu0 %v1304
        %1327 = vmatpush.bf16.xpose.msra.mxu0 %v1301
        %1328 = vmatpush.bf16.xpose.msra.mxu0 %v1298
        %1329 = vmatmul.bf16.gmra.mxu0 %v1274
        %v1330 = vpop.f32.mrf.mxu0
        %v1331 = vadd.f32 %v1231, %v1330
        %v1332 = vpop.f32.mrf.mxu0
        %v1333 = vadd.f32 %v1231, %v1332
        %1334 = vmatmul.bf16.gmra.mxu0 %v1277
        %v1335 = vpop.f32.mrf.mxu0
        %v1336 = vadd.f32 %v1231, %v1335
        %v1337 = vpop.f32.mrf.mxu0
        %v1338 = vadd.f32 %v1231, %v1337
        %1339 = vmatmul.bf16.gmra.mxu0 %v1280
        %v1340 = vpop.f32.mrf.mxu0
        %v1341 = vadd.f32 %v1231, %v1340
        %v1342 = vpop.f32.mrf.mxu0
        %v1343 = vadd.f32 %v1231, %v1342
        %1344 = vmatmul.bf16.gmra.mxu0 %v1283
        %v1345 = vpop.f32.mrf.mxu0
        %v1346 = vadd.f32 %v1231, %v1345
        %v1347 = vpop.f32.mrf.mxu0
        %v1348 = vadd.f32 %v1231, %v1347
        %1349 = vmatmul.bf16.gmra.mxu0 %v1286
        %v1350 = vpop.f32.mrf.mxu0
        %v1351 = vadd.f32 %v1231, %v1350
        %v1352 = vpop.f32.mrf.mxu0
        %v1353 = vadd.f32 %v1231, %v1352
        %1354 = vmatmul.bf16.gmra.mxu0 %v1289
        %v1355 = vpop.f32.mrf.mxu0
        %v1356 = vadd.f32 %v1231, %v1355
        %v1357 = vpop.f32.mrf.mxu0
        %v1358 = vadd.f32 %v1231, %v1357
        %1359 = vmatmul.bf16.gmra.mxu0 %v1292
        %v1360 = vpop.f32.mrf.mxu0
        %v1361 = vadd.f32 %v1231, %v1360
        %v1362 = vpop.f32.mrf.mxu0
        %v1363 = vadd.f32 %v1231, %v1362
        %1364 = vmatmul.bf16.gmra.mxu0 %v1295
        %v1365 = vpop.f32.mrf.mxu0
        %v1366 = vadd.f32 %v1231, %v1365
        %v1367 = vpop.f32.mrf.mxu0
        %v1368 = vadd.f32 %v1231, %v1367
        %1369 = vdwg.mxu0
        %1370 = vmax.xlane.f32.xlu0 %v1331
        %v1371 = vpop.xlane.xlu0 %1370
        %1372 = vmax.xlane.f32.xlu0 %v1333
        %v1373 = vpop.xlane.xlu0 %1372
        %1374 = vmax.xlane.f32.xlu0 %v1336
        %v1375 = vpop.xlane.xlu0 %1374
        %1376 = vmax.xlane.f32.xlu0 %v1338
        %v1377 = vpop.xlane.xlu0 %1376
        %1378 = vmax.xlane.f32.xlu0 %v1341
        %v1379 = vpop.xlane.xlu0 %1378
        %1380 = vmax.xlane.f32.xlu0 %v1343
        %v1381 = vpop.xlane.xlu0 %1380
        %1382 = vmax.xlane.f32.xlu0 %v1346
        %v1383 = vpop.xlane.xlu0 %1382
        %1384 = vmax.xlane.f32.xlu0 %v1348
        %v1385 = vpop.xlane.xlu0 %1384
        %1386 = vmax.xlane.f32.xlu0 %v1351
        %v1387 = vpop.xlane.xlu0 %1386
        %1388 = vmax.xlane.f32.xlu0 %v1353
        %v1389 = vpop.xlane.xlu0 %1388
        %1390 = vmax.xlane.f32.xlu0 %v1356
        %v1391 = vpop.xlane.xlu0 %1390
        %1392 = vmax.xlane.f32.xlu0 %v1358
        %v1393 = vpop.xlane.xlu0 %1392
        %1394 = vmax.xlane.f32.xlu0 %v1361
        %v1395 = vpop.xlane.xlu0 %1394
        %1396 = vmax.xlane.f32.xlu0 %v1363
        %v1397 = vpop.xlane.xlu0 %1396
        %1398 = vmax.xlane.f32.xlu0 %v1366
        %v1399 = vpop.xlane.xlu0 %1398
        %1400 = vmax.xlane.f32.xlu0 %v1368
        %v1401 = vpop.xlane.xlu0 %1400
        %v1402 = vsub.f32 %v1331, %v1371
        %v1403 = vsub.f32 %v1333, %v1373
        %v1404 = vsub.f32 %v1336, %v1375
        %v1405 = vsub.f32 %v1338, %v1377
        %v1406 = vsub.f32 %v1341, %v1379
        %v1407 = vsub.f32 %v1343, %v1381
        %v1408 = vsub.f32 %v1346, %v1383
        %v1409 = vsub.f32 %v1348, %v1385
        %v1410 = vsub.f32 %v1351, %v1387
        %v1411 = vsub.f32 %v1353, %v1389
        %v1412 = vsub.f32 %v1356, %v1391
        %v1413 = vsub.f32 %v1358, %v1393
        %v1414 = vsub.f32 %v1361, %v1395
        %v1415 = vsub.f32 %v1363, %v1397
        %v1416 = vsub.f32 %v1366, %v1399
        %v1417 = vsub.f32 %v1368, %v1401
        %v1418 = vmul.f32 %v1402, 1.442695
        %v1419 = vpow.pop %v1418
        %v1420 = vmul.f32 %v1403, 1.442695
        %v1421 = vpow.pop %v1420
        %v1422 = vmul.f32 %v1404, 1.442695
        %v1423 = vpow.pop %v1422
        %v1424 = vmul.f32 %v1405, 1.442695
        %v1425 = vpow.pop %v1424
        %v1426 = vmul.f32 %v1406, 1.442695
        %v1427 = vpow.pop %v1426
        %v1428 = vmul.f32 %v1407, 1.442695
        %v1429 = vpow.pop %v1428
        %v1430 = vmul.f32 %v1408, 1.442695
        %v1431 = vpow.pop %v1430
        %v1432 = vmul.f32 %v1409, 1.442695
        %v1433 = vpow.pop %v1432
        %v1434 = vmul.f32 %v1410, 1.442695
        %v1435 = vpow.pop %v1434
        %v1436 = vmul.f32 %v1411, 1.442695
        %v1437 = vpow.pop %v1436
        %v1438 = vmul.f32 %v1412, 1.442695
        %v1439 = vpow.pop %v1438
        %v1440 = vmul.f32 %v1413, 1.442695
        %v1441 = vpow.pop %v1440
        %v1442 = vmul.f32 %v1414, 1.442695
        %v1443 = vpow.pop %v1442
        %v1444 = vmul.f32 %v1415, 1.442695
        %v1445 = vpow.pop %v1444
        %v1446 = vmul.f32 %v1416, 1.442695
        %v1447 = vpow.pop %v1446
        %v1448 = vmul.f32 %v1417, 1.442695
        %v1449 = vpow.pop %v1448
        %1450 = vadd.xlane.f32.xlu0 %v1419
        %v1451 = vpop.xlane.xlu0 %1450
        %1452 = vadd.xlane.f32.xlu0 %v1421
        %v1453 = vpop.xlane.xlu0 %1452
        %1454 = vadd.xlane.f32.xlu0 %v1423
        %v1455 = vpop.xlane.xlu0 %1454
        %1456 = vadd.xlane.f32.xlu0 %v1425
        %v1457 = vpop.xlane.xlu0 %1456
        %1458 = vadd.xlane.f32.xlu0 %v1427
        %v1459 = vpop.xlane.xlu0 %1458
        %1460 = vadd.xlane.f32.xlu0 %v1429
        %v1461 = vpop.xlane.xlu0 %1460
        %1462 = vadd.xlane.f32.xlu0 %v1431
        %v1463 = vpop.xlane.xlu0 %1462
        %1464 = vadd.xlane.f32.xlu0 %v1433
        %v1465 = vpop.xlane.xlu0 %1464
        %1466 = vadd.xlane.f32.xlu0 %v1435
        %v1467 = vpop.xlane.xlu0 %1466
        %1468 = vadd.xlane.f32.xlu0 %v1437
        %v1469 = vpop.xlane.xlu0 %1468
        %1470 = vadd.xlane.f32.xlu0 %v1439
        %v1471 = vpop.xlane.xlu0 %1470
        %1472 = vadd.xlane.f32.xlu0 %v1441
        %v1473 = vpop.xlane.xlu0 %1472
        %1474 = vadd.xlane.f32.xlu0 %v1443
        %v1475 = vpop.xlane.xlu0 %1474
        %1476 = vadd.xlane.f32.xlu0 %v1445
        %v1477 = vpop.xlane.xlu0 %1476
        %1478 = vadd.xlane.f32.xlu0 %v1447
        %v1479 = vpop.xlane.xlu0 %1478
        %1480 = vadd.xlane.f32.xlu0 %v1449
        %v1481 = vpop.xlane.xlu0 %1480
        %v1482 = vpack.c.bf16 %v1421, %v1419
        %v1483 = vpack.c.bf16 %v1425, %v1423
        %v1484 = vpack.c.bf16 %v1429, %v1427
        %v1485 = vpack.c.bf16 %v1433, %v1431
        %v1486 = vpack.c.bf16 %v1437, %v1435
        %v1487 = vpack.c.bf16 %v1441, %v1439
        %v1488 = vpack.c.bf16 %v1445, %v1443
        %v1489 = vpack.c.bf16 %v1449, %v1447
        %1490 = vmatpush.bf16.msra.mxu0 %v1271
        %1491 = vmatpush.bf16.msra.mxu0 %v1270
        %1492 = vmatpush.bf16.msra.mxu0 %v1269
        %1493 = vmatpush.bf16.msra.mxu0 %v1268
        %1494 = vmatpush.bf16.msra.mxu0 %v1267
        %1495 = vmatpush.bf16.msra.mxu0 %v1266
        %1496 = vmatpush.bf16.msra.mxu0 %v1265
        %1497 = vmatpush.bf16.msra.mxu0 %v1264
        %1498 = vmatmul.bf16.gmra.mxu0 %v1482
        %v1499 = vpop.f32.mrf.mxu0
        %v1500 = vadd.f32 0.0, %v1499
        %v1501 = vpop.f32.mrf.mxu0
        %v1502 = vadd.f32 0.0, %v1501
        %1503 = vmatmul.bf16.gmra.mxu0 %v1483
        %v1504 = vpop.f32.mrf.mxu0
        %v1505 = vadd.f32 0.0, %v1504
        %v1506 = vpop.f32.mrf.mxu0
        %v1507 = vadd.f32 0.0, %v1506
        %1508 = vmatmul.bf16.gmra.mxu0 %v1484
        %v1509 = vpop.f32.mrf.mxu0
        %v1510 = vadd.f32 0.0, %v1509
        %v1511 = vpop.f32.mrf.mxu0
        %v1512 = vadd.f32 0.0, %v1511
        %1513 = vmatmul.bf16.gmra.mxu0 %v1485
        %v1514 = vpop.f32.mrf.mxu0
        %v1515 = vadd.f32 0.0, %v1514
        %v1516 = vpop.f32.mrf.mxu0
        %v1517 = vadd.f32 0.0, %v1516
        %1518 = vmatmul.bf16.gmra.mxu0 %v1486
        %v1519 = vpop.f32.mrf.mxu0
        %v1520 = vadd.f32 0.0, %v1519
        %v1521 = vpop.f32.mrf.mxu0
        %v1522 = vadd.f32 0.0, %v1521
        %1523 = vmatmul.bf16.gmra.mxu0 %v1487
        %v1524 = vpop.f32.mrf.mxu0
        %v1525 = vadd.f32 0.0, %v1524
        %v1526 = vpop.f32.mrf.mxu0
        %v1527 = vadd.f32 0.0, %v1526
        %1528 = vmatmul.bf16.gmra.mxu0 %v1488
        %v1529 = vpop.f32.mrf.mxu0
        %v1530 = vadd.f32 0.0, %v1529
        %v1531 = vpop.f32.mrf.mxu0
        %v1532 = vadd.f32 0.0, %v1531
        %1533 = vmatmul.bf16.gmra.mxu0 %v1489
        %v1534 = vpop.f32.mrf.mxu0
        %v1535 = vadd.f32 0.0, %v1534
        %v1536 = vpop.f32.mrf.mxu0
        %v1537 = vadd.f32 0.0, %v1536
        %1538 = vdwg.mxu0
        %v1539 = vrcp.pop %v1451
        %v1540 = vrcp.pop %v1453
        %v1541 = vrcp.pop %v1455
        %v1542 = vrcp.pop %v1457
        %v1543 = vrcp.pop %v1459
        %v1544 = vrcp.pop %v1461
        %v1545 = vrcp.pop %v1463
        %v1546 = vrcp.pop %v1465
        %v1547 = vrcp.pop %v1467
        %v1548 = vrcp.pop %v1469
        %v1549 = vrcp.pop %v1471
        %v1550 = vrcp.pop %v1473
        %v1551 = vrcp.pop %v1475
        %v1552 = vrcp.pop %v1477
        %v1553 = vrcp.pop %v1479
        %v1554 = vrcp.pop %v1481
        %v1555 = vmul.f32 %v1500, %v1539
        %v1556 = vmul.f32 %v1502, %v1540
        %v1557 = vmul.f32 %v1505, %v1541
        %v1558 = vmul.f32 %v1507, %v1542
        %v1559 = vmul.f32 %v1510, %v1543
        %v1560 = vmul.f32 %v1512, %v1544
        %v1561 = vmul.f32 %v1515, %v1545
        %v1562 = vmul.f32 %v1517, %v1546
        %v1563 = vmul.f32 %v1520, %v1547
        %v1564 = vmul.f32 %v1522, %v1548
        %v1565 = vmul.f32 %v1525, %v1549
        %v1566 = vmul.f32 %v1527, %v1550
        %v1567 = vmul.f32 %v1530, %v1551
        %v1568 = vmul.f32 %v1532, %v1552
        %v1569 = vmul.f32 %v1535, %v1553
        %v1570 = vmul.f32 %v1537, %v1554
        %v1571 = vpack.c.bf16 %v1556, %v1555
        %v1572 = vpack.c.bf16 %v1558, %v1557
        %v1573 = vpack.c.bf16 %v1560, %v1559
        %v1574 = vpack.c.bf16 %v1562, %v1561
        %v1575 = vpack.c.bf16 %v1564, %v1563
        %v1576 = vpack.c.bf16 %v1566, %v1565
        %v1577 = vpack.c.bf16 %v1568, %v1567
        %v1578 = vpack.c.bf16 %v1570, %v1569
        %v1579 = vld [vmem:[#allocation8] sm:$0xf]
        %v1580 = vld [vmem:[#allocation8 + $0x4] sm:$0xf]
        %v1581 = vld [vmem:[#allocation8 + $0x8] sm:$0xf]
        %v1582 = vld [vmem:[#allocation8 + $0xc] sm:$0xf]
        %1591 = vrot.lane.b32.xlu0 %v1248, 96
        %v1592 = vpop.permute.xlu0 %1591
        %1593 = vrot.lane.b32.xlu0 %v1249, 96
        %v1594 = vpop.permute.xlu0 %1593
        %1595 = vrot.lane.b32.xlu0 %v1250, 96
        %v1596 = vpop.permute.xlu0 %1595
        %1597 = vrot.lane.b32.xlu0 %v1251, 96
        %v1598 = vpop.permute.xlu0 %1597
        %1599 = vrot.lane.b32.xlu0 %v1252, 96
        %v1600 = vpop.permute.xlu0 %1599
        %1601 = vrot.lane.b32.xlu0 %v1253, 96
        %v1602 = vpop.permute.xlu0 %1601
        %1603 = vrot.lane.b32.xlu0 %v1254, 96
        %v1604 = vpop.permute.xlu0 %1603
        %1605 = vrot.lane.b32.xlu0 %v1255, 96
        %v1606 = vpop.permute.xlu0 %1605
        %1615 = vrot.lane.b32.xlu0 %v1256, 96
        %v1616 = vpop.permute.xlu0 %1615
        %1617 = vrot.lane.b32.xlu0 %v1257, 96
        %v1618 = vpop.permute.xlu0 %1617
        %1619 = vrot.lane.b32.xlu0 %v1258, 96
        %v1620 = vpop.permute.xlu0 %1619
        %1621 = vrot.lane.b32.xlu0 %v1259, 96
        %v1622 = vpop.permute.xlu0 %1621
        %1623 = vrot.lane.b32.xlu0 %v1260, 96
        %v1624 = vpop.permute.xlu0 %1623
        %1625 = vrot.lane.b32.xlu0 %v1261, 96
        %v1626 = vpop.permute.xlu0 %1625
        %1627 = vrot.lane.b32.xlu0 %v1262, 96
        %v1628 = vpop.permute.xlu0 %1627
        %1629 = vrot.lane.b32.xlu0 %v1263, 96
        %v1630 = vpop.permute.xlu0 %1629
        %v1632 = vsel %vm1272, %v1592, 0
        %v1635 = vsel %vm1272, %v1594, 0
        %v1638 = vsel %vm1272, %v1596, 0
        %v1641 = vsel %vm1272, %v1598, 0
        %v1644 = vsel %vm1272, %v1600, 0
        %v1647 = vsel %vm1272, %v1602, 0
        %v1650 = vsel %vm1272, %v1604, 0
        %v1653 = vsel %vm1272, %v1606, 0
        %v1656 = vsel %vm1272, %v1616, 0
        %v1659 = vsel %vm1272, %v1618, 0
        %v1662 = vsel %vm1272, %v1620, 0
        %v1665 = vsel %vm1272, %v1622, 0
        %v1668 = vsel %vm1272, %v1624, 0
        %v1671 = vsel %vm1272, %v1626, 0
        %v1674 = vsel %vm1272, %v1628, 0
        %v1677 = vsel %vm1272, %v1630, 0
        %1679 = vmatpush.bf16.xpose.msra.mxu0 %v1677
        %1680 = vmatpush.bf16.xpose.msra.mxu0 %v1674
        %1681 = vmatpush.bf16.xpose.msra.mxu0 %v1671
        %1682 = vmatpush.bf16.xpose.msra.mxu0 %v1668
        %1683 = vmatpush.bf16.xpose.msra.mxu0 %v1665
        %1684 = vmatpush.bf16.xpose.msra.mxu0 %v1662
        %1685 = vmatpush.bf16.xpose.msra.mxu0 %v1659
        %1686 = vmatpush.bf16.xpose.msra.mxu0 %v1656
        %1687 = vmatmul.bf16.gmra.mxu0 %v1632
        %v1688 = vpop.f32.mrf.mxu0
        %v1689 = vadd.f32 %v1231, %v1688
        %v1690 = vpop.f32.mrf.mxu0
        %v1691 = vadd.f32 %v1231, %v1690
        %1692 = vmatmul.bf16.gmra.mxu0 %v1635
        %v1693 = vpop.f32.mrf.mxu0
        %v1694 = vadd.f32 %v1231, %v1693
        %v1695 = vpop.f32.mrf.mxu0
        %v1696 = vadd.f32 %v1231, %v1695
        %1697 = vmatmul.bf16.gmra.mxu0 %v1638
        %v1698 = vpop.f32.mrf.mxu0
        %v1699 = vadd.f32 %v1231, %v1698
        %v1700 = vpop.f32.mrf.mxu0
        %v1701 = vadd.f32 %v1231, %v1700
        %1702 = vmatmul.bf16.gmra.mxu0 %v1641
        %v1703 = vpop.f32.mrf.mxu0
        %v1704 = vadd.f32 %v1231, %v1703
        %v1705 = vpop.f32.mrf.mxu0
        %v1706 = vadd.f32 %v1231, %v1705
        %1707 = vmatmul.bf16.gmra.mxu0 %v1644
        %v1708 = vpop.f32.mrf.mxu0
        %v1709 = vadd.f32 %v1231, %v1708
        %v1710 = vpop.f32.mrf.mxu0
        %v1711 = vadd.f32 %v1231, %v1710
        %1712 = vmatmul.bf16.gmra.mxu0 %v1647
        %v1713 = vpop.f32.mrf.mxu0
        %v1714 = vadd.f32 %v1231, %v1713
        %v1715 = vpop.f32.mrf.mxu0
        %v1716 = vadd.f32 %v1231, %v1715
        %1717 = vmatmul.bf16.gmra.mxu0 %v1650
        %v1718 = vpop.f32.mrf.mxu0
        %v1719 = vadd.f32 %v1231, %v1718
        %v1720 = vpop.f32.mrf.mxu0
        %v1721 = vadd.f32 %v1231, %v1720
        %1722 = vmatmul.bf16.gmra.mxu0 %v1653
        %v1723 = vpop.f32.mrf.mxu0
        %v1724 = vadd.f32 %v1231, %v1723
        %v1725 = vpop.f32.mrf.mxu0
        %v1726 = vadd.f32 %v1231, %v1725
        %1727 = vdwg.mxu0
        %1728 = vmax.xlane.f32.xlu0 %v1689
        %v1729 = vpop.xlane.xlu0 %1728
        %1730 = vmax.xlane.f32.xlu0 %v1691
        %v1731 = vpop.xlane.xlu0 %1730
        %1732 = vmax.xlane.f32.xlu0 %v1694
        %v1733 = vpop.xlane.xlu0 %1732
        %1734 = vmax.xlane.f32.xlu0 %v1696
        %v1735 = vpop.xlane.xlu0 %1734
        %1736 = vmax.xlane.f32.xlu0 %v1699
        %v1737 = vpop.xlane.xlu0 %1736
        %1738 = vmax.xlane.f32.xlu0 %v1701
        %v1739 = vpop.xlane.xlu0 %1738
        %1740 = vmax.xlane.f32.xlu0 %v1704
        %v1741 = vpop.xlane.xlu0 %1740
        %1742 = vmax.xlane.f32.xlu0 %v1706
        %v1743 = vpop.xlane.xlu0 %1742
        %1744 = vmax.xlane.f32.xlu0 %v1709
        %v1745 = vpop.xlane.xlu0 %1744
        %1746 = vmax.xlane.f32.xlu0 %v1711
        %v1747 = vpop.xlane.xlu0 %1746
        %1748 = vmax.xlane.f32.xlu0 %v1714
        %v1749 = vpop.xlane.xlu0 %1748
        %1750 = vmax.xlane.f32.xlu0 %v1716
        %v1751 = vpop.xlane.xlu0 %1750
        %1752 = vmax.xlane.f32.xlu0 %v1719
        %v1753 = vpop.xlane.xlu0 %1752
        %1754 = vmax.xlane.f32.xlu0 %v1721
        %v1755 = vpop.xlane.xlu0 %1754
        %1756 = vmax.xlane.f32.xlu0 %v1724
        %v1757 = vpop.xlane.xlu0 %1756
        %1758 = vmax.xlane.f32.xlu0 %v1726
        %v1759 = vpop.xlane.xlu0 %1758
        %v1760 = vsub.f32 %v1689, %v1729
        %v1761 = vsub.f32 %v1691, %v1731
        %v1762 = vsub.f32 %v1694, %v1733
        %v1763 = vsub.f32 %v1696, %v1735
        %v1764 = vsub.f32 %v1699, %v1737
        %v1765 = vsub.f32 %v1701, %v1739
        %v1766 = vsub.f32 %v1704, %v1741
        %v1767 = vsub.f32 %v1706, %v1743
        %v1768 = vsub.f32 %v1709, %v1745
        %v1769 = vsub.f32 %v1711, %v1747
        %v1770 = vsub.f32 %v1714, %v1749
        %v1771 = vsub.f32 %v1716, %v1751
        %v1772 = vsub.f32 %v1719, %v1753
        %v1773 = vsub.f32 %v1721, %v1755
        %v1774 = vsub.f32 %v1724, %v1757
        %v1775 = vsub.f32 %v1726, %v1759
        %v1776 = vmul.f32 %v1760, 1.442695
        %v1777 = vpow.pop %v1776
        %v1778 = vmul.f32 %v1761, 1.442695
        %v1779 = vpow.pop %v1778
        %v1780 = vmul.f32 %v1762, 1.442695
        %v1781 = vpow.pop %v1780
        %v1782 = vmul.f32 %v1763, 1.442695
        %v1783 = vpow.pop %v1782
        %v1784 = vmul.f32 %v1764, 1.442695
        %v1785 = vpow.pop %v1784
        %v1786 = vmul.f32 %v1765, 1.442695
        %v1787 = vpow.pop %v1786
        %v1788 = vmul.f32 %v1766, 1.442695
        %v1789 = vpow.pop %v1788
        %v1790 = vmul.f32 %v1767, 1.442695
        %v1791 = vpow.pop %v1790
        %v1792 = vmul.f32 %v1768, 1.442695
        %v1793 = vpow.pop %v1792
        %v1794 = vmul.f32 %v1769, 1.442695
        %v1795 = vpow.pop %v1794
        %v1796 = vmul.f32 %v1770, 1.442695
        %v1797 = vpow.pop %v1796
        %v1798 = vmul.f32 %v1771, 1.442695
        %v1799 = vpow.pop %v1798
        %v1800 = vmul.f32 %v1772, 1.442695
        %v1801 = vpow.pop %v1800
        %v1802 = vmul.f32 %v1773, 1.442695
        %v1803 = vpow.pop %v1802
        %v1804 = vmul.f32 %v1774, 1.442695
        %v1805 = vpow.pop %v1804
        %v1806 = vmul.f32 %v1775, 1.442695
        %v1807 = vpow.pop %v1806
        %1808 = vadd.xlane.f32.xlu0 %v1777
        %v1809 = vpop.xlane.xlu0 %1808
        %1810 = vadd.xlane.f32.xlu0 %v1779
        %v1811 = vpop.xlane.xlu0 %1810
        %1812 = vadd.xlane.f32.xlu0 %v1781
        %v1813 = vpop.xlane.xlu0 %1812
        %1814 = vadd.xlane.f32.xlu0 %v1783
        %v1815 = vpop.xlane.xlu0 %1814
        %1816 = vadd.xlane.f32.xlu0 %v1785
        %v1817 = vpop.xlane.xlu0 %1816
        %1818 = vadd.xlane.f32.xlu0 %v1787
        %v1819 = vpop.xlane.xlu0 %1818
        %1820 = vadd.xlane.f32.xlu0 %v1789
        %v1821 = vpop.xlane.xlu0 %1820
        %1822 = vadd.xlane.f32.xlu0 %v1791
        %v1823 = vpop.xlane.xlu0 %1822
        %1824 = vadd.xlane.f32.xlu0 %v1793
        %v1825 = vpop.xlane.xlu0 %1824
        %1826 = vadd.xlane.f32.xlu0 %v1795
        %v1827 = vpop.xlane.xlu0 %1826
        %1828 = vadd.xlane.f32.xlu0 %v1797
        %v1829 = vpop.xlane.xlu0 %1828
        %1830 = vadd.xlane.f32.xlu0 %v1799
        %v1831 = vpop.xlane.xlu0 %1830
        %1832 = vadd.xlane.f32.xlu0 %v1801
        %v1833 = vpop.xlane.xlu0 %1832
        %1834 = vadd.xlane.f32.xlu0 %v1803
        %v1835 = vpop.xlane.xlu0 %1834
        %1836 = vadd.xlane.f32.xlu0 %v1805
        %v1837 = vpop.xlane.xlu0 %1836
        %1838 = vadd.xlane.f32.xlu0 %v1807
        %v1839 = vpop.xlane.xlu0 %1838
        %v1840 = vpack.c.bf16 %v1779, %v1777
        %v1841 = vpack.c.bf16 %v1783, %v1781
        %v1842 = vpack.c.bf16 %v1787, %v1785
        %v1843 = vpack.c.bf16 %v1791, %v1789
        %v1844 = vpack.c.bf16 %v1795, %v1793
        %v1845 = vpack.c.bf16 %v1799, %v1797
        %v1846 = vpack.c.bf16 %v1803, %v1801
        %v1847 = vpack.c.bf16 %v1807, %v1805
        %1856 = vrot.lane.b32.xlu0 %v1264, 96
        %v1857 = vpop.permute.xlu0 %1856
        %1858 = vrot.lane.b32.xlu0 %v1265, 96
        %v1859 = vpop.permute.xlu0 %1858
        %1860 = vrot.lane.b32.xlu0 %v1266, 96
        %v1861 = vpop.permute.xlu0 %1860
        %1862 = vrot.lane.b32.xlu0 %v1267, 96
        %v1863 = vpop.permute.xlu0 %1862
        %1864 = vrot.lane.b32.xlu0 %v1268, 96
        %v1865 = vpop.permute.xlu0 %1864
        %1866 = vrot.lane.b32.xlu0 %v1269, 96
        %v1867 = vpop.permute.xlu0 %1866
        %1868 = vrot.lane.b32.xlu0 %v1270, 96
        %v1869 = vpop.permute.xlu0 %1868
        %1870 = vrot.lane.b32.xlu0 %v1271, 96
        %v1871 = vpop.permute.xlu0 %1870
        %1880 = vmatpush.bf16.msra.mxu0 %v1871
        %1881 = vmatpush.bf16.msra.mxu0 %v1869
        %1882 = vmatpush.bf16.msra.mxu0 %v1867
        %1883 = vmatpush.bf16.msra.mxu0 %v1865
        %1884 = vmatpush.bf16.msra.mxu0 %v1863
        %1885 = vmatpush.bf16.msra.mxu0 %v1861
        %1886 = vmatpush.bf16.msra.mxu0 %v1859
        %1887 = vmatpush.bf16.msra.mxu0 %v1857
        %1888 = vmatmul.bf16.gmra.mxu0 %v1840
        %v1889 = vpop.f32.mrf.mxu0
        %v1890 = vadd.f32 0.0, %v1889
        %v1891 = vpop.f32.mrf.mxu0
        %v1892 = vadd.f32 0.0, %v1891
        %1893 = vmatmul.bf16.gmra.mxu0 %v1841
        %v1894 = vpop.f32.mrf.mxu0
        %v1895 = vadd.f32 0.0, %v1894
        %v1896 = vpop.f32.mrf.mxu0
        %v1897 = vadd.f32 0.0, %v1896
        %1898 = vmatmul.bf16.gmra.mxu0 %v1842
        %v1899 = vpop.f32.mrf.mxu0
        %v1900 = vadd.f32 0.0, %v1899
        %v1901 = vpop.f32.mrf.mxu0
        %v1902 = vadd.f32 0.0, %v1901
        %1903 = vmatmul.bf16.gmra.mxu0 %v1843
        %v1904 = vpop.f32.mrf.mxu0
        %v1905 = vadd.f32 0.0, %v1904
        %v1906 = vpop.f32.mrf.mxu0
        %v1907 = vadd.f32 0.0, %v1906
        %1908 = vmatmul.bf16.gmra.mxu0 %v1844
        %v1909 = vpop.f32.mrf.mxu0
        %v1910 = vadd.f32 0.0, %v1909
        %v1911 = vpop.f32.mrf.mxu0
        %v1912 = vadd.f32 0.0, %v1911
        %1913 = vmatmul.bf16.gmra.mxu0 %v1845
        %v1914 = vpop.f32.mrf.mxu0
        %v1915 = vadd.f32 0.0, %v1914
        %v1916 = vpop.f32.mrf.mxu0
        %v1917 = vadd.f32 0.0, %v1916
        %1918 = vmatmul.bf16.gmra.mxu0 %v1846
        %v1919 = vpop.f32.mrf.mxu0
        %v1920 = vadd.f32 0.0, %v1919
        %v1921 = vpop.f32.mrf.mxu0
        %v1922 = vadd.f32 0.0, %v1921
        %1923 = vmatmul.bf16.gmra.mxu0 %v1847
        %v1924 = vpop.f32.mrf.mxu0
        %v1925 = vadd.f32 0.0, %v1924
        %v1926 = vpop.f32.mrf.mxu0
        %v1927 = vadd.f32 0.0, %v1926
        %1928 = vdwg.mxu0
        %v1929 = vrcp.pop %v1809
        %v1930 = vrcp.pop %v1811
        %v1931 = vrcp.pop %v1813
        %v1932 = vrcp.pop %v1815
        %v1933 = vrcp.pop %v1817
        %v1934 = vrcp.pop %v1819
        %v1935 = vrcp.pop %v1821
        %v1936 = vrcp.pop %v1823
        %v1937 = vrcp.pop %v1825
        %v1938 = vrcp.pop %v1827
        %v1939 = vrcp.pop %v1829
        %v1940 = vrcp.pop %v1831
        %v1941 = vrcp.pop %v1833
        %v1942 = vrcp.pop %v1835
        %v1943 = vrcp.pop %v1837
        %v1944 = vrcp.pop %v1839
        %v1945 = vmul.f32 %v1890, %v1929
        %v1946 = vmul.f32 %v1892, %v1930
        %v1947 = vmul.f32 %v1895, %v1931
        %v1948 = vmul.f32 %v1897, %v1932
        %v1949 = vmul.f32 %v1900, %v1933
        %v1950 = vmul.f32 %v1902, %v1934
        %v1951 = vmul.f32 %v1905, %v1935
        %v1952 = vmul.f32 %v1907, %v1936
        %v1953 = vmul.f32 %v1910, %v1937
        %v1954 = vmul.f32 %v1912, %v1938
        %v1955 = vmul.f32 %v1915, %v1939
        %v1956 = vmul.f32 %v1917, %v1940
        %v1957 = vmul.f32 %v1920, %v1941
        %v1958 = vmul.f32 %v1922, %v1942
        %v1959 = vmul.f32 %v1925, %v1943
        %v1960 = vmul.f32 %v1927, %v1944
        %v1961 = vpack.c.bf16 %v1946, %v1945
        %v1962 = vpack.c.bf16 %v1948, %v1947
        %v1963 = vpack.c.bf16 %v1950, %v1949
        %v1964 = vpack.c.bf16 %v1952, %v1951
        %v1965 = vpack.c.bf16 %v1954, %v1953
        %v1966 = vpack.c.bf16 %v1956, %v1955
        %v1967 = vpack.c.bf16 %v1958, %v1957
        %v1968 = vpack.c.bf16 %v1960, %v1959
        %v1969 = vld [vmem:[#allocation8 + $0x10] sm:$0xf]
        %v1970 = vld [vmem:[#allocation8 + $0x14] sm:$0xf]
        %v1971 = vld [vmem:[#allocation8 + $0x18] sm:$0xf]
        %v1972 = vld [vmem:[#allocation8 + $0x1c] sm:$0xf]
        %v1977 = vunpack.c.l.b16 %v1969
        %v1978 = vunpack.c.l.b16 %v1970
        %v1979 = vunpack.c.l.b16 %v1971
        %v1980 = vunpack.c.l.b16 %v1972
        %v1981 = vpack.c.b16 %v1978, %v1977
        %v1982 = vpack.c.b16 %v1980, %v1979
        %v1986 = vsel %vm1272, %v1961, 0
        %v1989 = vsel %vm1272, %v1962, 0
        %v1992 = vsel %vm1272, %v1963, 0
        %v1995 = vsel %vm1272, %v1964, 0
        %v1998 = vsel %vm1272, %v1965, 0
        %v2001 = vsel %vm1272, %v1966, 0
        %v2004 = vsel %vm1272, %v1967, 0
        %v2007 = vsel %vm1272, %v1968, 0
        %2009 = vmatpush.bf16.msra.mxu0 0
        %2010 = vmatpush.bf16.msra.mxu0 0
        %2011 = vmatpush.bf16.msra.mxu0 0
        %2012 = vmatpush.bf16.msra.mxu0 0
        %2013 = vmatpush.bf16.msra.mxu0 0
        %2014 = vmatpush.bf16.msra.mxu0 0
        %2015 = vmatpush.bf16.msra.mxu0 %v1982
        %2016 = vmatpush.bf16.msra.mxu0 %v1981
        %2017 = vmatmul.bf16.gmra.mxu0 %v1986
        %v2018 = vpop.f32.mrf.mxu0
        %v2019 = vadd.f32 0.0, %v2018
        %v2020 = vpop.f32.mrf.mxu0
        %v2021 = vadd.f32 0.0, %v2020
        %2022 = vmatmul.bf16.gmra.mxu0 %v1989
        %v2023 = vpop.f32.mrf.mxu0
        %v2024 = vadd.f32 0.0, %v2023
        %v2025 = vpop.f32.mrf.mxu0
        %v2026 = vadd.f32 0.0, %v2025
        %2027 = vmatmul.bf16.gmra.mxu0 %v1992
        %v2028 = vpop.f32.mrf.mxu0
        %v2029 = vadd.f32 0.0, %v2028
        %v2030 = vpop.f32.mrf.mxu0
        %v2031 = vadd.f32 0.0, %v2030
        %2032 = vmatmul.bf16.gmra.mxu0 %v1995
        %v2033 = vpop.f32.mrf.mxu0
        %v2034 = vadd.f32 0.0, %v2033
        %v2035 = vpop.f32.mrf.mxu0
        %v2036 = vadd.f32 0.0, %v2035
        %2037 = vmatmul.bf16.gmra.mxu0 %v1998
        %v2038 = vpop.f32.mrf.mxu0
        %v2039 = vadd.f32 0.0, %v2038
        %v2040 = vpop.f32.mrf.mxu0
        %v2041 = vadd.f32 0.0, %v2040
        %2042 = vmatmul.bf16.gmra.mxu0 %v2001
        %v2043 = vpop.f32.mrf.mxu0
        %v2044 = vadd.f32 0.0, %v2043
        %v2045 = vpop.f32.mrf.mxu0
        %v2046 = vadd.f32 0.0, %v2045
        %2047 = vmatmul.bf16.gmra.mxu0 %v2004
        %v2048 = vpop.f32.mrf.mxu0
        %v2049 = vadd.f32 0.0, %v2048
        %v2050 = vpop.f32.mrf.mxu0
        %v2051 = vadd.f32 0.0, %v2050
        %2052 = vmatmul.bf16.gmra.mxu0 %v2007
        %v2053 = vpop.f32.mrf.mxu0
        %v2054 = vadd.f32 0.0, %v2053
        %v2055 = vpop.f32.mrf.mxu0
        %v2056 = vadd.f32 0.0, %v2055
        %2057 = vdwg.mxu0
        %v2062 = vunpack.c.l.b16 %v1579
        %v2063 = vunpack.c.l.b16 %v1580
        %v2064 = vunpack.c.l.b16 %v1581
        %v2065 = vunpack.c.l.b16 %v1582
        %v2066 = vpack.c.b16 %v2063, %v2062
        %v2067 = vpack.c.b16 %v2065, %v2064
        %v2071 = vsel %vm1272, %v1571, 0
        %v2074 = vsel %vm1272, %v1572, 0
        %v2077 = vsel %vm1272, %v1573, 0
        %v2080 = vsel %vm1272, %v1574, 0
        %v2083 = vsel %vm1272, %v1575, 0
        %v2086 = vsel %vm1272, %v1576, 0
        %v2089 = vsel %vm1272, %v1577, 0
        %v2092 = vsel %vm1272, %v1578, 0
        %2094 = vmatpush.bf16.msra.mxu0 0
        %2095 = vmatpush.bf16.msra.mxu0 0
        %2096 = vmatpush.bf16.msra.mxu0 0
        %2097 = vmatpush.bf16.msra.mxu0 0
        %2098 = vmatpush.bf16.msra.mxu0 0
        %2099 = vmatpush.bf16.msra.mxu0 0
        %2100 = vmatpush.bf16.msra.mxu0 %v2067
        %2101 = vmatpush.bf16.msra.mxu0 %v2066
        %2102 = vmatmul.bf16.gmra.mxu0 %v2071
        %v2103 = vpop.f32.mrf.mxu0
        %v2104 = vadd.f32 %v2019, %v2103
        %v2105 = vpop.f32.mrf.mxu0
        %v2106 = vadd.f32 %v2021, %v2105
        %2107 = vmatmul.bf16.gmra.mxu0 %v2074
        %v2108 = vpop.f32.mrf.mxu0
        %v2109 = vadd.f32 %v2024, %v2108
        %v2110 = vpop.f32.mrf.mxu0
        %v2111 = vadd.f32 %v2026, %v2110
        %2112 = vmatmul.bf16.gmra.mxu0 %v2077
        %v2113 = vpop.f32.mrf.mxu0
        %v2114 = vadd.f32 %v2029, %v2113
        %v2115 = vpop.f32.mrf.mxu0
        %v2116 = vadd.f32 %v2031, %v2115
        %2117 = vmatmul.bf16.gmra.mxu0 %v2080
        %v2118 = vpop.f32.mrf.mxu0
        %v2119 = vadd.f32 %v2034, %v2118
        %v2120 = vpop.f32.mrf.mxu0
        %v2121 = vadd.f32 %v2036, %v2120
        %2122 = vmatmul.bf16.gmra.mxu0 %v2083
        %v2123 = vpop.f32.mrf.mxu0
        %v2124 = vadd.f32 %v2039, %v2123
        %v2125 = vpop.f32.mrf.mxu0
        %v2126 = vadd.f32 %v2041, %v2125
        %2127 = vmatmul.bf16.gmra.mxu0 %v2086
        %v2128 = vpop.f32.mrf.mxu0
        %v2129 = vadd.f32 %v2044, %v2128
        %v2130 = vpop.f32.mrf.mxu0
        %v2131 = vadd.f32 %v2046, %v2130
        %2132 = vmatmul.bf16.gmra.mxu0 %v2089
        %v2133 = vpop.f32.mrf.mxu0
        %v2134 = vadd.f32 %v2049, %v2133
        %v2135 = vpop.f32.mrf.mxu0
        %v2136 = vadd.f32 %v2051, %v2135
        %2137 = vmatmul.bf16.gmra.mxu0 %v2092
        %v2138 = vpop.f32.mrf.mxu0
        %v2139 = vadd.f32 %v2054, %v2138
        %v2140 = vpop.f32.mrf.mxu0
        %v2141 = vadd.f32 %v2056, %v2140
        %2142 = vdwg.mxu0
        %2143 = vrot.lane.b32.xlu0 %v1248, 64
        %v2144 = vpop.permute.xlu0 %2143
        %2145 = vrot.lane.b32.xlu0 %v1249, 64
        %v2146 = vpop.permute.xlu0 %2145
        %2147 = vrot.lane.b32.xlu0 %v1250, 64
        %v2148 = vpop.permute.xlu0 %2147
        %2149 = vrot.lane.b32.xlu0 %v1251, 64
        %v2150 = vpop.permute.xlu0 %2149
        %2151 = vrot.lane.b32.xlu0 %v1252, 64
        %v2152 = vpop.permute.xlu0 %2151
        %2153 = vrot.lane.b32.xlu0 %v1253, 64
        %v2154 = vpop.permute.xlu0 %2153
        %2155 = vrot.lane.b32.xlu0 %v1254, 64
        %v2156 = vpop.permute.xlu0 %2155
        %2157 = vrot.lane.b32.xlu0 %v1255, 64
        %v2158 = vpop.permute.xlu0 %2157
        %2159 = vrot.lane.b32.xlu0 %v1256, 64
        %v2160 = vpop.permute.xlu0 %2159
        %2161 = vrot.lane.b32.xlu0 %v1257, 64
        %v2162 = vpop.permute.xlu0 %2161
        %2163 = vrot.lane.b32.xlu0 %v1258, 64
        %v2164 = vpop.permute.xlu0 %2163
        %2165 = vrot.lane.b32.xlu0 %v1259, 64
        %v2166 = vpop.permute.xlu0 %2165
        %2167 = vrot.lane.b32.xlu0 %v1260, 64
        %v2168 = vpop.permute.xlu0 %2167
        %2169 = vrot.lane.b32.xlu0 %v1261, 64
        %v2170 = vpop.permute.xlu0 %2169
        %2171 = vrot.lane.b32.xlu0 %v1262, 64
        %v2172 = vpop.permute.xlu0 %2171
        %2173 = vrot.lane.b32.xlu0 %v1263, 64
        %v2174 = vpop.permute.xlu0 %2173
        %v2176 = vsel %vm1272, %v2144, 0
        %v2179 = vsel %vm1272, %v2146, 0
        %v2182 = vsel %vm1272, %v2148, 0
        %v2185 = vsel %vm1272, %v2150, 0
        %v2188 = vsel %vm1272, %v2152, 0
        %v2191 = vsel %vm1272, %v2154, 0
        %v2194 = vsel %vm1272, %v2156, 0
        %v2197 = vsel %vm1272, %v2158, 0
        %v2200 = vsel %vm1272, %v2160, 0
        %v2203 = vsel %vm1272, %v2162, 0
        %v2206 = vsel %vm1272, %v2164, 0
        %v2209 = vsel %vm1272, %v2166, 0
        %v2212 = vsel %vm1272, %v2168, 0
        %v2215 = vsel %vm1272, %v2170, 0
        %v2218 = vsel %vm1272, %v2172, 0
        %v2221 = vsel %vm1272, %v2174, 0
        %2223 = vmatpush.bf16.xpose.msra.mxu0 %v2221
        %2224 = vmatpush.bf16.xpose.msra.mxu0 %v2218
        %2225 = vmatpush.bf16.xpose.msra.mxu0 %v2215
        %2226 = vmatpush.bf16.xpose.msra.mxu0 %v2212
        %2227 = vmatpush.bf16.xpose.msra.mxu0 %v2209
        %2228 = vmatpush.bf16.xpose.msra.mxu0 %v2206
        %2229 = vmatpush.bf16.xpose.msra.mxu0 %v2203
        %2230 = vmatpush.bf16.xpose.msra.mxu0 %v2200
        %2231 = vmatmul.bf16.gmra.mxu0 %v2176
        %v2232 = vpop.f32.mrf.mxu0
        %v2233 = vadd.f32 %v1231, %v2232
        %v2234 = vpop.f32.mrf.mxu0
        %v2235 = vadd.f32 %v1231, %v2234
        %2236 = vmatmul.bf16.gmra.mxu0 %v2179
        %v2237 = vpop.f32.mrf.mxu0
        %v2238 = vadd.f32 %v1231, %v2237
        %v2239 = vpop.f32.mrf.mxu0
        %v2240 = vadd.f32 %v1231, %v2239
        %2241 = vmatmul.bf16.gmra.mxu0 %v2182
        %v2242 = vpop.f32.mrf.mxu0
        %v2243 = vadd.f32 %v1231, %v2242
        %v2244 = vpop.f32.mrf.mxu0
        %v2245 = vadd.f32 %v1231, %v2244
        %2246 = vmatmul.bf16.gmra.mxu0 %v2185
        %v2247 = vpop.f32.mrf.mxu0
        %v2248 = vadd.f32 %v1231, %v2247
        %v2249 = vpop.f32.mrf.mxu0
        %v2250 = vadd.f32 %v1231, %v2249
        %2251 = vmatmul.bf16.gmra.mxu0 %v2188
        %v2252 = vpop.f32.mrf.mxu0
        %v2253 = vadd.f32 %v1231, %v2252
        %v2254 = vpop.f32.mrf.mxu0
        %v2255 = vadd.f32 %v1231, %v2254
        %2256 = vmatmul.bf16.gmra.mxu0 %v2191
        %v2257 = vpop.f32.mrf.mxu0
        %v2258 = vadd.f32 %v1231, %v2257
        %v2259 = vpop.f32.mrf.mxu0
        %v2260 = vadd.f32 %v1231, %v2259
        %2261 = vmatmul.bf16.gmra.mxu0 %v2194
        %v2262 = vpop.f32.mrf.mxu0
        %v2263 = vadd.f32 %v1231, %v2262
        %v2264 = vpop.f32.mrf.mxu0
        %v2265 = vadd.f32 %v1231, %v2264
        %2266 = vmatmul.bf16.gmra.mxu0 %v2197
        %v2267 = vpop.f32.mrf.mxu0
        %v2268 = vadd.f32 %v1231, %v2267
        %v2269 = vpop.f32.mrf.mxu0
        %v2270 = vadd.f32 %v1231, %v2269
        %2271 = vdwg.mxu0
        %2272 = vmax.xlane.f32.xlu0 %v2233
        %v2273 = vpop.xlane.xlu0 %2272
        %2274 = vmax.xlane.f32.xlu0 %v2235
        %v2275 = vpop.xlane.xlu0 %2274
        %2276 = vmax.xlane.f32.xlu0 %v2238
        %v2277 = vpop.xlane.xlu0 %2276
        %2278 = vmax.xlane.f32.xlu0 %v2240
        %v2279 = vpop.xlane.xlu0 %2278
        %2280 = vmax.xlane.f32.xlu0 %v2243
        %v2281 = vpop.xlane.xlu0 %2280
        %2282 = vmax.xlane.f32.xlu0 %v2245
        %v2283 = vpop.xlane.xlu0 %2282
        %2284 = vmax.xlane.f32.xlu0 %v2248
        %v2285 = vpop.xlane.xlu0 %2284
        %2286 = vmax.xlane.f32.xlu0 %v2250
        %v2287 = vpop.xlane.xlu0 %2286
        %2288 = vmax.xlane.f32.xlu0 %v2253
        %v2289 = vpop.xlane.xlu0 %2288
        %2290 = vmax.xlane.f32.xlu0 %v2255
        %v2291 = vpop.xlane.xlu0 %2290
        %2292 = vmax.xlane.f32.xlu0 %v2258
        %v2293 = vpop.xlane.xlu0 %2292
        %2294 = vmax.xlane.f32.xlu0 %v2260
        %v2295 = vpop.xlane.xlu0 %2294
        %2296 = vmax.xlane.f32.xlu0 %v2263
        %v2297 = vpop.xlane.xlu0 %2296
        %2298 = vmax.xlane.f32.xlu0 %v2265
        %v2299 = vpop.xlane.xlu0 %2298
        %2300 = vmax.xlane.f32.xlu0 %v2268
        %v2301 = vpop.xlane.xlu0 %2300
        %2302 = vmax.xlane.f32.xlu0 %v2270
        %v2303 = vpop.xlane.xlu0 %2302
        %v2304 = vsub.f32 %v2233, %v2273
        %v2305 = vsub.f32 %v2235, %v2275
        %v2306 = vsub.f32 %v2238, %v2277
        %v2307 = vsub.f32 %v2240, %v2279
        %v2308 = vsub.f32 %v2243, %v2281
        %v2309 = vsub.f32 %v2245, %v2283
        %v2310 = vsub.f32 %v2248, %v2285
        %v2311 = vsub.f32 %v2250, %v2287
        %v2312 = vsub.f32 %v2253, %v2289
        %v2313 = vsub.f32 %v2255, %v2291
        %v2314 = vsub.f32 %v2258, %v2293
        %v2315 = vsub.f32 %v2260, %v2295
        %v2316 = vsub.f32 %v2263, %v2297
        %v2317 = vsub.f32 %v2265, %v2299
        %v2318 = vsub.f32 %v2268, %v2301
        %v2319 = vsub.f32 %v2270, %v2303
        %v2320 = vmul.f32 %v2304, 1.442695
        %v2321 = vpow.pop %v2320
        %v2322 = vmul.f32 %v2305, 1.442695
        %v2323 = vpow.pop %v2322
        %v2324 = vmul.f32 %v2306, 1.442695
        %v2325 = vpow.pop %v2324
        %v2326 = vmul.f32 %v2307, 1.442695
        %v2327 = vpow.pop %v2326
        %v2328 = vmul.f32 %v2308, 1.442695
        %v2329 = vpow.pop %v2328
        %v2330 = vmul.f32 %v2309, 1.442695
        %v2331 = vpow.pop %v2330
        %v2332 = vmul.f32 %v2310, 1.442695
        %v2333 = vpow.pop %v2332
        %v2334 = vmul.f32 %v2311, 1.442695
        %v2335 = vpow.pop %v2334
        %v2336 = vmul.f32 %v2312, 1.442695
        %v2337 = vpow.pop %v2336
        %v2338 = vmul.f32 %v2313, 1.442695
        %v2339 = vpow.pop %v2338
        %v2340 = vmul.f32 %v2314, 1.442695
        %v2341 = vpow.pop %v2340
        %v2342 = vmul.f32 %v2315, 1.442695
        %v2343 = vpow.pop %v2342
        %v2344 = vmul.f32 %v2316, 1.442695
        %v2345 = vpow.pop %v2344
        %v2346 = vmul.f32 %v2317, 1.442695
        %v2347 = vpow.pop %v2346
        %v2348 = vmul.f32 %v2318, 1.442695
        %v2349 = vpow.pop %v2348
        %v2350 = vmul.f32 %v2319, 1.442695
        %v2351 = vpow.pop %v2350
        %2352 = vadd.xlane.f32.xlu0 %v2321
        %v2353 = vpop.xlane.xlu0 %2352
        %2354 = vadd.xlane.f32.xlu0 %v2323
        %v2355 = vpop.xlane.xlu0 %2354
        %2356 = vadd.xlane.f32.xlu0 %v2325
        %v2357 = vpop.xlane.xlu0 %2356
        %2358 = vadd.xlane.f32.xlu0 %v2327
        %v2359 = vpop.xlane.xlu0 %2358
        %2360 = vadd.xlane.f32.xlu0 %v2329
        %v2361 = vpop.xlane.xlu0 %2360
        %2362 = vadd.xlane.f32.xlu0 %v2331
        %v2363 = vpop.xlane.xlu0 %2362
        %2364 = vadd.xlane.f32.xlu0 %v2333
        %v2365 = vpop.xlane.xlu0 %2364
        %2366 = vadd.xlane.f32.xlu0 %v2335
        %v2367 = vpop.xlane.xlu0 %2366
        %2368 = vadd.xlane.f32.xlu0 %v2337
        %v2369 = vpop.xlane.xlu0 %2368
        %2370 = vadd.xlane.f32.xlu0 %v2339
        %v2371 = vpop.xlane.xlu0 %2370
        %2372 = vadd.xlane.f32.xlu0 %v2341
        %v2373 = vpop.xlane.xlu0 %2372
        %2374 = vadd.xlane.f32.xlu0 %v2343
        %v2375 = vpop.xlane.xlu0 %2374
        %2376 = vadd.xlane.f32.xlu0 %v2345
        %v2377 = vpop.xlane.xlu0 %2376
        %2378 = vadd.xlane.f32.xlu0 %v2347
        %v2379 = vpop.xlane.xlu0 %2378
        %2380 = vadd.xlane.f32.xlu0 %v2349
        %v2381 = vpop.xlane.xlu0 %2380
        %2382 = vadd.xlane.f32.xlu0 %v2351
        %v2383 = vpop.xlane.xlu0 %2382
        %v2384 = vpack.c.bf16 %v2323, %v2321
        %v2385 = vpack.c.bf16 %v2327, %v2325
        %v2386 = vpack.c.bf16 %v2331, %v2329
        %v2387 = vpack.c.bf16 %v2335, %v2333
        %v2388 = vpack.c.bf16 %v2339, %v2337
        %v2389 = vpack.c.bf16 %v2343, %v2341
        %v2390 = vpack.c.bf16 %v2347, %v2345
        %v2391 = vpack.c.bf16 %v2351, %v2349
        %2392 = vrot.lane.b32.xlu0 %v1264, 64
        %v2393 = vpop.permute.xlu0 %2392
        %2394 = vrot.lane.b32.xlu0 %v1265, 64
        %v2395 = vpop.permute.xlu0 %2394
        %2396 = vrot.lane.b32.xlu0 %v1266, 64
        %v2397 = vpop.permute.xlu0 %2396
        %2398 = vrot.lane.b32.xlu0 %v1267, 64
        %v2399 = vpop.permute.xlu0 %2398
        %2400 = vrot.lane.b32.xlu0 %v1268, 64
        %v2401 = vpop.permute.xlu0 %2400
        %2402 = vrot.lane.b32.xlu0 %v1269, 64
        %v2403 = vpop.permute.xlu0 %2402
        %2404 = vrot.lane.b32.xlu0 %v1270, 64
        %v2405 = vpop.permute.xlu0 %2404
        %2406 = vrot.lane.b32.xlu0 %v1271, 64
        %v2407 = vpop.permute.xlu0 %2406
        %2416 = vmatpush.bf16.msra.mxu0 %v2407
        %2417 = vmatpush.bf16.msra.mxu0 %v2405
        %2418 = vmatpush.bf16.msra.mxu0 %v2403
        %2419 = vmatpush.bf16.msra.mxu0 %v2401
        %2420 = vmatpush.bf16.msra.mxu0 %v2399
        %2421 = vmatpush.bf16.msra.mxu0 %v2397
        %2422 = vmatpush.bf16.msra.mxu0 %v2395
        %2423 = vmatpush.bf16.msra.mxu0 %v2393
        %2424 = vmatmul.bf16.gmra.mxu0 %v2384
        %v2425 = vpop.f32.mrf.mxu0
        %v2426 = vadd.f32 0.0, %v2425
        %v2427 = vpop.f32.mrf.mxu0
        %v2428 = vadd.f32 0.0, %v2427
        %2429 = vmatmul.bf16.gmra.mxu0 %v2385
        %v2430 = vpop.f32.mrf.mxu0
        %v2431 = vadd.f32 0.0, %v2430
        %v2432 = vpop.f32.mrf.mxu0
        %v2433 = vadd.f32 0.0, %v2432
        %2434 = vmatmul.bf16.gmra.mxu0 %v2386
        %v2435 = vpop.f32.mrf.mxu0
        %v2436 = vadd.f32 0.0, %v2435
        %v2437 = vpop.f32.mrf.mxu0
        %v2438 = vadd.f32 0.0, %v2437
        %2439 = vmatmul.bf16.gmra.mxu0 %v2387
        %v2440 = vpop.f32.mrf.mxu0
        %v2441 = vadd.f32 0.0, %v2440
        %v2442 = vpop.f32.mrf.mxu0
        %v2443 = vadd.f32 0.0, %v2442
        %2444 = vmatmul.bf16.gmra.mxu0 %v2388
        %v2445 = vpop.f32.mrf.mxu0
        %v2446 = vadd.f32 0.0, %v2445
        %v2447 = vpop.f32.mrf.mxu0
        %v2448 = vadd.f32 0.0, %v2447
        %2449 = vmatmul.bf16.gmra.mxu0 %v2389
        %v2450 = vpop.f32.mrf.mxu0
        %v2451 = vadd.f32 0.0, %v2450
        %v2452 = vpop.f32.mrf.mxu0
        %v2453 = vadd.f32 0.0, %v2452
        %2454 = vmatmul.bf16.gmra.mxu0 %v2390
        %v2455 = vpop.f32.mrf.mxu0
        %v2456 = vadd.f32 0.0, %v2455
        %v2457 = vpop.f32.mrf.mxu0
        %v2458 = vadd.f32 0.0, %v2457
        %2459 = vmatmul.bf16.gmra.mxu0 %v2391
        %v2460 = vpop.f32.mrf.mxu0
        %v2461 = vadd.f32 0.0, %v2460
        %v2462 = vpop.f32.mrf.mxu0
        %v2463 = vadd.f32 0.0, %v2462
        %2464 = vdwg.mxu0
        %v2465 = vrcp.pop %v2353
        %v2466 = vrcp.pop %v2355
        %v2467 = vrcp.pop %v2357
        %v2468 = vrcp.pop %v2359
        %v2469 = vrcp.pop %v2361
        %v2470 = vrcp.pop %v2363
        %v2471 = vrcp.pop %v2365
        %v2472 = vrcp.pop %v2367
        %v2473 = vrcp.pop %v2369
        %v2474 = vrcp.pop %v2371
        %v2475 = vrcp.pop %v2373
        %v2476 = vrcp.pop %v2375
        %v2477 = vrcp.pop %v2377
        %v2478 = vrcp.pop %v2379
        %v2479 = vrcp.pop %v2381
        %v2480 = vrcp.pop %v2383
        %v2481 = vmul.f32 %v2426, %v2465
        %v2482 = vmul.f32 %v2428, %v2466
        %v2483 = vmul.f32 %v2431, %v2467
        %v2484 = vmul.f32 %v2433, %v2468
        %v2485 = vmul.f32 %v2436, %v2469
        %v2486 = vmul.f32 %v2438, %v2470
        %v2487 = vmul.f32 %v2441, %v2471
        %v2488 = vmul.f32 %v2443, %v2472
        %v2489 = vmul.f32 %v2446, %v2473
        %v2490 = vmul.f32 %v2448, %v2474
        %v2491 = vmul.f32 %v2451, %v2475
        %v2492 = vmul.f32 %v2453, %v2476
        %v2493 = vmul.f32 %v2456, %v2477
        %v2494 = vmul.f32 %v2458, %v2478
        %v2495 = vmul.f32 %v2461, %v2479
        %v2496 = vmul.f32 %v2463, %v2480
        %v2497 = vpack.c.bf16 %v2482, %v2481
        %v2498 = vpack.c.bf16 %v2484, %v2483
        %v2499 = vpack.c.bf16 %v2486, %v2485
        %v2500 = vpack.c.bf16 %v2488, %v2487
        %v2501 = vpack.c.bf16 %v2490, %v2489
        %v2502 = vpack.c.bf16 %v2492, %v2491
        %v2503 = vpack.c.bf16 %v2494, %v2493
        %v2504 = vpack.c.bf16 %v2496, %v2495
        %v2505 = vld [vmem:[#allocation8 + $0x20] sm:$0xf]
        %v2506 = vld [vmem:[#allocation8 + $0x24] sm:$0xf]
        %v2507 = vld [vmem:[#allocation8 + $0x28] sm:$0xf]
        %v2508 = vld [vmem:[#allocation8 + $0x2c] sm:$0xf]
        %v2513 = vunpack.c.l.b16 %v2505
        %v2514 = vunpack.c.l.b16 %v2506
        %v2515 = vunpack.c.l.b16 %v2507
        %v2516 = vunpack.c.l.b16 %v2508
        %v2517 = vpack.c.b16 %v2514, %v2513
        %v2518 = vpack.c.b16 %v2516, %v2515
        %v2522 = vsel %vm1272, %v2497, 0
        %v2525 = vsel %vm1272, %v2498, 0
        %v2528 = vsel %vm1272, %v2499, 0
        %v2531 = vsel %vm1272, %v2500, 0
        %v2534 = vsel %vm1272, %v2501, 0
        %v2537 = vsel %vm1272, %v2502, 0
        %v2540 = vsel %vm1272, %v2503, 0
        %v2543 = vsel %vm1272, %v2504, 0
        %2545 = vmatpush.bf16.msra.mxu0 0
        %2546 = vmatpush.bf16.msra.mxu0 0
        %2547 = vmatpush.bf16.msra.mxu0 0
        %2548 = vmatpush.bf16.msra.mxu0 0
        %2549 = vmatpush.bf16.msra.mxu0 0
        %2550 = vmatpush.bf16.msra.mxu0 0
        %2551 = vmatpush.bf16.msra.mxu0 %v2518
        %2552 = vmatpush.bf16.msra.mxu0 %v2517
        %2553 = vmatmul.bf16.gmra.mxu0 %v2522
        %v2554 = vpop.f32.mrf.mxu0
        %v2555 = vadd.f32 0.0, %v2554
        %v2556 = vpop.f32.mrf.mxu0
        %v2557 = vadd.f32 0.0, %v2556
        %2558 = vmatmul.bf16.gmra.mxu0 %v2525
        %v2559 = vpop.f32.mrf.mxu0
        %v2560 = vadd.f32 0.0, %v2559
        %v2561 = vpop.f32.mrf.mxu0
        %v2562 = vadd.f32 0.0, %v2561
        %2563 = vmatmul.bf16.gmra.mxu0 %v2528
        %v2564 = vpop.f32.mrf.mxu0
        %v2565 = vadd.f32 0.0, %v2564
        %v2566 = vpop.f32.mrf.mxu0
        %v2567 = vadd.f32 0.0, %v2566
        %2568 = vmatmul.bf16.gmra.mxu0 %v2531
        %v2569 = vpop.f32.mrf.mxu0
        %v2570 = vadd.f32 0.0, %v2569
        %v2571 = vpop.f32.mrf.mxu0
        %v2572 = vadd.f32 0.0, %v2571
        %2573 = vmatmul.bf16.gmra.mxu0 %v2534
        %v2574 = vpop.f32.mrf.mxu0
        %v2575 = vadd.f32 0.0, %v2574
        %v2576 = vpop.f32.mrf.mxu0
        %v2577 = vadd.f32 0.0, %v2576
        %2578 = vmatmul.bf16.gmra.mxu0 %v2537
        %v2579 = vpop.f32.mrf.mxu0
        %v2580 = vadd.f32 0.0, %v2579
        %v2581 = vpop.f32.mrf.mxu0
        %v2582 = vadd.f32 0.0, %v2581
        %2583 = vmatmul.bf16.gmra.mxu0 %v2540
        %v2584 = vpop.f32.mrf.mxu0
        %v2585 = vadd.f32 0.0, %v2584
        %v2586 = vpop.f32.mrf.mxu0
        %v2587 = vadd.f32 0.0, %v2586
        %2588 = vmatmul.bf16.gmra.mxu0 %v2543
        %v2589 = vpop.f32.mrf.mxu0
        %v2590 = vadd.f32 0.0, %v2589
        %v2591 = vpop.f32.mrf.mxu0
        %v2592 = vadd.f32 0.0, %v2591
        %2593 = vdwg.mxu0
        %v2594 = vadd.f32 %v2104, %v2555
        %v2595 = vadd.f32 %v2106, %v2557
        %v2596 = vadd.f32 %v2109, %v2560
        %v2597 = vadd.f32 %v2111, %v2562
        %v2598 = vadd.f32 %v2114, %v2565
        %v2599 = vadd.f32 %v2116, %v2567
        %v2600 = vadd.f32 %v2119, %v2570
        %v2601 = vadd.f32 %v2121, %v2572
        %v2602 = vadd.f32 %v2124, %v2575
        %v2603 = vadd.f32 %v2126, %v2577
        %v2604 = vadd.f32 %v2129, %v2580
        %v2605 = vadd.f32 %v2131, %v2582
        %v2606 = vadd.f32 %v2134, %v2585
        %v2607 = vadd.f32 %v2136, %v2587
        %v2608 = vadd.f32 %v2139, %v2590
        %v2609 = vadd.f32 %v2141, %v2592
        %2610 = vrot.lane.b32.xlu0 %v1248, 32
        %v2611 = vpop.permute.xlu0 %2610
        %2612 = vrot.lane.b32.xlu0 %v1249, 32
        %v2613 = vpop.permute.xlu0 %2612
        %2614 = vrot.lane.b32.xlu0 %v1250, 32
        %v2615 = vpop.permute.xlu0 %2614
        %2616 = vrot.lane.b32.xlu0 %v1251, 32
        %v2617 = vpop.permute.xlu0 %2616
        %2618 = vrot.lane.b32.xlu0 %v1252, 32
        %v2619 = vpop.permute.xlu0 %2618
        %2620 = vrot.lane.b32.xlu0 %v1253, 32
        %v2621 = vpop.permute.xlu0 %2620
        %2622 = vrot.lane.b32.xlu0 %v1254, 32
        %v2623 = vpop.permute.xlu0 %2622
        %2624 = vrot.lane.b32.xlu0 %v1255, 32
        %v2625 = vpop.permute.xlu0 %2624
        %2626 = vrot.lane.b32.xlu0 %v1256, 32
        %v2627 = vpop.permute.xlu0 %2626
        %2628 = vrot.lane.b32.xlu0 %v1257, 32
        %v2629 = vpop.permute.xlu0 %2628
        %2630 = vrot.lane.b32.xlu0 %v1258, 32
        %v2631 = vpop.permute.xlu0 %2630
        %2632 = vrot.lane.b32.xlu0 %v1259, 32
        %v2633 = vpop.permute.xlu0 %2632
        %2634 = vrot.lane.b32.xlu0 %v1260, 32
        %v2635 = vpop.permute.xlu0 %2634
        %2636 = vrot.lane.b32.xlu0 %v1261, 32
        %v2637 = vpop.permute.xlu0 %2636
        %2638 = vrot.lane.b32.xlu0 %v1262, 32
        %v2639 = vpop.permute.xlu0 %2638
        %2640 = vrot.lane.b32.xlu0 %v1263, 32
        %v2641 = vpop.permute.xlu0 %2640
        %v2643 = vsel %vm1272, %v2611, 0
        %v2646 = vsel %vm1272, %v2613, 0
        %v2649 = vsel %vm1272, %v2615, 0
        %v2652 = vsel %vm1272, %v2617, 0
        %v2655 = vsel %vm1272, %v2619, 0
        %v2658 = vsel %vm1272, %v2621, 0
        %v2661 = vsel %vm1272, %v2623, 0
        %v2664 = vsel %vm1272, %v2625, 0
        %v2667 = vsel %vm1272, %v2627, 0
        %v2670 = vsel %vm1272, %v2629, 0
        %v2673 = vsel %vm1272, %v2631, 0
        %v2676 = vsel %vm1272, %v2633, 0
        %v2679 = vsel %vm1272, %v2635, 0
        %v2682 = vsel %vm1272, %v2637, 0
        %v2685 = vsel %vm1272, %v2639, 0
        %v2688 = vsel %vm1272, %v2641, 0
        %2690 = vmatpush.bf16.xpose.msra.mxu0 %v2688
        %2691 = vmatpush.bf16.xpose.msra.mxu0 %v2685
        %2692 = vmatpush.bf16.xpose.msra.mxu0 %v2682
        %2693 = vmatpush.bf16.xpose.msra.mxu0 %v2679
        %2694 = vmatpush.bf16.xpose.msra.mxu0 %v2676
        %2695 = vmatpush.bf16.xpose.msra.mxu0 %v2673
        %2696 = vmatpush.bf16.xpose.msra.mxu0 %v2670
        %2697 = vmatpush.bf16.xpose.msra.mxu0 %v2667
        %2698 = vmatmul.bf16.gmra.mxu0 %v2643
        %v2699 = vpop.f32.mrf.mxu0
        %v2700 = vadd.f32 %v1231, %v2699
        %v2701 = vpop.f32.mrf.mxu0
        %v2702 = vadd.f32 %v1231, %v2701
        %2703 = vmatmul.bf16.gmra.mxu0 %v2646
        %v2704 = vpop.f32.mrf.mxu0
        %v2705 = vadd.f32 %v1231, %v2704
        %v2706 = vpop.f32.mrf.mxu0
        %v2707 = vadd.f32 %v1231, %v2706
        %2708 = vmatmul.bf16.gmra.mxu0 %v2649
        %v2709 = vpop.f32.mrf.mxu0
        %v2710 = vadd.f32 %v1231, %v2709
        %v2711 = vpop.f32.mrf.mxu0
        %v2712 = vadd.f32 %v1231, %v2711
        %2713 = vmatmul.bf16.gmra.mxu0 %v2652
        %v2714 = vpop.f32.mrf.mxu0
        %v2715 = vadd.f32 %v1231, %v2714
        %v2716 = vpop.f32.mrf.mxu0
        %v2717 = vadd.f32 %v1231, %v2716
        %2718 = vmatmul.bf16.gmra.mxu0 %v2655
        %v2719 = vpop.f32.mrf.mxu0
        %v2720 = vadd.f32 %v1231, %v2719
        %v2721 = vpop.f32.mrf.mxu0
        %v2722 = vadd.f32 %v1231, %v2721
        %2723 = vmatmul.bf16.gmra.mxu0 %v2658
        %v2724 = vpop.f32.mrf.mxu0
        %v2725 = vadd.f32 %v1231, %v2724
        %v2726 = vpop.f32.mrf.mxu0
        %v2727 = vadd.f32 %v1231, %v2726
        %2728 = vmatmul.bf16.gmra.mxu0 %v2661
        %v2729 = vpop.f32.mrf.mxu0
        %v2730 = vadd.f32 %v1231, %v2729
        %v2731 = vpop.f32.mrf.mxu0
        %v2732 = vadd.f32 %v1231, %v2731
        %2733 = vmatmul.bf16.gmra.mxu0 %v2664
        %v2734 = vpop.f32.mrf.mxu0
        %v2735 = vadd.f32 %v1231, %v2734
        %v2736 = vpop.f32.mrf.mxu0
        %v2737 = vadd.f32 %v1231, %v2736
        %2738 = vdwg.mxu0
        %2739 = vmax.xlane.f32.xlu0 %v2700
        %v2740 = vpop.xlane.xlu0 %2739
        %2741 = vmax.xlane.f32.xlu0 %v2702
        %v2742 = vpop.xlane.xlu0 %2741
        %2743 = vmax.xlane.f32.xlu0 %v2705
        %v2744 = vpop.xlane.xlu0 %2743
        %2745 = vmax.xlane.f32.xlu0 %v2707
        %v2746 = vpop.xlane.xlu0 %2745
        %2747 = vmax.xlane.f32.xlu0 %v2710
        %v2748 = vpop.xlane.xlu0 %2747
        %2749 = vmax.xlane.f32.xlu0 %v2712
        %v2750 = vpop.xlane.xlu0 %2749
        %2751 = vmax.xlane.f32.xlu0 %v2715
        %v2752 = vpop.xlane.xlu0 %2751
        %2753 = vmax.xlane.f32.xlu0 %v2717
        %v2754 = vpop.xlane.xlu0 %2753
        %2755 = vmax.xlane.f32.xlu0 %v2720
        %v2756 = vpop.xlane.xlu0 %2755
        %2757 = vmax.xlane.f32.xlu0 %v2722
        %v2758 = vpop.xlane.xlu0 %2757
        %2759 = vmax.xlane.f32.xlu0 %v2725
        %v2760 = vpop.xlane.xlu0 %2759
        %2761 = vmax.xlane.f32.xlu0 %v2727
        %v2762 = vpop.xlane.xlu0 %2761
        %2763 = vmax.xlane.f32.xlu0 %v2730
        %v2764 = vpop.xlane.xlu0 %2763
        %2765 = vmax.xlane.f32.xlu0 %v2732
        %v2766 = vpop.xlane.xlu0 %2765
        %2767 = vmax.xlane.f32.xlu0 %v2735
        %v2768 = vpop.xlane.xlu0 %2767
        %2769 = vmax.xlane.f32.xlu0 %v2737
        %v2770 = vpop.xlane.xlu0 %2769
        %v2771 = vsub.f32 %v2700, %v2740
        %v2772 = vsub.f32 %v2702, %v2742
        %v2773 = vsub.f32 %v2705, %v2744
        %v2774 = vsub.f32 %v2707, %v2746
        %v2775 = vsub.f32 %v2710, %v2748
        %v2776 = vsub.f32 %v2712, %v2750
        %v2777 = vsub.f32 %v2715, %v2752
        %v2778 = vsub.f32 %v2717, %v2754
        %v2779 = vsub.f32 %v2720, %v2756
        %v2780 = vsub.f32 %v2722, %v2758
        %v2781 = vsub.f32 %v2725, %v2760
        %v2782 = vsub.f32 %v2727, %v2762
        %v2783 = vsub.f32 %v2730, %v2764
        %v2784 = vsub.f32 %v2732, %v2766
        %v2785 = vsub.f32 %v2735, %v2768
        %v2786 = vsub.f32 %v2737, %v2770
        %v2787 = vmul.f32 %v2771, 1.442695
        %v2788 = vpow.pop %v2787
        %v2789 = vmul.f32 %v2772, 1.442695
        %v2790 = vpow.pop %v2789
        %v2791 = vmul.f32 %v2773, 1.442695
        %v2792 = vpow.pop %v2791
        %v2793 = vmul.f32 %v2774, 1.442695
        %v2794 = vpow.pop %v2793
        %v2795 = vmul.f32 %v2775, 1.442695
        %v2796 = vpow.pop %v2795
        %v2797 = vmul.f32 %v2776, 1.442695
        %v2798 = vpow.pop %v2797
        %v2799 = vmul.f32 %v2777, 1.442695
        %v2800 = vpow.pop %v2799
        %v2801 = vmul.f32 %v2778, 1.442695
        %v2802 = vpow.pop %v2801
        %v2803 = vmul.f32 %v2779, 1.442695
        %v2804 = vpow.pop %v2803
        %v2805 = vmul.f32 %v2780, 1.442695
        %v2806 = vpow.pop %v2805
        %v2807 = vmul.f32 %v2781, 1.442695
        %v2808 = vpow.pop %v2807
        %v2809 = vmul.f32 %v2782, 1.442695
        %v2810 = vpow.pop %v2809
        %v2811 = vmul.f32 %v2783, 1.442695
        %v2812 = vpow.pop %v2811
        %v2813 = vmul.f32 %v2784, 1.442695
        %v2814 = vpow.pop %v2813
        %v2815 = vmul.f32 %v2785, 1.442695
        %v2816 = vpow.pop %v2815
        %v2817 = vmul.f32 %v2786, 1.442695
        %v2818 = vpow.pop %v2817
        %2819 = vadd.xlane.f32.xlu0 %v2788
        %v2820 = vpop.xlane.xlu0 %2819
        %2821 = vadd.xlane.f32.xlu0 %v2790
        %v2822 = vpop.xlane.xlu0 %2821
        %2823 = vadd.xlane.f32.xlu0 %v2792
        %v2824 = vpop.xlane.xlu0 %2823
        %2825 = vadd.xlane.f32.xlu0 %v2794
        %v2826 = vpop.xlane.xlu0 %2825
        %2827 = vadd.xlane.f32.xlu0 %v2796
        %v2828 = vpop.xlane.xlu0 %2827
        %2829 = vadd.xlane.f32.xlu0 %v2798
        %v2830 = vpop.xlane.xlu0 %2829
        %2831 = vadd.xlane.f32.xlu0 %v2800
        %v2832 = vpop.xlane.xlu0 %2831
        %2833 = vadd.xlane.f32.xlu0 %v2802
        %v2834 = vpop.xlane.xlu0 %2833
        %2835 = vadd.xlane.f32.xlu0 %v2804
        %v2836 = vpop.xlane.xlu0 %2835
        %2837 = vadd.xlane.f32.xlu0 %v2806
        %v2838 = vpop.xlane.xlu0 %2837
        %2839 = vadd.xlane.f32.xlu0 %v2808
        %v2840 = vpop.xlane.xlu0 %2839
        %2841 = vadd.xlane.f32.xlu0 %v2810
        %v2842 = vpop.xlane.xlu0 %2841
        %2843 = vadd.xlane.f32.xlu0 %v2812
        %v2844 = vpop.xlane.xlu0 %2843
        %2845 = vadd.xlane.f32.xlu0 %v2814
        %v2846 = vpop.xlane.xlu0 %2845
        %2847 = vadd.xlane.f32.xlu0 %v2816
        %v2848 = vpop.xlane.xlu0 %2847
        %2849 = vadd.xlane.f32.xlu0 %v2818
        %v2850 = vpop.xlane.xlu0 %2849
        %v2851 = vpack.c.bf16 %v2790, %v2788
        %v2852 = vpack.c.bf16 %v2794, %v2792
        %v2853 = vpack.c.bf16 %v2798, %v2796
        %v2854 = vpack.c.bf16 %v2802, %v2800
        %v2855 = vpack.c.bf16 %v2806, %v2804
        %v2856 = vpack.c.bf16 %v2810, %v2808
        %v2857 = vpack.c.bf16 %v2814, %v2812
        %v2858 = vpack.c.bf16 %v2818, %v2816
        %2859 = vrot.lane.b32.xlu0 %v1264, 32
        %v2860 = vpop.permute.xlu0 %2859
        %2861 = vrot.lane.b32.xlu0 %v1265, 32
        %v2862 = vpop.permute.xlu0 %2861
        %2863 = vrot.lane.b32.xlu0 %v1266, 32
        %v2864 = vpop.permute.xlu0 %2863
        %2865 = vrot.lane.b32.xlu0 %v1267, 32
        %v2866 = vpop.permute.xlu0 %2865
        %2867 = vrot.lane.b32.xlu0 %v1268, 32
        %v2868 = vpop.permute.xlu0 %2867
        %2869 = vrot.lane.b32.xlu0 %v1269, 32
        %v2870 = vpop.permute.xlu0 %2869
        %2871 = vrot.lane.b32.xlu0 %v1270, 32
        %v2872 = vpop.permute.xlu0 %2871
        %2873 = vrot.lane.b32.xlu0 %v1271, 32
        %v2874 = vpop.permute.xlu0 %2873
        %2883 = vmatpush.bf16.msra.mxu0 %v2874
        %2884 = vmatpush.bf16.msra.mxu0 %v2872
        %2885 = vmatpush.bf16.msra.mxu0 %v2870
        %2886 = vmatpush.bf16.msra.mxu0 %v2868
        %2887 = vmatpush.bf16.msra.mxu0 %v2866
        %2888 = vmatpush.bf16.msra.mxu0 %v2864
        %2889 = vmatpush.bf16.msra.mxu0 %v2862
        %2890 = vmatpush.bf16.msra.mxu0 %v2860
        %2891 = vmatmul.bf16.gmra.mxu0 %v2851
        %v2892 = vpop.f32.mrf.mxu0
        %v2893 = vadd.f32 0.0, %v2892
        %v2894 = vpop.f32.mrf.mxu0
        %v2895 = vadd.f32 0.0, %v2894
        %2896 = vmatmul.bf16.gmra.mxu0 %v2852
        %v2897 = vpop.f32.mrf.mxu0
        %v2898 = vadd.f32 0.0, %v2897
        %v2899 = vpop.f32.mrf.mxu0
        %v2900 = vadd.f32 0.0, %v2899
        %2901 = vmatmul.bf16.gmra.mxu0 %v2853
        %v2902 = vpop.f32.mrf.mxu0
        %v2903 = vadd.f32 0.0, %v2902
        %v2904 = vpop.f32.mrf.mxu0
        %v2905 = vadd.f32 0.0, %v2904
        %2906 = vmatmul.bf16.gmra.mxu0 %v2854
        %v2907 = vpop.f32.mrf.mxu0
        %v2908 = vadd.f32 0.0, %v2907
        %v2909 = vpop.f32.mrf.mxu0
        %v2910 = vadd.f32 0.0, %v2909
        %2911 = vmatmul.bf16.gmra.mxu0 %v2855
        %v2912 = vpop.f32.mrf.mxu0
        %v2913 = vadd.f32 0.0, %v2912
        %v2914 = vpop.f32.mrf.mxu0
        %v2915 = vadd.f32 0.0, %v2914
        %2916 = vmatmul.bf16.gmra.mxu0 %v2856
        %v2917 = vpop.f32.mrf.mxu0
        %v2918 = vadd.f32 0.0, %v2917
        %v2919 = vpop.f32.mrf.mxu0
        %v2920 = vadd.f32 0.0, %v2919
        %2921 = vmatmul.bf16.gmra.mxu0 %v2857
        %v2922 = vpop.f32.mrf.mxu0
        %v2923 = vadd.f32 0.0, %v2922
        %v2924 = vpop.f32.mrf.mxu0
        %v2925 = vadd.f32 0.0, %v2924
        %2926 = vmatmul.bf16.gmra.mxu0 %v2858
        %v2927 = vpop.f32.mrf.mxu0
        %v2928 = vadd.f32 0.0, %v2927
        %v2929 = vpop.f32.mrf.mxu0
        %v2930 = vadd.f32 0.0, %v2929
        %2931 = vdwg.mxu0
        %v2932 = vrcp.pop %v2820
        %v2933 = vrcp.pop %v2822
        %v2934 = vrcp.pop %v2824
        %v2935 = vrcp.pop %v2826
        %v2936 = vrcp.pop %v2828
        %v2937 = vrcp.pop %v2830
        %v2938 = vrcp.pop %v2832
        %v2939 = vrcp.pop %v2834
        %v2940 = vrcp.pop %v2836
        %v2941 = vrcp.pop %v2838
        %v2942 = vrcp.pop %v2840
        %v2943 = vrcp.pop %v2842
        %v2944 = vrcp.pop %v2844
        %v2945 = vrcp.pop %v2846
        %v2946 = vrcp.pop %v2848
        %v2947 = vrcp.pop %v2850
        %v2948 = vmul.f32 %v2893, %v2932
        %v2949 = vmul.f32 %v2895, %v2933
        %v2950 = vmul.f32 %v2898, %v2934
        %v2951 = vmul.f32 %v2900, %v2935
        %v2952 = vmul.f32 %v2903, %v2936
        %v2953 = vmul.f32 %v2905, %v2937
        %v2954 = vmul.f32 %v2908, %v2938
        %v2955 = vmul.f32 %v2910, %v2939
        %v2956 = vmul.f32 %v2913, %v2940
        %v2957 = vmul.f32 %v2915, %v2941
        %v2958 = vmul.f32 %v2918, %v2942
        %v2959 = vmul.f32 %v2920, %v2943
        %v2960 = vmul.f32 %v2923, %v2944
        %v2961 = vmul.f32 %v2925, %v2945
        %v2962 = vmul.f32 %v2928, %v2946
        %v2963 = vmul.f32 %v2930, %v2947
        %v2964 = vpack.c.bf16 %v2949, %v2948
        %v2965 = vpack.c.bf16 %v2951, %v2950
        %v2966 = vpack.c.bf16 %v2953, %v2952
        %v2967 = vpack.c.bf16 %v2955, %v2954
        %v2968 = vpack.c.bf16 %v2957, %v2956
        %v2969 = vpack.c.bf16 %v2959, %v2958
        %v2970 = vpack.c.bf16 %v2961, %v2960
        %v2971 = vpack.c.bf16 %v2963, %v2962
        %v2972 = vld [vmem:[#allocation8 + $0x30] sm:$0xf]
        %v2973 = vld [vmem:[#allocation8 + $0x34] sm:$0xf]
        %v2974 = vld [vmem:[#allocation8 + $0x38] sm:$0xf]
        %v2975 = vld [vmem:[#allocation8 + $0x3c] sm:$0xf]
        %v2980 = vunpack.c.l.b16 %v2972
        %v2981 = vunpack.c.l.b16 %v2973
        %v2982 = vunpack.c.l.b16 %v2974
        %v2983 = vunpack.c.l.b16 %v2975
        %v2984 = vpack.c.b16 %v2981, %v2980
        %v2985 = vpack.c.b16 %v2983, %v2982
        %v2989 = vsel %vm1272, %v2964, 0
        %v2992 = vsel %vm1272, %v2965, 0
        %v2995 = vsel %vm1272, %v2966, 0
        %v2998 = vsel %vm1272, %v2967, 0
        %v3001 = vsel %vm1272, %v2968, 0
        %v3004 = vsel %vm1272, %v2969, 0
        %v3007 = vsel %vm1272, %v2970, 0
        %v3010 = vsel %vm1272, %v2971, 0
        %3012 = vmatpush.bf16.msra.mxu0 0
        %3013 = vmatpush.bf16.msra.mxu0 0
        %3014 = vmatpush.bf16.msra.mxu0 0
        %3015 = vmatpush.bf16.msra.mxu0 0
        %3016 = vmatpush.bf16.msra.mxu0 0
        %3017 = vmatpush.bf16.msra.mxu0 0
        %3018 = vmatpush.bf16.msra.mxu0 %v2985
        %3019 = vmatpush.bf16.msra.mxu0 %v2984
        %3020 = vmatmul.bf16.gmra.mxu0 %v2989
        %v3021 = vpop.f32.mrf.mxu0
        %v3022 = vadd.f32 0.0, %v3021
        %v3023 = vpop.f32.mrf.mxu0
        %v3024 = vadd.f32 0.0, %v3023
        %3025 = vmatmul.bf16.gmra.mxu0 %v2992
        %v3026 = vpop.f32.mrf.mxu0
        %v3027 = vadd.f32 0.0, %v3026
        %v3028 = vpop.f32.mrf.mxu0
        %v3029 = vadd.f32 0.0, %v3028
        %3030 = vmatmul.bf16.gmra.mxu0 %v2995
        %v3031 = vpop.f32.mrf.mxu0
        %v3032 = vadd.f32 0.0, %v3031
        %v3033 = vpop.f32.mrf.mxu0
        %v3034 = vadd.f32 0.0, %v3033
        %3035 = vmatmul.bf16.gmra.mxu0 %v2998
        %v3036 = vpop.f32.mrf.mxu0
        %v3037 = vadd.f32 0.0, %v3036
        %v3038 = vpop.f32.mrf.mxu0
        %v3039 = vadd.f32 0.0, %v3038
        %3040 = vmatmul.bf16.gmra.mxu0 %v3001
        %v3041 = vpop.f32.mrf.mxu0
        %v3042 = vadd.f32 0.0, %v3041
        %v3043 = vpop.f32.mrf.mxu0
        %v3044 = vadd.f32 0.0, %v3043
        %3045 = vmatmul.bf16.gmra.mxu0 %v3004
        %v3046 = vpop.f32.mrf.mxu0
        %v3047 = vadd.f32 0.0, %v3046
        %v3048 = vpop.f32.mrf.mxu0
        %v3049 = vadd.f32 0.0, %v3048
        %3050 = vmatmul.bf16.gmra.mxu0 %v3007
        %v3051 = vpop.f32.mrf.mxu0
        %v3052 = vadd.f32 0.0, %v3051
        %v3053 = vpop.f32.mrf.mxu0
        %v3054 = vadd.f32 0.0, %v3053
        %3055 = vmatmul.bf16.gmra.mxu0 %v3010
        %v3056 = vpop.f32.mrf.mxu0
        %v3057 = vadd.f32 0.0, %v3056
        %v3058 = vpop.f32.mrf.mxu0
        %v3059 = vadd.f32 0.0, %v3058
        %3060 = vdwg.mxu0
        %v3061 = vadd.f32 %v2594, %v3022
        %v3062 = vadd.f32 %v2595, %v3024
        %v3063 = vadd.f32 %v2596, %v3027
        %v3064 = vadd.f32 %v2597, %v3029
        %v3065 = vadd.f32 %v2598, %v3032
        %v3066 = vadd.f32 %v2599, %v3034
        %v3067 = vadd.f32 %v2600, %v3037
        %v3068 = vadd.f32 %v2601, %v3039
        %v3069 = vadd.f32 %v2602, %v3042
        %v3070 = vadd.f32 %v2603, %v3044
        %v3071 = vadd.f32 %v2604, %v3047
        %v3072 = vadd.f32 %v2605, %v3049
        %v3073 = vadd.f32 %v2606, %v3052
        %v3074 = vadd.f32 %v2607, %v3054
        %v3075 = vadd.f32 %v2608, %v3057
        %v3076 = vadd.f32 %v2609, %v3059
        %v3077 = vadd.f32 %v530, %v3061
        %v3078 = vadd.f32 %v531, %v3062
        %v3079 = vadd.f32 %v532, %v3063
        %v3080 = vadd.f32 %v533, %v3064
        %v3081 = vadd.f32 %v534, %v3065
        %v3082 = vadd.f32 %v535, %v3066
        %v3083 = vadd.f32 %v536, %v3067
        %v3084 = vadd.f32 %v537, %v3068
        %v3085 = vadd.f32 %v538, %v3069
        %v3086 = vadd.f32 %v539, %v3070
        %v3087 = vadd.f32 %v540, %v3071
        %v3088 = vadd.f32 %v541, %v3072
        %v3089 = vadd.f32 %v542, %v3073
        %v3090 = vadd.f32 %v543, %v3074
        %v3091 = vadd.f32 %v544, %v3075
        %v3092 = vadd.f32 %v545, %v3076
        %v3093 = vld [vmem:[%s5] sm:$0x1]
        %v3095 = vperm.slane %v3093, 0
        %v3097 = vadd.f32 %v3077, %v3095
        %v3098 = vadd.f32 %v3078, %v3095
        %v3099 = vadd.f32 %v3079, %v3095
        %v3100 = vadd.f32 %v3080, %v3095
        %v3101 = vadd.f32 %v3081, %v3095
        %v3102 = vadd.f32 %v3082, %v3095
        %v3103 = vadd.f32 %v3083, %v3095
        %v3104 = vadd.f32 %v3084, %v3095
        %v3105 = vadd.f32 %v3085, %v3095
        %v3106 = vadd.f32 %v3086, %v3095
        %v3107 = vadd.f32 %v3087, %v3095
        %v3108 = vadd.f32 %v3088, %v3095
        %v3109 = vadd.f32 %v3089, %v3095
        %v3110 = vadd.f32 %v3090, %v3095
        %v3111 = vadd.f32 %v3091, %v3095
        %v3112 = vadd.f32 %v3092, %v3095
        %v3113 = vld [vmem:[%s6] sm:$0x1]
        %v3114 = vld [vmem:[#allocation10] sm:$0x1]
        %3115 = vadd.xlane.f32.xlu0 %v3097
        %v3116 = vpop.xlane.xlu0 %3115
        %3117 = vadd.xlane.f32.xlu0 %v3098
        %v3118 = vpop.xlane.xlu0 %3117
        %3119 = vadd.xlane.f32.xlu0 %v3099
        %v3120 = vpop.xlane.xlu0 %3119
        %3121 = vadd.xlane.f32.xlu0 %v3100
        %v3122 = vpop.xlane.xlu0 %3121
        %3123 = vadd.xlane.f32.xlu0 %v3101
        %v3124 = vpop.xlane.xlu0 %3123
        %3125 = vadd.xlane.f32.xlu0 %v3102
        %v3126 = vpop.xlane.xlu0 %3125
        %3127 = vadd.xlane.f32.xlu0 %v3103
        %v3128 = vpop.xlane.xlu0 %3127
        %3129 = vadd.xlane.f32.xlu0 %v3104
        %v3130 = vpop.xlane.xlu0 %3129
        %3131 = vadd.xlane.f32.xlu0 %v3105
        %v3132 = vpop.xlane.xlu0 %3131
        %3133 = vadd.xlane.f32.xlu0 %v3106
        %v3134 = vpop.xlane.xlu0 %3133
        %3135 = vadd.xlane.f32.xlu0 %v3107
        %v3136 = vpop.xlane.xlu0 %3135
        %3137 = vadd.xlane.f32.xlu0 %v3108
        %v3138 = vpop.xlane.xlu0 %3137
        %3139 = vadd.xlane.f32.xlu0 %v3109
        %v3140 = vpop.xlane.xlu0 %3139
        %3141 = vadd.xlane.f32.xlu0 %v3110
        %v3142 = vpop.xlane.xlu0 %3141
        %3143 = vadd.xlane.f32.xlu0 %v3111
        %v3144 = vpop.xlane.xlu0 %3143
        %3145 = vadd.xlane.f32.xlu0 %v3112
        %v3146 = vpop.xlane.xlu0 %3145
        %v3147 = vmul.f32 %v3116, %v586
        %v3148 = vmul.f32 %v3118, %v586
        %v3149 = vmul.f32 %v3120, %v586
        %v3150 = vmul.f32 %v3122, %v586
        %v3151 = vmul.f32 %v3124, %v586
        %v3152 = vmul.f32 %v3126, %v586
        %v3153 = vmul.f32 %v3128, %v586
        %v3154 = vmul.f32 %v3130, %v586
        %v3155 = vmul.f32 %v3132, %v586
        %v3156 = vmul.f32 %v3134, %v586
        %v3157 = vmul.f32 %v3136, %v586
        %v3158 = vmul.f32 %v3138, %v586
        %v3159 = vmul.f32 %v3140, %v586
        %v3160 = vmul.f32 %v3142, %v586
        %v3161 = vmul.f32 %v3144, %v586
        %v3162 = vmul.f32 %v3146, %v586
        %v3163 = vsub.f32 %v3097, %v3147
        %v3164 = vsub.f32 %v3098, %v3148
        %v3165 = vsub.f32 %v3099, %v3149
        %v3166 = vsub.f32 %v3100, %v3150
        %v3167 = vsub.f32 %v3101, %v3151
        %v3168 = vsub.f32 %v3102, %v3152
        %v3169 = vsub.f32 %v3103, %v3153
        %v3170 = vsub.f32 %v3104, %v3154
        %v3171 = vsub.f32 %v3105, %v3155
        %v3172 = vsub.f32 %v3106, %v3156
        %v3173 = vsub.f32 %v3107, %v3157
        %v3174 = vsub.f32 %v3108, %v3158
        %v3175 = vsub.f32 %v3109, %v3159
        %v3176 = vsub.f32 %v3110, %v3160
        %v3177 = vsub.f32 %v3111, %v3161
        %v3178 = vsub.f32 %v3112, %v3162
        %v3179 = vmul.f32 %v3163, %v3163
        %v3180 = vmul.f32 %v3164, %v3164
        %v3181 = vmul.f32 %v3165, %v3165
        %v3182 = vmul.f32 %v3166, %v3166
        %v3183 = vmul.f32 %v3167, %v3167
        %v3184 = vmul.f32 %v3168, %v3168
        %v3185 = vmul.f32 %v3169, %v3169
        %v3186 = vmul.f32 %v3170, %v3170
        %v3187 = vmul.f32 %v3171, %v3171
        %v3188 = vmul.f32 %v3172, %v3172
        %v3189 = vmul.f32 %v3173, %v3173
        %v3190 = vmul.f32 %v3174, %v3174
        %v3191 = vmul.f32 %v3175, %v3175
        %v3192 = vmul.f32 %v3176, %v3176
        %v3193 = vmul.f32 %v3177, %v3177
        %v3194 = vmul.f32 %v3178, %v3178
        %3195 = vadd.xlane.f32.xlu0 %v3179
        %v3196 = vpop.xlane.xlu0 %3195
        %3197 = vadd.xlane.f32.xlu0 %v3180
        %v3198 = vpop.xlane.xlu0 %3197
        %3199 = vadd.xlane.f32.xlu0 %v3181
        %v3200 = vpop.xlane.xlu0 %3199
        %3201 = vadd.xlane.f32.xlu0 %v3182
        %v3202 = vpop.xlane.xlu0 %3201
        %3203 = vadd.xlane.f32.xlu0 %v3183
        %v3204 = vpop.xlane.xlu0 %3203
        %3205 = vadd.xlane.f32.xlu0 %v3184
        %v3206 = vpop.xlane.xlu0 %3205
        %3207 = vadd.xlane.f32.xlu0 %v3185
        %v3208 = vpop.xlane.xlu0 %3207
        %3209 = vadd.xlane.f32.xlu0 %v3186
        %v3210 = vpop.xlane.xlu0 %3209
        %3211 = vadd.xlane.f32.xlu0 %v3187
        %v3212 = vpop.xlane.xlu0 %3211
        %3213 = vadd.xlane.f32.xlu0 %v3188
        %v3214 = vpop.xlane.xlu0 %3213
        %3215 = vadd.xlane.f32.xlu0 %v3189
        %v3216 = vpop.xlane.xlu0 %3215
        %3217 = vadd.xlane.f32.xlu0 %v3190
        %v3218 = vpop.xlane.xlu0 %3217
        %3219 = vadd.xlane.f32.xlu0 %v3191
        %v3220 = vpop.xlane.xlu0 %3219
        %3221 = vadd.xlane.f32.xlu0 %v3192
        %v3222 = vpop.xlane.xlu0 %3221
        %3223 = vadd.xlane.f32.xlu0 %v3193
        %v3224 = vpop.xlane.xlu0 %3223
        %3225 = vadd.xlane.f32.xlu0 %v3194
        %v3226 = vpop.xlane.xlu0 %3225
        %v3227 = vmul.f32 %v3196, %v586
        %v3228 = vmul.f32 %v3198, %v586
        %v3229 = vmul.f32 %v3200, %v586
        %v3230 = vmul.f32 %v3202, %v586
        %v3231 = vmul.f32 %v3204, %v586
        %v3232 = vmul.f32 %v3206, %v586
        %v3233 = vmul.f32 %v3208, %v586
        %v3234 = vmul.f32 %v3210, %v586
        %v3235 = vmul.f32 %v3212, %v586
        %v3236 = vmul.f32 %v3214, %v586
        %v3237 = vmul.f32 %v3216, %v586
        %v3238 = vmul.f32 %v3218, %v586
        %v3239 = vmul.f32 %v3220, %v586
        %v3240 = vmul.f32 %v3222, %v586
        %v3241 = vmul.f32 %v3224, %v586
        %v3242 = vmul.f32 %v3226, %v586
        %v3243 = vadd.f32 %v3227, 1e-05
        %v3244 = vadd.f32 %v3228, 1e-05
        %v3245 = vadd.f32 %v3229, 1e-05
        %v3246 = vadd.f32 %v3230, 1e-05
        %v3247 = vadd.f32 %v3231, 1e-05
        %v3248 = vadd.f32 %v3232, 1e-05
        %v3249 = vadd.f32 %v3233, 1e-05
        %v3250 = vadd.f32 %v3234, 1e-05
        %v3251 = vadd.f32 %v3235, 1e-05
        %v3252 = vadd.f32 %v3236, 1e-05
        %v3253 = vadd.f32 %v3237, 1e-05
        %v3254 = vadd.f32 %v3238, 1e-05
        %v3255 = vadd.f32 %v3239, 1e-05
        %v3256 = vadd.f32 %v3240, 1e-05
        %v3257 = vadd.f32 %v3241, 1e-05
        %v3258 = vadd.f32 %v3242, 1e-05
        %v3259 = vrsqrt.pop %v3243
        %v3260 = vmul.f32 %v3259, %v3243
        %v3261 = vmul.f32 %v3260, %v3259
        %v3262 = vmul.f32 0.5, %v3261
        %v3263 = vsub.f32 1.5, %v3262
        %v3264 = vmul.f32 %v3259, %v3263
        %vm3265 = vweird.f32 %v3243
        %vm3266 = vweird.f32 %v3259
        %vm3267 = vmor %vm3265, %vm3266
        %v3268 = vsel %vm3267, %v3259, %v3264
        %v3269 = vrsqrt.pop %v3244
        %v3270 = vmul.f32 %v3269, %v3244
        %v3271 = vmul.f32 %v3270, %v3269
        %v3272 = vmul.f32 0.5, %v3271
        %v3273 = vsub.f32 1.5, %v3272
        %v3274 = vmul.f32 %v3269, %v3273
        %vm3275 = vweird.f32 %v3244
        %vm3276 = vweird.f32 %v3269
        %vm3277 = vmor %vm3275, %vm3276
        %v3278 = vsel %vm3277, %v3269, %v3274
        %v3279 = vrsqrt.pop %v3245
        %v3280 = vmul.f32 %v3279, %v3245
        %v3281 = vmul.f32 %v3280, %v3279
        %v3282 = vmul.f32 0.5, %v3281
        %v3283 = vsub.f32 1.5, %v3282
        %v3284 = vmul.f32 %v3279, %v3283
        %vm3285 = vweird.f32 %v3245
        %vm3286 = vweird.f32 %v3279
        %vm3287 = vmor %vm3285, %vm3286
        %v3288 = vsel %vm3287, %v3279, %v3284
        %v3289 = vrsqrt.pop %v3246
        %v3290 = vmul.f32 %v3289, %v3246
        %v3291 = vmul.f32 %v3290, %v3289
        %v3292 = vmul.f32 0.5, %v3291
        %v3293 = vsub.f32 1.5, %v3292
        %v3294 = vmul.f32 %v3289, %v3293
        %vm3295 = vweird.f32 %v3246
        %vm3296 = vweird.f32 %v3289
        %vm3297 = vmor %vm3295, %vm3296
        %v3298 = vsel %vm3297, %v3289, %v3294
        %v3299 = vrsqrt.pop %v3247
        %v3300 = vmul.f32 %v3299, %v3247
        %v3301 = vmul.f32 %v3300, %v3299
        %v3302 = vmul.f32 0.5, %v3301
        %v3303 = vsub.f32 1.5, %v3302
        %v3304 = vmul.f32 %v3299, %v3303
        %vm3305 = vweird.f32 %v3247
        %vm3306 = vweird.f32 %v3299
        %vm3307 = vmor %vm3305, %vm3306
        %v3308 = vsel %vm3307, %v3299, %v3304
        %v3309 = vrsqrt.pop %v3248
        %v3310 = vmul.f32 %v3309, %v3248
        %v3311 = vmul.f32 %v3310, %v3309
        %v3312 = vmul.f32 0.5, %v3311
        %v3313 = vsub.f32 1.5, %v3312
        %v3314 = vmul.f32 %v3309, %v3313
        %vm3315 = vweird.f32 %v3248
        %vm3316 = vweird.f32 %v3309
        %vm3317 = vmor %vm3315, %vm3316
        %v3318 = vsel %vm3317, %v3309, %v3314
        %v3319 = vrsqrt.pop %v3249
        %v3320 = vmul.f32 %v3319, %v3249
        %v3321 = vmul.f32 %v3320, %v3319
        %v3322 = vmul.f32 0.5, %v3321
        %v3323 = vsub.f32 1.5, %v3322
        %v3324 = vmul.f32 %v3319, %v3323
        %vm3325 = vweird.f32 %v3249
        %vm3326 = vweird.f32 %v3319
        %vm3327 = vmor %vm3325, %vm3326
        %v3328 = vsel %vm3327, %v3319, %v3324
        %v3329 = vrsqrt.pop %v3250
        %v3330 = vmul.f32 %v3329, %v3250
        %v3331 = vmul.f32 %v3330, %v3329
        %v3332 = vmul.f32 0.5, %v3331
        %v3333 = vsub.f32 1.5, %v3332
        %v3334 = vmul.f32 %v3329, %v3333
        %vm3335 = vweird.f32 %v3250
        %vm3336 = vweird.f32 %v3329
        %vm3337 = vmor %vm3335, %vm3336
        %v3338 = vsel %vm3337, %v3329, %v3334
        %v3339 = vrsqrt.pop %v3251
        %v3340 = vmul.f32 %v3339, %v3251
        %v3341 = vmul.f32 %v3340, %v3339
        %v3342 = vmul.f32 0.5, %v3341
        %v3343 = vsub.f32 1.5, %v3342
        %v3344 = vmul.f32 %v3339, %v3343
        %vm3345 = vweird.f32 %v3251
        %vm3346 = vweird.f32 %v3339
        %vm3347 = vmor %vm3345, %vm3346
        %v3348 = vsel %vm3347, %v3339, %v3344
        %v3349 = vrsqrt.pop %v3252
        %v3350 = vmul.f32 %v3349, %v3252
        %v3351 = vmul.f32 %v3350, %v3349
        %v3352 = vmul.f32 0.5, %v3351
        %v3353 = vsub.f32 1.5, %v3352
        %v3354 = vmul.f32 %v3349, %v3353
        %vm3355 = vweird.f32 %v3252
        %vm3356 = vweird.f32 %v3349
        %vm3357 = vmor %vm3355, %vm3356
        %v3358 = vsel %vm3357, %v3349, %v3354
        %v3359 = vrsqrt.pop %v3253
        %v3360 = vmul.f32 %v3359, %v3253
        %v3361 = vmul.f32 %v3360, %v3359
        %v3362 = vmul.f32 0.5, %v3361
        %v3363 = vsub.f32 1.5, %v3362
        %v3364 = vmul.f32 %v3359, %v3363
        %vm3365 = vweird.f32 %v3253
        %vm3366 = vweird.f32 %v3359
        %vm3367 = vmor %vm3365, %vm3366
        %v3368 = vsel %vm3367, %v3359, %v3364
        %v3369 = vrsqrt.pop %v3254
        %v3370 = vmul.f32 %v3369, %v3254
        %v3371 = vmul.f32 %v3370, %v3369
        %v3372 = vmul.f32 0.5, %v3371
        %v3373 = vsub.f32 1.5, %v3372
        %v3374 = vmul.f32 %v3369, %v3373
        %vm3375 = vweird.f32 %v3254
        %vm3376 = vweird.f32 %v3369
        %vm3377 = vmor %vm3375, %vm3376
        %v3378 = vsel %vm3377, %v3369, %v3374
        %v3379 = vrsqrt.pop %v3255
        %v3380 = vmul.f32 %v3379, %v3255
        %v3381 = vmul.f32 %v3380, %v3379
        %v3382 = vmul.f32 0.5, %v3381
        %v3383 = vsub.f32 1.5, %v3382
        %v3384 = vmul.f32 %v3379, %v3383
        %vm3385 = vweird.f32 %v3255
        %vm3386 = vweird.f32 %v3379
        %vm3387 = vmor %vm3385, %vm3386
        %v3388 = vsel %vm3387, %v3379, %v3384
        %v3389 = vrsqrt.pop %v3256
        %v3390 = vmul.f32 %v3389, %v3256
        %v3391 = vmul.f32 %v3390, %v3389
        %v3392 = vmul.f32 0.5, %v3391
        %v3393 = vsub.f32 1.5, %v3392
        %v3394 = vmul.f32 %v3389, %v3393
        %vm3395 = vweird.f32 %v3256
        %vm3396 = vweird.f32 %v3389
        %vm3397 = vmor %vm3395, %vm3396
        %v3398 = vsel %vm3397, %v3389, %v3394
        %v3399 = vrsqrt.pop %v3257
        %v3400 = vmul.f32 %v3399, %v3257
        %v3401 = vmul.f32 %v3400, %v3399
        %v3402 = vmul.f32 0.5, %v3401
        %v3403 = vsub.f32 1.5, %v3402
        %v3404 = vmul.f32 %v3399, %v3403
        %vm3405 = vweird.f32 %v3257
        %vm3406 = vweird.f32 %v3399
        %vm3407 = vmor %vm3405, %vm3406
        %v3408 = vsel %vm3407, %v3399, %v3404
        %v3409 = vrsqrt.pop %v3258
        %v3410 = vmul.f32 %v3409, %v3258
        %v3411 = vmul.f32 %v3410, %v3409
        %v3412 = vmul.f32 0.5, %v3411
        %v3413 = vsub.f32 1.5, %v3412
        %v3414 = vmul.f32 %v3409, %v3413
        %vm3415 = vweird.f32 %v3258
        %vm3416 = vweird.f32 %v3409
        %vm3417 = vmor %vm3415, %vm3416
        %v3418 = vsel %vm3417, %v3409, %v3414
        %v3419 = vmul.f32 %v3163, %v3268
        %v3420 = vmul.f32 %v3164, %v3278
        %v3421 = vmul.f32 %v3165, %v3288
        %v3422 = vmul.f32 %v3166, %v3298
        %v3423 = vmul.f32 %v3167, %v3308
        %v3424 = vmul.f32 %v3168, %v3318
        %v3425 = vmul.f32 %v3169, %v3328
        %v3426 = vmul.f32 %v3170, %v3338
        %v3427 = vmul.f32 %v3171, %v3348
        %v3428 = vmul.f32 %v3172, %v3358
        %v3429 = vmul.f32 %v3173, %v3368
        %v3430 = vmul.f32 %v3174, %v3378
        %v3431 = vmul.f32 %v3175, %v3388
        %v3432 = vmul.f32 %v3176, %v3398
        %v3433 = vmul.f32 %v3177, %v3408
        %v3434 = vmul.f32 %v3178, %v3418
        %v3436 = vperm.slane %v3113, 0
        %v3438 = vmul.f32 %v3419, %v3436
        %v3439 = vmul.f32 %v3420, %v3436
        %v3440 = vmul.f32 %v3421, %v3436
        %v3441 = vmul.f32 %v3422, %v3436
        %v3442 = vmul.f32 %v3423, %v3436
        %v3443 = vmul.f32 %v3424, %v3436
        %v3444 = vmul.f32 %v3425, %v3436
        %v3445 = vmul.f32 %v3426, %v3436
        %v3446 = vmul.f32 %v3427, %v3436
        %v3447 = vmul.f32 %v3428, %v3436
        %v3448 = vmul.f32 %v3429, %v3436
        %v3449 = vmul.f32 %v3430, %v3436
        %v3450 = vmul.f32 %v3431, %v3436
        %v3451 = vmul.f32 %v3432, %v3436
        %v3452 = vmul.f32 %v3433, %v3436
        %v3453 = vmul.f32 %v3434, %v3436
        %v3455 = vperm.slane %v3114, 0
        %v3457 = vadd.f32 %v3438, %v3455
        %v3458 = vadd.f32 %v3439, %v3455
        %v3459 = vadd.f32 %v3440, %v3455
        %v3460 = vadd.f32 %v3441, %v3455
        %v3461 = vadd.f32 %v3442, %v3455
        %v3462 = vadd.f32 %v3443, %v3455
        %v3463 = vadd.f32 %v3444, %v3455
        %v3464 = vadd.f32 %v3445, %v3455
        %v3465 = vadd.f32 %v3446, %v3455
        %v3466 = vadd.f32 %v3447, %v3455
        %v3467 = vadd.f32 %v3448, %v3455
        %v3468 = vadd.f32 %v3449, %v3455
        %v3469 = vadd.f32 %v3450, %v3455
        %v3470 = vadd.f32 %v3451, %v3455
        %v3471 = vadd.f32 %v3452, %v3455
        %v3472 = vadd.f32 %v3453, %v3455
        %v3473 = vpack.c.bf16 %v3458, %v3457
        %v3474 = vpack.c.bf16 %v3460, %v3459
        %v3475 = vpack.c.bf16 %v3462, %v3461
        %v3476 = vpack.c.bf16 %v3464, %v3463
        %v3477 = vpack.c.bf16 %v3466, %v3465
        %v3478 = vpack.c.bf16 %v3468, %v3467
        %v3479 = vpack.c.bf16 %v3470, %v3469
        %v3480 = vpack.c.bf16 %v3472, %v3471
        %v3481 = vld [vmem:[#allocation11] sm:$0xff]
        %v3482 = vld [vmem:[#allocation11 + $0x8] sm:$0xff]
        %v3483 = vld [vmem:[#allocation11 + $0x10] sm:$0xff]
        %v3484 = vld [vmem:[#allocation11 + $0x18] sm:$0xff]
        %v3485 = vld [vmem:[#allocation11 + $0x20] sm:$0xff]
        %v3486 = vld [vmem:[#allocation11 + $0x28] sm:$0xff]
        %v3487 = vld [vmem:[#allocation11 + $0x30] sm:$0xff]
        %v3488 = vld [vmem:[#allocation11 + $0x38] sm:$0xff]
        %v3489 = vld [vmem:[#allocation11 + $0x40] sm:$0xff]
        %v3490 = vld [vmem:[#allocation11 + $0x48] sm:$0xff]
        %v3491 = vld [vmem:[#allocation11 + $0x50] sm:$0xff]
        %v3492 = vld [vmem:[#allocation11 + $0x58] sm:$0xff]
        %v3493 = vld [vmem:[#allocation11 + $0x60] sm:$0xff]
        %v3494 = vld [vmem:[#allocation11 + $0x68] sm:$0xff]
        %v3495 = vld [vmem:[#allocation11 + $0x70] sm:$0xff]
        %v3496 = vld [vmem:[#allocation11 + $0x78] sm:$0xff]
        %v3497 = vld [vmem:[#allocation11 + $0x80] sm:$0xff]
        %v3498 = vld [vmem:[#allocation11 + $0x88] sm:$0xff]
        %v3499 = vld [vmem:[#allocation11 + $0x90] sm:$0xff]
        %v3500 = vld [vmem:[#allocation11 + $0x98] sm:$0xff]
        %v3501 = vld [vmem:[#allocation11 + $0xa0] sm:$0xff]
        %v3502 = vld [vmem:[#allocation11 + $0xa8] sm:$0xff]
        %v3503 = vld [vmem:[#allocation11 + $0xb0] sm:$0xff]
        %v3504 = vld [vmem:[#allocation11 + $0xb8] sm:$0xff]
        %v3505 = vld [vmem:[#allocation11 + $0xc0] sm:$0xff]
        %v3506 = vld [vmem:[#allocation11 + $0xc8] sm:$0xff]
        %v3507 = vld [vmem:[#allocation11 + $0xd0] sm:$0xff]
        %v3508 = vld [vmem:[#allocation11 + $0xd8] sm:$0xff]
        %v3509 = vld [vmem:[#allocation11 + $0xe0] sm:$0xff]
        %v3510 = vld [vmem:[#allocation11 + $0xe8] sm:$0xff]
        %v3511 = vld [vmem:[#allocation11 + $0xf0] sm:$0xff]
        %v3512 = vld [vmem:[#allocation11 + $0xf8] sm:$0xff]
        %v3513 = vld [vmem:[%s9] sm:$0xf]
        %v3515 = vperm.slane %v3513, 0
        %v3516 = vperm.slane %v3513, 1
        %v3517 = vperm.slane %v3513, 2
        %v3518 = vperm.slane %v3513, 3
        %v3555 = vunpack.c.l.b16 %v3481
        %v3556 = vunpack.c.h.b16 %v3481
        %v3557 = vunpack.c.l.b16 %v3482
        %v3558 = vunpack.c.h.b16 %v3482
        %v3559 = vunpack.c.l.b16 %v3483
        %v3560 = vunpack.c.h.b16 %v3483
        %v3561 = vunpack.c.l.b16 %v3484
        %v3562 = vunpack.c.h.b16 %v3484
        %v3563 = vunpack.c.l.b16 %v3485
        %v3564 = vunpack.c.h.b16 %v3485
        %v3565 = vunpack.c.l.b16 %v3486
        %v3566 = vunpack.c.h.b16 %v3486
        %v3567 = vunpack.c.l.b16 %v3487
        %v3568 = vunpack.c.h.b16 %v3487
        %v3569 = vunpack.c.l.b16 %v3488
        %v3570 = vunpack.c.h.b16 %v3488
        %v3571 = vunpack.c.l.b16 %v3489
        %v3572 = vunpack.c.h.b16 %v3489
        %v3573 = vunpack.c.l.b16 %v3490
        %v3574 = vunpack.c.h.b16 %v3490
        %v3575 = vunpack.c.l.b16 %v3491
        %v3576 = vunpack.c.h.b16 %v3491
        %v3577 = vunpack.c.l.b16 %v3492
        %v3578 = vunpack.c.h.b16 %v3492
        %v3579 = vunpack.c.l.b16 %v3493
        %v3580 = vunpack.c.h.b16 %v3493
        %v3581 = vunpack.c.l.b16 %v3494
        %v3582 = vunpack.c.h.b16 %v3494
        %v3583 = vunpack.c.l.b16 %v3495
        %v3584 = vunpack.c.h.b16 %v3495
        %v3585 = vunpack.c.l.b16 %v3496
        %v3586 = vunpack.c.h.b16 %v3496
        %v3587 = vunpack.c.l.b16 %v3497
        %v3588 = vunpack.c.h.b16 %v3497
        %v3589 = vunpack.c.l.b16 %v3498
        %v3590 = vunpack.c.h.b16 %v3498
        %v3591 = vunpack.c.l.b16 %v3499
        %v3592 = vunpack.c.h.b16 %v3499
        %v3593 = vunpack.c.l.b16 %v3500
        %v3594 = vunpack.c.h.b16 %v3500
        %v3595 = vunpack.c.l.b16 %v3501
        %v3596 = vunpack.c.h.b16 %v3501
        %v3597 = vunpack.c.l.b16 %v3502
        %v3598 = vunpack.c.h.b16 %v3502
        %v3599 = vunpack.c.l.b16 %v3503
        %v3600 = vunpack.c.h.b16 %v3503
        %v3601 = vunpack.c.l.b16 %v3504
        %v3602 = vunpack.c.h.b16 %v3504
        %v3603 = vunpack.c.l.b16 %v3505
        %v3604 = vunpack.c.h.b16 %v3505
        %v3605 = vunpack.c.l.b16 %v3506
        %v3606 = vunpack.c.h.b16 %v3506
        %v3607 = vunpack.c.l.b16 %v3507
        %v3608 = vunpack.c.h.b16 %v3507
        %v3609 = vunpack.c.l.b16 %v3508
        %v3610 = vunpack.c.h.b16 %v3508
        %v3611 = vunpack.c.l.b16 %v3509
        %v3612 = vunpack.c.h.b16 %v3509
        %v3613 = vunpack.c.l.b16 %v3510
        %v3614 = vunpack.c.h.b16 %v3510
        %v3615 = vunpack.c.l.b16 %v3511
        %v3616 = vunpack.c.h.b16 %v3511
        %v3617 = vunpack.c.l.b16 %v3512
        %v3618 = vunpack.c.h.b16 %v3512
        %v3619 = vpack.c.b16 %v3559, %v3555
        %v3620 = vpack.c.b16 %v3560, %v3556
        %v3621 = vpack.c.b16 %v3561, %v3557
        %v3622 = vpack.c.b16 %v3562, %v3558
        %v3623 = vpack.c.b16 %v3567, %v3563
        %v3624 = vpack.c.b16 %v3568, %v3564
        %v3625 = vpack.c.b16 %v3569, %v3565
        %v3626 = vpack.c.b16 %v3570, %v3566
        %v3627 = vpack.c.b16 %v3575, %v3571
        %v3628 = vpack.c.b16 %v3576, %v3572
        %v3629 = vpack.c.b16 %v3577, %v3573
        %v3630 = vpack.c.b16 %v3578, %v3574
        %v3631 = vpack.c.b16 %v3583, %v3579
        %v3632 = vpack.c.b16 %v3584, %v3580
        %v3633 = vpack.c.b16 %v3585, %v3581
        %v3634 = vpack.c.b16 %v3586, %v3582
        %v3635 = vpack.c.b16 %v3591, %v3587
        %v3636 = vpack.c.b16 %v3592, %v3588
        %v3637 = vpack.c.b16 %v3593, %v3589
        %v3638 = vpack.c.b16 %v3594, %v3590
        %v3639 = vpack.c.b16 %v3599, %v3595
        %v3640 = vpack.c.b16 %v3600, %v3596
        %v3641 = vpack.c.b16 %v3601, %v3597
        %v3642 = vpack.c.b16 %v3602, %v3598
        %v3643 = vpack.c.b16 %v3607, %v3603
        %v3644 = vpack.c.b16 %v3608, %v3604
        %v3645 = vpack.c.b16 %v3609, %v3605
        %v3646 = vpack.c.b16 %v3610, %v3606
        %v3647 = vpack.c.b16 %v3615, %v3611
        %v3648 = vpack.c.b16 %v3616, %v3612
        %v3649 = vpack.c.b16 %v3617, %v3613
        %v3650 = vpack.c.b16 %v3618, %v3614
        %3683 = vmatpush.bf16.msra.mxu0 %v3647
        %3684 = vmatpush.bf16.msra.mxu0 %v3643
        %3685 = vmatpush.bf16.msra.mxu0 %v3639
        %3686 = vmatpush.bf16.msra.mxu0 %v3635
        %3687 = vmatpush.bf16.msra.mxu0 %v3631
        %3688 = vmatpush.bf16.msra.mxu0 %v3627
        %3689 = vmatpush.bf16.msra.mxu0 %v3623
        %3690 = vmatpush.bf16.msra.mxu0 %v3619
        %3691 = vmatmul.bf16.gmra.mxu0 %v3473
        %v3692 = vpop.f32.mrf.mxu0
        %v3693 = vadd.f32 %v3515, %v3692
        %v3694 = vpop.f32.mrf.mxu0
        %v3695 = vadd.f32 %v3515, %v3694
        %3696 = vmatmul.bf16.gmra.mxu0 %v3474
        %v3697 = vpop.f32.mrf.mxu0
        %v3698 = vadd.f32 %v3515, %v3697
        %v3699 = vpop.f32.mrf.mxu0
        %v3700 = vadd.f32 %v3515, %v3699
        %3701 = vmatmul.bf16.gmra.mxu0 %v3475
        %v3702 = vpop.f32.mrf.mxu0
        %v3703 = vadd.f32 %v3515, %v3702
        %v3704 = vpop.f32.mrf.mxu0
        %v3705 = vadd.f32 %v3515, %v3704
        %3706 = vmatmul.bf16.gmra.mxu0 %v3476
        %v3707 = vpop.f32.mrf.mxu0
        %v3708 = vadd.f32 %v3515, %v3707
        %v3709 = vpop.f32.mrf.mxu0
        %v3710 = vadd.f32 %v3515, %v3709
        %3711 = vmatmul.bf16.gmra.mxu0 %v3477
        %v3712 = vpop.f32.mrf.mxu0
        %v3713 = vadd.f32 %v3515, %v3712
        %v3714 = vpop.f32.mrf.mxu0
        %v3715 = vadd.f32 %v3515, %v3714
        %3716 = vmatmul.bf16.gmra.mxu0 %v3478
        %v3717 = vpop.f32.mrf.mxu0
        %v3718 = vadd.f32 %v3515, %v3717
        %v3719 = vpop.f32.mrf.mxu0
        %v3720 = vadd.f32 %v3515, %v3719
        %3721 = vmatmul.bf16.gmra.mxu0 %v3479
        %v3722 = vpop.f32.mrf.mxu0
        %v3723 = vadd.f32 %v3515, %v3722
        %v3724 = vpop.f32.mrf.mxu0
        %v3725 = vadd.f32 %v3515, %v3724
        %3726 = vmatmul.bf16.gmra.mxu0 %v3480
        %v3727 = vpop.f32.mrf.mxu0
        %v3728 = vadd.f32 %v3515, %v3727
        %v3729 = vpop.f32.mrf.mxu0
        %v3730 = vadd.f32 %v3515, %v3729
        %3731 = vdwg.mxu0
        %3732 = vmatpush.bf16.msra.mxu0 %v3648
        %3733 = vmatpush.bf16.msra.mxu0 %v3644
        %3734 = vmatpush.bf16.msra.mxu0 %v3640
        %3735 = vmatpush.bf16.msra.mxu0 %v3636
        %3736 = vmatpush.bf16.msra.mxu0 %v3632
        %3737 = vmatpush.bf16.msra.mxu0 %v3628
        %3738 = vmatpush.bf16.msra.mxu0 %v3624
        %3739 = vmatpush.bf16.msra.mxu0 %v3620
        %3740 = vmatmul.bf16.gmra.mxu0 %v3473
        %v3741 = vpop.f32.mrf.mxu0
        %v3742 = vadd.f32 %v3516, %v3741
        %v3743 = vpop.f32.mrf.mxu0
        %v3744 = vadd.f32 %v3516, %v3743
        %3745 = vmatmul.bf16.gmra.mxu0 %v3474
        %v3746 = vpop.f32.mrf.mxu0
        %v3747 = vadd.f32 %v3516, %v3746
        %v3748 = vpop.f32.mrf.mxu0
        %v3749 = vadd.f32 %v3516, %v3748
        %3750 = vmatmul.bf16.gmra.mxu0 %v3475
        %v3751 = vpop.f32.mrf.mxu0
        %v3752 = vadd.f32 %v3516, %v3751
        %v3753 = vpop.f32.mrf.mxu0
        %v3754 = vadd.f32 %v3516, %v3753
        %3755 = vmatmul.bf16.gmra.mxu0 %v3476
        %v3756 = vpop.f32.mrf.mxu0
        %v3757 = vadd.f32 %v3516, %v3756
        %v3758 = vpop.f32.mrf.mxu0
        %v3759 = vadd.f32 %v3516, %v3758
        %3760 = vmatmul.bf16.gmra.mxu0 %v3477
        %v3761 = vpop.f32.mrf.mxu0
        %v3762 = vadd.f32 %v3516, %v3761
        %v3763 = vpop.f32.mrf.mxu0
        %v3764 = vadd.f32 %v3516, %v3763
        %3765 = vmatmul.bf16.gmra.mxu0 %v3478
        %v3766 = vpop.f32.mrf.mxu0
        %v3767 = vadd.f32 %v3516, %v3766
        %v3768 = vpop.f32.mrf.mxu0
        %v3769 = vadd.f32 %v3516, %v3768
        %3770 = vmatmul.bf16.gmra.mxu0 %v3479
        %v3771 = vpop.f32.mrf.mxu0
        %v3772 = vadd.f32 %v3516, %v3771
        %v3773 = vpop.f32.mrf.mxu0
        %v3774 = vadd.f32 %v3516, %v3773
        %3775 = vmatmul.bf16.gmra.mxu0 %v3480
        %v3776 = vpop.f32.mrf.mxu0
        %v3777 = vadd.f32 %v3516, %v3776
        %v3778 = vpop.f32.mrf.mxu0
        %v3779 = vadd.f32 %v3516, %v3778
        %3780 = vdwg.mxu0
        %3781 = vmatpush.bf16.msra.mxu0 %v3649
        %3782 = vmatpush.bf16.msra.mxu0 %v3645
        %3783 = vmatpush.bf16.msra.mxu0 %v3641
        %3784 = vmatpush.bf16.msra.mxu0 %v3637
        %3785 = vmatpush.bf16.msra.mxu0 %v3633
        %3786 = vmatpush.bf16.msra.mxu0 %v3629
        %3787 = vmatpush.bf16.msra.mxu0 %v3625
        %3788 = vmatpush.bf16.msra.mxu0 %v3621
        %3789 = vmatmul.bf16.gmra.mxu0 %v3473
        %v3790 = vpop.f32.mrf.mxu0
        %v3791 = vadd.f32 %v3517, %v3790
        %v3792 = vpop.f32.mrf.mxu0
        %v3793 = vadd.f32 %v3517, %v3792
        %3794 = vmatmul.bf16.gmra.mxu0 %v3474
        %v3795 = vpop.f32.mrf.mxu0
        %v3796 = vadd.f32 %v3517, %v3795
        %v3797 = vpop.f32.mrf.mxu0
        %v3798 = vadd.f32 %v3517, %v3797
        %3799 = vmatmul.bf16.gmra.mxu0 %v3475
        %v3800 = vpop.f32.mrf.mxu0
        %v3801 = vadd.f32 %v3517, %v3800
        %v3802 = vpop.f32.mrf.mxu0
        %v3803 = vadd.f32 %v3517, %v3802
        %3804 = vmatmul.bf16.gmra.mxu0 %v3476
        %v3805 = vpop.f32.mrf.mxu0
        %v3806 = vadd.f32 %v3517, %v3805
        %v3807 = vpop.f32.mrf.mxu0
        %v3808 = vadd.f32 %v3517, %v3807
        %3809 = vmatmul.bf16.gmra.mxu0 %v3477
        %v3810 = vpop.f32.mrf.mxu0
        %v3811 = vadd.f32 %v3517, %v3810
        %v3812 = vpop.f32.mrf.mxu0
        %v3813 = vadd.f32 %v3517, %v3812
        %3814 = vmatmul.bf16.gmra.mxu0 %v3478
        %v3815 = vpop.f32.mrf.mxu0
        %v3816 = vadd.f32 %v3517, %v3815
        %v3817 = vpop.f32.mrf.mxu0
        %v3818 = vadd.f32 %v3517, %v3817
        %3819 = vmatmul.bf16.gmra.mxu0 %v3479
        %v3820 = vpop.f32.mrf.mxu0
        %v3821 = vadd.f32 %v3517, %v3820
        %v3822 = vpop.f32.mrf.mxu0
        %v3823 = vadd.f32 %v3517, %v3822
        %3824 = vmatmul.bf16.gmra.mxu0 %v3480
        %v3825 = vpop.f32.mrf.mxu0
        %v3826 = vadd.f32 %v3517, %v3825
        %v3827 = vpop.f32.mrf.mxu0
        %v3828 = vadd.f32 %v3517, %v3827
        %3829 = vdwg.mxu0
        %3830 = vmatpush.bf16.msra.mxu0 %v3650
        %3831 = vmatpush.bf16.msra.mxu0 %v3646
        %3832 = vmatpush.bf16.msra.mxu0 %v3642
        %3833 = vmatpush.bf16.msra.mxu0 %v3638
        %3834 = vmatpush.bf16.msra.mxu0 %v3634
        %3835 = vmatpush.bf16.msra.mxu0 %v3630
        %3836 = vmatpush.bf16.msra.mxu0 %v3626
        %3837 = vmatpush.bf16.msra.mxu0 %v3622
        %3838 = vmatmul.bf16.gmra.mxu0 %v3473
        %v3839 = vpop.f32.mrf.mxu0
        %v3840 = vadd.f32 %v3518, %v3839
        %v3841 = vpop.f32.mrf.mxu0
        %v3842 = vadd.f32 %v3518, %v3841
        %3843 = vmatmul.bf16.gmra.mxu0 %v3474
        %v3844 = vpop.f32.mrf.mxu0
        %v3845 = vadd.f32 %v3518, %v3844
        %v3846 = vpop.f32.mrf.mxu0
        %v3847 = vadd.f32 %v3518, %v3846
        %3848 = vmatmul.bf16.gmra.mxu0 %v3475
        %v3849 = vpop.f32.mrf.mxu0
        %v3850 = vadd.f32 %v3518, %v3849
        %v3851 = vpop.f32.mrf.mxu0
        %v3852 = vadd.f32 %v3518, %v3851
        %3853 = vmatmul.bf16.gmra.mxu0 %v3476
        %v3854 = vpop.f32.mrf.mxu0
        %v3855 = vadd.f32 %v3518, %v3854
        %v3856 = vpop.f32.mrf.mxu0
        %v3857 = vadd.f32 %v3518, %v3856
        %3858 = vmatmul.bf16.gmra.mxu0 %v3477
        %v3859 = vpop.f32.mrf.mxu0
        %v3860 = vadd.f32 %v3518, %v3859
        %v3861 = vpop.f32.mrf.mxu0
        %v3862 = vadd.f32 %v3518, %v3861
        %3863 = vmatmul.bf16.gmra.mxu0 %v3478
        %v3864 = vpop.f32.mrf.mxu0
        %v3865 = vadd.f32 %v3518, %v3864
        %v3866 = vpop.f32.mrf.mxu0
        %v3867 = vadd.f32 %v3518, %v3866
        %3868 = vmatmul.bf16.gmra.mxu0 %v3479
        %v3869 = vpop.f32.mrf.mxu0
        %v3870 = vadd.f32 %v3518, %v3869
        %v3871 = vpop.f32.mrf.mxu0
        %v3872 = vadd.f32 %v3518, %v3871
        %3873 = vmatmul.bf16.gmra.mxu0 %v3480
        %v3874 = vpop.f32.mrf.mxu0
        %v3875 = vadd.f32 %v3518, %v3874
        %v3876 = vpop.f32.mrf.mxu0
        %v3877 = vadd.f32 %v3518, %v3876
        %3878 = vdwg.mxu0
        %v3879 = vmul.f32 %v3693, %v3693
        %v3880 = vmul.f32 %v3742, %v3742
        %v3881 = vmul.f32 %v3791, %v3791
        %v3882 = vmul.f32 %v3840, %v3840
        %v3883 = vmul.f32 %v3695, %v3695
        %v3884 = vmul.f32 %v3744, %v3744
        %v3885 = vmul.f32 %v3793, %v3793
        %v3886 = vmul.f32 %v3842, %v3842
        %v3887 = vmul.f32 %v3698, %v3698
        %v3888 = vmul.f32 %v3747, %v3747
        %v3889 = vmul.f32 %v3796, %v3796
        %v3890 = vmul.f32 %v3845, %v3845
        %v3891 = vmul.f32 %v3700, %v3700
        %v3892 = vmul.f32 %v3749, %v3749
        %v3893 = vmul.f32 %v3798, %v3798
        %v3894 = vmul.f32 %v3847, %v3847
        %v3895 = vmul.f32 %v3703, %v3703
        %v3896 = vmul.f32 %v3752, %v3752
        %v3897 = vmul.f32 %v3801, %v3801
        %v3898 = vmul.f32 %v3850, %v3850
        %v3899 = vmul.f32 %v3705, %v3705
        %v3900 = vmul.f32 %v3754, %v3754
        %v3901 = vmul.f32 %v3803, %v3803
        %v3902 = vmul.f32 %v3852, %v3852
        %v3903 = vmul.f32 %v3708, %v3708
        %v3904 = vmul.f32 %v3757, %v3757
        %v3905 = vmul.f32 %v3806, %v3806
        %v3906 = vmul.f32 %v3855, %v3855
        %v3907 = vmul.f32 %v3710, %v3710
        %v3908 = vmul.f32 %v3759, %v3759
        %v3909 = vmul.f32 %v3808, %v3808
        %v3910 = vmul.f32 %v3857, %v3857
        %v3911 = vmul.f32 %v3713, %v3713
        %v3912 = vmul.f32 %v3762, %v3762
        %v3913 = vmul.f32 %v3811, %v3811
        %v3914 = vmul.f32 %v3860, %v3860
        %v3915 = vmul.f32 %v3715, %v3715
        %v3916 = vmul.f32 %v3764, %v3764
        %v3917 = vmul.f32 %v3813, %v3813
        %v3918 = vmul.f32 %v3862, %v3862
        %v3919 = vmul.f32 %v3718, %v3718
        %v3920 = vmul.f32 %v3767, %v3767
        %v3921 = vmul.f32 %v3816, %v3816
        %v3922 = vmul.f32 %v3865, %v3865
        %v3923 = vmul.f32 %v3720, %v3720
        %v3924 = vmul.f32 %v3769, %v3769
        %v3925 = vmul.f32 %v3818, %v3818
        %v3926 = vmul.f32 %v3867, %v3867
        %v3927 = vmul.f32 %v3723, %v3723
        %v3928 = vmul.f32 %v3772, %v3772
        %v3929 = vmul.f32 %v3821, %v3821
        %v3930 = vmul.f32 %v3870, %v3870
        %v3931 = vmul.f32 %v3725, %v3725
        %v3932 = vmul.f32 %v3774, %v3774
        %v3933 = vmul.f32 %v3823, %v3823
        %v3934 = vmul.f32 %v3872, %v3872
        %v3935 = vmul.f32 %v3728, %v3728
        %v3936 = vmul.f32 %v3777, %v3777
        %v3937 = vmul.f32 %v3826, %v3826
        %v3938 = vmul.f32 %v3875, %v3875
        %v3939 = vmul.f32 %v3730, %v3730
        %v3940 = vmul.f32 %v3779, %v3779
        %v3941 = vmul.f32 %v3828, %v3828
        %v3942 = vmul.f32 %v3877, %v3877
        %v3943 = vmul.f32 %v3693, %v3879
        %v3944 = vmul.f32 %v3742, %v3880
        %v3945 = vmul.f32 %v3791, %v3881
        %v3946 = vmul.f32 %v3840, %v3882
        %v3947 = vmul.f32 %v3695, %v3883
        %v3948 = vmul.f32 %v3744, %v3884
        %v3949 = vmul.f32 %v3793, %v3885
        %v3950 = vmul.f32 %v3842, %v3886
        %v3951 = vmul.f32 %v3698, %v3887
        %v3952 = vmul.f32 %v3747, %v3888
        %v3953 = vmul.f32 %v3796, %v3889
        %v3954 = vmul.f32 %v3845, %v3890
        %v3955 = vmul.f32 %v3700, %v3891
        %v3956 = vmul.f32 %v3749, %v3892
        %v3957 = vmul.f32 %v3798, %v3893
        %v3958 = vmul.f32 %v3847, %v3894
        %v3959 = vmul.f32 %v3703, %v3895
        %v3960 = vmul.f32 %v3752, %v3896
        %v3961 = vmul.f32 %v3801, %v3897
        %v3962 = vmul.f32 %v3850, %v3898
        %v3963 = vmul.f32 %v3705, %v3899
        %v3964 = vmul.f32 %v3754, %v3900
        %v3965 = vmul.f32 %v3803, %v3901
        %v3966 = vmul.f32 %v3852, %v3902
        %v3967 = vmul.f32 %v3708, %v3903
        %v3968 = vmul.f32 %v3757, %v3904
        %v3969 = vmul.f32 %v3806, %v3905
        %v3970 = vmul.f32 %v3855, %v3906
        %v3971 = vmul.f32 %v3710, %v3907
        %v3972 = vmul.f32 %v3759, %v3908
        %v3973 = vmul.f32 %v3808, %v3909
        %v3974 = vmul.f32 %v3857, %v3910
        %v3975 = vmul.f32 %v3713, %v3911
        %v3976 = vmul.f32 %v3762, %v3912
        %v3977 = vmul.f32 %v3811, %v3913
        %v3978 = vmul.f32 %v3860, %v3914
        %v3979 = vmul.f32 %v3715, %v3915
        %v3980 = vmul.f32 %v3764, %v3916
        %v3981 = vmul.f32 %v3813, %v3917
        %v3982 = vmul.f32 %v3862, %v3918
        %v3983 = vmul.f32 %v3718, %v3919
        %v3984 = vmul.f32 %v3767, %v3920
        %v3985 = vmul.f32 %v3816, %v3921
        %v3986 = vmul.f32 %v3865, %v3922
        %v3987 = vmul.f32 %v3720, %v3923
        %v3988 = vmul.f32 %v3769, %v3924
        %v3989 = vmul.f32 %v3818, %v3925
        %v3990 = vmul.f32 %v3867, %v3926
        %v3991 = vmul.f32 %v3723, %v3927
        %v3992 = vmul.f32 %v3772, %v3928
        %v3993 = vmul.f32 %v3821, %v3929
        %v3994 = vmul.f32 %v3870, %v3930
        %v3995 = vmul.f32 %v3725, %v3931
        %v3996 = vmul.f32 %v3774, %v3932
        %v3997 = vmul.f32 %v3823, %v3933
        %v3998 = vmul.f32 %v3872, %v3934
        %v3999 = vmul.f32 %v3728, %v3935
        %v4000 = vmul.f32 %v3777, %v3936
        %v4001 = vmul.f32 %v3826, %v3937
        %v4002 = vmul.f32 %v3875, %v3938
        %v4003 = vmul.f32 %v3730, %v3939
        %v4004 = vmul.f32 %v3779, %v3940
        %v4005 = vmul.f32 %v3828, %v3941
        %v4006 = vmul.f32 %v3877, %v3942
        %v4007 = vmul.f32 %v3943, 0.044715
        %v4008 = vmul.f32 %v3944, 0.044715
        %v4009 = vmul.f32 %v3945, 0.044715
        %v4010 = vmul.f32 %v3946, 0.044715
        %v4011 = vmul.f32 %v3947, 0.044715
        %v4012 = vmul.f32 %v3948, 0.044715
        %v4013 = vmul.f32 %v3949, 0.044715
        %v4014 = vmul.f32 %v3950, 0.044715
        %v4015 = vmul.f32 %v3951, 0.044715
        %v4016 = vmul.f32 %v3952, 0.044715
        %v4017 = vmul.f32 %v3953, 0.044715
        %v4018 = vmul.f32 %v3954, 0.044715
        %v4019 = vmul.f32 %v3955, 0.044715
        %v4020 = vmul.f32 %v3956, 0.044715
        %v4021 = vmul.f32 %v3957, 0.044715
        %v4022 = vmul.f32 %v3958, 0.044715
        %v4023 = vmul.f32 %v3959, 0.044715
        %v4024 = vmul.f32 %v3960, 0.044715
        %v4025 = vmul.f32 %v3961, 0.044715
        %v4026 = vmul.f32 %v3962, 0.044715
        %v4027 = vmul.f32 %v3963, 0.044715
        %v4028 = vmul.f32 %v3964, 0.044715
        %v4029 = vmul.f32 %v3965, 0.044715
        %v4030 = vmul.f32 %v3966, 0.044715
        %v4031 = vmul.f32 %v3967, 0.044715
        %v4032 = vmul.f32 %v3968, 0.044715
        %v4033 = vmul.f32 %v3969, 0.044715
        %v4034 = vmul.f32 %v3970, 0.044715
        %v4035 = vmul.f32 %v3971, 0.044715
        %v4036 = vmul.f32 %v3972, 0.044715
        %v4037 = vmul.f32 %v3973, 0.044715
        %v4038 = vmul.f32 %v3974, 0.044715
        %v4039 = vmul.f32 %v3975, 0.044715
        %v4040 = vmul.f32 %v3976, 0.044715
        %v4041 = vmul.f32 %v3977, 0.044715
        %v4042 = vmul.f32 %v3978, 0.044715
        %v4043 = vmul.f32 %v3979, 0.044715
        %v4044 = vmul.f32 %v3980, 0.044715
        %v4045 = vmul.f32 %v3981, 0.044715
        %v4046 = vmul.f32 %v3982, 0.044715
        %v4047 = vmul.f32 %v3983, 0.044715
        %v4048 = vmul.f32 %v3984, 0.044715
        %v4049 = vmul.f32 %v3985, 0.044715
        %v4050 = vmul.f32 %v3986, 0.044715
        %v4051 = vmul.f32 %v3987, 0.044715
        %v4052 = vmul.f32 %v3988, 0.044715
        %v4053 = vmul.f32 %v3989, 0.044715
        %v4054 = vmul.f32 %v3990, 0.044715
        %v4055 = vmul.f32 %v3991, 0.044715
        %v4056 = vmul.f32 %v3992, 0.044715
        %v4057 = vmul.f32 %v3993, 0.044715
        %v4058 = vmul.f32 %v3994, 0.044715
        %v4059 = vmul.f32 %v3995, 0.044715
        %v4060 = vmul.f32 %v3996, 0.044715
        %v4061 = vmul.f32 %v3997, 0.044715
        %v4062 = vmul.f32 %v3998, 0.044715
        %v4063 = vmul.f32 %v3999, 0.044715
        %v4064 = vmul.f32 %v4000, 0.044715
        %v4065 = vmul.f32 %v4001, 0.044715
        %v4066 = vmul.f32 %v4002, 0.044715
        %v4067 = vmul.f32 %v4003, 0.044715
        %v4068 = vmul.f32 %v4004, 0.044715
        %v4069 = vmul.f32 %v4005, 0.044715
        %v4070 = vmul.f32 %v4006, 0.044715
        %v4071 = vadd.f32 %v3693, %v4007
        %v4072 = vadd.f32 %v3742, %v4008
        %v4073 = vadd.f32 %v3791, %v4009
        %v4074 = vadd.f32 %v3840, %v4010
        %v4075 = vadd.f32 %v3695, %v4011
        %v4076 = vadd.f32 %v3744, %v4012
        %v4077 = vadd.f32 %v3793, %v4013
        %v4078 = vadd.f32 %v3842, %v4014
        %v4079 = vadd.f32 %v3698, %v4015
        %v4080 = vadd.f32 %v3747, %v4016
        %v4081 = vadd.f32 %v3796, %v4017
        %v4082 = vadd.f32 %v3845, %v4018
        %v4083 = vadd.f32 %v3700, %v4019
        %v4084 = vadd.f32 %v3749, %v4020
        %v4085 = vadd.f32 %v3798, %v4021
        %v4086 = vadd.f32 %v3847, %v4022
        %v4087 = vadd.f32 %v3703, %v4023
        %v4088 = vadd.f32 %v3752, %v4024
        %v4089 = vadd.f32 %v3801, %v4025
        %v4090 = vadd.f32 %v3850, %v4026
        %v4091 = vadd.f32 %v3705, %v4027
        %v4092 = vadd.f32 %v3754, %v4028
        %v4093 = vadd.f32 %v3803, %v4029
        %v4094 = vadd.f32 %v3852, %v4030
        %v4095 = vadd.f32 %v3708, %v4031
        %v4096 = vadd.f32 %v3757, %v4032
        %v4097 = vadd.f32 %v3806, %v4033
        %v4098 = vadd.f32 %v3855, %v4034
        %v4099 = vadd.f32 %v3710, %v4035
        %v4100 = vadd.f32 %v3759, %v4036
        %v4101 = vadd.f32 %v3808, %v4037
        %v4102 = vadd.f32 %v3857, %v4038
        %v4103 = vadd.f32 %v3713, %v4039
        %v4104 = vadd.f32 %v3762, %v4040
        %v4105 = vadd.f32 %v3811, %v4041
        %v4106 = vadd.f32 %v3860, %v4042
        %v4107 = vadd.f32 %v3715, %v4043
        %v4108 = vadd.f32 %v3764, %v4044
        %v4109 = vadd.f32 %v3813, %v4045
        %v4110 = vadd.f32 %v3862, %v4046
        %v4111 = vadd.f32 %v3718, %v4047
        %v4112 = vadd.f32 %v3767, %v4048
        %v4113 = vadd.f32 %v3816, %v4049
        %v4114 = vadd.f32 %v3865, %v4050
        %v4115 = vadd.f32 %v3720, %v4051
        %v4116 = vadd.f32 %v3769, %v4052
        %v4117 = vadd.f32 %v3818, %v4053
        %v4118 = vadd.f32 %v3867, %v4054
        %v4119 = vadd.f32 %v3723, %v4055
        %v4120 = vadd.f32 %v3772, %v4056
        %v4121 = vadd.f32 %v3821, %v4057
        %v4122 = vadd.f32 %v3870, %v4058
        %v4123 = vadd.f32 %v3725, %v4059
        %v4124 = vadd.f32 %v3774, %v4060
        %v4125 = vadd.f32 %v3823, %v4061
        %v4126 = vadd.f32 %v3872, %v4062
        %v4127 = vadd.f32 %v3728, %v4063
        %v4128 = vadd.f32 %v3777, %v4064
        %v4129 = vadd.f32 %v3826, %v4065
        %v4130 = vadd.f32 %v3875, %v4066
        %v4131 = vadd.f32 %v3730, %v4067
        %v4132 = vadd.f32 %v3779, %v4068
        %v4133 = vadd.f32 %v3828, %v4069
        %v4134 = vadd.f32 %v3877, %v4070
        %v4135 = vmul.f32 %v4071, 0.7978846
        %v4136 = vmul.f32 %v4072, 0.7978846
        %v4137 = vmul.f32 %v4073, 0.7978846
        %v4138 = vmul.f32 %v4074, 0.7978846
        %v4139 = vmul.f32 %v4075, 0.7978846
        %v4140 = vmul.f32 %v4076, 0.7978846
        %v4141 = vmul.f32 %v4077, 0.7978846
        %v4142 = vmul.f32 %v4078, 0.7978846
        %v4143 = vmul.f32 %v4079, 0.7978846
        %v4144 = vmul.f32 %v4080, 0.7978846
        %v4145 = vmul.f32 %v4081, 0.7978846
        %v4146 = vmul.f32 %v4082, 0.7978846
        %v4147 = vmul.f32 %v4083, 0.7978846
        %v4148 = vmul.f32 %v4084, 0.7978846
        %v4149 = vmul.f32 %v4085, 0.7978846
        %v4150 = vmul.f32 %v4086, 0.7978846
        %v4151 = vmul.f32 %v4087, 0.7978846
        %v4152 = vmul.f32 %v4088, 0.7978846
        %v4153 = vmul.f32 %v4089, 0.7978846
        %v4154 = vmul.f32 %v4090, 0.7978846
        %v4155 = vmul.f32 %v4091, 0.7978846
        %v4156 = vmul.f32 %v4092, 0.7978846
        %v4157 = vmul.f32 %v4093, 0.7978846
        %v4158 = vmul.f32 %v4094, 0.7978846
        %v4159 = vmul.f32 %v4095, 0.7978846
        %v4160 = vmul.f32 %v4096, 0.7978846
        %v4161 = vmul.f32 %v4097, 0.7978846
        %v4162 = vmul.f32 %v4098, 0.7978846
        %v4163 = vmul.f32 %v4099, 0.7978846
        %v4164 = vmul.f32 %v4100, 0.7978846
        %v4165 = vmul.f32 %v4101, 0.7978846
        %v4166 = vmul.f32 %v4102, 0.7978846
        %v4167 = vmul.f32 %v4103, 0.7978846
        %v4168 = vmul.f32 %v4104, 0.7978846
        %v4169 = vmul.f32 %v4105, 0.7978846
        %v4170 = vmul.f32 %v4106, 0.7978846
        %v4171 = vmul.f32 %v4107, 0.7978846
        %v4172 = vmul.f32 %v4108, 0.7978846
        %v4173 = vmul.f32 %v4109, 0.7978846
        %v4174 = vmul.f32 %v4110, 0.7978846
        %v4175 = vmul.f32 %v4111, 0.7978846
        %v4176 = vmul.f32 %v4112, 0.7978846
        %v4177 = vmul.f32 %v4113, 0.7978846
        %v4178 = vmul.f32 %v4114, 0.7978846
        %v4179 = vmul.f32 %v4115, 0.7978846
        %v4180 = vmul.f32 %v4116, 0.7978846
        %v4181 = vmul.f32 %v4117, 0.7978846
        %v4182 = vmul.f32 %v4118, 0.7978846
        %v4183 = vmul.f32 %v4119, 0.7978846
        %v4184 = vmul.f32 %v4120, 0.7978846
        %v4185 = vmul.f32 %v4121, 0.7978846
        %v4186 = vmul.f32 %v4122, 0.7978846
        %v4187 = vmul.f32 %v4123, 0.7978846
        %v4188 = vmul.f32 %v4124, 0.7978846
        %v4189 = vmul.f32 %v4125, 0.7978846
        %v4190 = vmul.f32 %v4126, 0.7978846
        %v4191 = vmul.f32 %v4127, 0.7978846
        %v4192 = vmul.f32 %v4128, 0.7978846
        %v4193 = vmul.f32 %v4129, 0.7978846
        %v4194 = vmul.f32 %v4130, 0.7978846
        %v4195 = vmul.f32 %v4131, 0.7978846
        %v4196 = vmul.f32 %v4132, 0.7978846
        %v4197 = vmul.f32 %v4133, 0.7978846
        %v4198 = vmul.f32 %v4134, 0.7978846
        %v4199 = vtanh.pop %v4135
        %v4200 = vtanh.pop %v4136
        %v4201 = vtanh.pop %v4137
        %v4202 = vtanh.pop %v4138
        %v4203 = vtanh.pop %v4139
        %v4204 = vtanh.pop %v4140
        %v4205 = vtanh.pop %v4141
        %v4206 = vtanh.pop %v4142
        %v4207 = vtanh.pop %v4143
        %v4208 = vtanh.pop %v4144
        %v4209 = vtanh.pop %v4145
        %v4210 = vtanh.pop %v4146
        %v4211 = vtanh.pop %v4147
        %v4212 = vtanh.pop %v4148
        %v4213 = vtanh.pop %v4149
        %v4214 = vtanh.pop %v4150
        %v4215 = vtanh.pop %v4151
        %v4216 = vtanh.pop %v4152
        %v4217 = vtanh.pop %v4153
        %v4218 = vtanh.pop %v4154
        %v4219 = vtanh.pop %v4155
        %v4220 = vtanh.pop %v4156
        %v4221 = vtanh.pop %v4157
        %v4222 = vtanh.pop %v4158
        %v4223 = vtanh.pop %v4159
        %v4224 = vtanh.pop %v4160
        %v4225 = vtanh.pop %v4161
        %v4226 = vtanh.pop %v4162
        %v4227 = vtanh.pop %v4163
        %v4228 = vtanh.pop %v4164
        %v4229 = vtanh.pop %v4165
        %v4230 = vtanh.pop %v4166
        %v4231 = vtanh.pop %v4167
        %v4232 = vtanh.pop %v4168
        %v4233 = vtanh.pop %v4169
        %v4234 = vtanh.pop %v4170
        %v4235 = vtanh.pop %v4171
        %v4236 = vtanh.pop %v4172
        %v4237 = vtanh.pop %v4173
        %v4238 = vtanh.pop %v4174
        %v4239 = vtanh.pop %v4175
        %v4240 = vtanh.pop %v4176
        %v4241 = vtanh.pop %v4177
        %v4242 = vtanh.pop %v4178
        %v4243 = vtanh.pop %v4179
        %v4244 = vtanh.pop %v4180
        %v4245 = vtanh.pop %v4181
        %v4246 = vtanh.pop %v4182
        %v4247 = vtanh.pop %v4183
        %v4248 = vtanh.pop %v4184
        %v4249 = vtanh.pop %v4185
        %v4250 = vtanh.pop %v4186
        %v4251 = vtanh.pop %v4187
        %v4252 = vtanh.pop %v4188
        %v4253 = vtanh.pop %v4189
        %v4254 = vtanh.pop %v4190
        %v4255 = vtanh.pop %v4191
        %v4256 = vtanh.pop %v4192
        %v4257 = vtanh.pop %v4193
        %v4258 = vtanh.pop %v4194
        %v4259 = vtanh.pop %v4195
        %v4260 = vtanh.pop %v4196
        %v4261 = vtanh.pop %v4197
        %v4262 = vtanh.pop %v4198
        %v4263 = vadd.f32 %v4199, 1.0
        %v4264 = vadd.f32 %v4200, 1.0
        %v4265 = vadd.f32 %v4201, 1.0
        %v4266 = vadd.f32 %v4202, 1.0
        %v4267 = vadd.f32 %v4203, 1.0
        %v4268 = vadd.f32 %v4204, 1.0
        %v4269 = vadd.f32 %v4205, 1.0
        %v4270 = vadd.f32 %v4206, 1.0
        %v4271 = vadd.f32 %v4207, 1.0
        %v4272 = vadd.f32 %v4208, 1.0
        %v4273 = vadd.f32 %v4209, 1.0
        %v4274 = vadd.f32 %v4210, 1.0
        %v4275 = vadd.f32 %v4211, 1.0
        %v4276 = vadd.f32 %v4212, 1.0
        %v4277 = vadd.f32 %v4213, 1.0
        %v4278 = vadd.f32 %v4214, 1.0
        %v4279 = vadd.f32 %v4215, 1.0
        %v4280 = vadd.f32 %v4216, 1.0
        %v4281 = vadd.f32 %v4217, 1.0
        %v4282 = vadd.f32 %v4218, 1.0
        %v4283 = vadd.f32 %v4219, 1.0
        %v4284 = vadd.f32 %v4220, 1.0
        %v4285 = vadd.f32 %v4221, 1.0
        %v4286 = vadd.f32 %v4222, 1.0
        %v4287 = vadd.f32 %v4223, 1.0
        %v4288 = vadd.f32 %v4224, 1.0
        %v4289 = vadd.f32 %v4225, 1.0
        %v4290 = vadd.f32 %v4226, 1.0
        %v4291 = vadd.f32 %v4227, 1.0
        %v4292 = vadd.f32 %v4228, 1.0
        %v4293 = vadd.f32 %v4229, 1.0
        %v4294 = vadd.f32 %v4230, 1.0
        %v4295 = vadd.f32 %v4231, 1.0
        %v4296 = vadd.f32 %v4232, 1.0
        %v4297 = vadd.f32 %v4233, 1.0
        %v4298 = vadd.f32 %v4234, 1.0
        %v4299 = vadd.f32 %v4235, 1.0
        %v4300 = vadd.f32 %v4236, 1.0
        %v4301 = vadd.f32 %v4237, 1.0
        %v4302 = vadd.f32 %v4238, 1.0
        %v4303 = vadd.f32 %v4239, 1.0
        %v4304 = vadd.f32 %v4240, 1.0
        %v4305 = vadd.f32 %v4241, 1.0
        %v4306 = vadd.f32 %v4242, 1.0
        %v4307 = vadd.f32 %v4243, 1.0
        %v4308 = vadd.f32 %v4244, 1.0
        %v4309 = vadd.f32 %v4245, 1.0
        %v4310 = vadd.f32 %v4246, 1.0
        %v4311 = vadd.f32 %v4247, 1.0
        %v4312 = vadd.f32 %v4248, 1.0
        %v4313 = vadd.f32 %v4249, 1.0
        %v4314 = vadd.f32 %v4250, 1.0
        %v4315 = vadd.f32 %v4251, 1.0
        %v4316 = vadd.f32 %v4252, 1.0
        %v4317 = vadd.f32 %v4253, 1.0
        %v4318 = vadd.f32 %v4254, 1.0
        %v4319 = vadd.f32 %v4255, 1.0
        %v4320 = vadd.f32 %v4256, 1.0
        %v4321 = vadd.f32 %v4257, 1.0
        %v4322 = vadd.f32 %v4258, 1.0
        %v4323 = vadd.f32 %v4259, 1.0
        %v4324 = vadd.f32 %v4260, 1.0
        %v4325 = vadd.f32 %v4261, 1.0
        %v4326 = vadd.f32 %v4262, 1.0
        %v4327 = vmul.f32 %v4263, 0.5
        %v4328 = vmul.f32 %v4264, 0.5
        %v4329 = vmul.f32 %v4265, 0.5
        %v4330 = vmul.f32 %v4266, 0.5
        %v4331 = vmul.f32 %v4267, 0.5
        %v4332 = vmul.f32 %v4268, 0.5
        %v4333 = vmul.f32 %v4269, 0.5
        %v4334 = vmul.f32 %v4270, 0.5
        %v4335 = vmul.f32 %v4271, 0.5
        %v4336 = vmul.f32 %v4272, 0.5
        %v4337 = vmul.f32 %v4273, 0.5
        %v4338 = vmul.f32 %v4274, 0.5
        %v4339 = vmul.f32 %v4275, 0.5
        %v4340 = vmul.f32 %v4276, 0.5
        %v4341 = vmul.f32 %v4277, 0.5
        %v4342 = vmul.f32 %v4278, 0.5
        %v4343 = vmul.f32 %v4279, 0.5
        %v4344 = vmul.f32 %v4280, 0.5
        %v4345 = vmul.f32 %v4281, 0.5
        %v4346 = vmul.f32 %v4282, 0.5
        %v4347 = vmul.f32 %v4283, 0.5
        %v4348 = vmul.f32 %v4284, 0.5
        %v4349 = vmul.f32 %v4285, 0.5
        %v4350 = vmul.f32 %v4286, 0.5
        %v4351 = vmul.f32 %v4287, 0.5
        %v4352 = vmul.f32 %v4288, 0.5
        %v4353 = vmul.f32 %v4289, 0.5
        %v4354 = vmul.f32 %v4290, 0.5
        %v4355 = vmul.f32 %v4291, 0.5
        %v4356 = vmul.f32 %v4292, 0.5
        %v4357 = vmul.f32 %v4293, 0.5
        %v4358 = vmul.f32 %v4294, 0.5
        %v4359 = vmul.f32 %v4295, 0.5
        %v4360 = vmul.f32 %v4296, 0.5
        %v4361 = vmul.f32 %v4297, 0.5
        %v4362 = vmul.f32 %v4298, 0.5
        %v4363 = vmul.f32 %v4299, 0.5
        %v4364 = vmul.f32 %v4300, 0.5
        %v4365 = vmul.f32 %v4301, 0.5
        %v4366 = vmul.f32 %v4302, 0.5
        %v4367 = vmul.f32 %v4303, 0.5
        %v4368 = vmul.f32 %v4304, 0.5
        %v4369 = vmul.f32 %v4305, 0.5
        %v4370 = vmul.f32 %v4306, 0.5
        %v4371 = vmul.f32 %v4307, 0.5
        %v4372 = vmul.f32 %v4308, 0.5
        %v4373 = vmul.f32 %v4309, 0.5
        %v4374 = vmul.f32 %v4310, 0.5
        %v4375 = vmul.f32 %v4311, 0.5
        %v4376 = vmul.f32 %v4312, 0.5
        %v4377 = vmul.f32 %v4313, 0.5
        %v4378 = vmul.f32 %v4314, 0.5
        %v4379 = vmul.f32 %v4315, 0.5
        %v4380 = vmul.f32 %v4316, 0.5
        %v4381 = vmul.f32 %v4317, 0.5
        %v4382 = vmul.f32 %v4318, 0.5
        %v4383 = vmul.f32 %v4319, 0.5
        %v4384 = vmul.f32 %v4320, 0.5
        %v4385 = vmul.f32 %v4321, 0.5
        %v4386 = vmul.f32 %v4322, 0.5
        %v4387 = vmul.f32 %v4323, 0.5
        %v4388 = vmul.f32 %v4324, 0.5
        %v4389 = vmul.f32 %v4325, 0.5
        %v4390 = vmul.f32 %v4326, 0.5
        %v4391 = vmul.f32 %v3693, %v4327
        %v4392 = vmul.f32 %v3742, %v4328
        %v4393 = vmul.f32 %v3791, %v4329
        %v4394 = vmul.f32 %v3840, %v4330
        %v4395 = vmul.f32 %v3695, %v4331
        %v4396 = vmul.f32 %v3744, %v4332
        %v4397 = vmul.f32 %v3793, %v4333
        %v4398 = vmul.f32 %v3842, %v4334
        %v4399 = vmul.f32 %v3698, %v4335
        %v4400 = vmul.f32 %v3747, %v4336
        %v4401 = vmul.f32 %v3796, %v4337
        %v4402 = vmul.f32 %v3845, %v4338
        %v4403 = vmul.f32 %v3700, %v4339
        %v4404 = vmul.f32 %v3749, %v4340
        %v4405 = vmul.f32 %v3798, %v4341
        %v4406 = vmul.f32 %v3847, %v4342
        %v4407 = vmul.f32 %v3703, %v4343
        %v4408 = vmul.f32 %v3752, %v4344
        %v4409 = vmul.f32 %v3801, %v4345
        %v4410 = vmul.f32 %v3850, %v4346
        %v4411 = vmul.f32 %v3705, %v4347
        %v4412 = vmul.f32 %v3754, %v4348
        %v4413 = vmul.f32 %v3803, %v4349
        %v4414 = vmul.f32 %v3852, %v4350
        %v4415 = vmul.f32 %v3708, %v4351
        %v4416 = vmul.f32 %v3757, %v4352
        %v4417 = vmul.f32 %v3806, %v4353
        %v4418 = vmul.f32 %v3855, %v4354
        %v4419 = vmul.f32 %v3710, %v4355
        %v4420 = vmul.f32 %v3759, %v4356
        %v4421 = vmul.f32 %v3808, %v4357
        %v4422 = vmul.f32 %v3857, %v4358
        %v4423 = vmul.f32 %v3713, %v4359
        %v4424 = vmul.f32 %v3762, %v4360
        %v4425 = vmul.f32 %v3811, %v4361
        %v4426 = vmul.f32 %v3860, %v4362
        %v4427 = vmul.f32 %v3715, %v4363
        %v4428 = vmul.f32 %v3764, %v4364
        %v4429 = vmul.f32 %v3813, %v4365
        %v4430 = vmul.f32 %v3862, %v4366
        %v4431 = vmul.f32 %v3718, %v4367
        %v4432 = vmul.f32 %v3767, %v4368
        %v4433 = vmul.f32 %v3816, %v4369
        %v4434 = vmul.f32 %v3865, %v4370
        %v4435 = vmul.f32 %v3720, %v4371
        %v4436 = vmul.f32 %v3769, %v4372
        %v4437 = vmul.f32 %v3818, %v4373
        %v4438 = vmul.f32 %v3867, %v4374
        %v4439 = vmul.f32 %v3723, %v4375
        %v4440 = vmul.f32 %v3772, %v4376
        %v4441 = vmul.f32 %v3821, %v4377
        %v4442 = vmul.f32 %v3870, %v4378
        %v4443 = vmul.f32 %v3725, %v4379
        %v4444 = vmul.f32 %v3774, %v4380
        %v4445 = vmul.f32 %v3823, %v4381
        %v4446 = vmul.f32 %v3872, %v4382
        %v4447 = vmul.f32 %v3728, %v4383
        %v4448 = vmul.f32 %v3777, %v4384
        %v4449 = vmul.f32 %v3826, %v4385
        %v4450 = vmul.f32 %v3875, %v4386
        %v4451 = vmul.f32 %v3730, %v4387
        %v4452 = vmul.f32 %v3779, %v4388
        %v4453 = vmul.f32 %v3828, %v4389
        %v4454 = vmul.f32 %v3877, %v4390
        %v4455 = vpack.c.bf16 %v4395, %v4391
        %v4456 = vpack.c.bf16 %v4396, %v4392
        %v4457 = vpack.c.bf16 %v4397, %v4393
        %v4458 = vpack.c.bf16 %v4398, %v4394
        %v4459 = vpack.c.bf16 %v4403, %v4399
        %v4460 = vpack.c.bf16 %v4404, %v4400
        %v4461 = vpack.c.bf16 %v4405, %v4401
        %v4462 = vpack.c.bf16 %v4406, %v4402
        %v4463 = vpack.c.bf16 %v4411, %v4407
        %v4464 = vpack.c.bf16 %v4412, %v4408
        %v4465 = vpack.c.bf16 %v4413, %v4409
        %v4466 = vpack.c.bf16 %v4414, %v4410
        %v4467 = vpack.c.bf16 %v4419, %v4415
        %v4468 = vpack.c.bf16 %v4420, %v4416
        %v4469 = vpack.c.bf16 %v4421, %v4417
        %v4470 = vpack.c.bf16 %v4422, %v4418
        %v4471 = vpack.c.bf16 %v4427, %v4423
        %v4472 = vpack.c.bf16 %v4428, %v4424
        %v4473 = vpack.c.bf16 %v4429, %v4425
        %v4474 = vpack.c.bf16 %v4430, %v4426
        %v4475 = vpack.c.bf16 %v4435, %v4431
        %v4476 = vpack.c.bf16 %v4436, %v4432
        %v4477 = vpack.c.bf16 %v4437, %v4433
        %v4478 = vpack.c.bf16 %v4438, %v4434
        %v4479 = vpack.c.bf16 %v4443, %v4439
        %v4480 = vpack.c.bf16 %v4444, %v4440
        %v4481 = vpack.c.bf16 %v4445, %v4441
        %v4482 = vpack.c.bf16 %v4446, %v4442
        %v4483 = vpack.c.bf16 %v4451, %v4447
        %v4484 = vpack.c.bf16 %v4452, %v4448
        %v4485 = vpack.c.bf16 %v4453, %v4449
        %v4486 = vpack.c.bf16 %v4454, %v4450
        %v4487 = vld [vmem:[#allocation13] sm:$0xf]
        %v4488 = vld [vmem:[#allocation13 + $0x4] sm:$0xf]
        %v4489 = vld [vmem:[#allocation13 + $0x8] sm:$0xf]
        %v4490 = vld [vmem:[#allocation13 + $0xc] sm:$0xf]
        %v4491 = vld [vmem:[#allocation13 + $0x10] sm:$0xf]
        %v4492 = vld [vmem:[#allocation13 + $0x14] sm:$0xf]
        %v4493 = vld [vmem:[#allocation13 + $0x18] sm:$0xf]
        %v4494 = vld [vmem:[#allocation13 + $0x1c] sm:$0xf]
        %v4495 = vld [vmem:[#allocation13 + $0x20] sm:$0xf]
        %v4496 = vld [vmem:[#allocation13 + $0x24] sm:$0xf]
        %v4497 = vld [vmem:[#allocation13 + $0x28] sm:$0xf]
        %v4498 = vld [vmem:[#allocation13 + $0x2c] sm:$0xf]
        %v4499 = vld [vmem:[#allocation13 + $0x30] sm:$0xf]
        %v4500 = vld [vmem:[#allocation13 + $0x34] sm:$0xf]
        %v4501 = vld [vmem:[#allocation13 + $0x38] sm:$0xf]
        %v4502 = vld [vmem:[#allocation13 + $0x3c] sm:$0xf]
        %v4503 = vld [vmem:[#allocation13 + $0x40] sm:$0xf]
        %v4504 = vld [vmem:[#allocation13 + $0x44] sm:$0xf]
        %v4505 = vld [vmem:[#allocation13 + $0x48] sm:$0xf]
        %v4506 = vld [vmem:[#allocation13 + $0x4c] sm:$0xf]
        %v4507 = vld [vmem:[#allocation13 + $0x50] sm:$0xf]
        %v4508 = vld [vmem:[#allocation13 + $0x54] sm:$0xf]
        %v4509 = vld [vmem:[#allocation13 + $0x58] sm:$0xf]
        %v4510 = vld [vmem:[#allocation13 + $0x5c] sm:$0xf]
        %v4511 = vld [vmem:[#allocation13 + $0x60] sm:$0xf]
        %v4512 = vld [vmem:[#allocation13 + $0x64] sm:$0xf]
        %v4513 = vld [vmem:[#allocation13 + $0x68] sm:$0xf]
        %v4514 = vld [vmem:[#allocation13 + $0x6c] sm:$0xf]
        %v4515 = vld [vmem:[#allocation13 + $0x70] sm:$0xf]
        %v4516 = vld [vmem:[#allocation13 + $0x74] sm:$0xf]
        %v4517 = vld [vmem:[#allocation13 + $0x78] sm:$0xf]
        %v4518 = vld [vmem:[#allocation13 + $0x7c] sm:$0xf]
        %v4519 = vld [vmem:[#allocation13 + $0x80] sm:$0xf]
        %v4520 = vld [vmem:[#allocation13 + $0x84] sm:$0xf]
        %v4521 = vld [vmem:[#allocation13 + $0x88] sm:$0xf]
        %v4522 = vld [vmem:[#allocation13 + $0x8c] sm:$0xf]
        %v4523 = vld [vmem:[#allocation13 + $0x90] sm:$0xf]
        %v4524 = vld [vmem:[#allocation13 + $0x94] sm:$0xf]
        %v4525 = vld [vmem:[#allocation13 + $0x98] sm:$0xf]
        %v4526 = vld [vmem:[#allocation13 + $0x9c] sm:$0xf]
        %v4527 = vld [vmem:[#allocation13 + $0xa0] sm:$0xf]
        %v4528 = vld [vmem:[#allocation13 + $0xa4] sm:$0xf]
        %v4529 = vld [vmem:[#allocation13 + $0xa8] sm:$0xf]
        %v4530 = vld [vmem:[#allocation13 + $0xac] sm:$0xf]
        %v4531 = vld [vmem:[#allocation13 + $0xb0] sm:$0xf]
        %v4532 = vld [vmem:[#allocation13 + $0xb4] sm:$0xf]
        %v4533 = vld [vmem:[#allocation13 + $0xb8] sm:$0xf]
        %v4534 = vld [vmem:[#allocation13 + $0xbc] sm:$0xf]
        %v4535 = vld [vmem:[#allocation13 + $0xc0] sm:$0xf]
        %v4536 = vld [vmem:[#allocation13 + $0xc4] sm:$0xf]
        %v4537 = vld [vmem:[#allocation13 + $0xc8] sm:$0xf]
        %v4538 = vld [vmem:[#allocation13 + $0xcc] sm:$0xf]
        %v4539 = vld [vmem:[#allocation13 + $0xd0] sm:$0xf]
        %v4540 = vld [vmem:[#allocation13 + $0xd4] sm:$0xf]
        %v4541 = vld [vmem:[#allocation13 + $0xd8] sm:$0xf]
        %v4542 = vld [vmem:[#allocation13 + $0xdc] sm:$0xf]
        %v4543 = vld [vmem:[#allocation13 + $0xe0] sm:$0xf]
        %v4544 = vld [vmem:[#allocation13 + $0xe4] sm:$0xf]
        %v4545 = vld [vmem:[#allocation13 + $0xe8] sm:$0xf]
        %v4546 = vld [vmem:[#allocation13 + $0xec] sm:$0xf]
        %v4547 = vld [vmem:[#allocation13 + $0xf0] sm:$0xf]
        %v4548 = vld [vmem:[#allocation13 + $0xf4] sm:$0xf]
        %v4549 = vld [vmem:[#allocation13 + $0xf8] sm:$0xf]
        %v4550 = vld [vmem:[#allocation13 + $0xfc] sm:$0xf]
        %v4551 = vld [vmem:[%s11] sm:$0x1]
        %v4553 = vperm.slane %v4551, 0
        %v4619 = vunpack.c.l.b16 %v4487
        %v4620 = vunpack.c.l.b16 %v4488
        %v4621 = vunpack.c.l.b16 %v4489
        %v4622 = vunpack.c.l.b16 %v4490
        %v4623 = vunpack.c.l.b16 %v4491
        %v4624 = vunpack.c.l.b16 %v4492
        %v4625 = vunpack.c.l.b16 %v4493
        %v4626 = vunpack.c.l.b16 %v4494
        %v4627 = vunpack.c.l.b16 %v4495
        %v4628 = vunpack.c.l.b16 %v4496
        %v4629 = vunpack.c.l.b16 %v4497
        %v4630 = vunpack.c.l.b16 %v4498
        %v4631 = vunpack.c.l.b16 %v4499
        %v4632 = vunpack.c.l.b16 %v4500
        %v4633 = vunpack.c.l.b16 %v4501
        %v4634 = vunpack.c.l.b16 %v4502
        %v4635 = vunpack.c.l.b16 %v4503
        %v4636 = vunpack.c.l.b16 %v4504
        %v4637 = vunpack.c.l.b16 %v4505
        %v4638 = vunpack.c.l.b16 %v4506
        %v4639 = vunpack.c.l.b16 %v4507
        %v4640 = vunpack.c.l.b16 %v4508
        %v4641 = vunpack.c.l.b16 %v4509
        %v4642 = vunpack.c.l.b16 %v4510
        %v4643 = vunpack.c.l.b16 %v4511
        %v4644 = vunpack.c.l.b16 %v4512
        %v4645 = vunpack.c.l.b16 %v4513
        %v4646 = vunpack.c.l.b16 %v4514
        %v4647 = vunpack.c.l.b16 %v4515
        %v4648 = vunpack.c.l.b16 %v4516
        %v4649 = vunpack.c.l.b16 %v4517
        %v4650 = vunpack.c.l.b16 %v4518
        %v4651 = vunpack.c.l.b16 %v4519
        %v4652 = vunpack.c.l.b16 %v4520
        %v4653 = vunpack.c.l.b16 %v4521
        %v4654 = vunpack.c.l.b16 %v4522
        %v4655 = vunpack.c.l.b16 %v4523
        %v4656 = vunpack.c.l.b16 %v4524
        %v4657 = vunpack.c.l.b16 %v4525
        %v4658 = vunpack.c.l.b16 %v4526
        %v4659 = vunpack.c.l.b16 %v4527
        %v4660 = vunpack.c.l.b16 %v4528
        %v4661 = vunpack.c.l.b16 %v4529
        %v4662 = vunpack.c.l.b16 %v4530
        %v4663 = vunpack.c.l.b16 %v4531
        %v4664 = vunpack.c.l.b16 %v4532
        %v4665 = vunpack.c.l.b16 %v4533
        %v4666 = vunpack.c.l.b16 %v4534
        %v4667 = vunpack.c.l.b16 %v4535
        %v4668 = vunpack.c.l.b16 %v4536
        %v4669 = vunpack.c.l.b16 %v4537
        %v4670 = vunpack.c.l.b16 %v4538
        %v4671 = vunpack.c.l.b16 %v4539
        %v4672 = vunpack.c.l.b16 %v4540
        %v4673 = vunpack.c.l.b16 %v4541
        %v4674 = vunpack.c.l.b16 %v4542
        %v4675 = vunpack.c.l.b16 %v4543
        %v4676 = vunpack.c.l.b16 %v4544
        %v4677 = vunpack.c.l.b16 %v4545
        %v4678 = vunpack.c.l.b16 %v4546
        %v4679 = vunpack.c.l.b16 %v4547
        %v4680 = vunpack.c.l.b16 %v4548
        %v4681 = vunpack.c.l.b16 %v4549
        %v4682 = vunpack.c.l.b16 %v4550
        %v4683 = vpack.c.b16 %v4620, %v4619
        %v4684 = vpack.c.b16 %v4622, %v4621
        %v4685 = vpack.c.b16 %v4624, %v4623
        %v4686 = vpack.c.b16 %v4626, %v4625
        %v4687 = vpack.c.b16 %v4628, %v4627
        %v4688 = vpack.c.b16 %v4630, %v4629
        %v4689 = vpack.c.b16 %v4632, %v4631
        %v4690 = vpack.c.b16 %v4634, %v4633
        %v4691 = vpack.c.b16 %v4636, %v4635
        %v4692 = vpack.c.b16 %v4638, %v4637
        %v4693 = vpack.c.b16 %v4640, %v4639
        %v4694 = vpack.c.b16 %v4642, %v4641
        %v4695 = vpack.c.b16 %v4644, %v4643
        %v4696 = vpack.c.b16 %v4646, %v4645
        %v4697 = vpack.c.b16 %v4648, %v4647
        %v4698 = vpack.c.b16 %v4650, %v4649
        %v4699 = vpack.c.b16 %v4652, %v4651
        %v4700 = vpack.c.b16 %v4654, %v4653
        %v4701 = vpack.c.b16 %v4656, %v4655
        %v4702 = vpack.c.b16 %v4658, %v4657
        %v4703 = vpack.c.b16 %v4660, %v4659
        %v4704 = vpack.c.b16 %v4662, %v4661
        %v4705 = vpack.c.b16 %v4664, %v4663
        %v4706 = vpack.c.b16 %v4666, %v4665
        %v4707 = vpack.c.b16 %v4668, %v4667
        %v4708 = vpack.c.b16 %v4670, %v4669
        %v4709 = vpack.c.b16 %v4672, %v4671
        %v4710 = vpack.c.b16 %v4674, %v4673
        %v4711 = vpack.c.b16 %v4676, %v4675
        %v4712 = vpack.c.b16 %v4678, %v4677
        %v4713 = vpack.c.b16 %v4680, %v4679
        %v4714 = vpack.c.b16 %v4682, %v4681
        %4747 = vmatpush.bf16.msra.mxu0 %v4690
        %4748 = vmatpush.bf16.msra.mxu0 %v4689
        %4749 = vmatpush.bf16.msra.mxu0 %v4688
        %4750 = vmatpush.bf16.msra.mxu0 %v4687
        %4751 = vmatpush.bf16.msra.mxu0 %v4686
        %4752 = vmatpush.bf16.msra.mxu0 %v4685
        %4753 = vmatpush.bf16.msra.mxu0 %v4684
        %4754 = vmatpush.bf16.msra.mxu0 %v4683
        %4755 = vmatmul.bf16.gmra.mxu0 %v4455
        %v4756 = vpop.f32.mrf.mxu0
        %v4757 = vadd.f32 %v4553, %v4756
        %v4758 = vpop.f32.mrf.mxu0
        %v4759 = vadd.f32 %v4553, %v4758
        %4760 = vmatmul.bf16.gmra.mxu0 %v4459
        %v4761 = vpop.f32.mrf.mxu0
        %v4762 = vadd.f32 %v4553, %v4761
        %v4763 = vpop.f32.mrf.mxu0
        %v4764 = vadd.f32 %v4553, %v4763
        %4765 = vmatmul.bf16.gmra.mxu0 %v4463
        %v4766 = vpop.f32.mrf.mxu0
        %v4767 = vadd.f32 %v4553, %v4766
        %v4768 = vpop.f32.mrf.mxu0
        %v4769 = vadd.f32 %v4553, %v4768
        %4770 = vmatmul.bf16.gmra.mxu0 %v4467
        %v4771 = vpop.f32.mrf.mxu0
        %v4772 = vadd.f32 %v4553, %v4771
        %v4773 = vpop.f32.mrf.mxu0
        %v4774 = vadd.f32 %v4553, %v4773
        %4775 = vmatmul.bf16.gmra.mxu0 %v4471
        %v4776 = vpop.f32.mrf.mxu0
        %v4777 = vadd.f32 %v4553, %v4776
        %v4778 = vpop.f32.mrf.mxu0
        %v4779 = vadd.f32 %v4553, %v4778
        %4780 = vmatmul.bf16.gmra.mxu0 %v4475
        %v4781 = vpop.f32.mrf.mxu0
        %v4782 = vadd.f32 %v4553, %v4781
        %v4783 = vpop.f32.mrf.mxu0
        %v4784 = vadd.f32 %v4553, %v4783
        %4785 = vmatmul.bf16.gmra.mxu0 %v4479
        %v4786 = vpop.f32.mrf.mxu0
        %v4787 = vadd.f32 %v4553, %v4786
        %v4788 = vpop.f32.mrf.mxu0
        %v4789 = vadd.f32 %v4553, %v4788
        %4790 = vmatmul.bf16.gmra.mxu0 %v4483
        %v4791 = vpop.f32.mrf.mxu0
        %v4792 = vadd.f32 %v4553, %v4791
        %v4793 = vpop.f32.mrf.mxu0
        %v4794 = vadd.f32 %v4553, %v4793
        %4795 = vdwg.mxu0
        %4796 = vmatpush.bf16.msra.mxu0 %v4698
        %4797 = vmatpush.bf16.msra.mxu0 %v4697
        %4798 = vmatpush.bf16.msra.mxu0 %v4696
        %4799 = vmatpush.bf16.msra.mxu0 %v4695
        %4800 = vmatpush.bf16.msra.mxu0 %v4694
        %4801 = vmatpush.bf16.msra.mxu0 %v4693
        %4802 = vmatpush.bf16.msra.mxu0 %v4692
        %4803 = vmatpush.bf16.msra.mxu0 %v4691
        %4804 = vmatmul.bf16.gmra.mxu0 %v4456
        %v4805 = vpop.f32.mrf.mxu0
        %v4806 = vadd.f32 %v4757, %v4805
        %v4807 = vpop.f32.mrf.mxu0
        %v4808 = vadd.f32 %v4759, %v4807
        %4809 = vmatmul.bf16.gmra.mxu0 %v4460
        %v4810 = vpop.f32.mrf.mxu0
        %v4811 = vadd.f32 %v4762, %v4810
        %v4812 = vpop.f32.mrf.mxu0
        %v4813 = vadd.f32 %v4764, %v4812
        %4814 = vmatmul.bf16.gmra.mxu0 %v4464
        %v4815 = vpop.f32.mrf.mxu0
        %v4816 = vadd.f32 %v4767, %v4815
        %v4817 = vpop.f32.mrf.mxu0
        %v4818 = vadd.f32 %v4769, %v4817
        %4819 = vmatmul.bf16.gmra.mxu0 %v4468
        %v4820 = vpop.f32.mrf.mxu0
        %v4821 = vadd.f32 %v4772, %v4820
        %v4822 = vpop.f32.mrf.mxu0
        %v4823 = vadd.f32 %v4774, %v4822
        %4824 = vmatmul.bf16.gmra.mxu0 %v4472
        %v4825 = vpop.f32.mrf.mxu0
        %v4826 = vadd.f32 %v4777, %v4825
        %v4827 = vpop.f32.mrf.mxu0
        %v4828 = vadd.f32 %v4779, %v4827
        %4829 = vmatmul.bf16.gmra.mxu0 %v4476
        %v4830 = vpop.f32.mrf.mxu0
        %v4831 = vadd.f32 %v4782, %v4830
        %v4832 = vpop.f32.mrf.mxu0
        %v4833 = vadd.f32 %v4784, %v4832
        %4834 = vmatmul.bf16.gmra.mxu0 %v4480
        %v4835 = vpop.f32.mrf.mxu0
        %v4836 = vadd.f32 %v4787, %v4835
        %v4837 = vpop.f32.mrf.mxu0
        %v4838 = vadd.f32 %v4789, %v4837
        %4839 = vmatmul.bf16.gmra.mxu0 %v4484
        %v4840 = vpop.f32.mrf.mxu0
        %v4841 = vadd.f32 %v4792, %v4840
        %v4842 = vpop.f32.mrf.mxu0
        %v4843 = vadd.f32 %v4794, %v4842
        %4844 = vdwg.mxu0
        %4845 = vmatpush.bf16.msra.mxu0 %v4706
        %4846 = vmatpush.bf16.msra.mxu0 %v4705
        %4847 = vmatpush.bf16.msra.mxu0 %v4704
        %4848 = vmatpush.bf16.msra.mxu0 %v4703
        %4849 = vmatpush.bf16.msra.mxu0 %v4702
        %4850 = vmatpush.bf16.msra.mxu0 %v4701
        %4851 = vmatpush.bf16.msra.mxu0 %v4700
        %4852 = vmatpush.bf16.msra.mxu0 %v4699
        %4853 = vmatmul.bf16.gmra.mxu0 %v4457
        %v4854 = vpop.f32.mrf.mxu0
        %v4855 = vadd.f32 %v4806, %v4854
        %v4856 = vpop.f32.mrf.mxu0
        %v4857 = vadd.f32 %v4808, %v4856
        %4858 = vmatmul.bf16.gmra.mxu0 %v4461
        %v4859 = vpop.f32.mrf.mxu0
        %v4860 = vadd.f32 %v4811, %v4859
        %v4861 = vpop.f32.mrf.mxu0
        %v4862 = vadd.f32 %v4813, %v4861
        %4863 = vmatmul.bf16.gmra.mxu0 %v4465
        %v4864 = vpop.f32.mrf.mxu0
        %v4865 = vadd.f32 %v4816, %v4864
        %v4866 = vpop.f32.mrf.mxu0
        %v4867 = vadd.f32 %v4818, %v4866
        %4868 = vmatmul.bf16.gmra.mxu0 %v4469
        %v4869 = vpop.f32.mrf.mxu0
        %v4870 = vadd.f32 %v4821, %v4869
        %v4871 = vpop.f32.mrf.mxu0
        %v4872 = vadd.f32 %v4823, %v4871
        %4873 = vmatmul.bf16.gmra.mxu0 %v4473
        %v4874 = vpop.f32.mrf.mxu0
        %v4875 = vadd.f32 %v4826, %v4874
        %v4876 = vpop.f32.mrf.mxu0
        %v4877 = vadd.f32 %v4828, %v4876
        %4878 = vmatmul.bf16.gmra.mxu0 %v4477
        %v4879 = vpop.f32.mrf.mxu0
        %v4880 = vadd.f32 %v4831, %v4879
        %v4881 = vpop.f32.mrf.mxu0
        %v4882 = vadd.f32 %v4833, %v4881
        %4883 = vmatmul.bf16.gmra.mxu0 %v4481
        %v4884 = vpop.f32.mrf.mxu0
        %v4885 = vadd.f32 %v4836, %v4884
        %v4886 = vpop.f32.mrf.mxu0
        %v4887 = vadd.f32 %v4838, %v4886
        %4888 = vmatmul.bf16.gmra.mxu0 %v4485
        %v4889 = vpop.f32.mrf.mxu0
        %v4890 = vadd.f32 %v4841, %v4889
        %v4891 = vpop.f32.mrf.mxu0
        %v4892 = vadd.f32 %v4843, %v4891
        %4893 = vdwg.mxu0
        %4894 = vmatpush.bf16.msra.mxu0 %v4714
        %4895 = vmatpush.bf16.msra.mxu0 %v4713
        %4896 = vmatpush.bf16.msra.mxu0 %v4712
        %4897 = vmatpush.bf16.msra.mxu0 %v4711
        %4898 = vmatpush.bf16.msra.mxu0 %v4710
        %4899 = vmatpush.bf16.msra.mxu0 %v4709
        %4900 = vmatpush.bf16.msra.mxu0 %v4708
        %4901 = vmatpush.bf16.msra.mxu0 %v4707
        %4902 = vmatmul.bf16.gmra.mxu0 %v4458
        %v4903 = vpop.f32.mrf.mxu0
        %v4904 = vadd.f32 %v4855, %v4903
        %v4905 = vpop.f32.mrf.mxu0
        %v4906 = vadd.f32 %v4857, %v4905
        %4907 = vmatmul.bf16.gmra.mxu0 %v4462
        %v4908 = vpop.f32.mrf.mxu0
        %v4909 = vadd.f32 %v4860, %v4908
        %v4910 = vpop.f32.mrf.mxu0
        %v4911 = vadd.f32 %v4862, %v4910
        %4912 = vmatmul.bf16.gmra.mxu0 %v4466
        %v4913 = vpop.f32.mrf.mxu0
        %v4914 = vadd.f32 %v4865, %v4913
        %v4915 = vpop.f32.mrf.mxu0
        %v4916 = vadd.f32 %v4867, %v4915
        %4917 = vmatmul.bf16.gmra.mxu0 %v4470
        %v4918 = vpop.f32.mrf.mxu0
        %v4919 = vadd.f32 %v4870, %v4918
        %v4920 = vpop.f32.mrf.mxu0
        %v4921 = vadd.f32 %v4872, %v4920
        %4922 = vmatmul.bf16.gmra.mxu0 %v4474
        %v4923 = vpop.f32.mrf.mxu0
        %v4924 = vadd.f32 %v4875, %v4923
        %v4925 = vpop.f32.mrf.mxu0
        %v4926 = vadd.f32 %v4877, %v4925
        %4927 = vmatmul.bf16.gmra.mxu0 %v4478
        %v4928 = vpop.f32.mrf.mxu0
        %v4929 = vadd.f32 %v4880, %v4928
        %v4930 = vpop.f32.mrf.mxu0
        %v4931 = vadd.f32 %v4882, %v4930
        %4932 = vmatmul.bf16.gmra.mxu0 %v4482
        %v4933 = vpop.f32.mrf.mxu0
        %v4934 = vadd.f32 %v4885, %v4933
        %v4935 = vpop.f32.mrf.mxu0
        %v4936 = vadd.f32 %v4887, %v4935
        %4937 = vmatmul.bf16.gmra.mxu0 %v4486
        %v4938 = vpop.f32.mrf.mxu0
        %v4939 = vadd.f32 %v4890, %v4938
        %v4940 = vpop.f32.mrf.mxu0
        %v4941 = vadd.f32 %v4892, %v4940
        %4942 = vdwg.mxu0
        %v4943 = vadd.f32 %v3097, %v4904
        %v4944 = vadd.f32 %v3098, %v4906
        %v4945 = vadd.f32 %v3099, %v4909
        %v4946 = vadd.f32 %v3100, %v4911
        %v4947 = vadd.f32 %v3101, %v4914
        %v4948 = vadd.f32 %v3102, %v4916
        %v4949 = vadd.f32 %v3103, %v4919
        %v4950 = vadd.f32 %v3104, %v4921
        %v4951 = vadd.f32 %v3105, %v4924
        %v4952 = vadd.f32 %v3106, %v4926
        %v4953 = vadd.f32 %v3107, %v4929
        %v4954 = vadd.f32 %v3108, %v4931
        %v4955 = vadd.f32 %v3109, %v4934
        %v4956 = vadd.f32 %v3110, %v4936
        %v4957 = vadd.f32 %v3111, %v4939
        %v4958 = vadd.f32 %v3112, %v4941
        %4959 = vst [vmem:[%s528] sm:$0xff] %v4943
        %4960 = vst [vmem:[%s528 + $0x8] sm:$0xff] %v4944
        %4961 = vst [vmem:[%s528 + $0x10] sm:$0xff] %v4945
        %4962 = vst [vmem:[%s528 + $0x18] sm:$0xff] %v4946
        %4963 = vst [vmem:[%s528 + $0x20] sm:$0xff] %v4947
        %4964 = vst [vmem:[%s528 + $0x28] sm:$0xff] %v4948
        %4965 = vst [vmem:[%s528 + $0x30] sm:$0xff] %v4949
        %4966 = vst [vmem:[%s528 + $0x38] sm:$0xff] %v4950
        %4967 = vst [vmem:[%s528 + $0x40] sm:$0xff] %v4951
        %4968 = vst [vmem:[%s528 + $0x48] sm:$0xff] %v4952
        %4969 = vst [vmem:[%s528 + $0x50] sm:$0xff] %v4953
        %4970 = vst [vmem:[%s528 + $0x58] sm:$0xff] %v4954
        %4971 = vst [vmem:[%s528 + $0x60] sm:$0xff] %v4955
        %4972 = vst [vmem:[%s528 + $0x68] sm:$0xff] %v4956
        %4973 = vst [vmem:[%s528 + $0x70] sm:$0xff] %v4957
        %4974 = vst [vmem:[%s528 + $0x78] sm:$0xff] %v4958
        %s4975 = sand.u32 %s297, 1
        %s4976 = scalar_lea.sflag [#allocation4], %s4975
        %s4977 = sand.u32 %s297, 1
        %s4978 = smul.addr %s4977, 128
        %s4979 = scalar_lea.vmem [#allocation14], %s4978
        // Predicated region
        $region97: #{tpu_custom_call.1} parent=67 // pred_check
          %p4980 = pneg %p307
        $region98: #{tpu_custom_call.1} parent=67 // pred_check_branch
          %4982 = sbr.rel (%p4980) target = $region100
        $region99: #{tpu_custom_call.1} parent=67 // pred_region
          %4984 = vsyncadd %s4976, 0
          %s4985 = smul.addr %s32, 16
          %s4986 = smul.addr %s4985, 8
          %s4987 = scalar_lea.hbm %s12, %s4986
          %s4988 = sshll.u32 %s4979, 4
          %s4989 = int_to_ptr.vmem [resolvable:$true] %s4988
          %s4990 = sshll.u32 %s4987, 4
          %s4991 = int_to_ptr.hbm [resolvable:$true] %s4990
          %4996 = dma.vmem_to_hbm [thread:$0]  %s4989, 2048, %s4991, %s4976, 128, 128, 8
        $region100: #{tpu_custom_call.1} parent=67 // pred_fallthru
          _
      $region68: #{tpu_custom_call.1} parent=5 // pred_fallthru
        _
      %p4997 = scmp.le.s32.totalorder 2, %s27
      // Predicated region
      $region101: #{tpu_custom_call.1} parent=5 // pred_check
        %p4998 = pneg %p4997
      $region102: #{tpu_custom_call.1} parent=5 // pred_check_branch
        %5000 = sbr.rel (%p4998) target = $region104
      $region103: #{tpu_custom_call.1} parent=5 // pred_region
        %s5001 = ssub.s32 %s27, 2
        // Predicated region
        $region105: #{tpu_custom_call.1} parent=103 // pred_check
          %p5002 = pneg %p313
        $region106: #{tpu_custom_call.1} parent=103 // pred_check_branch
          %5004 = sbr.rel (%p5002) target = $region108
        $region107: #{tpu_custom_call.1} parent=103 // pred_region
          %s5005 = sand.u32 %s298, 1
          %s5006 = scalar_lea.sflag [#allocation4], %s5005
          %s5007 = sand.u32 %s298, 1
          %s5008 = smul.addr %s5007, 128
          %s5009 = scalar_lea.vmem [#allocation14], %s5008
          %5011 = dma.done %s5006, 2048
        $region108: #{tpu_custom_call.1} parent=103 // pred_fallthru
          _
      $region104: #{tpu_custom_call.1} parent=5 // pred_fallthru
        _
    $region6: #{tpu_custom_call.1} parent=1 // loop_footer
      %s31 = sadd.s32 1, %s27
    $region7: #{tpu_custom_call.1} parent=1 // loop_footer_branch
      %26 = sbr.rel target = $region3
    $region8: #{tpu_custom_call.1} parent=1 // loop_exit
      _
    %5012 = vsyncpa [#allocation3], 1
    %s5013 = scalar_lea.sflag [#allocation3], 1
    %5014 = vsyncpa %s5013, 1
    %5015 = vsyncpa [#allocation6], 1
    %5016 = vsyncpa [#allocation9], 1
    %5017 = vsyncpa [#allocation12], 1
    %5018 = vsyncpa [#allocation4], 1
    %s5019 = scalar_lea.sflag [#allocation4], 1
    %5020 = vsyncpa %s5019, 1

</llo_original>
